<compile_context>
chip_gen: v7x
topology: tpu7x:2x2x1
jax: 0.10.0
libtpu: 0.0.40
codegen_flags: <defaults>
</compile_context>

<pallas_src>
import jax
import jax.numpy as jnp
from jax.experimental import pallas as pl
from jax.experimental.pallas import tpu as pltpu

IN_FEATURES = 64 * 64   # 4096
HIDDEN = 512
OUT_FEATURES = 22
OUT_PAD = 128           # lane-dense padded logits width


def mlp_kernel(x_ref, w1_ref, b1_ref, w2_ref, b2_ref, w3_ref, b3_ref, o_ref):
    # Layer 1: (tb, 4096) @ (4096, 512)  bf16 operands, f32 accumulation, f32 epilogue
    x = x_ref[...].astype(jnp.bfloat16)
    h1 = jnp.dot(x, w1_ref[...], preferred_element_type=jnp.float32)
    h1 = jnp.maximum(h1 + b1_ref[...], 0.0)
    # Layer 2: (tb, 512) @ (512, 512)
    h2 = jnp.dot(h1.astype(jnp.bfloat16), w2_ref[...],
                 preferred_element_type=jnp.float32)
    h2 = jnp.maximum(h2 + b2_ref[...], 0.0)
    # Layer 3: (tb, 512) @ (512, 128)  (padded output lanes -> unmasked stores)
    logits = jnp.dot(h2.astype(jnp.bfloat16), w3_ref[...],
                     preferred_element_type=jnp.float32)
    o_ref[...] = (logits + b3_ref[...]).astype(o_ref.dtype)


def _default_tb():
    # 128 rows matches v5e's 4x(128x128) MXU; 256 rows for v6e/v7x's 256-wide MXU.
    try:
        kind = jax.devices()[0].device_kind.lower()
        if "v5" in kind:
            return 128
    except Exception:
        pass
    return 256


def mlp_forward(x, params, *, tb=None):
    """x: (B, 64, 64) or (B, 4096) float32. Returns (B, 22) float32 logits."""
    B = x.shape[0]
    x2d = x.reshape(B, -1).astype(jnp.float32)     # glue: torch's x.view(B, -1)
    assert x2d.shape[1] == IN_FEATURES
    w1, b1, w2, b2, w3, b3 = params

    if tb is None:
        tb = _default_tb()
    # Shrink tile for small batches (tb stays a multiple of 8 for the (8,128) rule).
    tb = min(tb, max(8, ((B + 7) // 8) * 8))
    grid_m = pl.cdiv(B, tb)
    B_pad = grid_m * tb
    if B_pad != B:
        x2d = jnp.pad(x2d, ((0, B_pad - B), (0, 0)))

    # bf16 weights: halve DMA + VMEM footprint, use the native bf16 MXU path.
    w1b = w1.astype(jnp.bfloat16)
    w2b = w2.astype(jnp.bfloat16)
    w3b = jnp.pad(w3, ((0, 0), (0, OUT_PAD - OUT_FEATURES))).astype(jnp.bfloat16)
    b1f = b1.astype(jnp.float32)
    b2f = b2.astype(jnp.float32)
    b3p = jnp.pad(b3, ((0, 0), (0, OUT_PAD - OUT_FEATURES))).astype(jnp.float32)

    full = lambda i: (0, 0)          # weights/biases: one resident block
    single = pl.Buffered(1)          # constant index_map -> no double-buffering

    out = pl.pallas_call(
        mlp_kernel,
        out_shape=jax.ShapeDtypeStruct((B_pad, OUT_PAD), jnp.float32),
        grid_spec=pltpu.PrefetchScalarGridSpec(
            num_scalar_prefetch=0,
            grid=(grid_m,),
            in_specs=[
                pl.BlockSpec((tb, IN_FEATURES), lambda i: (i, 0)),
                pl.BlockSpec((IN_FEATURES, HIDDEN), full, pipeline_mode=single),
                pl.BlockSpec((1, HIDDEN), full, pipeline_mode=single),
                pl.BlockSpec((HIDDEN, HIDDEN), full, pipeline_mode=single),
                pl.BlockSpec((1, HIDDEN), full, pipeline_mode=single),
                pl.BlockSpec((HIDDEN, OUT_PAD), full, pipeline_mode=single),
                pl.BlockSpec((1, OUT_PAD), full, pipeline_mode=single),
            ],
            out_specs=pl.BlockSpec((tb, OUT_PAD), lambda i: (i, 0)),
        ),
        compiler_params=pltpu.CompilerParams(
            dimension_semantics=("parallel",),      # megacore-shard the batch axis
            vmem_limit_bytes=48 << 20,              # <= v7x 64 MiB physical VMEM
        ),
    )(x2d, w1b, b1f, w2b, b2f, w3b, b3p)

    return out[:B, :OUT_FEATURES]


def init_params(key):
    """Deterministic init mirroring torch.nn.Linear defaults:
    U(-1/sqrt(fan_in), 1/sqrt(fan_in)) for both weights and biases."""
    def linear(k, fan_in, fan_out):
        kw, kb = jax.random.split(k)
        bound = 1.0 / jnp.sqrt(fan_in)
        w = jax.random.uniform(kw, (fan_in, fan_out), jnp.float32, -bound, bound)
        b = jax.random.uniform(kb, (1, fan_out), jnp.float32, -bound, bound)
        return w, b

    k1, k2, k3 = jax.random.split(key, 3)
    w1, b1 = linear(k1, IN_FEATURES, HIDDEN)
    w2, b2 = linear(k2, HIDDEN, HIDDEN)
    w3, b3 = linear(k3, HIDDEN, OUT_FEATURES)
    return (w1, b1, w2, b2, w3, b3)


def ref_forward(x, params):
    """Plain-JAX reference reproducing the kernel's bf16-operand / f32-accumulate math."""
    w1, b1, w2, b2, w3, b3 = params
    bf = lambda v: v.astype(jnp.bfloat16).astype(jnp.float32)
    xf = x.reshape(x.shape[0], -1)
    h1 = jnp.maximum(bf(xf) @ bf(w1) + b1, 0.0)
    h2 = jnp.maximum(bf(h1) @ bf(w2) + b2, 0.0)
    return bf(h2) @ bf(w3) + b3


if __name__ == "__main__":
    key = jax.random.PRNGKey(0)
    kx, kp = jax.random.split(key)
    B = 8
    x = jax.random.normal(kx, (B, 64, 64), dtype=jnp.float32)   # image-like input
    params = init_params(kp)

    logits = mlp_forward(x, params)
    jax.block_until_ready(logits)

    ref = ref_forward(x, params)
    assert logits.shape == (B, OUT_FEATURES)
    assert jnp.allclose(logits, ref, atol=2e-3, rtol=2e-3), float(
        jnp.max(jnp.abs(logits - ref)))

    print("KERNEL_OK")
</pallas_src>

<mosaic_0001>
module attributes {stable_mosaic.version = 11 : i64} {
  func.func @mlp_kernel(%arg0: i32, %arg1: memref<8x4096xf32, #tpu.memory_space<vmem>>, %arg2: memref<4096x512xbf16, #tpu.memory_space<vmem>>, %arg3: memref<1x512xf32, #tpu.memory_space<vmem>>, %arg4: memref<512x512xbf16, #tpu.memory_space<vmem>>, %arg5: memref<1x512xf32, #tpu.memory_space<vmem>>, %arg6: memref<512x128xbf16, #tpu.memory_space<vmem>>, %arg7: memref<1x128xf32, #tpu.memory_space<vmem>>, %arg8: memref<8x128xf32, #tpu.memory_space<vmem>>) attributes {dimension_semantics = [#tpu.dimension_semantics<parallel>], iteration_bounds = array<i64: 1>, scalar_prefetch = 0 : i64, scratch_operands = 0 : i64, tpu.core_type = #tpu.core_type<tc>, window_params = [{transform_indices = @transform_0, window_bounds = array<i64: 8, 4096>}, {pipeline_mode = #tpu.pipeline_mode<synchronous>, transform_indices = @transform_1, window_bounds = array<i64: 4096, 512>}, {pipeline_mode = #tpu.pipeline_mode<synchronous>, transform_indices = @transform_2, window_bounds = array<i64: 1, 512>}, {pipeline_mode = #tpu.pipeline_mode<synchronous>, transform_indices = @transform_3, window_bounds = array<i64: 512, 512>}, {pipeline_mode = #tpu.pipeline_mode<synchronous>, transform_indices = @transform_4, window_bounds = array<i64: 1, 512>}, {pipeline_mode = #tpu.pipeline_mode<synchronous>, transform_indices = @transform_5, window_bounds = array<i64: 512, 128>}, {pipeline_mode = #tpu.pipeline_mode<synchronous>, transform_indices = @transform_6, window_bounds = array<i64: 1, 128>}, {transform_indices = @transform_7, window_bounds = array<i64: 8, 128>}]} {
    %c0 = arith.constant 0 : index
    %c0_0 = arith.constant 0 : index
    %0 = vector.load %arg1[%c0, %c0_0] : memref<8x4096xf32, #tpu.memory_space<vmem>>, vector<8x4096xf32>
    %1 = arith.truncf %0 : vector<8x4096xf32> to vector<8x4096xbf16>
    %c0_1 = arith.constant 0 : index
    %c0_2 = arith.constant 0 : index
    %2 = vector.load %arg2[%c0_1, %c0_2] : memref<4096x512xbf16, #tpu.memory_space<vmem>>, vector<4096x512xbf16>
    %cst = arith.constant dense<0.000000e+00> : vector<8x512xf32>
    %3 = tpu.matmul %1, %2, %cst {dimension_numbers = #tpu.dot_dimension_numbers<[1], [0], [0], [1], [0, 0, 1, 1], [], []>} : vector<8x4096xbf16>, vector<4096x512xbf16>, vector<8x512xf32> -> vector<8x512xf32>
    %c0_3 = arith.constant 0 : index
    %c0_4 = arith.constant 0 : index
    %4 = vector.load %arg3[%c0_3, %c0_4] : memref<1x512xf32, #tpu.memory_space<vmem>>, vector<1x512xf32>
    %5 = vector.broadcast %4 : vector<1x512xf32> to vector<8x512xf32>
    %6 = arith.addf %3, %5 : vector<8x512xf32>
    %cst_5 = arith.constant 0.000000e+00 : f32
    %7 = vector.broadcast %cst_5 : f32 to vector<8x512xf32>
    %8 = arith.maximumf %6, %7 : vector<8x512xf32>
    %9 = arith.truncf %8 : vector<8x512xf32> to vector<8x512xbf16>
    %c0_6 = arith.constant 0 : index
    %c0_7 = arith.constant 0 : index
    %10 = vector.load %arg4[%c0_6, %c0_7] : memref<512x512xbf16, #tpu.memory_space<vmem>>, vector<512x512xbf16>
    %cst_8 = arith.constant dense<0.000000e+00> : vector<8x512xf32>
    %11 = tpu.matmul %9, %10, %cst_8 {dimension_numbers = #tpu.dot_dimension_numbers<[1], [0], [0], [1], [0, 0, 1, 1], [], []>} : vector<8x512xbf16>, vector<512x512xbf16>, vector<8x512xf32> -> vector<8x512xf32>
    %c0_9 = arith.constant 0 : index
    %c0_10 = arith.constant 0 : index
    %12 = vector.load %arg5[%c0_9, %c0_10] : memref<1x512xf32, #tpu.memory_space<vmem>>, vector<1x512xf32>
    %13 = vector.broadcast %12 : vector<1x512xf32> to vector<8x512xf32>
    %14 = arith.addf %11, %13 : vector<8x512xf32>
    %cst_11 = arith.constant 0.000000e+00 : f32
    %15 = vector.broadcast %cst_11 : f32 to vector<8x512xf32>
    %16 = arith.maximumf %14, %15 : vector<8x512xf32>
    %17 = arith.truncf %16 : vector<8x512xf32> to vector<8x512xbf16>
    %c0_12 = arith.constant 0 : index
    %c0_13 = arith.constant 0 : index
    %18 = vector.load %arg6[%c0_12, %c0_13] : memref<512x128xbf16, #tpu.memory_space<vmem>>, vector<512x128xbf16>
    %cst_14 = arith.constant dense<0.000000e+00> : vector<8x128xf32>
    %19 = tpu.matmul %17, %18, %cst_14 {dimension_numbers = #tpu.dot_dimension_numbers<[1], [0], [0], [1], [0, 0, 1, 1], [], []>} : vector<8x512xbf16>, vector<512x128xbf16>, vector<8x128xf32> -> vector<8x128xf32>
    %c0_15 = arith.constant 0 : index
    %c0_16 = arith.constant 0 : index
    %20 = vector.load %arg7[%c0_15, %c0_16] : memref<1x128xf32, #tpu.memory_space<vmem>>, vector<1x128xf32>
    %21 = vector.broadcast %20 : vector<1x128xf32> to vector<8x128xf32>
    %22 = arith.addf %19, %21 : vector<8x128xf32>
    %c0_17 = arith.constant 0 : index
    %c0_18 = arith.constant 0 : index
    %23 = vector.load %arg8[%c0_17, %c0_18] : memref<8x128xf32, #tpu.memory_space<vmem>>, vector<8x128xf32>
    tpu.vector_store %arg8[%c0_17, %c0_18], %22 {strides = array<i32>} : memref<8x128xf32, #tpu.memory_space<vmem>>, vector<8x128xf32>,
    return
  }
  func.func @transform_0(%arg0: i32) -> (i32, i32) {
    %c0_i32 = arith.constant 0 : i32
    %c0_i32_0 = arith.constant 0 : i32
    return %arg0, %c0_i32 : i32, i32
  }
  func.func @transform_1(%arg0: i32) -> (i32, i32) {
    %c0_i32 = arith.constant 0 : i32
    %c0_i32_0 = arith.constant 0 : i32
    %c0_i32_1 = arith.constant 0 : i32
    return %c0_i32, %c0_i32_0 : i32, i32
  }
  func.func @transform_2(%arg0: i32) -> (i32, i32) {
    %c0_i32 = arith.constant 0 : i32
    %c0_i32_0 = arith.constant 0 : i32
    %c0_i32_1 = arith.constant 0 : i32
    return %c0_i32, %c0_i32_0 : i32, i32
  }
  func.func @transform_3(%arg0: i32) -> (i32, i32) {
    %c0_i32 = arith.constant 0 : i32
    %c0_i32_0 = arith.constant 0 : i32
    %c0_i32_1 = arith.constant 0 : i32
    return %c0_i32, %c0_i32_0 : i32, i32
  }
  func.func @transform_4(%arg0: i32) -> (i32, i32) {
    %c0_i32 = arith.constant 0 : i32
    %c0_i32_0 = arith.constant 0 : i32
    %c0_i32_1 = arith.constant 0 : i32
    return %c0_i32, %c0_i32_0 : i32, i32
  }
  func.func @transform_5(%arg0: i32) -> (i32, i32) {
    %c0_i32 = arith.constant 0 : i32
    %c0_i32_0 = arith.constant 0 : i32
    %c0_i32_1 = arith.constant 0 : i32
    return %c0_i32, %c0_i32_0 : i32, i32
  }
  func.func @transform_6(%arg0: i32) -> (i32, i32) {
    %c0_i32 = arith.constant 0 : i32
    %c0_i32_0 = arith.constant 0 : i32
    %c0_i32_1 = arith.constant 0 : i32
    return %c0_i32, %c0_i32_0 : i32, i32
  }
  func.func @transform_7(%arg0: i32) -> (i32, i32) {
    %c0_i32 = arith.constant 0 : i32
    %c0_i32_0 = arith.constant 0 : i32
    return %arg0, %c0_i32 : i32, i32
  }
}

</mosaic_0001>

<llo_original>
// kernel: tpu_custom_call.1
$region0: #{tpu_custom_call.1}
  #allocation0 [shape = 'u32[]', space=smem, size = 0x4, offset = 0x4, fixed_abs, tag = 'smem constant byte address 0x4 - core index']
  #allocation1 [shape = 'u32[144,128]{1,0:T(1,128)}', space=vmem, size = 0x12000, scoped, tag = 'internal scratch']
  %s0 = inlined_call_operand.hbm [shape: f32[8,4096], index: 0, kind: input, shape index: {}]
  %s1 = inlined_call_operand.hbm [shape: bf16[4096,512], index: 1, kind: input, shape index: {}]
  %s2 = inlined_call_operand.hbm [shape: f32[1,512], index: 2, kind: input, shape index: {}]
  %s3 = inlined_call_operand.hbm [shape: bf16[512,512], index: 3, kind: input, shape index: {}]
  %s4 = inlined_call_operand.hbm [shape: f32[1,512], index: 4, kind: input, shape index: {}]
  %s5 = inlined_call_operand.hbm [shape: bf16[512,128], index: 5, kind: input, shape index: {}]
  %s6 = inlined_call_operand.hbm [shape: f32[1,128], index: 6, kind: input, shape index: {}]
  %s7 = inlined_call_operand.hbm [shape: f32[8,128], index: 7, kind: output, shape index: {}]
  %s8 = sld [smem:[#allocation0]]
  $region66: #{tpu_custom_call.1} parent=0
    _
  %s10 = ssub.s32 1, %s8
  %s11 = scalar_select 0, %s10, %s8
  $region1: #{tpu_custom_call.1} parent=0
    #allocation2 [shape = 'u8[131072]{0}', space=vmem, size = 0x20000, scoped, tag = 'input window, operand 0, single buffered']
    #allocation3 [shape = 's32[1]{0}', space=sflag, size = 0x4, scoped, tag = 'scoped memory for tpu_custom_call.1']
    #allocation4 [shape = 's32[1]{0}', space=sflag, size = 0x4, scoped, tag = 'scoped memory for tpu_custom_call.1']
    #allocation5 [shape = 'u8[4194304]{0}', space=vmem, size = 0x400000, scoped, tag = 'input window, operand 1, single buffered']
    #allocation6 [shape = 's32[1]{0}', space=sflag, size = 0x4, scoped, tag = 'scoped memory for tpu_custom_call.1']
    #allocation7 [shape = 'u8[2048]{0}', space=vmem, size = 0x800, scoped, tag = 'input window, operand 2, single buffered']
    #allocation8 [shape = 'u8[524288]{0}', space=vmem, size = 0x80000, scoped, tag = 'input window, operand 3, single buffered']
    #allocation9 [shape = 's32[1]{0}', space=sflag, size = 0x4, scoped, tag = 'scoped memory for tpu_custom_call.1']
    #allocation10 [shape = 'u8[2048]{0}', space=vmem, size = 0x800, scoped, tag = 'input window, operand 4, single buffered']
    #allocation11 [shape = 'u8[131072]{0}', space=vmem, size = 0x20000, scoped, tag = 'input window, operand 5, single buffered']
    #allocation12 [shape = 's32[1]{0}', space=sflag, size = 0x4, scoped, tag = 'scoped memory for tpu_custom_call.1']
    #allocation13 [shape = 'u8[512]{0}', space=vmem, size = 0x400, scoped, tag = 'input window, operand 6, single buffered']
    #allocation14 [shape = 'u8[4096]{0}', space=vmem, size = 0x1000, scoped, tag = 'output window, operand 0, single buffered']
    %12 = vsyncpa [#allocation3], 0
    %13 = vsyncpa [#allocation6], 0
    %14 = vsyncpa [#allocation9], 0
    %15 = vsyncpa [#allocation12], 0
    %16 = vsyncpa [#allocation4], 0
    // Predicated region
    $region2: #{tpu_custom_call.1} parent=1 // pred_check
      _
    $region3: #{tpu_custom_call.1} parent=1 // pred_check_branch
      %18 = sbr.rel (0) target = $region5
    $region4: #{tpu_custom_call.1} parent=1 // pred_region
      %s20 = ssub.s32 4096, 4096
      %21 = vsyncadd [#allocation3], %s20
      %s23 = sshll.u32 [#allocation2], 4
      %s24 = int_to_ptr.vmem [resolvable:$true] %s23
      %26 = dma.hbm_to_vmem [thread:$0]  %s0, 4096, %s24, [#allocation3]
    $region5: #{tpu_custom_call.1} parent=1 // pred_fallthru
      _
    // Predicated region
    $region6: #{tpu_custom_call.1} parent=1 // pred_check
      _
    $region7: #{tpu_custom_call.1} parent=1 // pred_check_branch
      %28 = sbr.rel (0) target = $region9
    $region8: #{tpu_custom_call.1} parent=1 // pred_region
      %s30 = ssub.s32 131072, 131072
      %31 = vsyncadd [#allocation6], %s30
      %s32 = sshll.u32 [#allocation5], 4
      %s33 = int_to_ptr.vmem [resolvable:$true] %s32
      %38 = dma.hbm_to_vmem [thread:$0]  %s1, 131072, %s33, [#allocation6], 256, 256, 16
    $region9: #{tpu_custom_call.1} parent=1 // pred_fallthru
      _
    // Predicated region
    $region10: #{tpu_custom_call.1} parent=1 // pred_check
      _
    $region11: #{tpu_custom_call.1} parent=1 // pred_check_branch
      %40 = sbr.rel (0) target = $region13
    $region12: #{tpu_custom_call.1} parent=1 // pred_region
      %s42 = ssub.s32 64, 64
      %43 = vsyncadd [#allocation6], %s42
      %s45 = sshll.u32 [#allocation7], 4
      %s46 = int_to_ptr.vmem [resolvable:$true] %s45
      %48 = dma.hbm_to_vmem [thread:$0]  %s2, 64, %s46, [#allocation6]
    $region13: #{tpu_custom_call.1} parent=1 // pred_fallthru
      _
    // Predicated region
    $region14: #{tpu_custom_call.1} parent=1 // pred_check
      _
    $region15: #{tpu_custom_call.1} parent=1 // pred_check_branch
      %50 = sbr.rel (0) target = $region17
    $region16: #{tpu_custom_call.1} parent=1 // pred_region
      %s52 = ssub.s32 16384, 16384
      %53 = vsyncadd [#allocation9], %s52
      %s54 = sshll.u32 [#allocation8], 4
      %s55 = int_to_ptr.vmem [resolvable:$true] %s54
      %60 = dma.hbm_to_vmem [thread:$0]  %s3, 16384, %s55, [#allocation9], 256, 256, 16
    $region17: #{tpu_custom_call.1} parent=1 // pred_fallthru
      _
    // Predicated region
    $region18: #{tpu_custom_call.1} parent=1 // pred_check
      _
    $region19: #{tpu_custom_call.1} parent=1 // pred_check_branch
      %62 = sbr.rel (0) target = $region21
    $region20: #{tpu_custom_call.1} parent=1 // pred_region
      %s64 = ssub.s32 64, 64
      %65 = vsyncadd [#allocation9], %s64
      %s67 = sshll.u32 [#allocation10], 4
      %s68 = int_to_ptr.vmem [resolvable:$true] %s67
      %70 = dma.hbm_to_vmem [thread:$0]  %s4, 64, %s68, [#allocation9]
    $region21: #{tpu_custom_call.1} parent=1 // pred_fallthru
      _
    // Predicated region
    $region22: #{tpu_custom_call.1} parent=1 // pred_check
      _
    $region23: #{tpu_custom_call.1} parent=1 // pred_check_branch
      %72 = sbr.rel (0) target = $region25
    $region24: #{tpu_custom_call.1} parent=1 // pred_region
      %s74 = ssub.s32 4096, 4096
      %75 = vsyncadd [#allocation12], %s74
      %s76 = sshll.u32 [#allocation11], 4
      %s77 = int_to_ptr.vmem [resolvable:$true] %s76
      %82 = dma.hbm_to_vmem [thread:$0]  %s5, 4096, %s77, [#allocation12], 64, 64, 4
    $region25: #{tpu_custom_call.1} parent=1 // pred_fallthru
      _
    // Predicated region
    $region26: #{tpu_custom_call.1} parent=1 // pred_check
      _
    $region27: #{tpu_custom_call.1} parent=1 // pred_check_branch
      %84 = sbr.rel (0) target = $region29
    $region28: #{tpu_custom_call.1} parent=1 // pred_region
      %s86 = ssub.s32 16, 16
      %87 = vsyncadd [#allocation12], %s86
      %s89 = sshll.u32 [#allocation13], 4
      %s90 = int_to_ptr.vmem [resolvable:$true] %s89
      %92 = dma.hbm_to_vmem [thread:$0]  %s6, 16, %s90, [#allocation12]
    $region29: #{tpu_custom_call.1} parent=1 // pred_fallthru
      _
    // Predicated region
    $region30: #{tpu_custom_call.1} parent=1 // pred_check
      _
    $region31: #{tpu_custom_call.1} parent=1 // pred_check_branch
      %94 = sbr.rel (0) target = $region33
    $region32: #{tpu_custom_call.1} parent=1 // pred_region
      %95 = dma.done [#allocation3], 4096
    $region33: #{tpu_custom_call.1} parent=1 // pred_fallthru
      _
    // Predicated region
    $region34: #{tpu_custom_call.1} parent=1 // pred_check
      _
    $region35: #{tpu_custom_call.1} parent=1 // pred_check_branch
      %97 = sbr.rel (0) target = $region37
    $region36: #{tpu_custom_call.1} parent=1 // pred_region
      %98 = dma.done [#allocation6], 131072
    $region37: #{tpu_custom_call.1} parent=1 // pred_fallthru
      _
    // Predicated region
    $region38: #{tpu_custom_call.1} parent=1 // pred_check
      _
    $region39: #{tpu_custom_call.1} parent=1 // pred_check_branch
      %100 = sbr.rel (0) target = $region41
    $region40: #{tpu_custom_call.1} parent=1 // pred_region
      %101 = dma.done [#allocation6], 64
    $region41: #{tpu_custom_call.1} parent=1 // pred_fallthru
      _
    // Predicated region
    $region42: #{tpu_custom_call.1} parent=1 // pred_check
      _
    $region43: #{tpu_custom_call.1} parent=1 // pred_check_branch
      %103 = sbr.rel (0) target = $region45
    $region44: #{tpu_custom_call.1} parent=1 // pred_region
      %104 = dma.done [#allocation9], 16384
    $region45: #{tpu_custom_call.1} parent=1 // pred_fallthru
      _
    // Predicated region
    $region46: #{tpu_custom_call.1} parent=1 // pred_check
      _
    $region47: #{tpu_custom_call.1} parent=1 // pred_check_branch
      %106 = sbr.rel (0) target = $region49
    $region48: #{tpu_custom_call.1} parent=1 // pred_region
      %107 = dma.done [#allocation9], 64
    $region49: #{tpu_custom_call.1} parent=1 // pred_fallthru
      _
    // Predicated region
    $region50: #{tpu_custom_call.1} parent=1 // pred_check
      _
    $region51: #{tpu_custom_call.1} parent=1 // pred_check_branch
      %109 = sbr.rel (0) target = $region53
    $region52: #{tpu_custom_call.1} parent=1 // pred_region
      %110 = dma.done [#allocation12], 4096
    $region53: #{tpu_custom_call.1} parent=1 // pred_fallthru
      _
    // Predicated region
    $region54: #{tpu_custom_call.1} parent=1 // pred_check
      _
    $region55: #{tpu_custom_call.1} parent=1 // pred_check_branch
      %112 = sbr.rel (0) target = $region57
    $region56: #{tpu_custom_call.1} parent=1 // pred_region
      %113 = dma.done [#allocation12], 16
    $region57: #{tpu_custom_call.1} parent=1 // pred_fallthru
      _
    %v115 = vld [vmem:[#allocation2] sm:$0xff]
    %v116 = vld [vmem:[#allocation2 + $0x8] sm:$0xff]
    %v117 = vld [vmem:[#allocation2 + $0x10] sm:$0xff]
    %v118 = vld [vmem:[#allocation2 + $0x18] sm:$0xff]
    %v119 = vld [vmem:[#allocation2 + $0x20] sm:$0xff]
    %v120 = vld [vmem:[#allocation2 + $0x28] sm:$0xff]
    %v121 = vld [vmem:[#allocation2 + $0x30] sm:$0xff]
    %v122 = vld [vmem:[#allocation2 + $0x38] sm:$0xff]
    %v123 = vld [vmem:[#allocation2 + $0x40] sm:$0xff]
    %v124 = vld [vmem:[#allocation2 + $0x48] sm:$0xff]
    %v125 = vld [vmem:[#allocation2 + $0x50] sm:$0xff]
    %v126 = vld [vmem:[#allocation2 + $0x58] sm:$0xff]
    %v127 = vld [vmem:[#allocation2 + $0x60] sm:$0xff]
    %v128 = vld [vmem:[#allocation2 + $0x68] sm:$0xff]
    %v129 = vld [vmem:[#allocation2 + $0x70] sm:$0xff]
    %v130 = vld [vmem:[#allocation2 + $0x78] sm:$0xff]
    %v131 = vld [vmem:[#allocation2 + $0x80] sm:$0xff]
    %v132 = vld [vmem:[#allocation2 + $0x88] sm:$0xff]
    %v133 = vld [vmem:[#allocation2 + $0x90] sm:$0xff]
    %v134 = vld [vmem:[#allocation2 + $0x98] sm:$0xff]
    %v135 = vld [vmem:[#allocation2 + $0xa0] sm:$0xff]
    %v136 = vld [vmem:[#allocation2 + $0xa8] sm:$0xff]
    %v137 = vld [vmem:[#allocation2 + $0xb0] sm:$0xff]
    %v138 = vld [vmem:[#allocation2 + $0xb8] sm:$0xff]
    %v139 = vld [vmem:[#allocation2 + $0xc0] sm:$0xff]
    %v140 = vld [vmem:[#allocation2 + $0xc8] sm:$0xff]
    %v141 = vld [vmem:[#allocation2 + $0xd0] sm:$0xff]
    %v142 = vld [vmem:[#allocation2 + $0xd8] sm:$0xff]
    %v143 = vld [vmem:[#allocation2 + $0xe0] sm:$0xff]
    %v144 = vld [vmem:[#allocation2 + $0xe8] sm:$0xff]
    %v145 = vld [vmem:[#allocation2 + $0xf0] sm:$0xff]
    %v146 = vld [vmem:[#allocation2 + $0xf8] sm:$0xff]
    %v147 = vpack.c.bf16 %v115, %v115
    %v148 = vpack.c.bf16 %v116, %v116
    %v149 = vpack.c.bf16 %v117, %v117
    %v150 = vpack.c.bf16 %v118, %v118
    %v151 = vpack.c.bf16 %v119, %v119
    %v152 = vpack.c.bf16 %v120, %v120
    %v153 = vpack.c.bf16 %v121, %v121
    %v154 = vpack.c.bf16 %v122, %v122
    %v155 = vpack.c.bf16 %v123, %v123
    %v156 = vpack.c.bf16 %v124, %v124
    %v157 = vpack.c.bf16 %v125, %v125
    %v158 = vpack.c.bf16 %v126, %v126
    %v159 = vpack.c.bf16 %v127, %v127
    %v160 = vpack.c.bf16 %v128, %v128
    %v161 = vpack.c.bf16 %v129, %v129
    %v162 = vpack.c.bf16 %v130, %v130
    %v163 = vpack.c.bf16 %v131, %v131
    %v164 = vpack.c.bf16 %v132, %v132
    %v165 = vpack.c.bf16 %v133, %v133
    %v166 = vpack.c.bf16 %v134, %v134
    %v167 = vpack.c.bf16 %v135, %v135
    %v168 = vpack.c.bf16 %v136, %v136
    %v169 = vpack.c.bf16 %v137, %v137
    %v170 = vpack.c.bf16 %v138, %v138
    %v171 = vpack.c.bf16 %v139, %v139
    %v172 = vpack.c.bf16 %v140, %v140
    %v173 = vpack.c.bf16 %v141, %v141
    %v174 = vpack.c.bf16 %v142, %v142
    %v175 = vpack.c.bf16 %v143, %v143
    %v176 = vpack.c.bf16 %v144, %v144
    %v177 = vpack.c.bf16 %v145, %v145
    %v178 = vpack.c.bf16 %v146, %v146
    %v179 = vld [vmem:[#allocation5] sm:$0xff]
    %v180 = vld [vmem:[#allocation5 + $0x8] sm:$0xff]
    %v181 = vld [vmem:[#allocation5 + $0x10] sm:$0xff]
    %v182 = vld [vmem:[#allocation5 + $0x18] sm:$0xff]
    %v183 = vld [vmem:[#allocation5 + $0x20] sm:$0xff]
    %v184 = vld [vmem:[#allocation5 + $0x28] sm:$0xff]
    %v185 = vld [vmem:[#allocation5 + $0x30] sm:$0xff]
    %v186 = vld [vmem:[#allocation5 + $0x38] sm:$0xff]
    %v187 = vld [vmem:[#allocation5 + $0x40] sm:$0xff]
    %v188 = vld [vmem:[#allocation5 + $0x48] sm:$0xff]
    %v189 = vld [vmem:[#allocation5 + $0x50] sm:$0xff]
    %v190 = vld [vmem:[#allocation5 + $0x58] sm:$0xff]
    %v191 = vld [vmem:[#allocation5 + $0x60] sm:$0xff]
    %v192 = vld [vmem:[#allocation5 + $0x68] sm:$0xff]
    %v193 = vld [vmem:[#allocation5 + $0x70] sm:$0xff]
    %v194 = vld [vmem:[#allocation5 + $0x78] sm:$0xff]
    %v195 = vld [vmem:[#allocation5 + $0x80] sm:$0xff]
    %v196 = vld [vmem:[#allocation5 + $0x88] sm:$0xff]
    %v197 = vld [vmem:[#allocation5 + $0x90] sm:$0xff]
    %v198 = vld [vmem:[#allocation5 + $0x98] sm:$0xff]
    %v199 = vld [vmem:[#allocation5 + $0xa0] sm:$0xff]
    %v200 = vld [vmem:[#allocation5 + $0xa8] sm:$0xff]
    %v201 = vld [vmem:[#allocation5 + $0xb0] sm:$0xff]
    %v202 = vld [vmem:[#allocation5 + $0xb8] sm:$0xff]
    %v203 = vld [vmem:[#allocation5 + $0xc0] sm:$0xff]
    %v204 = vld [vmem:[#allocation5 + $0xc8] sm:$0xff]
    %v205 = vld [vmem:[#allocation5 + $0xd0] sm:$0xff]
    %v206 = vld [vmem:[#allocation5 + $0xd8] sm:$0xff]
    %v207 = vld [vmem:[#allocation5 + $0xe0] sm:$0xff]
    %v208 = vld [vmem:[#allocation5 + $0xe8] sm:$0xff]
    %v209 = vld [vmem:[#allocation5 + $0xf0] sm:$0xff]
    %v210 = vld [vmem:[#allocation5 + $0xf8] sm:$0xff]
    %v211 = vld [vmem:[#allocation5 + $0x100] sm:$0xff]
    %v212 = vld [vmem:[#allocation5 + $0x108] sm:$0xff]
    %v213 = vld [vmem:[#allocation5 + $0x110] sm:$0xff]
    %v214 = vld [vmem:[#allocation5 + $0x118] sm:$0xff]
    %v215 = vld [vmem:[#allocation5 + $0x120] sm:$0xff]
    %v216 = vld [vmem:[#allocation5 + $0x128] sm:$0xff]
    %v217 = vld [vmem:[#allocation5 + $0x130] sm:$0xff]
    %v218 = vld [vmem:[#allocation5 + $0x138] sm:$0xff]
    %v219 = vld [vmem:[#allocation5 + $0x140] sm:$0xff]
    %v220 = vld [vmem:[#allocation5 + $0x148] sm:$0xff]
    %v221 = vld [vmem:[#allocation5 + $0x150] sm:$0xff]
    %v222 = vld [vmem:[#allocation5 + $0x158] sm:$0xff]
    %v223 = vld [vmem:[#allocation5 + $0x160] sm:$0xff]
    %v224 = vld [vmem:[#allocation5 + $0x168] sm:$0xff]
    %v225 = vld [vmem:[#allocation5 + $0x170] sm:$0xff]
    %v226 = vld [vmem:[#allocation5 + $0x178] sm:$0xff]
    %v227 = vld [vmem:[#allocation5 + $0x180] sm:$0xff]
    %v228 = vld [vmem:[#allocation5 + $0x188] sm:$0xff]
    %v229 = vld [vmem:[#allocation5 + $0x190] sm:$0xff]
    %v230 = vld [vmem:[#allocation5 + $0x198] sm:$0xff]
    %v231 = vld [vmem:[#allocation5 + $0x1a0] sm:$0xff]
    %v232 = vld [vmem:[#allocation5 + $0x1a8] sm:$0xff]
    %v233 = vld [vmem:[#allocation5 + $0x1b0] sm:$0xff]
    %v234 = vld [vmem:[#allocation5 + $0x1b8] sm:$0xff]
    %v235 = vld [vmem:[#allocation5 + $0x1c0] sm:$0xff]
    %v236 = vld [vmem:[#allocation5 + $0x1c8] sm:$0xff]
    %v237 = vld [vmem:[#allocation5 + $0x1d0] sm:$0xff]
    %v238 = vld [vmem:[#allocation5 + $0x1d8] sm:$0xff]
    %v239 = vld [vmem:[#allocation5 + $0x1e0] sm:$0xff]
    %v240 = vld [vmem:[#allocation5 + $0x1e8] sm:$0xff]
    %v241 = vld [vmem:[#allocation5 + $0x1f0] sm:$0xff]
    %v242 = vld [vmem:[#allocation5 + $0x1f8] sm:$0xff]
    %v243 = vld [vmem:[#allocation5 + $0x200] sm:$0xff]
    %v244 = vld [vmem:[#allocation5 + $0x208] sm:$0xff]
    %v245 = vld [vmem:[#allocation5 + $0x210] sm:$0xff]
    %v246 = vld [vmem:[#allocation5 + $0x218] sm:$0xff]
    %v247 = vld [vmem:[#allocation5 + $0x220] sm:$0xff]
    %v248 = vld [vmem:[#allocation5 + $0x228] sm:$0xff]
    %v249 = vld [vmem:[#allocation5 + $0x230] sm:$0xff]
    %v250 = vld [vmem:[#allocation5 + $0x238] sm:$0xff]
    %v251 = vld [vmem:[#allocation5 + $0x240] sm:$0xff]
    %v252 = vld [vmem:[#allocation5 + $0x248] sm:$0xff]
    %v253 = vld [vmem:[#allocation5 + $0x250] sm:$0xff]
    %v254 = vld [vmem:[#allocation5 + $0x258] sm:$0xff]
    %v255 = vld [vmem:[#allocation5 + $0x260] sm:$0xff]
    %v256 = vld [vmem:[#allocation5 + $0x268] sm:$0xff]
    %v257 = vld [vmem:[#allocation5 + $0x270] sm:$0xff]
    %v258 = vld [vmem:[#allocation5 + $0x278] sm:$0xff]
    %v259 = vld [vmem:[#allocation5 + $0x280] sm:$0xff]
    %v260 = vld [vmem:[#allocation5 + $0x288] sm:$0xff]
    %v261 = vld [vmem:[#allocation5 + $0x290] sm:$0xff]
    %v262 = vld [vmem:[#allocation5 + $0x298] sm:$0xff]
    %v263 = vld [vmem:[#allocation5 + $0x2a0] sm:$0xff]
    %v264 = vld [vmem:[#allocation5 + $0x2a8] sm:$0xff]
    %v265 = vld [vmem:[#allocation5 + $0x2b0] sm:$0xff]
    %v266 = vld [vmem:[#allocation5 + $0x2b8] sm:$0xff]
    %v267 = vld [vmem:[#allocation5 + $0x2c0] sm:$0xff]
    %v268 = vld [vmem:[#allocation5 + $0x2c8] sm:$0xff]
    %v269 = vld [vmem:[#allocation5 + $0x2d0] sm:$0xff]
    %v270 = vld [vmem:[#allocation5 + $0x2d8] sm:$0xff]
    %v271 = vld [vmem:[#allocation5 + $0x2e0] sm:$0xff]
    %v272 = vld [vmem:[#allocation5 + $0x2e8] sm:$0xff]
    %v273 = vld [vmem:[#allocation5 + $0x2f0] sm:$0xff]
    %v274 = vld [vmem:[#allocation5 + $0x2f8] sm:$0xff]
    %v275 = vld [vmem:[#allocation5 + $0x300] sm:$0xff]
    %v276 = vld [vmem:[#allocation5 + $0x308] sm:$0xff]
    %v277 = vld [vmem:[#allocation5 + $0x310] sm:$0xff]
    %v278 = vld [vmem:[#allocation5 + $0x318] sm:$0xff]
    %v279 = vld [vmem:[#allocation5 + $0x320] sm:$0xff]
    %v280 = vld [vmem:[#allocation5 + $0x328] sm:$0xff]
    %v281 = vld [vmem:[#allocation5 + $0x330] sm:$0xff]
    %v282 = vld [vmem:[#allocation5 + $0x338] sm:$0xff]
    %v283 = vld [vmem:[#allocation5 + $0x340] sm:$0xff]
    %v284 = vld [vmem:[#allocation5 + $0x348] sm:$0xff]
    %v285 = vld [vmem:[#allocation5 + $0x350] sm:$0xff]
    %v286 = vld [vmem:[#allocation5 + $0x358] sm:$0xff]
    %v287 = vld [vmem:[#allocation5 + $0x360] sm:$0xff]
    %v288 = vld [vmem:[#allocation5 + $0x368] sm:$0xff]
    %v289 = vld [vmem:[#allocation5 + $0x370] sm:$0xff]
    %v290 = vld [vmem:[#allocation5 + $0x378] sm:$0xff]
    %v291 = vld [vmem:[#allocation5 + $0x380] sm:$0xff]
    %v292 = vld [vmem:[#allocation5 + $0x388] sm:$0xff]
    %v293 = vld [vmem:[#allocation5 + $0x390] sm:$0xff]
    %v294 = vld [vmem:[#allocation5 + $0x398] sm:$0xff]
    %v295 = vld [vmem:[#allocation5 + $0x3a0] sm:$0xff]
    %v296 = vld [vmem:[#allocation5 + $0x3a8] sm:$0xff]
    %v297 = vld [vmem:[#allocation5 + $0x3b0] sm:$0xff]
    %v298 = vld [vmem:[#allocation5 + $0x3b8] sm:$0xff]
    %v299 = vld [vmem:[#allocation5 + $0x3c0] sm:$0xff]
    %v300 = vld [vmem:[#allocation5 + $0x3c8] sm:$0xff]
    %v301 = vld [vmem:[#allocation5 + $0x3d0] sm:$0xff]
    %v302 = vld [vmem:[#allocation5 + $0x3d8] sm:$0xff]
    %v303 = vld [vmem:[#allocation5 + $0x3e0] sm:$0xff]
    %v304 = vld [vmem:[#allocation5 + $0x3e8] sm:$0xff]
    %v305 = vld [vmem:[#allocation5 + $0x3f0] sm:$0xff]
    %v306 = vld [vmem:[#allocation5 + $0x3f8] sm:$0xff]
    %v307 = vld [vmem:[#allocation5 + $0x400] sm:$0xff]
    %v308 = vld [vmem:[#allocation5 + $0x408] sm:$0xff]
    %v309 = vld [vmem:[#allocation5 + $0x410] sm:$0xff]
    %v310 = vld [vmem:[#allocation5 + $0x418] sm:$0xff]
    %v311 = vld [vmem:[#allocation5 + $0x420] sm:$0xff]
    %v312 = vld [vmem:[#allocation5 + $0x428] sm:$0xff]
    %v313 = vld [vmem:[#allocation5 + $0x430] sm:$0xff]
    %v314 = vld [vmem:[#allocation5 + $0x438] sm:$0xff]
    %v315 = vld [vmem:[#allocation5 + $0x440] sm:$0xff]
    %v316 = vld [vmem:[#allocation5 + $0x448] sm:$0xff]
    %v317 = vld [vmem:[#allocation5 + $0x450] sm:$0xff]
    %v318 = vld [vmem:[#allocation5 + $0x458] sm:$0xff]
    %v319 = vld [vmem:[#allocation5 + $0x460] sm:$0xff]
    %v320 = vld [vmem:[#allocation5 + $0x468] sm:$0xff]
    %v321 = vld [vmem:[#allocation5 + $0x470] sm:$0xff]
    %v322 = vld [vmem:[#allocation5 + $0x478] sm:$0xff]
    %v323 = vld [vmem:[#allocation5 + $0x480] sm:$0xff]
    %v324 = vld [vmem:[#allocation5 + $0x488] sm:$0xff]
    %v325 = vld [vmem:[#allocation5 + $0x490] sm:$0xff]
    %v326 = vld [vmem:[#allocation5 + $0x498] sm:$0xff]
    %v327 = vld [vmem:[#allocation5 + $0x4a0] sm:$0xff]
    %v328 = vld [vmem:[#allocation5 + $0x4a8] sm:$0xff]
    %v329 = vld [vmem:[#allocation5 + $0x4b0] sm:$0xff]
    %v330 = vld [vmem:[#allocation5 + $0x4b8] sm:$0xff]
    %v331 = vld [vmem:[#allocation5 + $0x4c0] sm:$0xff]
    %v332 = vld [vmem:[#allocation5 + $0x4c8] sm:$0xff]
    %v333 = vld [vmem:[#allocation5 + $0x4d0] sm:$0xff]
    %v334 = vld [vmem:[#allocation5 + $0x4d8] sm:$0xff]
    %v335 = vld [vmem:[#allocation5 + $0x4e0] sm:$0xff]
    %v336 = vld [vmem:[#allocation5 + $0x4e8] sm:$0xff]
    %v337 = vld [vmem:[#allocation5 + $0x4f0] sm:$0xff]
    %v338 = vld [vmem:[#allocation5 + $0x4f8] sm:$0xff]
    %v339 = vld [vmem:[#allocation5 + $0x500] sm:$0xff]
    %v340 = vld [vmem:[#allocation5 + $0x508] sm:$0xff]
    %v341 = vld [vmem:[#allocation5 + $0x510] sm:$0xff]
    %v342 = vld [vmem:[#allocation5 + $0x518] sm:$0xff]
    %v343 = vld [vmem:[#allocation5 + $0x520] sm:$0xff]
    %v344 = vld [vmem:[#allocation5 + $0x528] sm:$0xff]
    %v345 = vld [vmem:[#allocation5 + $0x530] sm:$0xff]
    %v346 = vld [vmem:[#allocation5 + $0x538] sm:$0xff]
    %v347 = vld [vmem:[#allocation5 + $0x540] sm:$0xff]
    %v348 = vld [vmem:[#allocation5 + $0x548] sm:$0xff]
    %v349 = vld [vmem:[#allocation5 + $0x550] sm:$0xff]
    %v350 = vld [vmem:[#allocation5 + $0x558] sm:$0xff]
    %v351 = vld [vmem:[#allocation5 + $0x560] sm:$0xff]
    %v352 = vld [vmem:[#allocation5 + $0x568] sm:$0xff]
    %v353 = vld [vmem:[#allocation5 + $0x570] sm:$0xff]
    %v354 = vld [vmem:[#allocation5 + $0x578] sm:$0xff]
    %v355 = vld [vmem:[#allocation5 + $0x580] sm:$0xff]
    %v356 = vld [vmem:[#allocation5 + $0x588] sm:$0xff]
    %v357 = vld [vmem:[#allocation5 + $0x590] sm:$0xff]
    %v358 = vld [vmem:[#allocation5 + $0x598] sm:$0xff]
    %v359 = vld [vmem:[#allocation5 + $0x5a0] sm:$0xff]
    %v360 = vld [vmem:[#allocation5 + $0x5a8] sm:$0xff]
    %v361 = vld [vmem:[#allocation5 + $0x5b0] sm:$0xff]
    %v362 = vld [vmem:[#allocation5 + $0x5b8] sm:$0xff]
    %v363 = vld [vmem:[#allocation5 + $0x5c0] sm:$0xff]
    %v364 = vld [vmem:[#allocation5 + $0x5c8] sm:$0xff]
    %v365 = vld [vmem:[#allocation5 + $0x5d0] sm:$0xff]
    %v366 = vld [vmem:[#allocation5 + $0x5d8] sm:$0xff]
    %v367 = vld [vmem:[#allocation5 + $0x5e0] sm:$0xff]
    %v368 = vld [vmem:[#allocation5 + $0x5e8] sm:$0xff]
    %v369 = vld [vmem:[#allocation5 + $0x5f0] sm:$0xff]
    %v370 = vld [vmem:[#allocation5 + $0x5f8] sm:$0xff]
    %v371 = vld [vmem:[#allocation5 + $0x600] sm:$0xff]
    %v372 = vld [vmem:[#allocation5 + $0x608] sm:$0xff]
    %v373 = vld [vmem:[#allocation5 + $0x610] sm:$0xff]
    %v374 = vld [vmem:[#allocation5 + $0x618] sm:$0xff]
    %v375 = vld [vmem:[#allocation5 + $0x620] sm:$0xff]
    %v376 = vld [vmem:[#allocation5 + $0x628] sm:$0xff]
    %v377 = vld [vmem:[#allocation5 + $0x630] sm:$0xff]
    %v378 = vld [vmem:[#allocation5 + $0x638] sm:$0xff]
    %v379 = vld [vmem:[#allocation5 + $0x640] sm:$0xff]
    %v380 = vld [vmem:[#allocation5 + $0x648] sm:$0xff]
    %v381 = vld [vmem:[#allocation5 + $0x650] sm:$0xff]
    %v382 = vld [vmem:[#allocation5 + $0x658] sm:$0xff]
    %v383 = vld [vmem:[#allocation5 + $0x660] sm:$0xff]
    %v384 = vld [vmem:[#allocation5 + $0x668] sm:$0xff]
    %v385 = vld [vmem:[#allocation5 + $0x670] sm:$0xff]
    %v386 = vld [vmem:[#allocation5 + $0x678] sm:$0xff]
    %v387 = vld [vmem:[#allocation5 + $0x680] sm:$0xff]
    %v388 = vld [vmem:[#allocation5 + $0x688] sm:$0xff]
    %v389 = vld [vmem:[#allocation5 + $0x690] sm:$0xff]
    %v390 = vld [vmem:[#allocation5 + $0x698] sm:$0xff]
    %v391 = vld [vmem:[#allocation5 + $0x6a0] sm:$0xff]
    %v392 = vld [vmem:[#allocation5 + $0x6a8] sm:$0xff]
    %v393 = vld [vmem:[#allocation5 + $0x6b0] sm:$0xff]
    %v394 = vld [vmem:[#allocation5 + $0x6b8] sm:$0xff]
    %v395 = vld [vmem:[#allocation5 + $0x6c0] sm:$0xff]
    %v396 = vld [vmem:[#allocation5 + $0x6c8] sm:$0xff]
    %v397 = vld [vmem:[#allocation5 + $0x6d0] sm:$0xff]
    %v398 = vld [vmem:[#allocation5 + $0x6d8] sm:$0xff]
    %v399 = vld [vmem:[#allocation5 + $0x6e0] sm:$0xff]
    %v400 = vld [vmem:[#allocation5 + $0x6e8] sm:$0xff]
    %v401 = vld [vmem:[#allocation5 + $0x6f0] sm:$0xff]
    %v402 = vld [vmem:[#allocation5 + $0x6f8] sm:$0xff]
    %v403 = vld [vmem:[#allocation5 + $0x700] sm:$0xff]
    %v404 = vld [vmem:[#allocation5 + $0x708] sm:$0xff]
    %v405 = vld [vmem:[#allocation5 + $0x710] sm:$0xff]
    %v406 = vld [vmem:[#allocation5 + $0x718] sm:$0xff]
    %v407 = vld [vmem:[#allocation5 + $0x720] sm:$0xff]
    %v408 = vld [vmem:[#allocation5 + $0x728] sm:$0xff]
    %v409 = vld [vmem:[#allocation5 + $0x730] sm:$0xff]
    %v410 = vld [vmem:[#allocation5 + $0x738] sm:$0xff]
    %v411 = vld [vmem:[#allocation5 + $0x740] sm:$0xff]
    %v412 = vld [vmem:[#allocation5 + $0x748] sm:$0xff]
    %v413 = vld [vmem:[#allocation5 + $0x750] sm:$0xff]
    %v414 = vld [vmem:[#allocation5 + $0x758] sm:$0xff]
    %v415 = vld [vmem:[#allocation5 + $0x760] sm:$0xff]
    %v416 = vld [vmem:[#allocation5 + $0x768] sm:$0xff]
    %v417 = vld [vmem:[#allocation5 + $0x770] sm:$0xff]
    %v418 = vld [vmem:[#allocation5 + $0x778] sm:$0xff]
    %v419 = vld [vmem:[#allocation5 + $0x780] sm:$0xff]
    %v420 = vld [vmem:[#allocation5 + $0x788] sm:$0xff]
    %v421 = vld [vmem:[#allocation5 + $0x790] sm:$0xff]
    %v422 = vld [vmem:[#allocation5 + $0x798] sm:$0xff]
    %v423 = vld [vmem:[#allocation5 + $0x7a0] sm:$0xff]
    %v424 = vld [vmem:[#allocation5 + $0x7a8] sm:$0xff]
    %v425 = vld [vmem:[#allocation5 + $0x7b0] sm:$0xff]
    %v426 = vld [vmem:[#allocation5 + $0x7b8] sm:$0xff]
    %v427 = vld [vmem:[#allocation5 + $0x7c0] sm:$0xff]
    %v428 = vld [vmem:[#allocation5 + $0x7c8] sm:$0xff]
    %v429 = vld [vmem:[#allocation5 + $0x7d0] sm:$0xff]
    %v430 = vld [vmem:[#allocation5 + $0x7d8] sm:$0xff]
    %v431 = vld [vmem:[#allocation5 + $0x7e0] sm:$0xff]
    %v432 = vld [vmem:[#allocation5 + $0x7e8] sm:$0xff]
    %v433 = vld [vmem:[#allocation5 + $0x7f0] sm:$0xff]
    %v434 = vld [vmem:[#allocation5 + $0x7f8] sm:$0xff]
    %v435 = vld [vmem:[#allocation5 + $0x800] sm:$0xff]
    %v436 = vld [vmem:[#allocation5 + $0x808] sm:$0xff]
    %v437 = vld [vmem:[#allocation5 + $0x810] sm:$0xff]
    %v438 = vld [vmem:[#allocation5 + $0x818] sm:$0xff]
    %v439 = vld [vmem:[#allocation5 + $0x820] sm:$0xff]
    %v440 = vld [vmem:[#allocation5 + $0x828] sm:$0xff]
    %v441 = vld [vmem:[#allocation5 + $0x830] sm:$0xff]
    %v442 = vld [vmem:[#allocation5 + $0x838] sm:$0xff]
    %v443 = vld [vmem:[#allocation5 + $0x840] sm:$0xff]
    %v444 = vld [vmem:[#allocation5 + $0x848] sm:$0xff]
    %v445 = vld [vmem:[#allocation5 + $0x850] sm:$0xff]
    %v446 = vld [vmem:[#allocation5 + $0x858] sm:$0xff]
    %v447 = vld [vmem:[#allocation5 + $0x860] sm:$0xff]
    %v448 = vld [vmem:[#allocation5 + $0x868] sm:$0xff]
    %v449 = vld [vmem:[#allocation5 + $0x870] sm:$0xff]
    %v450 = vld [vmem:[#allocation5 + $0x878] sm:$0xff]
    %v451 = vld [vmem:[#allocation5 + $0x880] sm:$0xff]
    %v452 = vld [vmem:[#allocation5 + $0x888] sm:$0xff]
    %v453 = vld [vmem:[#allocation5 + $0x890] sm:$0xff]
    %v454 = vld [vmem:[#allocation5 + $0x898] sm:$0xff]
    %v455 = vld [vmem:[#allocation5 + $0x8a0] sm:$0xff]
    %v456 = vld [vmem:[#allocation5 + $0x8a8] sm:$0xff]
    %v457 = vld [vmem:[#allocation5 + $0x8b0] sm:$0xff]
    %v458 = vld [vmem:[#allocation5 + $0x8b8] sm:$0xff]
    %v459 = vld [vmem:[#allocation5 + $0x8c0] sm:$0xff]
    %v460 = vld [vmem:[#allocation5 + $0x8c8] sm:$0xff]
    %v461 = vld [vmem:[#allocation5 + $0x8d0] sm:$0xff]
    %v462 = vld [vmem:[#allocation5 + $0x8d8] sm:$0xff]
    %v463 = vld [vmem:[#allocation5 + $0x8e0] sm:$0xff]
    %v464 = vld [vmem:[#allocation5 + $0x8e8] sm:$0xff]
    %v465 = vld [vmem:[#allocation5 + $0x8f0] sm:$0xff]
    %v466 = vld [vmem:[#allocation5 + $0x8f8] sm:$0xff]
    %v467 = vld [vmem:[#allocation5 + $0x900] sm:$0xff]
    %v468 = vld [vmem:[#allocation5 + $0x908] sm:$0xff]
    %v469 = vld [vmem:[#allocation5 + $0x910] sm:$0xff]
    %v470 = vld [vmem:[#allocation5 + $0x918] sm:$0xff]
    %v471 = vld [vmem:[#allocation5 + $0x920] sm:$0xff]
    %v472 = vld [vmem:[#allocation5 + $0x928] sm:$0xff]
    %v473 = vld [vmem:[#allocation5 + $0x930] sm:$0xff]
    %v474 = vld [vmem:[#allocation5 + $0x938] sm:$0xff]
    %v475 = vld [vmem:[#allocation5 + $0x940] sm:$0xff]
    %v476 = vld [vmem:[#allocation5 + $0x948] sm:$0xff]
    %v477 = vld [vmem:[#allocation5 + $0x950] sm:$0xff]
    %v478 = vld [vmem:[#allocation5 + $0x958] sm:$0xff]
    %v479 = vld [vmem:[#allocation5 + $0x960] sm:$0xff]
    %v480 = vld [vmem:[#allocation5 + $0x968] sm:$0xff]
    %v481 = vld [vmem:[#allocation5 + $0x970] sm:$0xff]
    %v482 = vld [vmem:[#allocation5 + $0x978] sm:$0xff]
    %v483 = vld [vmem:[#allocation5 + $0x980] sm:$0xff]
    %v484 = vld [vmem:[#allocation5 + $0x988] sm:$0xff]
    %v485 = vld [vmem:[#allocation5 + $0x990] sm:$0xff]
    %v486 = vld [vmem:[#allocation5 + $0x998] sm:$0xff]
    %v487 = vld [vmem:[#allocation5 + $0x9a0] sm:$0xff]
    %v488 = vld [vmem:[#allocation5 + $0x9a8] sm:$0xff]
    %v489 = vld [vmem:[#allocation5 + $0x9b0] sm:$0xff]
    %v490 = vld [vmem:[#allocation5 + $0x9b8] sm:$0xff]
    %v491 = vld [vmem:[#allocation5 + $0x9c0] sm:$0xff]
    %v492 = vld [vmem:[#allocation5 + $0x9c8] sm:$0xff]
    %v493 = vld [vmem:[#allocation5 + $0x9d0] sm:$0xff]
    %v494 = vld [vmem:[#allocation5 + $0x9d8] sm:$0xff]
    %v495 = vld [vmem:[#allocation5 + $0x9e0] sm:$0xff]
    %v496 = vld [vmem:[#allocation5 + $0x9e8] sm:$0xff]
    %v497 = vld [vmem:[#allocation5 + $0x9f0] sm:$0xff]
    %v498 = vld [vmem:[#allocation5 + $0x9f8] sm:$0xff]
    %v499 = vld [vmem:[#allocation5 + $0xa00] sm:$0xff]
    %v500 = vld [vmem:[#allocation5 + $0xa08] sm:$0xff]
    %v501 = vld [vmem:[#allocation5 + $0xa10] sm:$0xff]
    %v502 = vld [vmem:[#allocation5 + $0xa18] sm:$0xff]
    %v503 = vld [vmem:[#allocation5 + $0xa20] sm:$0xff]
    %v504 = vld [vmem:[#allocation5 + $0xa28] sm:$0xff]
    %v505 = vld [vmem:[#allocation5 + $0xa30] sm:$0xff]
    %v506 = vld [vmem:[#allocation5 + $0xa38] sm:$0xff]
    %v507 = vld [vmem:[#allocation5 + $0xa40] sm:$0xff]
    %v508 = vld [vmem:[#allocation5 + $0xa48] sm:$0xff]
    %v509 = vld [vmem:[#allocation5 + $0xa50] sm:$0xff]
    %v510 = vld [vmem:[#allocation5 + $0xa58] sm:$0xff]
    %v511 = vld [vmem:[#allocation5 + $0xa60] sm:$0xff]
    %v512 = vld [vmem:[#allocation5 + $0xa68] sm:$0xff]
    %v513 = vld [vmem:[#allocation5 + $0xa70] sm:$0xff]
    %v514 = vld [vmem:[#allocation5 + $0xa78] sm:$0xff]
    %v515 = vld [vmem:[#allocation5 + $0xa80] sm:$0xff]
    %v516 = vld [vmem:[#allocation5 + $0xa88] sm:$0xff]
    %v517 = vld [vmem:[#allocation5 + $0xa90] sm:$0xff]
    %v518 = vld [vmem:[#allocation5 + $0xa98] sm:$0xff]
    %v519 = vld [vmem:[#allocation5 + $0xaa0] sm:$0xff]
    %v520 = vld [vmem:[#allocation5 + $0xaa8] sm:$0xff]
    %v521 = vld [vmem:[#allocation5 + $0xab0] sm:$0xff]
    %v522 = vld [vmem:[#allocation5 + $0xab8] sm:$0xff]
    %v523 = vld [vmem:[#allocation5 + $0xac0] sm:$0xff]
    %v524 = vld [vmem:[#allocation5 + $0xac8] sm:$0xff]
    %v525 = vld [vmem:[#allocation5 + $0xad0] sm:$0xff]
    %v526 = vld [vmem:[#allocation5 + $0xad8] sm:$0xff]
    %v527 = vld [vmem:[#allocation5 + $0xae0] sm:$0xff]
    %v528 = vld [vmem:[#allocation5 + $0xae8] sm:$0xff]
    %v529 = vld [vmem:[#allocation5 + $0xaf0] sm:$0xff]
    %v530 = vld [vmem:[#allocation5 + $0xaf8] sm:$0xff]
    %v531 = vld [vmem:[#allocation5 + $0xb00] sm:$0xff]
    %v532 = vld [vmem:[#allocation5 + $0xb08] sm:$0xff]
    %v533 = vld [vmem:[#allocation5 + $0xb10] sm:$0xff]
    %v534 = vld [vmem:[#allocation5 + $0xb18] sm:$0xff]
    %v535 = vld [vmem:[#allocation5 + $0xb20] sm:$0xff]
    %v536 = vld [vmem:[#allocation5 + $0xb28] sm:$0xff]
    %v537 = vld [vmem:[#allocation5 + $0xb30] sm:$0xff]
    %v538 = vld [vmem:[#allocation5 + $0xb38] sm:$0xff]
    %v539 = vld [vmem:[#allocation5 + $0xb40] sm:$0xff]
    %v540 = vld [vmem:[#allocation5 + $0xb48] sm:$0xff]
    %v541 = vld [vmem:[#allocation5 + $0xb50] sm:$0xff]
    %v542 = vld [vmem:[#allocation5 + $0xb58] sm:$0xff]
    %v543 = vld [vmem:[#allocation5 + $0xb60] sm:$0xff]
    %v544 = vld [vmem:[#allocation5 + $0xb68] sm:$0xff]
    %v545 = vld [vmem:[#allocation5 + $0xb70] sm:$0xff]
    %v546 = vld [vmem:[#allocation5 + $0xb78] sm:$0xff]
    %v547 = vld [vmem:[#allocation5 + $0xb80] sm:$0xff]
    %v548 = vld [vmem:[#allocation5 + $0xb88] sm:$0xff]
    %v549 = vld [vmem:[#allocation5 + $0xb90] sm:$0xff]
    %v550 = vld [vmem:[#allocation5 + $0xb98] sm:$0xff]
    %v551 = vld [vmem:[#allocation5 + $0xba0] sm:$0xff]
    %v552 = vld [vmem:[#allocation5 + $0xba8] sm:$0xff]
    %v553 = vld [vmem:[#allocation5 + $0xbb0] sm:$0xff]
    %v554 = vld [vmem:[#allocation5 + $0xbb8] sm:$0xff]
    %v555 = vld [vmem:[#allocation5 + $0xbc0] sm:$0xff]
    %v556 = vld [vmem:[#allocation5 + $0xbc8] sm:$0xff]
    %v557 = vld [vmem:[#allocation5 + $0xbd0] sm:$0xff]
    %v558 = vld [vmem:[#allocation5 + $0xbd8] sm:$0xff]
    %v559 = vld [vmem:[#allocation5 + $0xbe0] sm:$0xff]
    %v560 = vld [vmem:[#allocation5 + $0xbe8] sm:$0xff]
    %v561 = vld [vmem:[#allocation5 + $0xbf0] sm:$0xff]
    %v562 = vld [vmem:[#allocation5 + $0xbf8] sm:$0xff]
    %v563 = vld [vmem:[#allocation5 + $0xc00] sm:$0xff]
    %v564 = vld [vmem:[#allocation5 + $0xc08] sm:$0xff]
    %v565 = vld [vmem:[#allocation5 + $0xc10] sm:$0xff]
    %v566 = vld [vmem:[#allocation5 + $0xc18] sm:$0xff]
    %v567 = vld [vmem:[#allocation5 + $0xc20] sm:$0xff]
    %v568 = vld [vmem:[#allocation5 + $0xc28] sm:$0xff]
    %v569 = vld [vmem:[#allocation5 + $0xc30] sm:$0xff]
    %v570 = vld [vmem:[#allocation5 + $0xc38] sm:$0xff]
    %v571 = vld [vmem:[#allocation5 + $0xc40] sm:$0xff]
    %v572 = vld [vmem:[#allocation5 + $0xc48] sm:$0xff]
    %v573 = vld [vmem:[#allocation5 + $0xc50] sm:$0xff]
    %v574 = vld [vmem:[#allocation5 + $0xc58] sm:$0xff]
    %v575 = vld [vmem:[#allocation5 + $0xc60] sm:$0xff]
    %v576 = vld [vmem:[#allocation5 + $0xc68] sm:$0xff]
    %v577 = vld [vmem:[#allocation5 + $0xc70] sm:$0xff]
    %v578 = vld [vmem:[#allocation5 + $0xc78] sm:$0xff]
    %v579 = vld [vmem:[#allocation5 + $0xc80] sm:$0xff]
    %v580 = vld [vmem:[#allocation5 + $0xc88] sm:$0xff]
    %v581 = vld [vmem:[#allocation5 + $0xc90] sm:$0xff]
    %v582 = vld [vmem:[#allocation5 + $0xc98] sm:$0xff]
    %v583 = vld [vmem:[#allocation5 + $0xca0] sm:$0xff]
    %v584 = vld [vmem:[#allocation5 + $0xca8] sm:$0xff]
    %v585 = vld [vmem:[#allocation5 + $0xcb0] sm:$0xff]
    %v586 = vld [vmem:[#allocation5 + $0xcb8] sm:$0xff]
    %v587 = vld [vmem:[#allocation5 + $0xcc0] sm:$0xff]
    %v588 = vld [vmem:[#allocation5 + $0xcc8] sm:$0xff]
    %v589 = vld [vmem:[#allocation5 + $0xcd0] sm:$0xff]
    %v590 = vld [vmem:[#allocation5 + $0xcd8] sm:$0xff]
    %v591 = vld [vmem:[#allocation5 + $0xce0] sm:$0xff]
    %v592 = vld [vmem:[#allocation5 + $0xce8] sm:$0xff]
    %v593 = vld [vmem:[#allocation5 + $0xcf0] sm:$0xff]
    %v594 = vld [vmem:[#allocation5 + $0xcf8] sm:$0xff]
    %v595 = vld [vmem:[#allocation5 + $0xd00] sm:$0xff]
    %v596 = vld [vmem:[#allocation5 + $0xd08] sm:$0xff]
    %v597 = vld [vmem:[#allocation5 + $0xd10] sm:$0xff]
    %v598 = vld [vmem:[#allocation5 + $0xd18] sm:$0xff]
    %v599 = vld [vmem:[#allocation5 + $0xd20] sm:$0xff]
    %v600 = vld [vmem:[#allocation5 + $0xd28] sm:$0xff]
    %v601 = vld [vmem:[#allocation5 + $0xd30] sm:$0xff]
    %v602 = vld [vmem:[#allocation5 + $0xd38] sm:$0xff]
    %v603 = vld [vmem:[#allocation5 + $0xd40] sm:$0xff]
    %v604 = vld [vmem:[#allocation5 + $0xd48] sm:$0xff]
    %v605 = vld [vmem:[#allocation5 + $0xd50] sm:$0xff]
    %v606 = vld [vmem:[#allocation5 + $0xd58] sm:$0xff]
    %v607 = vld [vmem:[#allocation5 + $0xd60] sm:$0xff]
    %v608 = vld [vmem:[#allocation5 + $0xd68] sm:$0xff]
    %v609 = vld [vmem:[#allocation5 + $0xd70] sm:$0xff]
    %v610 = vld [vmem:[#allocation5 + $0xd78] sm:$0xff]
    %v611 = vld [vmem:[#allocation5 + $0xd80] sm:$0xff]
    %v612 = vld [vmem:[#allocation5 + $0xd88] sm:$0xff]
    %v613 = vld [vmem:[#allocation5 + $0xd90] sm:$0xff]
    %v614 = vld [vmem:[#allocation5 + $0xd98] sm:$0xff]
    %v615 = vld [vmem:[#allocation5 + $0xda0] sm:$0xff]
    %v616 = vld [vmem:[#allocation5 + $0xda8] sm:$0xff]
    %v617 = vld [vmem:[#allocation5 + $0xdb0] sm:$0xff]
    %v618 = vld [vmem:[#allocation5 + $0xdb8] sm:$0xff]
    %v619 = vld [vmem:[#allocation5 + $0xdc0] sm:$0xff]
    %v620 = vld [vmem:[#allocation5 + $0xdc8] sm:$0xff]
    %v621 = vld [vmem:[#allocation5 + $0xdd0] sm:$0xff]
    %v622 = vld [vmem:[#allocation5 + $0xdd8] sm:$0xff]
    %v623 = vld [vmem:[#allocation5 + $0xde0] sm:$0xff]
    %v624 = vld [vmem:[#allocation5 + $0xde8] sm:$0xff]
    %v625 = vld [vmem:[#allocation5 + $0xdf0] sm:$0xff]
    %v626 = vld [vmem:[#allocation5 + $0xdf8] sm:$0xff]
    %v627 = vld [vmem:[#allocation5 + $0xe00] sm:$0xff]
    %v628 = vld [vmem:[#allocation5 + $0xe08] sm:$0xff]
    %v629 = vld [vmem:[#allocation5 + $0xe10] sm:$0xff]
    %v630 = vld [vmem:[#allocation5 + $0xe18] sm:$0xff]
    %v631 = vld [vmem:[#allocation5 + $0xe20] sm:$0xff]
    %v632 = vld [vmem:[#allocation5 + $0xe28] sm:$0xff]
    %v633 = vld [vmem:[#allocation5 + $0xe30] sm:$0xff]
    %v634 = vld [vmem:[#allocation5 + $0xe38] sm:$0xff]
    %v635 = vld [vmem:[#allocation5 + $0xe40] sm:$0xff]
    %v636 = vld [vmem:[#allocation5 + $0xe48] sm:$0xff]
    %v637 = vld [vmem:[#allocation5 + $0xe50] sm:$0xff]
    %v638 = vld [vmem:[#allocation5 + $0xe58] sm:$0xff]
    %v639 = vld [vmem:[#allocation5 + $0xe60] sm:$0xff]
    %v640 = vld [vmem:[#allocation5 + $0xe68] sm:$0xff]
    %v641 = vld [vmem:[#allocation5 + $0xe70] sm:$0xff]
    %v642 = vld [vmem:[#allocation5 + $0xe78] sm:$0xff]
    %v643 = vld [vmem:[#allocation5 + $0xe80] sm:$0xff]
    %v644 = vld [vmem:[#allocation5 + $0xe88] sm:$0xff]
    %v645 = vld [vmem:[#allocation5 + $0xe90] sm:$0xff]
    %v646 = vld [vmem:[#allocation5 + $0xe98] sm:$0xff]
    %v647 = vld [vmem:[#allocation5 + $0xea0] sm:$0xff]
    %v648 = vld [vmem:[#allocation5 + $0xea8] sm:$0xff]
    %v649 = vld [vmem:[#allocation5 + $0xeb0] sm:$0xff]
    %v650 = vld [vmem:[#allocation5 + $0xeb8] sm:$0xff]
    %v651 = vld [vmem:[#allocation5 + $0xec0] sm:$0xff]
    %v652 = vld [vmem:[#allocation5 + $0xec8] sm:$0xff]
    %v653 = vld [vmem:[#allocation5 + $0xed0] sm:$0xff]
    %v654 = vld [vmem:[#allocation5 + $0xed8] sm:$0xff]
    %v655 = vld [vmem:[#allocation5 + $0xee0] sm:$0xff]
    %v656 = vld [vmem:[#allocation5 + $0xee8] sm:$0xff]
    %v657 = vld [vmem:[#allocation5 + $0xef0] sm:$0xff]
    %v658 = vld [vmem:[#allocation5 + $0xef8] sm:$0xff]
    %v659 = vld [vmem:[#allocation5 + $0xf00] sm:$0xff]
    %v660 = vld [vmem:[#allocation5 + $0xf08] sm:$0xff]
    %v661 = vld [vmem:[#allocation5 + $0xf10] sm:$0xff]
    %v662 = vld [vmem:[#allocation5 + $0xf18] sm:$0xff]
    %v663 = vld [vmem:[#allocation5 + $0xf20] sm:$0xff]
    %v664 = vld [vmem:[#allocation5 + $0xf28] sm:$0xff]
    %v665 = vld [vmem:[#allocation5 + $0xf30] sm:$0xff]
    %v666 = vld [vmem:[#allocation5 + $0xf38] sm:$0xff]
    %v667 = vld [vmem:[#allocation5 + $0xf40] sm:$0xff]
    %v668 = vld [vmem:[#allocation5 + $0xf48] sm:$0xff]
    %v669 = vld [vmem:[#allocation5 + $0xf50] sm:$0xff]
    %v670 = vld [vmem:[#allocation5 + $0xf58] sm:$0xff]
    %v671 = vld [vmem:[#allocation5 + $0xf60] sm:$0xff]
    %v672 = vld [vmem:[#allocation5 + $0xf68] sm:$0xff]
    %v673 = vld [vmem:[#allocation5 + $0xf70] sm:$0xff]
    %v674 = vld [vmem:[#allocation5 + $0xf78] sm:$0xff]
    %v675 = vld [vmem:[#allocation5 + $0xf80] sm:$0xff]
    %v676 = vld [vmem:[#allocation5 + $0xf88] sm:$0xff]
    %v677 = vld [vmem:[#allocation5 + $0xf90] sm:$0xff]
    %v678 = vld [vmem:[#allocation5 + $0xf98] sm:$0xff]
    %v679 = vld [vmem:[#allocation5 + $0xfa0] sm:$0xff]
    %v680 = vld [vmem:[#allocation5 + $0xfa8] sm:$0xff]
    %v681 = vld [vmem:[#allocation5 + $0xfb0] sm:$0xff]
    %v682 = vld [vmem:[#allocation5 + $0xfb8] sm:$0xff]
    %v683 = vld [vmem:[#allocation5 + $0xfc0] sm:$0xff]
    %v684 = vld [vmem:[#allocation5 + $0xfc8] sm:$0xff]
    %v685 = vld [vmem:[#allocation5 + $0xfd0] sm:$0xff]
    %v686 = vld [vmem:[#allocation5 + $0xfd8] sm:$0xff]
    %v687 = vld [vmem:[#allocation5 + $0xfe0] sm:$0xff]
    %v688 = vld [vmem:[#allocation5 + $0xfe8] sm:$0xff]
    %v689 = vld [vmem:[#allocation5 + $0xff0] sm:$0xff]
    %v690 = vld [vmem:[#allocation5 + $0xff8] sm:$0xff]
    %v691 = vld [vmem:[#allocation5 + $0x1000] sm:$0xff]
    %v692 = vld [vmem:[#allocation5 + $0x1008] sm:$0xff]
    %v693 = vld [vmem:[#allocation5 + $0x1010] sm:$0xff]
    %v694 = vld [vmem:[#allocation5 + $0x1018] sm:$0xff]
    %v695 = vld [vmem:[#allocation5 + $0x1020] sm:$0xff]
    %v696 = vld [vmem:[#allocation5 + $0x1028] sm:$0xff]
    %v697 = vld [vmem:[#allocation5 + $0x1030] sm:$0xff]
    %v698 = vld [vmem:[#allocation5 + $0x1038] sm:$0xff]
    %v699 = vld [vmem:[#allocation5 + $0x1040] sm:$0xff]
    %v700 = vld [vmem:[#allocation5 + $0x1048] sm:$0xff]
    %v701 = vld [vmem:[#allocation5 + $0x1050] sm:$0xff]
    %v702 = vld [vmem:[#allocation5 + $0x1058] sm:$0xff]
    %v703 = vld [vmem:[#allocation5 + $0x1060] sm:$0xff]
    %v704 = vld [vmem:[#allocation5 + $0x1068] sm:$0xff]
    %v705 = vld [vmem:[#allocation5 + $0x1070] sm:$0xff]
    %v706 = vld [vmem:[#allocation5 + $0x1078] sm:$0xff]
    %v707 = vld [vmem:[#allocation5 + $0x1080] sm:$0xff]
    %v708 = vld [vmem:[#allocation5 + $0x1088] sm:$0xff]
    %v709 = vld [vmem:[#allocation5 + $0x1090] sm:$0xff]
    %v710 = vld [vmem:[#allocation5 + $0x1098] sm:$0xff]
    %v711 = vld [vmem:[#allocation5 + $0x10a0] sm:$0xff]
    %v712 = vld [vmem:[#allocation5 + $0x10a8] sm:$0xff]
    %v713 = vld [vmem:[#allocation5 + $0x10b0] sm:$0xff]
    %v714 = vld [vmem:[#allocation5 + $0x10b8] sm:$0xff]
    %v715 = vld [vmem:[#allocation5 + $0x10c0] sm:$0xff]
    %v716 = vld [vmem:[#allocation5 + $0x10c8] sm:$0xff]
    %v717 = vld [vmem:[#allocation5 + $0x10d0] sm:$0xff]
    %v718 = vld [vmem:[#allocation5 + $0x10d8] sm:$0xff]
    %v719 = vld [vmem:[#allocation5 + $0x10e0] sm:$0xff]
    %v720 = vld [vmem:[#allocation5 + $0x10e8] sm:$0xff]
    %v721 = vld [vmem:[#allocation5 + $0x10f0] sm:$0xff]
    %v722 = vld [vmem:[#allocation5 + $0x10f8] sm:$0xff]
    %v723 = vld [vmem:[#allocation5 + $0x1100] sm:$0xff]
    %v724 = vld [vmem:[#allocation5 + $0x1108] sm:$0xff]
    %v725 = vld [vmem:[#allocation5 + $0x1110] sm:$0xff]
    %v726 = vld [vmem:[#allocation5 + $0x1118] sm:$0xff]
    %v727 = vld [vmem:[#allocation5 + $0x1120] sm:$0xff]
    %v728 = vld [vmem:[#allocation5 + $0x1128] sm:$0xff]
    %v729 = vld [vmem:[#allocation5 + $0x1130] sm:$0xff]
    %v730 = vld [vmem:[#allocation5 + $0x1138] sm:$0xff]
    %v731 = vld [vmem:[#allocation5 + $0x1140] sm:$0xff]
    %v732 = vld [vmem:[#allocation5 + $0x1148] sm:$0xff]
    %v733 = vld [vmem:[#allocation5 + $0x1150] sm:$0xff]
    %v734 = vld [vmem:[#allocation5 + $0x1158] sm:$0xff]
    %v735 = vld [vmem:[#allocation5 + $0x1160] sm:$0xff]
    %v736 = vld [vmem:[#allocation5 + $0x1168] sm:$0xff]
    %v737 = vld [vmem:[#allocation5 + $0x1170] sm:$0xff]
    %v738 = vld [vmem:[#allocation5 + $0x1178] sm:$0xff]
    %v739 = vld [vmem:[#allocation5 + $0x1180] sm:$0xff]
    %v740 = vld [vmem:[#allocation5 + $0x1188] sm:$0xff]
    %v741 = vld [vmem:[#allocation5 + $0x1190] sm:$0xff]
    %v742 = vld [vmem:[#allocation5 + $0x1198] sm:$0xff]
    %v743 = vld [vmem:[#allocation5 + $0x11a0] sm:$0xff]
    %v744 = vld [vmem:[#allocation5 + $0x11a8] sm:$0xff]
    %v745 = vld [vmem:[#allocation5 + $0x11b0] sm:$0xff]
    %v746 = vld [vmem:[#allocation5 + $0x11b8] sm:$0xff]
    %v747 = vld [vmem:[#allocation5 + $0x11c0] sm:$0xff]
    %v748 = vld [vmem:[#allocation5 + $0x11c8] sm:$0xff]
    %v749 = vld [vmem:[#allocation5 + $0x11d0] sm:$0xff]
    %v750 = vld [vmem:[#allocation5 + $0x11d8] sm:$0xff]
    %v751 = vld [vmem:[#allocation5 + $0x11e0] sm:$0xff]
    %v752 = vld [vmem:[#allocation5 + $0x11e8] sm:$0xff]
    %v753 = vld [vmem:[#allocation5 + $0x11f0] sm:$0xff]
    %v754 = vld [vmem:[#allocation5 + $0x11f8] sm:$0xff]
    %v755 = vld [vmem:[#allocation5 + $0x1200] sm:$0xff]
    %v756 = vld [vmem:[#allocation5 + $0x1208] sm:$0xff]
    %v757 = vld [vmem:[#allocation5 + $0x1210] sm:$0xff]
    %v758 = vld [vmem:[#allocation5 + $0x1218] sm:$0xff]
    %v759 = vld [vmem:[#allocation5 + $0x1220] sm:$0xff]
    %v760 = vld [vmem:[#allocation5 + $0x1228] sm:$0xff]
    %v761 = vld [vmem:[#allocation5 + $0x1230] sm:$0xff]
    %v762 = vld [vmem:[#allocation5 + $0x1238] sm:$0xff]
    %v763 = vld [vmem:[#allocation5 + $0x1240] sm:$0xff]
    %v764 = vld [vmem:[#allocation5 + $0x1248] sm:$0xff]
    %v765 = vld [vmem:[#allocation5 + $0x1250] sm:$0xff]
    %v766 = vld [vmem:[#allocation5 + $0x1258] sm:$0xff]
    %v767 = vld [vmem:[#allocation5 + $0x1260] sm:$0xff]
    %v768 = vld [vmem:[#allocation5 + $0x1268] sm:$0xff]
    %v769 = vld [vmem:[#allocation5 + $0x1270] sm:$0xff]
    %v770 = vld [vmem:[#allocation5 + $0x1278] sm:$0xff]
    %v771 = vld [vmem:[#allocation5 + $0x1280] sm:$0xff]
    %v772 = vld [vmem:[#allocation5 + $0x1288] sm:$0xff]
    %v773 = vld [vmem:[#allocation5 + $0x1290] sm:$0xff]
    %v774 = vld [vmem:[#allocation5 + $0x1298] sm:$0xff]
    %v775 = vld [vmem:[#allocation5 + $0x12a0] sm:$0xff]
    %v776 = vld [vmem:[#allocation5 + $0x12a8] sm:$0xff]
    %v777 = vld [vmem:[#allocation5 + $0x12b0] sm:$0xff]
    %v778 = vld [vmem:[#allocation5 + $0x12b8] sm:$0xff]
    %v779 = vld [vmem:[#allocation5 + $0x12c0] sm:$0xff]
    %v780 = vld [vmem:[#allocation5 + $0x12c8] sm:$0xff]
    %v781 = vld [vmem:[#allocation5 + $0x12d0] sm:$0xff]
    %v782 = vld [vmem:[#allocation5 + $0x12d8] sm:$0xff]
    %v783 = vld [vmem:[#allocation5 + $0x12e0] sm:$0xff]
    %v784 = vld [vmem:[#allocation5 + $0x12e8] sm:$0xff]
    %v785 = vld [vmem:[#allocation5 + $0x12f0] sm:$0xff]
    %v786 = vld [vmem:[#allocation5 + $0x12f8] sm:$0xff]
    %v787 = vld [vmem:[#allocation5 + $0x1300] sm:$0xff]
    %v788 = vld [vmem:[#allocation5 + $0x1308] sm:$0xff]
    %v789 = vld [vmem:[#allocation5 + $0x1310] sm:$0xff]
    %v790 = vld [vmem:[#allocation5 + $0x1318] sm:$0xff]
    %v791 = vld [vmem:[#allocation5 + $0x1320] sm:$0xff]
    %v792 = vld [vmem:[#allocation5 + $0x1328] sm:$0xff]
    %v793 = vld [vmem:[#allocation5 + $0x1330] sm:$0xff]
    %v794 = vld [vmem:[#allocation5 + $0x1338] sm:$0xff]
    %v795 = vld [vmem:[#allocation5 + $0x1340] sm:$0xff]
    %v796 = vld [vmem:[#allocation5 + $0x1348] sm:$0xff]
    %v797 = vld [vmem:[#allocation5 + $0x1350] sm:$0xff]
    %v798 = vld [vmem:[#allocation5 + $0x1358] sm:$0xff]
    %v799 = vld [vmem:[#allocation5 + $0x1360] sm:$0xff]
    %v800 = vld [vmem:[#allocation5 + $0x1368] sm:$0xff]
    %v801 = vld [vmem:[#allocation5 + $0x1370] sm:$0xff]
    %v802 = vld [vmem:[#allocation5 + $0x1378] sm:$0xff]
    %v803 = vld [vmem:[#allocation5 + $0x1380] sm:$0xff]
    %v804 = vld [vmem:[#allocation5 + $0x1388] sm:$0xff]
    %v805 = vld [vmem:[#allocation5 + $0x1390] sm:$0xff]
    %v806 = vld [vmem:[#allocation5 + $0x1398] sm:$0xff]
    %v807 = vld [vmem:[#allocation5 + $0x13a0] sm:$0xff]
    %v808 = vld [vmem:[#allocation5 + $0x13a8] sm:$0xff]
    %v809 = vld [vmem:[#allocation5 + $0x13b0] sm:$0xff]
    %v810 = vld [vmem:[#allocation5 + $0x13b8] sm:$0xff]
    %v811 = vld [vmem:[#allocation5 + $0x13c0] sm:$0xff]
    %v812 = vld [vmem:[#allocation5 + $0x13c8] sm:$0xff]
    %v813 = vld [vmem:[#allocation5 + $0x13d0] sm:$0xff]
    %v814 = vld [vmem:[#allocation5 + $0x13d8] sm:$0xff]
    %v815 = vld [vmem:[#allocation5 + $0x13e0] sm:$0xff]
    %v816 = vld [vmem:[#allocation5 + $0x13e8] sm:$0xff]
    %v817 = vld [vmem:[#allocation5 + $0x13f0] sm:$0xff]
    %v818 = vld [vmem:[#allocation5 + $0x13f8] sm:$0xff]
    %v819 = vld [vmem:[#allocation5 + $0x1400] sm:$0xff]
    %v820 = vld [vmem:[#allocation5 + $0x1408] sm:$0xff]
    %v821 = vld [vmem:[#allocation5 + $0x1410] sm:$0xff]
    %v822 = vld [vmem:[#allocation5 + $0x1418] sm:$0xff]
    %v823 = vld [vmem:[#allocation5 + $0x1420] sm:$0xff]
    %v824 = vld [vmem:[#allocation5 + $0x1428] sm:$0xff]
    %v825 = vld [vmem:[#allocation5 + $0x1430] sm:$0xff]
    %v826 = vld [vmem:[#allocation5 + $0x1438] sm:$0xff]
    %v827 = vld [vmem:[#allocation5 + $0x1440] sm:$0xff]
    %v828 = vld [vmem:[#allocation5 + $0x1448] sm:$0xff]
    %v829 = vld [vmem:[#allocation5 + $0x1450] sm:$0xff]
    %v830 = vld [vmem:[#allocation5 + $0x1458] sm:$0xff]
    %v831 = vld [vmem:[#allocation5 + $0x1460] sm:$0xff]
    %v832 = vld [vmem:[#allocation5 + $0x1468] sm:$0xff]
    %v833 = vld [vmem:[#allocation5 + $0x1470] sm:$0xff]
    %v834 = vld [vmem:[#allocation5 + $0x1478] sm:$0xff]
    %v835 = vld [vmem:[#allocation5 + $0x1480] sm:$0xff]
    %v836 = vld [vmem:[#allocation5 + $0x1488] sm:$0xff]
    %v837 = vld [vmem:[#allocation5 + $0x1490] sm:$0xff]
    %v838 = vld [vmem:[#allocation5 + $0x1498] sm:$0xff]
    %v839 = vld [vmem:[#allocation5 + $0x14a0] sm:$0xff]
    %v840 = vld [vmem:[#allocation5 + $0x14a8] sm:$0xff]
    %v841 = vld [vmem:[#allocation5 + $0x14b0] sm:$0xff]
    %v842 = vld [vmem:[#allocation5 + $0x14b8] sm:$0xff]
    %v843 = vld [vmem:[#allocation5 + $0x14c0] sm:$0xff]
    %v844 = vld [vmem:[#allocation5 + $0x14c8] sm:$0xff]
    %v845 = vld [vmem:[#allocation5 + $0x14d0] sm:$0xff]
    %v846 = vld [vmem:[#allocation5 + $0x14d8] sm:$0xff]
    %v847 = vld [vmem:[#allocation5 + $0x14e0] sm:$0xff]
    %v848 = vld [vmem:[#allocation5 + $0x14e8] sm:$0xff]
    %v849 = vld [vmem:[#allocation5 + $0x14f0] sm:$0xff]
    %v850 = vld [vmem:[#allocation5 + $0x14f8] sm:$0xff]
    %v851 = vld [vmem:[#allocation5 + $0x1500] sm:$0xff]
    %v852 = vld [vmem:[#allocation5 + $0x1508] sm:$0xff]
    %v853 = vld [vmem:[#allocation5 + $0x1510] sm:$0xff]
    %v854 = vld [vmem:[#allocation5 + $0x1518] sm:$0xff]
    %v855 = vld [vmem:[#allocation5 + $0x1520] sm:$0xff]
    %v856 = vld [vmem:[#allocation5 + $0x1528] sm:$0xff]
    %v857 = vld [vmem:[#allocation5 + $0x1530] sm:$0xff]
    %v858 = vld [vmem:[#allocation5 + $0x1538] sm:$0xff]
    %v859 = vld [vmem:[#allocation5 + $0x1540] sm:$0xff]
    %v860 = vld [vmem:[#allocation5 + $0x1548] sm:$0xff]
    %v861 = vld [vmem:[#allocation5 + $0x1550] sm:$0xff]
    %v862 = vld [vmem:[#allocation5 + $0x1558] sm:$0xff]
    %v863 = vld [vmem:[#allocation5 + $0x1560] sm:$0xff]
    %v864 = vld [vmem:[#allocation5 + $0x1568] sm:$0xff]
    %v865 = vld [vmem:[#allocation5 + $0x1570] sm:$0xff]
    %v866 = vld [vmem:[#allocation5 + $0x1578] sm:$0xff]
    %v867 = vld [vmem:[#allocation5 + $0x1580] sm:$0xff]
    %v868 = vld [vmem:[#allocation5 + $0x1588] sm:$0xff]
    %v869 = vld [vmem:[#allocation5 + $0x1590] sm:$0xff]
    %v870 = vld [vmem:[#allocation5 + $0x1598] sm:$0xff]
    %v871 = vld [vmem:[#allocation5 + $0x15a0] sm:$0xff]
    %v872 = vld [vmem:[#allocation5 + $0x15a8] sm:$0xff]
    %v873 = vld [vmem:[#allocation5 + $0x15b0] sm:$0xff]
    %v874 = vld [vmem:[#allocation5 + $0x15b8] sm:$0xff]
    %v875 = vld [vmem:[#allocation5 + $0x15c0] sm:$0xff]
    %v876 = vld [vmem:[#allocation5 + $0x15c8] sm:$0xff]
    %v877 = vld [vmem:[#allocation5 + $0x15d0] sm:$0xff]
    %v878 = vld [vmem:[#allocation5 + $0x15d8] sm:$0xff]
    %v879 = vld [vmem:[#allocation5 + $0x15e0] sm:$0xff]
    %v880 = vld [vmem:[#allocation5 + $0x15e8] sm:$0xff]
    %v881 = vld [vmem:[#allocation5 + $0x15f0] sm:$0xff]
    %v882 = vld [vmem:[#allocation5 + $0x15f8] sm:$0xff]
    %v883 = vld [vmem:[#allocation5 + $0x1600] sm:$0xff]
    %v884 = vld [vmem:[#allocation5 + $0x1608] sm:$0xff]
    %v885 = vld [vmem:[#allocation5 + $0x1610] sm:$0xff]
    %v886 = vld [vmem:[#allocation5 + $0x1618] sm:$0xff]
    %v887 = vld [vmem:[#allocation5 + $0x1620] sm:$0xff]
    %v888 = vld [vmem:[#allocation5 + $0x1628] sm:$0xff]
    %v889 = vld [vmem:[#allocation5 + $0x1630] sm:$0xff]
    %v890 = vld [vmem:[#allocation5 + $0x1638] sm:$0xff]
    %v891 = vld [vmem:[#allocation5 + $0x1640] sm:$0xff]
    %v892 = vld [vmem:[#allocation5 + $0x1648] sm:$0xff]
    %v893 = vld [vmem:[#allocation5 + $0x1650] sm:$0xff]
    %v894 = vld [vmem:[#allocation5 + $0x1658] sm:$0xff]
    %v895 = vld [vmem:[#allocation5 + $0x1660] sm:$0xff]
    %v896 = vld [vmem:[#allocation5 + $0x1668] sm:$0xff]
    %v897 = vld [vmem:[#allocation5 + $0x1670] sm:$0xff]
    %v898 = vld [vmem:[#allocation5 + $0x1678] sm:$0xff]
    %v899 = vld [vmem:[#allocation5 + $0x1680] sm:$0xff]
    %v900 = vld [vmem:[#allocation5 + $0x1688] sm:$0xff]
    %v901 = vld [vmem:[#allocation5 + $0x1690] sm:$0xff]
    %v902 = vld [vmem:[#allocation5 + $0x1698] sm:$0xff]
    %v903 = vld [vmem:[#allocation5 + $0x16a0] sm:$0xff]
    %v904 = vld [vmem:[#allocation5 + $0x16a8] sm:$0xff]
    %v905 = vld [vmem:[#allocation5 + $0x16b0] sm:$0xff]
    %v906 = vld [vmem:[#allocation5 + $0x16b8] sm:$0xff]
    %v907 = vld [vmem:[#allocation5 + $0x16c0] sm:$0xff]
    %v908 = vld [vmem:[#allocation5 + $0x16c8] sm:$0xff]
    %v909 = vld [vmem:[#allocation5 + $0x16d0] sm:$0xff]
    %v910 = vld [vmem:[#allocation5 + $0x16d8] sm:$0xff]
    %v911 = vld [vmem:[#allocation5 + $0x16e0] sm:$0xff]
    %v912 = vld [vmem:[#allocation5 + $0x16e8] sm:$0xff]
    %v913 = vld [vmem:[#allocation5 + $0x16f0] sm:$0xff]
    %v914 = vld [vmem:[#allocation5 + $0x16f8] sm:$0xff]
    %v915 = vld [vmem:[#allocation5 + $0x1700] sm:$0xff]
    %v916 = vld [vmem:[#allocation5 + $0x1708] sm:$0xff]
    %v917 = vld [vmem:[#allocation5 + $0x1710] sm:$0xff]
    %v918 = vld [vmem:[#allocation5 + $0x1718] sm:$0xff]
    %v919 = vld [vmem:[#allocation5 + $0x1720] sm:$0xff]
    %v920 = vld [vmem:[#allocation5 + $0x1728] sm:$0xff]
    %v921 = vld [vmem:[#allocation5 + $0x1730] sm:$0xff]
    %v922 = vld [vmem:[#allocation5 + $0x1738] sm:$0xff]
    %v923 = vld [vmem:[#allocation5 + $0x1740] sm:$0xff]
    %v924 = vld [vmem:[#allocation5 + $0x1748] sm:$0xff]
    %v925 = vld [vmem:[#allocation5 + $0x1750] sm:$0xff]
    %v926 = vld [vmem:[#allocation5 + $0x1758] sm:$0xff]
    %v927 = vld [vmem:[#allocation5 + $0x1760] sm:$0xff]
    %v928 = vld [vmem:[#allocation5 + $0x1768] sm:$0xff]
    %v929 = vld [vmem:[#allocation5 + $0x1770] sm:$0xff]
    %v930 = vld [vmem:[#allocation5 + $0x1778] sm:$0xff]
    %v931 = vld [vmem:[#allocation5 + $0x1780] sm:$0xff]
    %v932 = vld [vmem:[#allocation5 + $0x1788] sm:$0xff]
    %v933 = vld [vmem:[#allocation5 + $0x1790] sm:$0xff]
    %v934 = vld [vmem:[#allocation5 + $0x1798] sm:$0xff]
    %v935 = vld [vmem:[#allocation5 + $0x17a0] sm:$0xff]
    %v936 = vld [vmem:[#allocation5 + $0x17a8] sm:$0xff]
    %v937 = vld [vmem:[#allocation5 + $0x17b0] sm:$0xff]
    %v938 = vld [vmem:[#allocation5 + $0x17b8] sm:$0xff]
    %v939 = vld [vmem:[#allocation5 + $0x17c0] sm:$0xff]
    %v940 = vld [vmem:[#allocation5 + $0x17c8] sm:$0xff]
    %v941 = vld [vmem:[#allocation5 + $0x17d0] sm:$0xff]
    %v942 = vld [vmem:[#allocation5 + $0x17d8] sm:$0xff]
    %v943 = vld [vmem:[#allocation5 + $0x17e0] sm:$0xff]
    %v944 = vld [vmem:[#allocation5 + $0x17e8] sm:$0xff]
    %v945 = vld [vmem:[#allocation5 + $0x17f0] sm:$0xff]
    %v946 = vld [vmem:[#allocation5 + $0x17f8] sm:$0xff]
    %v947 = vld [vmem:[#allocation5 + $0x1800] sm:$0xff]
    %v948 = vld [vmem:[#allocation5 + $0x1808] sm:$0xff]
    %v949 = vld [vmem:[#allocation5 + $0x1810] sm:$0xff]
    %v950 = vld [vmem:[#allocation5 + $0x1818] sm:$0xff]
    %v951 = vld [vmem:[#allocation5 + $0x1820] sm:$0xff]
    %v952 = vld [vmem:[#allocation5 + $0x1828] sm:$0xff]
    %v953 = vld [vmem:[#allocation5 + $0x1830] sm:$0xff]
    %v954 = vld [vmem:[#allocation5 + $0x1838] sm:$0xff]
    %v955 = vld [vmem:[#allocation5 + $0x1840] sm:$0xff]
    %v956 = vld [vmem:[#allocation5 + $0x1848] sm:$0xff]
    %v957 = vld [vmem:[#allocation5 + $0x1850] sm:$0xff]
    %v958 = vld [vmem:[#allocation5 + $0x1858] sm:$0xff]
    %v959 = vld [vmem:[#allocation5 + $0x1860] sm:$0xff]
    %v960 = vld [vmem:[#allocation5 + $0x1868] sm:$0xff]
    %v961 = vld [vmem:[#allocation5 + $0x1870] sm:$0xff]
    %v962 = vld [vmem:[#allocation5 + $0x1878] sm:$0xff]
    %v963 = vld [vmem:[#allocation5 + $0x1880] sm:$0xff]
    %v964 = vld [vmem:[#allocation5 + $0x1888] sm:$0xff]
    %v965 = vld [vmem:[#allocation5 + $0x1890] sm:$0xff]
    %v966 = vld [vmem:[#allocation5 + $0x1898] sm:$0xff]
    %v967 = vld [vmem:[#allocation5 + $0x18a0] sm:$0xff]
    %v968 = vld [vmem:[#allocation5 + $0x18a8] sm:$0xff]
    %v969 = vld [vmem:[#allocation5 + $0x18b0] sm:$0xff]
    %v970 = vld [vmem:[#allocation5 + $0x18b8] sm:$0xff]
    %v971 = vld [vmem:[#allocation5 + $0x18c0] sm:$0xff]
    %v972 = vld [vmem:[#allocation5 + $0x18c8] sm:$0xff]
    %v973 = vld [vmem:[#allocation5 + $0x18d0] sm:$0xff]
    %v974 = vld [vmem:[#allocation5 + $0x18d8] sm:$0xff]
    %v975 = vld [vmem:[#allocation5 + $0x18e0] sm:$0xff]
    %v976 = vld [vmem:[#allocation5 + $0x18e8] sm:$0xff]
    %v977 = vld [vmem:[#allocation5 + $0x18f0] sm:$0xff]
    %v978 = vld [vmem:[#allocation5 + $0x18f8] sm:$0xff]
    %v979 = vld [vmem:[#allocation5 + $0x1900] sm:$0xff]
    %v980 = vld [vmem:[#allocation5 + $0x1908] sm:$0xff]
    %v981 = vld [vmem:[#allocation5 + $0x1910] sm:$0xff]
    %v982 = vld [vmem:[#allocation5 + $0x1918] sm:$0xff]
    %v983 = vld [vmem:[#allocation5 + $0x1920] sm:$0xff]
    %v984 = vld [vmem:[#allocation5 + $0x1928] sm:$0xff]
    %v985 = vld [vmem:[#allocation5 + $0x1930] sm:$0xff]
    %v986 = vld [vmem:[#allocation5 + $0x1938] sm:$0xff]
    %v987 = vld [vmem:[#allocation5 + $0x1940] sm:$0xff]
    %v988 = vld [vmem:[#allocation5 + $0x1948] sm:$0xff]
    %v989 = vld [vmem:[#allocation5 + $0x1950] sm:$0xff]
    %v990 = vld [vmem:[#allocation5 + $0x1958] sm:$0xff]
    %v991 = vld [vmem:[#allocation5 + $0x1960] sm:$0xff]
    %v992 = vld [vmem:[#allocation5 + $0x1968] sm:$0xff]
    %v993 = vld [vmem:[#allocation5 + $0x1970] sm:$0xff]
    %v994 = vld [vmem:[#allocation5 + $0x1978] sm:$0xff]
    %v995 = vld [vmem:[#allocation5 + $0x1980] sm:$0xff]
    %v996 = vld [vmem:[#allocation5 + $0x1988] sm:$0xff]
    %v997 = vld [vmem:[#allocation5 + $0x1990] sm:$0xff]
    %v998 = vld [vmem:[#allocation5 + $0x1998] sm:$0xff]
    %v999 = vld [vmem:[#allocation5 + $0x19a0] sm:$0xff]
    %v1000 = vld [vmem:[#allocation5 + $0x19a8] sm:$0xff]
    %v1001 = vld [vmem:[#allocation5 + $0x19b0] sm:$0xff]
    %v1002 = vld [vmem:[#allocation5 + $0x19b8] sm:$0xff]
    %v1003 = vld [vmem:[#allocation5 + $0x19c0] sm:$0xff]
    %v1004 = vld [vmem:[#allocation5 + $0x19c8] sm:$0xff]
    %v1005 = vld [vmem:[#allocation5 + $0x19d0] sm:$0xff]
    %v1006 = vld [vmem:[#allocation5 + $0x19d8] sm:$0xff]
    %v1007 = vld [vmem:[#allocation5 + $0x19e0] sm:$0xff]
    %v1008 = vld [vmem:[#allocation5 + $0x19e8] sm:$0xff]
    %v1009 = vld [vmem:[#allocation5 + $0x19f0] sm:$0xff]
    %v1010 = vld [vmem:[#allocation5 + $0x19f8] sm:$0xff]
    %v1011 = vld [vmem:[#allocation5 + $0x1a00] sm:$0xff]
    %v1012 = vld [vmem:[#allocation5 + $0x1a08] sm:$0xff]
    %v1013 = vld [vmem:[#allocation5 + $0x1a10] sm:$0xff]
    %v1014 = vld [vmem:[#allocation5 + $0x1a18] sm:$0xff]
    %v1015 = vld [vmem:[#allocation5 + $0x1a20] sm:$0xff]
    %v1016 = vld [vmem:[#allocation5 + $0x1a28] sm:$0xff]
    %v1017 = vld [vmem:[#allocation5 + $0x1a30] sm:$0xff]
    %v1018 = vld [vmem:[#allocation5 + $0x1a38] sm:$0xff]
    %v1019 = vld [vmem:[#allocation5 + $0x1a40] sm:$0xff]
    %v1020 = vld [vmem:[#allocation5 + $0x1a48] sm:$0xff]
    %v1021 = vld [vmem:[#allocation5 + $0x1a50] sm:$0xff]
    %v1022 = vld [vmem:[#allocation5 + $0x1a58] sm:$0xff]
    %v1023 = vld [vmem:[#allocation5 + $0x1a60] sm:$0xff]
    %v1024 = vld [vmem:[#allocation5 + $0x1a68] sm:$0xff]
    %v1025 = vld [vmem:[#allocation5 + $0x1a70] sm:$0xff]
    %v1026 = vld [vmem:[#allocation5 + $0x1a78] sm:$0xff]
    %v1027 = vld [vmem:[#allocation5 + $0x1a80] sm:$0xff]
    %v1028 = vld [vmem:[#allocation5 + $0x1a88] sm:$0xff]
    %v1029 = vld [vmem:[#allocation5 + $0x1a90] sm:$0xff]
    %v1030 = vld [vmem:[#allocation5 + $0x1a98] sm:$0xff]
    %v1031 = vld [vmem:[#allocation5 + $0x1aa0] sm:$0xff]
    %v1032 = vld [vmem:[#allocation5 + $0x1aa8] sm:$0xff]
    %v1033 = vld [vmem:[#allocation5 + $0x1ab0] sm:$0xff]
    %v1034 = vld [vmem:[#allocation5 + $0x1ab8] sm:$0xff]
    %v1035 = vld [vmem:[#allocation5 + $0x1ac0] sm:$0xff]
    %v1036 = vld [vmem:[#allocation5 + $0x1ac8] sm:$0xff]
    %v1037 = vld [vmem:[#allocation5 + $0x1ad0] sm:$0xff]
    %v1038 = vld [vmem:[#allocation5 + $0x1ad8] sm:$0xff]
    %v1039 = vld [vmem:[#allocation5 + $0x1ae0] sm:$0xff]
    %v1040 = vld [vmem:[#allocation5 + $0x1ae8] sm:$0xff]
    %v1041 = vld [vmem:[#allocation5 + $0x1af0] sm:$0xff]
    %v1042 = vld [vmem:[#allocation5 + $0x1af8] sm:$0xff]
    %v1043 = vld [vmem:[#allocation5 + $0x1b00] sm:$0xff]
    %v1044 = vld [vmem:[#allocation5 + $0x1b08] sm:$0xff]
    %v1045 = vld [vmem:[#allocation5 + $0x1b10] sm:$0xff]
    %v1046 = vld [vmem:[#allocation5 + $0x1b18] sm:$0xff]
    %v1047 = vld [vmem:[#allocation5 + $0x1b20] sm:$0xff]
    %v1048 = vld [vmem:[#allocation5 + $0x1b28] sm:$0xff]
    %v1049 = vld [vmem:[#allocation5 + $0x1b30] sm:$0xff]
    %v1050 = vld [vmem:[#allocation5 + $0x1b38] sm:$0xff]
    %v1051 = vld [vmem:[#allocation5 + $0x1b40] sm:$0xff]
    %v1052 = vld [vmem:[#allocation5 + $0x1b48] sm:$0xff]
    %v1053 = vld [vmem:[#allocation5 + $0x1b50] sm:$0xff]
    %v1054 = vld [vmem:[#allocation5 + $0x1b58] sm:$0xff]
    %v1055 = vld [vmem:[#allocation5 + $0x1b60] sm:$0xff]
    %v1056 = vld [vmem:[#allocation5 + $0x1b68] sm:$0xff]
    %v1057 = vld [vmem:[#allocation5 + $0x1b70] sm:$0xff]
    %v1058 = vld [vmem:[#allocation5 + $0x1b78] sm:$0xff]
    %v1059 = vld [vmem:[#allocation5 + $0x1b80] sm:$0xff]
    %v1060 = vld [vmem:[#allocation5 + $0x1b88] sm:$0xff]
    %v1061 = vld [vmem:[#allocation5 + $0x1b90] sm:$0xff]
    %v1062 = vld [vmem:[#allocation5 + $0x1b98] sm:$0xff]
    %v1063 = vld [vmem:[#allocation5 + $0x1ba0] sm:$0xff]
    %v1064 = vld [vmem:[#allocation5 + $0x1ba8] sm:$0xff]
    %v1065 = vld [vmem:[#allocation5 + $0x1bb0] sm:$0xff]
    %v1066 = vld [vmem:[#allocation5 + $0x1bb8] sm:$0xff]
    %v1067 = vld [vmem:[#allocation5 + $0x1bc0] sm:$0xff]
    %v1068 = vld [vmem:[#allocation5 + $0x1bc8] sm:$0xff]
    %v1069 = vld [vmem:[#allocation5 + $0x1bd0] sm:$0xff]
    %v1070 = vld [vmem:[#allocation5 + $0x1bd8] sm:$0xff]
    %v1071 = vld [vmem:[#allocation5 + $0x1be0] sm:$0xff]
    %v1072 = vld [vmem:[#allocation5 + $0x1be8] sm:$0xff]
    %v1073 = vld [vmem:[#allocation5 + $0x1bf0] sm:$0xff]
    %v1074 = vld [vmem:[#allocation5 + $0x1bf8] sm:$0xff]
    %v1075 = vld [vmem:[#allocation5 + $0x1c00] sm:$0xff]
    %v1076 = vld [vmem:[#allocation5 + $0x1c08] sm:$0xff]
    %v1077 = vld [vmem:[#allocation5 + $0x1c10] sm:$0xff]
    %v1078 = vld [vmem:[#allocation5 + $0x1c18] sm:$0xff]
    %v1079 = vld [vmem:[#allocation5 + $0x1c20] sm:$0xff]
    %v1080 = vld [vmem:[#allocation5 + $0x1c28] sm:$0xff]
    %v1081 = vld [vmem:[#allocation5 + $0x1c30] sm:$0xff]
    %v1082 = vld [vmem:[#allocation5 + $0x1c38] sm:$0xff]
    %v1083 = vld [vmem:[#allocation5 + $0x1c40] sm:$0xff]
    %v1084 = vld [vmem:[#allocation5 + $0x1c48] sm:$0xff]
    %v1085 = vld [vmem:[#allocation5 + $0x1c50] sm:$0xff]
    %v1086 = vld [vmem:[#allocation5 + $0x1c58] sm:$0xff]
    %v1087 = vld [vmem:[#allocation5 + $0x1c60] sm:$0xff]
    %v1088 = vld [vmem:[#allocation5 + $0x1c68] sm:$0xff]
    %v1089 = vld [vmem:[#allocation5 + $0x1c70] sm:$0xff]
    %v1090 = vld [vmem:[#allocation5 + $0x1c78] sm:$0xff]
    %v1091 = vld [vmem:[#allocation5 + $0x1c80] sm:$0xff]
    %v1092 = vld [vmem:[#allocation5 + $0x1c88] sm:$0xff]
    %v1093 = vld [vmem:[#allocation5 + $0x1c90] sm:$0xff]
    %v1094 = vld [vmem:[#allocation5 + $0x1c98] sm:$0xff]
    %v1095 = vld [vmem:[#allocation5 + $0x1ca0] sm:$0xff]
    %v1096 = vld [vmem:[#allocation5 + $0x1ca8] sm:$0xff]
    %v1097 = vld [vmem:[#allocation5 + $0x1cb0] sm:$0xff]
    %v1098 = vld [vmem:[#allocation5 + $0x1cb8] sm:$0xff]
    %v1099 = vld [vmem:[#allocation5 + $0x1cc0] sm:$0xff]
    %v1100 = vld [vmem:[#allocation5 + $0x1cc8] sm:$0xff]
    %v1101 = vld [vmem:[#allocation5 + $0x1cd0] sm:$0xff]
    %v1102 = vld [vmem:[#allocation5 + $0x1cd8] sm:$0xff]
    %v1103 = vld [vmem:[#allocation5 + $0x1ce0] sm:$0xff]
    %v1104 = vld [vmem:[#allocation5 + $0x1ce8] sm:$0xff]
    %v1105 = vld [vmem:[#allocation5 + $0x1cf0] sm:$0xff]
    %v1106 = vld [vmem:[#allocation5 + $0x1cf8] sm:$0xff]
    %v1107 = vld [vmem:[#allocation5 + $0x1d00] sm:$0xff]
    %v1108 = vld [vmem:[#allocation5 + $0x1d08] sm:$0xff]
    %v1109 = vld [vmem:[#allocation5 + $0x1d10] sm:$0xff]
    %v1110 = vld [vmem:[#allocation5 + $0x1d18] sm:$0xff]
    %v1111 = vld [vmem:[#allocation5 + $0x1d20] sm:$0xff]
    %v1112 = vld [vmem:[#allocation5 + $0x1d28] sm:$0xff]
    %v1113 = vld [vmem:[#allocation5 + $0x1d30] sm:$0xff]
    %v1114 = vld [vmem:[#allocation5 + $0x1d38] sm:$0xff]
    %v1115 = vld [vmem:[#allocation5 + $0x1d40] sm:$0xff]
    %v1116 = vld [vmem:[#allocation5 + $0x1d48] sm:$0xff]
    %v1117 = vld [vmem:[#allocation5 + $0x1d50] sm:$0xff]
    %v1118 = vld [vmem:[#allocation5 + $0x1d58] sm:$0xff]
    %v1119 = vld [vmem:[#allocation5 + $0x1d60] sm:$0xff]
    %v1120 = vld [vmem:[#allocation5 + $0x1d68] sm:$0xff]
    %v1121 = vld [vmem:[#allocation5 + $0x1d70] sm:$0xff]
    %v1122 = vld [vmem:[#allocation5 + $0x1d78] sm:$0xff]
    %v1123 = vld [vmem:[#allocation5 + $0x1d80] sm:$0xff]
    %v1124 = vld [vmem:[#allocation5 + $0x1d88] sm:$0xff]
    %v1125 = vld [vmem:[#allocation5 + $0x1d90] sm:$0xff]
    %v1126 = vld [vmem:[#allocation5 + $0x1d98] sm:$0xff]
    %v1127 = vld [vmem:[#allocation5 + $0x1da0] sm:$0xff]
    %v1128 = vld [vmem:[#allocation5 + $0x1da8] sm:$0xff]
    %v1129 = vld [vmem:[#allocation5 + $0x1db0] sm:$0xff]
    %v1130 = vld [vmem:[#allocation5 + $0x1db8] sm:$0xff]
    %v1131 = vld [vmem:[#allocation5 + $0x1dc0] sm:$0xff]
    %v1132 = vld [vmem:[#allocation5 + $0x1dc8] sm:$0xff]
    %v1133 = vld [vmem:[#allocation5 + $0x1dd0] sm:$0xff]
    %v1134 = vld [vmem:[#allocation5 + $0x1dd8] sm:$0xff]
    %v1135 = vld [vmem:[#allocation5 + $0x1de0] sm:$0xff]
    %v1136 = vld [vmem:[#allocation5 + $0x1de8] sm:$0xff]
    %v1137 = vld [vmem:[#allocation5 + $0x1df0] sm:$0xff]
    %v1138 = vld [vmem:[#allocation5 + $0x1df8] sm:$0xff]
    %v1139 = vld [vmem:[#allocation5 + $0x1e00] sm:$0xff]
    %v1140 = vld [vmem:[#allocation5 + $0x1e08] sm:$0xff]
    %v1141 = vld [vmem:[#allocation5 + $0x1e10] sm:$0xff]
    %v1142 = vld [vmem:[#allocation5 + $0x1e18] sm:$0xff]
    %v1143 = vld [vmem:[#allocation5 + $0x1e20] sm:$0xff]
    %v1144 = vld [vmem:[#allocation5 + $0x1e28] sm:$0xff]
    %v1145 = vld [vmem:[#allocation5 + $0x1e30] sm:$0xff]
    %v1146 = vld [vmem:[#allocation5 + $0x1e38] sm:$0xff]
    %v1147 = vld [vmem:[#allocation5 + $0x1e40] sm:$0xff]
    %v1148 = vld [vmem:[#allocation5 + $0x1e48] sm:$0xff]
    %v1149 = vld [vmem:[#allocation5 + $0x1e50] sm:$0xff]
    %v1150 = vld [vmem:[#allocation5 + $0x1e58] sm:$0xff]
    %v1151 = vld [vmem:[#allocation5 + $0x1e60] sm:$0xff]
    %v1152 = vld [vmem:[#allocation5 + $0x1e68] sm:$0xff]
    %v1153 = vld [vmem:[#allocation5 + $0x1e70] sm:$0xff]
    %v1154 = vld [vmem:[#allocation5 + $0x1e78] sm:$0xff]
    %v1155 = vld [vmem:[#allocation5 + $0x1e80] sm:$0xff]
    %v1156 = vld [vmem:[#allocation5 + $0x1e88] sm:$0xff]
    %v1157 = vld [vmem:[#allocation5 + $0x1e90] sm:$0xff]
    %v1158 = vld [vmem:[#allocation5 + $0x1e98] sm:$0xff]
    %v1159 = vld [vmem:[#allocation5 + $0x1ea0] sm:$0xff]
    %v1160 = vld [vmem:[#allocation5 + $0x1ea8] sm:$0xff]
    %v1161 = vld [vmem:[#allocation5 + $0x1eb0] sm:$0xff]
    %v1162 = vld [vmem:[#allocation5 + $0x1eb8] sm:$0xff]
    %v1163 = vld [vmem:[#allocation5 + $0x1ec0] sm:$0xff]
    %v1164 = vld [vmem:[#allocation5 + $0x1ec8] sm:$0xff]
    %v1165 = vld [vmem:[#allocation5 + $0x1ed0] sm:$0xff]
    %v1166 = vld [vmem:[#allocation5 + $0x1ed8] sm:$0xff]
    %v1167 = vld [vmem:[#allocation5 + $0x1ee0] sm:$0xff]
    %v1168 = vld [vmem:[#allocation5 + $0x1ee8] sm:$0xff]
    %v1169 = vld [vmem:[#allocation5 + $0x1ef0] sm:$0xff]
    %v1170 = vld [vmem:[#allocation5 + $0x1ef8] sm:$0xff]
    %v1171 = vld [vmem:[#allocation5 + $0x1f00] sm:$0xff]
    %v1172 = vld [vmem:[#allocation5 + $0x1f08] sm:$0xff]
    %v1173 = vld [vmem:[#allocation5 + $0x1f10] sm:$0xff]
    %v1174 = vld [vmem:[#allocation5 + $0x1f18] sm:$0xff]
    %v1175 = vld [vmem:[#allocation5 + $0x1f20] sm:$0xff]
    %v1176 = vld [vmem:[#allocation5 + $0x1f28] sm:$0xff]
    %v1177 = vld [vmem:[#allocation5 + $0x1f30] sm:$0xff]
    %v1178 = vld [vmem:[#allocation5 + $0x1f38] sm:$0xff]
    %v1179 = vld [vmem:[#allocation5 + $0x1f40] sm:$0xff]
    %v1180 = vld [vmem:[#allocation5 + $0x1f48] sm:$0xff]
    %v1181 = vld [vmem:[#allocation5 + $0x1f50] sm:$0xff]
    %v1182 = vld [vmem:[#allocation5 + $0x1f58] sm:$0xff]
    %v1183 = vld [vmem:[#allocation5 + $0x1f60] sm:$0xff]
    %v1184 = vld [vmem:[#allocation5 + $0x1f68] sm:$0xff]
    %v1185 = vld [vmem:[#allocation5 + $0x1f70] sm:$0xff]
    %v1186 = vld [vmem:[#allocation5 + $0x1f78] sm:$0xff]
    %v1187 = vld [vmem:[#allocation5 + $0x1f80] sm:$0xff]
    %v1188 = vld [vmem:[#allocation5 + $0x1f88] sm:$0xff]
    %v1189 = vld [vmem:[#allocation5 + $0x1f90] sm:$0xff]
    %v1190 = vld [vmem:[#allocation5 + $0x1f98] sm:$0xff]
    %v1191 = vld [vmem:[#allocation5 + $0x1fa0] sm:$0xff]
    %v1192 = vld [vmem:[#allocation5 + $0x1fa8] sm:$0xff]
    %v1193 = vld [vmem:[#allocation5 + $0x1fb0] sm:$0xff]
    %v1194 = vld [vmem:[#allocation5 + $0x1fb8] sm:$0xff]
    %v1195 = vld [vmem:[#allocation5 + $0x1fc0] sm:$0xff]
    %v1196 = vld [vmem:[#allocation5 + $0x1fc8] sm:$0xff]
    %v1197 = vld [vmem:[#allocation5 + $0x1fd0] sm:$0xff]
    %v1198 = vld [vmem:[#allocation5 + $0x1fd8] sm:$0xff]
    %v1199 = vld [vmem:[#allocation5 + $0x1fe0] sm:$0xff]
    %v1200 = vld [vmem:[#allocation5 + $0x1fe8] sm:$0xff]
    %v1201 = vld [vmem:[#allocation5 + $0x1ff0] sm:$0xff]
    %v1202 = vld [vmem:[#allocation5 + $0x1ff8] sm:$0xff]
    %v1203 = vld [vmem:[#allocation7] sm:$0xf]
    %v1205 = vlaneseq
    %v1206 = vshrl.u32 %v1205, 7
    %v1207 = vsub.s32 0, %v1206
    %v1208 = vrot.slane %v1203, %v1207
    %v1209 = vlaneseq
    %v1210 = vshrl.u32 %v1209, 7
    %v1211 = vsub.s32 1, %v1210
    %v1212 = vrot.slane %v1203, %v1211
    %v1213 = vlaneseq
    %v1214 = vshrl.u32 %v1213, 7
    %v1215 = vsub.s32 2, %v1214
    %v1216 = vrot.slane %v1203, %v1215
    %v1217 = vlaneseq
    %v1218 = vshrl.u32 %v1217, 7
    %v1219 = vsub.s32 3, %v1218
    %v1220 = vrot.slane %v1203, %v1219
    %v2249 = vunpack.c.l.b16 %v179
    %v2250 = vunpack.c.h.b16 %v179
    %v2251 = vunpack.c.l.b16 %v180
    %v2252 = vunpack.c.h.b16 %v180
    %v2253 = vunpack.c.l.b16 %v181
    %v2254 = vunpack.c.h.b16 %v181
    %v2255 = vunpack.c.l.b16 %v182
    %v2256 = vunpack.c.h.b16 %v182
    %v2257 = vunpack.c.l.b16 %v183
    %v2258 = vunpack.c.h.b16 %v183
    %v2259 = vunpack.c.l.b16 %v184
    %v2260 = vunpack.c.h.b16 %v184
    %v2261 = vunpack.c.l.b16 %v185
    %v2262 = vunpack.c.h.b16 %v185
    %v2263 = vunpack.c.l.b16 %v186
    %v2264 = vunpack.c.h.b16 %v186
    %v2265 = vunpack.c.l.b16 %v187
    %v2266 = vunpack.c.h.b16 %v187
    %v2267 = vunpack.c.l.b16 %v188
    %v2268 = vunpack.c.h.b16 %v188
    %v2269 = vunpack.c.l.b16 %v189
    %v2270 = vunpack.c.h.b16 %v189
    %v2271 = vunpack.c.l.b16 %v190
    %v2272 = vunpack.c.h.b16 %v190
    %v2273 = vunpack.c.l.b16 %v191
    %v2274 = vunpack.c.h.b16 %v191
    %v2275 = vunpack.c.l.b16 %v192
    %v2276 = vunpack.c.h.b16 %v192
    %v2277 = vunpack.c.l.b16 %v193
    %v2278 = vunpack.c.h.b16 %v193
    %v2279 = vunpack.c.l.b16 %v194
    %v2280 = vunpack.c.h.b16 %v194
    %v2281 = vunpack.c.l.b16 %v195
    %v2282 = vunpack.c.h.b16 %v195
    %v2283 = vunpack.c.l.b16 %v196
    %v2284 = vunpack.c.h.b16 %v196
    %v2285 = vunpack.c.l.b16 %v197
    %v2286 = vunpack.c.h.b16 %v197
    %v2287 = vunpack.c.l.b16 %v198
    %v2288 = vunpack.c.h.b16 %v198
    %v2289 = vunpack.c.l.b16 %v199
    %v2290 = vunpack.c.h.b16 %v199
    %v2291 = vunpack.c.l.b16 %v200
    %v2292 = vunpack.c.h.b16 %v200
    %v2293 = vunpack.c.l.b16 %v201
    %v2294 = vunpack.c.h.b16 %v201
    %v2295 = vunpack.c.l.b16 %v202
    %v2296 = vunpack.c.h.b16 %v202
    %v2297 = vunpack.c.l.b16 %v203
    %v2298 = vunpack.c.h.b16 %v203
    %v2299 = vunpack.c.l.b16 %v204
    %v2300 = vunpack.c.h.b16 %v204
    %v2301 = vunpack.c.l.b16 %v205
    %v2302 = vunpack.c.h.b16 %v205
    %v2303 = vunpack.c.l.b16 %v206
    %v2304 = vunpack.c.h.b16 %v206
    %v2305 = vunpack.c.l.b16 %v207
    %v2306 = vunpack.c.h.b16 %v207
    %v2307 = vunpack.c.l.b16 %v208
    %v2308 = vunpack.c.h.b16 %v208
    %v2309 = vunpack.c.l.b16 %v209
    %v2310 = vunpack.c.h.b16 %v209
    %v2311 = vunpack.c.l.b16 %v210
    %v2312 = vunpack.c.h.b16 %v210
    %v2313 = vunpack.c.l.b16 %v211
    %v2314 = vunpack.c.h.b16 %v211
    %v2315 = vunpack.c.l.b16 %v212
    %v2316 = vunpack.c.h.b16 %v212
    %v2317 = vunpack.c.l.b16 %v213
    %v2318 = vunpack.c.h.b16 %v213
    %v2319 = vunpack.c.l.b16 %v214
    %v2320 = vunpack.c.h.b16 %v214
    %v2321 = vunpack.c.l.b16 %v215
    %v2322 = vunpack.c.h.b16 %v215
    %v2323 = vunpack.c.l.b16 %v216
    %v2324 = vunpack.c.h.b16 %v216
    %v2325 = vunpack.c.l.b16 %v217
    %v2326 = vunpack.c.h.b16 %v217
    %v2327 = vunpack.c.l.b16 %v218
    %v2328 = vunpack.c.h.b16 %v218
    %v2329 = vunpack.c.l.b16 %v219
    %v2330 = vunpack.c.h.b16 %v219
    %v2331 = vunpack.c.l.b16 %v220
    %v2332 = vunpack.c.h.b16 %v220
    %v2333 = vunpack.c.l.b16 %v221
    %v2334 = vunpack.c.h.b16 %v221
    %v2335 = vunpack.c.l.b16 %v222
    %v2336 = vunpack.c.h.b16 %v222
    %v2337 = vunpack.c.l.b16 %v223
    %v2338 = vunpack.c.h.b16 %v223
    %v2339 = vunpack.c.l.b16 %v224
    %v2340 = vunpack.c.h.b16 %v224
    %v2341 = vunpack.c.l.b16 %v225
    %v2342 = vunpack.c.h.b16 %v225
    %v2343 = vunpack.c.l.b16 %v226
    %v2344 = vunpack.c.h.b16 %v226
    %v2345 = vunpack.c.l.b16 %v227
    %v2346 = vunpack.c.h.b16 %v227
    %v2347 = vunpack.c.l.b16 %v228
    %v2348 = vunpack.c.h.b16 %v228
    %v2349 = vunpack.c.l.b16 %v229
    %v2350 = vunpack.c.h.b16 %v229
    %v2351 = vunpack.c.l.b16 %v230
    %v2352 = vunpack.c.h.b16 %v230
    %v2353 = vunpack.c.l.b16 %v231
    %v2354 = vunpack.c.h.b16 %v231
    %v2355 = vunpack.c.l.b16 %v232
    %v2356 = vunpack.c.h.b16 %v232
    %v2357 = vunpack.c.l.b16 %v233
    %v2358 = vunpack.c.h.b16 %v233
    %v2359 = vunpack.c.l.b16 %v234
    %v2360 = vunpack.c.h.b16 %v234
    %v2361 = vunpack.c.l.b16 %v235
    %v2362 = vunpack.c.h.b16 %v235
    %v2363 = vunpack.c.l.b16 %v236
    %v2364 = vunpack.c.h.b16 %v236
    %v2365 = vunpack.c.l.b16 %v237
    %v2366 = vunpack.c.h.b16 %v237
    %v2367 = vunpack.c.l.b16 %v238
    %v2368 = vunpack.c.h.b16 %v238
    %v2369 = vunpack.c.l.b16 %v239
    %v2370 = vunpack.c.h.b16 %v239
    %v2371 = vunpack.c.l.b16 %v240
    %v2372 = vunpack.c.h.b16 %v240
    %v2373 = vunpack.c.l.b16 %v241
    %v2374 = vunpack.c.h.b16 %v241
    %v2375 = vunpack.c.l.b16 %v242
    %v2376 = vunpack.c.h.b16 %v242
    %v2377 = vunpack.c.l.b16 %v243
    %v2378 = vunpack.c.h.b16 %v243
    %v2379 = vunpack.c.l.b16 %v244
    %v2380 = vunpack.c.h.b16 %v244
    %v2381 = vunpack.c.l.b16 %v245
    %v2382 = vunpack.c.h.b16 %v245
    %v2383 = vunpack.c.l.b16 %v246
    %v2384 = vunpack.c.h.b16 %v246
    %v2385 = vunpack.c.l.b16 %v247
    %v2386 = vunpack.c.h.b16 %v247
    %v2387 = vunpack.c.l.b16 %v248
    %v2388 = vunpack.c.h.b16 %v248
    %v2389 = vunpack.c.l.b16 %v249
    %v2390 = vunpack.c.h.b16 %v249
    %v2391 = vunpack.c.l.b16 %v250
    %v2392 = vunpack.c.h.b16 %v250
    %v2393 = vunpack.c.l.b16 %v251
    %v2394 = vunpack.c.h.b16 %v251
    %v2395 = vunpack.c.l.b16 %v252
    %v2396 = vunpack.c.h.b16 %v252
    %v2397 = vunpack.c.l.b16 %v253
    %v2398 = vunpack.c.h.b16 %v253
    %v2399 = vunpack.c.l.b16 %v254
    %v2400 = vunpack.c.h.b16 %v254
    %v2401 = vunpack.c.l.b16 %v255
    %v2402 = vunpack.c.h.b16 %v255
    %v2403 = vunpack.c.l.b16 %v256
    %v2404 = vunpack.c.h.b16 %v256
    %v2405 = vunpack.c.l.b16 %v257
    %v2406 = vunpack.c.h.b16 %v257
    %v2407 = vunpack.c.l.b16 %v258
    %v2408 = vunpack.c.h.b16 %v258
    %v2409 = vunpack.c.l.b16 %v259
    %v2410 = vunpack.c.h.b16 %v259
    %v2411 = vunpack.c.l.b16 %v260
    %v2412 = vunpack.c.h.b16 %v260
    %v2413 = vunpack.c.l.b16 %v261
    %v2414 = vunpack.c.h.b16 %v261
    %v2415 = vunpack.c.l.b16 %v262
    %v2416 = vunpack.c.h.b16 %v262
    %v2417 = vunpack.c.l.b16 %v263
    %v2418 = vunpack.c.h.b16 %v263
    %v2419 = vunpack.c.l.b16 %v264
    %v2420 = vunpack.c.h.b16 %v264
    %v2421 = vunpack.c.l.b16 %v265
    %v2422 = vunpack.c.h.b16 %v265
    %v2423 = vunpack.c.l.b16 %v266
    %v2424 = vunpack.c.h.b16 %v266
    %v2425 = vunpack.c.l.b16 %v267
    %v2426 = vunpack.c.h.b16 %v267
    %v2427 = vunpack.c.l.b16 %v268
    %v2428 = vunpack.c.h.b16 %v268
    %v2429 = vunpack.c.l.b16 %v269
    %v2430 = vunpack.c.h.b16 %v269
    %v2431 = vunpack.c.l.b16 %v270
    %v2432 = vunpack.c.h.b16 %v270
    %v2433 = vunpack.c.l.b16 %v271
    %v2434 = vunpack.c.h.b16 %v271
    %v2435 = vunpack.c.l.b16 %v272
    %v2436 = vunpack.c.h.b16 %v272
    %v2437 = vunpack.c.l.b16 %v273
    %v2438 = vunpack.c.h.b16 %v273
    %v2439 = vunpack.c.l.b16 %v274
    %v2440 = vunpack.c.h.b16 %v274
    %v2441 = vunpack.c.l.b16 %v275
    %v2442 = vunpack.c.h.b16 %v275
    %v2443 = vunpack.c.l.b16 %v276
    %v2444 = vunpack.c.h.b16 %v276
    %v2445 = vunpack.c.l.b16 %v277
    %v2446 = vunpack.c.h.b16 %v277
    %v2447 = vunpack.c.l.b16 %v278
    %v2448 = vunpack.c.h.b16 %v278
    %v2449 = vunpack.c.l.b16 %v279
    %v2450 = vunpack.c.h.b16 %v279
    %v2451 = vunpack.c.l.b16 %v280
    %v2452 = vunpack.c.h.b16 %v280
    %v2453 = vunpack.c.l.b16 %v281
    %v2454 = vunpack.c.h.b16 %v281
    %v2455 = vunpack.c.l.b16 %v282
    %v2456 = vunpack.c.h.b16 %v282
    %v2457 = vunpack.c.l.b16 %v283
    %v2458 = vunpack.c.h.b16 %v283
    %v2459 = vunpack.c.l.b16 %v284
    %v2460 = vunpack.c.h.b16 %v284
    %v2461 = vunpack.c.l.b16 %v285
    %v2462 = vunpack.c.h.b16 %v285
    %v2463 = vunpack.c.l.b16 %v286
    %v2464 = vunpack.c.h.b16 %v286
    %v2465 = vunpack.c.l.b16 %v287
    %v2466 = vunpack.c.h.b16 %v287
    %v2467 = vunpack.c.l.b16 %v288
    %v2468 = vunpack.c.h.b16 %v288
    %v2469 = vunpack.c.l.b16 %v289
    %v2470 = vunpack.c.h.b16 %v289
    %v2471 = vunpack.c.l.b16 %v290
    %v2472 = vunpack.c.h.b16 %v290
    %v2473 = vunpack.c.l.b16 %v291
    %v2474 = vunpack.c.h.b16 %v291
    %v2475 = vunpack.c.l.b16 %v292
    %v2476 = vunpack.c.h.b16 %v292
    %v2477 = vunpack.c.l.b16 %v293
    %v2478 = vunpack.c.h.b16 %v293
    %v2479 = vunpack.c.l.b16 %v294
    %v2480 = vunpack.c.h.b16 %v294
    %v2481 = vunpack.c.l.b16 %v295
    %v2482 = vunpack.c.h.b16 %v295
    %v2483 = vunpack.c.l.b16 %v296
    %v2484 = vunpack.c.h.b16 %v296
    %v2485 = vunpack.c.l.b16 %v297
    %v2486 = vunpack.c.h.b16 %v297
    %v2487 = vunpack.c.l.b16 %v298
    %v2488 = vunpack.c.h.b16 %v298
    %v2489 = vunpack.c.l.b16 %v299
    %v2490 = vunpack.c.h.b16 %v299
    %v2491 = vunpack.c.l.b16 %v300
    %v2492 = vunpack.c.h.b16 %v300
    %v2493 = vunpack.c.l.b16 %v301
    %v2494 = vunpack.c.h.b16 %v301
    %v2495 = vunpack.c.l.b16 %v302
    %v2496 = vunpack.c.h.b16 %v302
    %v2497 = vunpack.c.l.b16 %v303
    %v2498 = vunpack.c.h.b16 %v303
    %v2499 = vunpack.c.l.b16 %v304
    %v2500 = vunpack.c.h.b16 %v304
    %v2501 = vunpack.c.l.b16 %v305
    %v2502 = vunpack.c.h.b16 %v305
    %v2503 = vunpack.c.l.b16 %v306
    %v2504 = vunpack.c.h.b16 %v306
    %v2505 = vunpack.c.l.b16 %v307
    %v2506 = vunpack.c.h.b16 %v307
    %v2507 = vunpack.c.l.b16 %v308
    %v2508 = vunpack.c.h.b16 %v308
    %v2509 = vunpack.c.l.b16 %v309
    %v2510 = vunpack.c.h.b16 %v309
    %v2511 = vunpack.c.l.b16 %v310
    %v2512 = vunpack.c.h.b16 %v310
    %v2513 = vunpack.c.l.b16 %v311
    %v2514 = vunpack.c.h.b16 %v311
    %v2515 = vunpack.c.l.b16 %v312
    %v2516 = vunpack.c.h.b16 %v312
    %v2517 = vunpack.c.l.b16 %v313
    %v2518 = vunpack.c.h.b16 %v313
    %v2519 = vunpack.c.l.b16 %v314
    %v2520 = vunpack.c.h.b16 %v314
    %v2521 = vunpack.c.l.b16 %v315
    %v2522 = vunpack.c.h.b16 %v315
    %v2523 = vunpack.c.l.b16 %v316
    %v2524 = vunpack.c.h.b16 %v316
    %v2525 = vunpack.c.l.b16 %v317
    %v2526 = vunpack.c.h.b16 %v317
    %v2527 = vunpack.c.l.b16 %v318
    %v2528 = vunpack.c.h.b16 %v318
    %v2529 = vunpack.c.l.b16 %v319
    %v2530 = vunpack.c.h.b16 %v319
    %v2531 = vunpack.c.l.b16 %v320
    %v2532 = vunpack.c.h.b16 %v320
    %v2533 = vunpack.c.l.b16 %v321
    %v2534 = vunpack.c.h.b16 %v321
    %v2535 = vunpack.c.l.b16 %v322
    %v2536 = vunpack.c.h.b16 %v322
    %v2537 = vunpack.c.l.b16 %v323
    %v2538 = vunpack.c.h.b16 %v323
    %v2539 = vunpack.c.l.b16 %v324
    %v2540 = vunpack.c.h.b16 %v324
    %v2541 = vunpack.c.l.b16 %v325
    %v2542 = vunpack.c.h.b16 %v325
    %v2543 = vunpack.c.l.b16 %v326
    %v2544 = vunpack.c.h.b16 %v326
    %v2545 = vunpack.c.l.b16 %v327
    %v2546 = vunpack.c.h.b16 %v327
    %v2547 = vunpack.c.l.b16 %v328
    %v2548 = vunpack.c.h.b16 %v328
    %v2549 = vunpack.c.l.b16 %v329
    %v2550 = vunpack.c.h.b16 %v329
    %v2551 = vunpack.c.l.b16 %v330
    %v2552 = vunpack.c.h.b16 %v330
    %v2553 = vunpack.c.l.b16 %v331
    %v2554 = vunpack.c.h.b16 %v331
    %v2555 = vunpack.c.l.b16 %v332
    %v2556 = vunpack.c.h.b16 %v332
    %v2557 = vunpack.c.l.b16 %v333
    %v2558 = vunpack.c.h.b16 %v333
    %v2559 = vunpack.c.l.b16 %v334
    %v2560 = vunpack.c.h.b16 %v334
    %v2561 = vunpack.c.l.b16 %v335
    %v2562 = vunpack.c.h.b16 %v335
    %v2563 = vunpack.c.l.b16 %v336
    %v2564 = vunpack.c.h.b16 %v336
    %v2565 = vunpack.c.l.b16 %v337
    %v2566 = vunpack.c.h.b16 %v337
    %v2567 = vunpack.c.l.b16 %v338
    %v2568 = vunpack.c.h.b16 %v338
    %v2569 = vunpack.c.l.b16 %v339
    %v2570 = vunpack.c.h.b16 %v339
    %v2571 = vunpack.c.l.b16 %v340
    %v2572 = vunpack.c.h.b16 %v340
    %v2573 = vunpack.c.l.b16 %v341
    %v2574 = vunpack.c.h.b16 %v341
    %v2575 = vunpack.c.l.b16 %v342
    %v2576 = vunpack.c.h.b16 %v342
    %v2577 = vunpack.c.l.b16 %v343
    %v2578 = vunpack.c.h.b16 %v343
    %v2579 = vunpack.c.l.b16 %v344
    %v2580 = vunpack.c.h.b16 %v344
    %v2581 = vunpack.c.l.b16 %v345
    %v2582 = vunpack.c.h.b16 %v345
    %v2583 = vunpack.c.l.b16 %v346
    %v2584 = vunpack.c.h.b16 %v346
    %v2585 = vunpack.c.l.b16 %v347
    %v2586 = vunpack.c.h.b16 %v347
    %v2587 = vunpack.c.l.b16 %v348
    %v2588 = vunpack.c.h.b16 %v348
    %v2589 = vunpack.c.l.b16 %v349
    %v2590 = vunpack.c.h.b16 %v349
    %v2591 = vunpack.c.l.b16 %v350
    %v2592 = vunpack.c.h.b16 %v350
    %v2593 = vunpack.c.l.b16 %v351
    %v2594 = vunpack.c.h.b16 %v351
    %v2595 = vunpack.c.l.b16 %v352
    %v2596 = vunpack.c.h.b16 %v352
    %v2597 = vunpack.c.l.b16 %v353
    %v2598 = vunpack.c.h.b16 %v353
    %v2599 = vunpack.c.l.b16 %v354
    %v2600 = vunpack.c.h.b16 %v354
    %v2601 = vunpack.c.l.b16 %v355
    %v2602 = vunpack.c.h.b16 %v355
    %v2603 = vunpack.c.l.b16 %v356
    %v2604 = vunpack.c.h.b16 %v356
    %v2605 = vunpack.c.l.b16 %v357
    %v2606 = vunpack.c.h.b16 %v357
    %v2607 = vunpack.c.l.b16 %v358
    %v2608 = vunpack.c.h.b16 %v358
    %v2609 = vunpack.c.l.b16 %v359
    %v2610 = vunpack.c.h.b16 %v359
    %v2611 = vunpack.c.l.b16 %v360
    %v2612 = vunpack.c.h.b16 %v360
    %v2613 = vunpack.c.l.b16 %v361
    %v2614 = vunpack.c.h.b16 %v361
    %v2615 = vunpack.c.l.b16 %v362
    %v2616 = vunpack.c.h.b16 %v362
    %v2617 = vunpack.c.l.b16 %v363
    %v2618 = vunpack.c.h.b16 %v363
    %v2619 = vunpack.c.l.b16 %v364
    %v2620 = vunpack.c.h.b16 %v364
    %v2621 = vunpack.c.l.b16 %v365
    %v2622 = vunpack.c.h.b16 %v365
    %v2623 = vunpack.c.l.b16 %v366
    %v2624 = vunpack.c.h.b16 %v366
    %v2625 = vunpack.c.l.b16 %v367
    %v2626 = vunpack.c.h.b16 %v367
    %v2627 = vunpack.c.l.b16 %v368
    %v2628 = vunpack.c.h.b16 %v368
    %v2629 = vunpack.c.l.b16 %v369
    %v2630 = vunpack.c.h.b16 %v369
    %v2631 = vunpack.c.l.b16 %v370
    %v2632 = vunpack.c.h.b16 %v370
    %v2633 = vunpack.c.l.b16 %v371
    %v2634 = vunpack.c.h.b16 %v371
    %v2635 = vunpack.c.l.b16 %v372
    %v2636 = vunpack.c.h.b16 %v372
    %v2637 = vunpack.c.l.b16 %v373
    %v2638 = vunpack.c.h.b16 %v373
    %v2639 = vunpack.c.l.b16 %v374
    %v2640 = vunpack.c.h.b16 %v374
    %v2641 = vunpack.c.l.b16 %v375
    %v2642 = vunpack.c.h.b16 %v375
    %v2643 = vunpack.c.l.b16 %v376
    %v2644 = vunpack.c.h.b16 %v376
    %v2645 = vunpack.c.l.b16 %v377
    %v2646 = vunpack.c.h.b16 %v377
    %v2647 = vunpack.c.l.b16 %v378
    %v2648 = vunpack.c.h.b16 %v378
    %v2649 = vunpack.c.l.b16 %v379
    %v2650 = vunpack.c.h.b16 %v379
    %v2651 = vunpack.c.l.b16 %v380
    %v2652 = vunpack.c.h.b16 %v380
    %v2653 = vunpack.c.l.b16 %v381
    %v2654 = vunpack.c.h.b16 %v381
    %v2655 = vunpack.c.l.b16 %v382
    %v2656 = vunpack.c.h.b16 %v382
    %v2657 = vunpack.c.l.b16 %v383
    %v2658 = vunpack.c.h.b16 %v383
    %v2659 = vunpack.c.l.b16 %v384
    %v2660 = vunpack.c.h.b16 %v384
    %v2661 = vunpack.c.l.b16 %v385
    %v2662 = vunpack.c.h.b16 %v385
    %v2663 = vunpack.c.l.b16 %v386
    %v2664 = vunpack.c.h.b16 %v386
    %v2665 = vunpack.c.l.b16 %v387
    %v2666 = vunpack.c.h.b16 %v387
    %v2667 = vunpack.c.l.b16 %v388
    %v2668 = vunpack.c.h.b16 %v388
    %v2669 = vunpack.c.l.b16 %v389
    %v2670 = vunpack.c.h.b16 %v389
    %v2671 = vunpack.c.l.b16 %v390
    %v2672 = vunpack.c.h.b16 %v390
    %v2673 = vunpack.c.l.b16 %v391
    %v2674 = vunpack.c.h.b16 %v391
    %v2675 = vunpack.c.l.b16 %v392
    %v2676 = vunpack.c.h.b16 %v392
    %v2677 = vunpack.c.l.b16 %v393
    %v2678 = vunpack.c.h.b16 %v393
    %v2679 = vunpack.c.l.b16 %v394
    %v2680 = vunpack.c.h.b16 %v394
    %v2681 = vunpack.c.l.b16 %v395
    %v2682 = vunpack.c.h.b16 %v395
    %v2683 = vunpack.c.l.b16 %v396
    %v2684 = vunpack.c.h.b16 %v396
    %v2685 = vunpack.c.l.b16 %v397
    %v2686 = vunpack.c.h.b16 %v397
    %v2687 = vunpack.c.l.b16 %v398
    %v2688 = vunpack.c.h.b16 %v398
    %v2689 = vunpack.c.l.b16 %v399
    %v2690 = vunpack.c.h.b16 %v399
    %v2691 = vunpack.c.l.b16 %v400
    %v2692 = vunpack.c.h.b16 %v400
    %v2693 = vunpack.c.l.b16 %v401
    %v2694 = vunpack.c.h.b16 %v401
    %v2695 = vunpack.c.l.b16 %v402
    %v2696 = vunpack.c.h.b16 %v402
    %v2697 = vunpack.c.l.b16 %v403
    %v2698 = vunpack.c.h.b16 %v403
    %v2699 = vunpack.c.l.b16 %v404
    %v2700 = vunpack.c.h.b16 %v404
    %v2701 = vunpack.c.l.b16 %v405
    %v2702 = vunpack.c.h.b16 %v405
    %v2703 = vunpack.c.l.b16 %v406
    %v2704 = vunpack.c.h.b16 %v406
    %v2705 = vunpack.c.l.b16 %v407
    %v2706 = vunpack.c.h.b16 %v407
    %v2707 = vunpack.c.l.b16 %v408
    %v2708 = vunpack.c.h.b16 %v408
    %v2709 = vunpack.c.l.b16 %v409
    %v2710 = vunpack.c.h.b16 %v409
    %v2711 = vunpack.c.l.b16 %v410
    %v2712 = vunpack.c.h.b16 %v410
    %v2713 = vunpack.c.l.b16 %v411
    %v2714 = vunpack.c.h.b16 %v411
    %v2715 = vunpack.c.l.b16 %v412
    %v2716 = vunpack.c.h.b16 %v412
    %v2717 = vunpack.c.l.b16 %v413
    %v2718 = vunpack.c.h.b16 %v413
    %v2719 = vunpack.c.l.b16 %v414
    %v2720 = vunpack.c.h.b16 %v414
    %v2721 = vunpack.c.l.b16 %v415
    %v2722 = vunpack.c.h.b16 %v415
    %v2723 = vunpack.c.l.b16 %v416
    %v2724 = vunpack.c.h.b16 %v416
    %v2725 = vunpack.c.l.b16 %v417
    %v2726 = vunpack.c.h.b16 %v417
    %v2727 = vunpack.c.l.b16 %v418
    %v2728 = vunpack.c.h.b16 %v418
    %v2729 = vunpack.c.l.b16 %v419
    %v2730 = vunpack.c.h.b16 %v419
    %v2731 = vunpack.c.l.b16 %v420
    %v2732 = vunpack.c.h.b16 %v420
    %v2733 = vunpack.c.l.b16 %v421
    %v2734 = vunpack.c.h.b16 %v421
    %v2735 = vunpack.c.l.b16 %v422
    %v2736 = vunpack.c.h.b16 %v422
    %v2737 = vunpack.c.l.b16 %v423
    %v2738 = vunpack.c.h.b16 %v423
    %v2739 = vunpack.c.l.b16 %v424
    %v2740 = vunpack.c.h.b16 %v424
    %v2741 = vunpack.c.l.b16 %v425
    %v2742 = vunpack.c.h.b16 %v425
    %v2743 = vunpack.c.l.b16 %v426
    %v2744 = vunpack.c.h.b16 %v426
    %v2745 = vunpack.c.l.b16 %v427
    %v2746 = vunpack.c.h.b16 %v427
    %v2747 = vunpack.c.l.b16 %v428
    %v2748 = vunpack.c.h.b16 %v428
    %v2749 = vunpack.c.l.b16 %v429
    %v2750 = vunpack.c.h.b16 %v429
    %v2751 = vunpack.c.l.b16 %v430
    %v2752 = vunpack.c.h.b16 %v430
    %v2753 = vunpack.c.l.b16 %v431
    %v2754 = vunpack.c.h.b16 %v431
    %v2755 = vunpack.c.l.b16 %v432
    %v2756 = vunpack.c.h.b16 %v432
    %v2757 = vunpack.c.l.b16 %v433
    %v2758 = vunpack.c.h.b16 %v433
    %v2759 = vunpack.c.l.b16 %v434
    %v2760 = vunpack.c.h.b16 %v434
    %v2761 = vunpack.c.l.b16 %v435
    %v2762 = vunpack.c.h.b16 %v435
    %v2763 = vunpack.c.l.b16 %v436
    %v2764 = vunpack.c.h.b16 %v436
    %v2765 = vunpack.c.l.b16 %v437
    %v2766 = vunpack.c.h.b16 %v437
    %v2767 = vunpack.c.l.b16 %v438
    %v2768 = vunpack.c.h.b16 %v438
    %v2769 = vunpack.c.l.b16 %v439
    %v2770 = vunpack.c.h.b16 %v439
    %v2771 = vunpack.c.l.b16 %v440
    %v2772 = vunpack.c.h.b16 %v440
    %v2773 = vunpack.c.l.b16 %v441
    %v2774 = vunpack.c.h.b16 %v441
    %v2775 = vunpack.c.l.b16 %v442
    %v2776 = vunpack.c.h.b16 %v442
    %v2777 = vunpack.c.l.b16 %v443
    %v2778 = vunpack.c.h.b16 %v443
    %v2779 = vunpack.c.l.b16 %v444
    %v2780 = vunpack.c.h.b16 %v444
    %v2781 = vunpack.c.l.b16 %v445
    %v2782 = vunpack.c.h.b16 %v445
    %v2783 = vunpack.c.l.b16 %v446
    %v2784 = vunpack.c.h.b16 %v446
    %v2785 = vunpack.c.l.b16 %v447
    %v2786 = vunpack.c.h.b16 %v447
    %v2787 = vunpack.c.l.b16 %v448
    %v2788 = vunpack.c.h.b16 %v448
    %v2789 = vunpack.c.l.b16 %v449
    %v2790 = vunpack.c.h.b16 %v449
    %v2791 = vunpack.c.l.b16 %v450
    %v2792 = vunpack.c.h.b16 %v450
    %v2793 = vunpack.c.l.b16 %v451
    %v2794 = vunpack.c.h.b16 %v451
    %v2795 = vunpack.c.l.b16 %v452
    %v2796 = vunpack.c.h.b16 %v452
    %v2797 = vunpack.c.l.b16 %v453
    %v2798 = vunpack.c.h.b16 %v453
    %v2799 = vunpack.c.l.b16 %v454
    %v2800 = vunpack.c.h.b16 %v454
    %v2801 = vunpack.c.l.b16 %v455
    %v2802 = vunpack.c.h.b16 %v455
    %v2803 = vunpack.c.l.b16 %v456
    %v2804 = vunpack.c.h.b16 %v456
    %v2805 = vunpack.c.l.b16 %v457
    %v2806 = vunpack.c.h.b16 %v457
    %v2807 = vunpack.c.l.b16 %v458
    %v2808 = vunpack.c.h.b16 %v458
    %v2809 = vunpack.c.l.b16 %v459
    %v2810 = vunpack.c.h.b16 %v459
    %v2811 = vunpack.c.l.b16 %v460
    %v2812 = vunpack.c.h.b16 %v460
    %v2813 = vunpack.c.l.b16 %v461
    %v2814 = vunpack.c.h.b16 %v461
    %v2815 = vunpack.c.l.b16 %v462
    %v2816 = vunpack.c.h.b16 %v462
    %v2817 = vunpack.c.l.b16 %v463
    %v2818 = vunpack.c.h.b16 %v463
    %v2819 = vunpack.c.l.b16 %v464
    %v2820 = vunpack.c.h.b16 %v464
    %v2821 = vunpack.c.l.b16 %v465
    %v2822 = vunpack.c.h.b16 %v465
    %v2823 = vunpack.c.l.b16 %v466
    %v2824 = vunpack.c.h.b16 %v466
    %v2825 = vunpack.c.l.b16 %v467
    %v2826 = vunpack.c.h.b16 %v467
    %v2827 = vunpack.c.l.b16 %v468
    %v2828 = vunpack.c.h.b16 %v468
    %v2829 = vunpack.c.l.b16 %v469
    %v2830 = vunpack.c.h.b16 %v469
    %v2831 = vunpack.c.l.b16 %v470
    %v2832 = vunpack.c.h.b16 %v470
    %v2833 = vunpack.c.l.b16 %v471
    %v2834 = vunpack.c.h.b16 %v471
    %v2835 = vunpack.c.l.b16 %v472
    %v2836 = vunpack.c.h.b16 %v472
    %v2837 = vunpack.c.l.b16 %v473
    %v2838 = vunpack.c.h.b16 %v473
    %v2839 = vunpack.c.l.b16 %v474
    %v2840 = vunpack.c.h.b16 %v474
    %v2841 = vunpack.c.l.b16 %v475
    %v2842 = vunpack.c.h.b16 %v475
    %v2843 = vunpack.c.l.b16 %v476
    %v2844 = vunpack.c.h.b16 %v476
    %v2845 = vunpack.c.l.b16 %v477
    %v2846 = vunpack.c.h.b16 %v477
    %v2847 = vunpack.c.l.b16 %v478
    %v2848 = vunpack.c.h.b16 %v478
    %v2849 = vunpack.c.l.b16 %v479
    %v2850 = vunpack.c.h.b16 %v479
    %v2851 = vunpack.c.l.b16 %v480
    %v2852 = vunpack.c.h.b16 %v480
    %v2853 = vunpack.c.l.b16 %v481
    %v2854 = vunpack.c.h.b16 %v481
    %v2855 = vunpack.c.l.b16 %v482
    %v2856 = vunpack.c.h.b16 %v482
    %v2857 = vunpack.c.l.b16 %v483
    %v2858 = vunpack.c.h.b16 %v483
    %v2859 = vunpack.c.l.b16 %v484
    %v2860 = vunpack.c.h.b16 %v484
    %v2861 = vunpack.c.l.b16 %v485
    %v2862 = vunpack.c.h.b16 %v485
    %v2863 = vunpack.c.l.b16 %v486
    %v2864 = vunpack.c.h.b16 %v486
    %v2865 = vunpack.c.l.b16 %v487
    %v2866 = vunpack.c.h.b16 %v487
    %v2867 = vunpack.c.l.b16 %v488
    %v2868 = vunpack.c.h.b16 %v488
    %v2869 = vunpack.c.l.b16 %v489
    %v2870 = vunpack.c.h.b16 %v489
    %v2871 = vunpack.c.l.b16 %v490
    %v2872 = vunpack.c.h.b16 %v490
    %v2873 = vunpack.c.l.b16 %v491
    %v2874 = vunpack.c.h.b16 %v491
    %v2875 = vunpack.c.l.b16 %v492
    %v2876 = vunpack.c.h.b16 %v492
    %v2877 = vunpack.c.l.b16 %v493
    %v2878 = vunpack.c.h.b16 %v493
    %v2879 = vunpack.c.l.b16 %v494
    %v2880 = vunpack.c.h.b16 %v494
    %v2881 = vunpack.c.l.b16 %v495
    %v2882 = vunpack.c.h.b16 %v495
    %v2883 = vunpack.c.l.b16 %v496
    %v2884 = vunpack.c.h.b16 %v496
    %v2885 = vunpack.c.l.b16 %v497
    %v2886 = vunpack.c.h.b16 %v497
    %v2887 = vunpack.c.l.b16 %v498
    %v2888 = vunpack.c.h.b16 %v498
    %v2889 = vunpack.c.l.b16 %v499
    %v2890 = vunpack.c.h.b16 %v499
    %v2891 = vunpack.c.l.b16 %v500
    %v2892 = vunpack.c.h.b16 %v500
    %v2893 = vunpack.c.l.b16 %v501
    %v2894 = vunpack.c.h.b16 %v501
    %v2895 = vunpack.c.l.b16 %v502
    %v2896 = vunpack.c.h.b16 %v502
    %v2897 = vunpack.c.l.b16 %v503
    %v2898 = vunpack.c.h.b16 %v503
    %v2899 = vunpack.c.l.b16 %v504
    %v2900 = vunpack.c.h.b16 %v504
    %v2901 = vunpack.c.l.b16 %v505
    %v2902 = vunpack.c.h.b16 %v505
    %v2903 = vunpack.c.l.b16 %v506
    %v2904 = vunpack.c.h.b16 %v506
    %v2905 = vunpack.c.l.b16 %v507
    %v2906 = vunpack.c.h.b16 %v507
    %v2907 = vunpack.c.l.b16 %v508
    %v2908 = vunpack.c.h.b16 %v508
    %v2909 = vunpack.c.l.b16 %v509
    %v2910 = vunpack.c.h.b16 %v509
    %v2911 = vunpack.c.l.b16 %v510
    %v2912 = vunpack.c.h.b16 %v510
    %v2913 = vunpack.c.l.b16 %v511
    %v2914 = vunpack.c.h.b16 %v511
    %v2915 = vunpack.c.l.b16 %v512
    %v2916 = vunpack.c.h.b16 %v512
    %v2917 = vunpack.c.l.b16 %v513
    %v2918 = vunpack.c.h.b16 %v513
    %v2919 = vunpack.c.l.b16 %v514
    %v2920 = vunpack.c.h.b16 %v514
    %v2921 = vunpack.c.l.b16 %v515
    %v2922 = vunpack.c.h.b16 %v515
    %v2923 = vunpack.c.l.b16 %v516
    %v2924 = vunpack.c.h.b16 %v516
    %v2925 = vunpack.c.l.b16 %v517
    %v2926 = vunpack.c.h.b16 %v517
    %v2927 = vunpack.c.l.b16 %v518
    %v2928 = vunpack.c.h.b16 %v518
    %v2929 = vunpack.c.l.b16 %v519
    %v2930 = vunpack.c.h.b16 %v519
    %v2931 = vunpack.c.l.b16 %v520
    %v2932 = vunpack.c.h.b16 %v520
    %v2933 = vunpack.c.l.b16 %v521
    %v2934 = vunpack.c.h.b16 %v521
    %v2935 = vunpack.c.l.b16 %v522
    %v2936 = vunpack.c.h.b16 %v522
    %v2937 = vunpack.c.l.b16 %v523
    %v2938 = vunpack.c.h.b16 %v523
    %v2939 = vunpack.c.l.b16 %v524
    %v2940 = vunpack.c.h.b16 %v524
    %v2941 = vunpack.c.l.b16 %v525
    %v2942 = vunpack.c.h.b16 %v525
    %v2943 = vunpack.c.l.b16 %v526
    %v2944 = vunpack.c.h.b16 %v526
    %v2945 = vunpack.c.l.b16 %v527
    %v2946 = vunpack.c.h.b16 %v527
    %v2947 = vunpack.c.l.b16 %v528
    %v2948 = vunpack.c.h.b16 %v528
    %v2949 = vunpack.c.l.b16 %v529
    %v2950 = vunpack.c.h.b16 %v529
    %v2951 = vunpack.c.l.b16 %v530
    %v2952 = vunpack.c.h.b16 %v530
    %v2953 = vunpack.c.l.b16 %v531
    %v2954 = vunpack.c.h.b16 %v531
    %v2955 = vunpack.c.l.b16 %v532
    %v2956 = vunpack.c.h.b16 %v532
    %v2957 = vunpack.c.l.b16 %v533
    %v2958 = vunpack.c.h.b16 %v533
    %v2959 = vunpack.c.l.b16 %v534
    %v2960 = vunpack.c.h.b16 %v534
    %v2961 = vunpack.c.l.b16 %v535
    %v2962 = vunpack.c.h.b16 %v535
    %v2963 = vunpack.c.l.b16 %v536
    %v2964 = vunpack.c.h.b16 %v536
    %v2965 = vunpack.c.l.b16 %v537
    %v2966 = vunpack.c.h.b16 %v537
    %v2967 = vunpack.c.l.b16 %v538
    %v2968 = vunpack.c.h.b16 %v538
    %v2969 = vunpack.c.l.b16 %v539
    %v2970 = vunpack.c.h.b16 %v539
    %v2971 = vunpack.c.l.b16 %v540
    %v2972 = vunpack.c.h.b16 %v540
    %v2973 = vunpack.c.l.b16 %v541
    %v2974 = vunpack.c.h.b16 %v541
    %v2975 = vunpack.c.l.b16 %v542
    %v2976 = vunpack.c.h.b16 %v542
    %v2977 = vunpack.c.l.b16 %v543
    %v2978 = vunpack.c.h.b16 %v543
    %v2979 = vunpack.c.l.b16 %v544
    %v2980 = vunpack.c.h.b16 %v544
    %v2981 = vunpack.c.l.b16 %v545
    %v2982 = vunpack.c.h.b16 %v545
    %v2983 = vunpack.c.l.b16 %v546
    %v2984 = vunpack.c.h.b16 %v546
    %v2985 = vunpack.c.l.b16 %v547
    %v2986 = vunpack.c.h.b16 %v547
    %v2987 = vunpack.c.l.b16 %v548
    %v2988 = vunpack.c.h.b16 %v548
    %v2989 = vunpack.c.l.b16 %v549
    %v2990 = vunpack.c.h.b16 %v549
    %v2991 = vunpack.c.l.b16 %v550
    %v2992 = vunpack.c.h.b16 %v550
    %v2993 = vunpack.c.l.b16 %v551
    %v2994 = vunpack.c.h.b16 %v551
    %v2995 = vunpack.c.l.b16 %v552
    %v2996 = vunpack.c.h.b16 %v552
    %v2997 = vunpack.c.l.b16 %v553
    %v2998 = vunpack.c.h.b16 %v553
    %v2999 = vunpack.c.l.b16 %v554
    %v3000 = vunpack.c.h.b16 %v554
    %v3001 = vunpack.c.l.b16 %v555
    %v3002 = vunpack.c.h.b16 %v555
    %v3003 = vunpack.c.l.b16 %v556
    %v3004 = vunpack.c.h.b16 %v556
    %v3005 = vunpack.c.l.b16 %v557
    %v3006 = vunpack.c.h.b16 %v557
    %v3007 = vunpack.c.l.b16 %v558
    %v3008 = vunpack.c.h.b16 %v558
    %v3009 = vunpack.c.l.b16 %v559
    %v3010 = vunpack.c.h.b16 %v559
    %v3011 = vunpack.c.l.b16 %v560
    %v3012 = vunpack.c.h.b16 %v560
    %v3013 = vunpack.c.l.b16 %v561
    %v3014 = vunpack.c.h.b16 %v561
    %v3015 = vunpack.c.l.b16 %v562
    %v3016 = vunpack.c.h.b16 %v562
    %v3017 = vunpack.c.l.b16 %v563
    %v3018 = vunpack.c.h.b16 %v563
    %v3019 = vunpack.c.l.b16 %v564
    %v3020 = vunpack.c.h.b16 %v564
    %v3021 = vunpack.c.l.b16 %v565
    %v3022 = vunpack.c.h.b16 %v565
    %v3023 = vunpack.c.l.b16 %v566
    %v3024 = vunpack.c.h.b16 %v566
    %v3025 = vunpack.c.l.b16 %v567
    %v3026 = vunpack.c.h.b16 %v567
    %v3027 = vunpack.c.l.b16 %v568
    %v3028 = vunpack.c.h.b16 %v568
    %v3029 = vunpack.c.l.b16 %v569
    %v3030 = vunpack.c.h.b16 %v569
    %v3031 = vunpack.c.l.b16 %v570
    %v3032 = vunpack.c.h.b16 %v570
    %v3033 = vunpack.c.l.b16 %v571
    %v3034 = vunpack.c.h.b16 %v571
    %v3035 = vunpack.c.l.b16 %v572
    %v3036 = vunpack.c.h.b16 %v572
    %v3037 = vunpack.c.l.b16 %v573
    %v3038 = vunpack.c.h.b16 %v573
    %v3039 = vunpack.c.l.b16 %v574
    %v3040 = vunpack.c.h.b16 %v574
    %v3041 = vunpack.c.l.b16 %v575
    %v3042 = vunpack.c.h.b16 %v575
    %v3043 = vunpack.c.l.b16 %v576
    %v3044 = vunpack.c.h.b16 %v576
    %v3045 = vunpack.c.l.b16 %v577
    %v3046 = vunpack.c.h.b16 %v577
    %v3047 = vunpack.c.l.b16 %v578
    %v3048 = vunpack.c.h.b16 %v578
    %v3049 = vunpack.c.l.b16 %v579
    %v3050 = vunpack.c.h.b16 %v579
    %v3051 = vunpack.c.l.b16 %v580
    %v3052 = vunpack.c.h.b16 %v580
    %v3053 = vunpack.c.l.b16 %v581
    %v3054 = vunpack.c.h.b16 %v581
    %v3055 = vunpack.c.l.b16 %v582
    %v3056 = vunpack.c.h.b16 %v582
    %v3057 = vunpack.c.l.b16 %v583
    %v3058 = vunpack.c.h.b16 %v583
    %v3059 = vunpack.c.l.b16 %v584
    %v3060 = vunpack.c.h.b16 %v584
    %v3061 = vunpack.c.l.b16 %v585
    %v3062 = vunpack.c.h.b16 %v585
    %v3063 = vunpack.c.l.b16 %v586
    %v3064 = vunpack.c.h.b16 %v586
    %v3065 = vunpack.c.l.b16 %v587
    %v3066 = vunpack.c.h.b16 %v587
    %v3067 = vunpack.c.l.b16 %v588
    %v3068 = vunpack.c.h.b16 %v588
    %v3069 = vunpack.c.l.b16 %v589
    %v3070 = vunpack.c.h.b16 %v589
    %v3071 = vunpack.c.l.b16 %v590
    %v3072 = vunpack.c.h.b16 %v590
    %v3073 = vunpack.c.l.b16 %v591
    %v3074 = vunpack.c.h.b16 %v591
    %v3075 = vunpack.c.l.b16 %v592
    %v3076 = vunpack.c.h.b16 %v592
    %v3077 = vunpack.c.l.b16 %v593
    %v3078 = vunpack.c.h.b16 %v593
    %v3079 = vunpack.c.l.b16 %v594
    %v3080 = vunpack.c.h.b16 %v594
    %v3081 = vunpack.c.l.b16 %v595
    %v3082 = vunpack.c.h.b16 %v595
    %v3083 = vunpack.c.l.b16 %v596
    %v3084 = vunpack.c.h.b16 %v596
    %v3085 = vunpack.c.l.b16 %v597
    %v3086 = vunpack.c.h.b16 %v597
    %v3087 = vunpack.c.l.b16 %v598
    %v3088 = vunpack.c.h.b16 %v598
    %v3089 = vunpack.c.l.b16 %v599
    %v3090 = vunpack.c.h.b16 %v599
    %v3091 = vunpack.c.l.b16 %v600
    %v3092 = vunpack.c.h.b16 %v600
    %v3093 = vunpack.c.l.b16 %v601
    %v3094 = vunpack.c.h.b16 %v601
    %v3095 = vunpack.c.l.b16 %v602
    %v3096 = vunpack.c.h.b16 %v602
    %v3097 = vunpack.c.l.b16 %v603
    %v3098 = vunpack.c.h.b16 %v603
    %v3099 = vunpack.c.l.b16 %v604
    %v3100 = vunpack.c.h.b16 %v604
    %v3101 = vunpack.c.l.b16 %v605
    %v3102 = vunpack.c.h.b16 %v605
    %v3103 = vunpack.c.l.b16 %v606
    %v3104 = vunpack.c.h.b16 %v606
    %v3105 = vunpack.c.l.b16 %v607
    %v3106 = vunpack.c.h.b16 %v607
    %v3107 = vunpack.c.l.b16 %v608
    %v3108 = vunpack.c.h.b16 %v608
    %v3109 = vunpack.c.l.b16 %v609
    %v3110 = vunpack.c.h.b16 %v609
    %v3111 = vunpack.c.l.b16 %v610
    %v3112 = vunpack.c.h.b16 %v610
    %v3113 = vunpack.c.l.b16 %v611
    %v3114 = vunpack.c.h.b16 %v611
    %v3115 = vunpack.c.l.b16 %v612
    %v3116 = vunpack.c.h.b16 %v612
    %v3117 = vunpack.c.l.b16 %v613
    %v3118 = vunpack.c.h.b16 %v613
    %v3119 = vunpack.c.l.b16 %v614
    %v3120 = vunpack.c.h.b16 %v614
    %v3121 = vunpack.c.l.b16 %v615
    %v3122 = vunpack.c.h.b16 %v615
    %v3123 = vunpack.c.l.b16 %v616
    %v3124 = vunpack.c.h.b16 %v616
    %v3125 = vunpack.c.l.b16 %v617
    %v3126 = vunpack.c.h.b16 %v617
    %v3127 = vunpack.c.l.b16 %v618
    %v3128 = vunpack.c.h.b16 %v618
    %v3129 = vunpack.c.l.b16 %v619
    %v3130 = vunpack.c.h.b16 %v619
    %v3131 = vunpack.c.l.b16 %v620
    %v3132 = vunpack.c.h.b16 %v620
    %v3133 = vunpack.c.l.b16 %v621
    %v3134 = vunpack.c.h.b16 %v621
    %v3135 = vunpack.c.l.b16 %v622
    %v3136 = vunpack.c.h.b16 %v622
    %v3137 = vunpack.c.l.b16 %v623
    %v3138 = vunpack.c.h.b16 %v623
    %v3139 = vunpack.c.l.b16 %v624
    %v3140 = vunpack.c.h.b16 %v624
    %v3141 = vunpack.c.l.b16 %v625
    %v3142 = vunpack.c.h.b16 %v625
    %v3143 = vunpack.c.l.b16 %v626
    %v3144 = vunpack.c.h.b16 %v626
    %v3145 = vunpack.c.l.b16 %v627
    %v3146 = vunpack.c.h.b16 %v627
    %v3147 = vunpack.c.l.b16 %v628
    %v3148 = vunpack.c.h.b16 %v628
    %v3149 = vunpack.c.l.b16 %v629
    %v3150 = vunpack.c.h.b16 %v629
    %v3151 = vunpack.c.l.b16 %v630
    %v3152 = vunpack.c.h.b16 %v630
    %v3153 = vunpack.c.l.b16 %v631
    %v3154 = vunpack.c.h.b16 %v631
    %v3155 = vunpack.c.l.b16 %v632
    %v3156 = vunpack.c.h.b16 %v632
    %v3157 = vunpack.c.l.b16 %v633
    %v3158 = vunpack.c.h.b16 %v633
    %v3159 = vunpack.c.l.b16 %v634
    %v3160 = vunpack.c.h.b16 %v634
    %v3161 = vunpack.c.l.b16 %v635
    %v3162 = vunpack.c.h.b16 %v635
    %v3163 = vunpack.c.l.b16 %v636
    %v3164 = vunpack.c.h.b16 %v636
    %v3165 = vunpack.c.l.b16 %v637
    %v3166 = vunpack.c.h.b16 %v637
    %v3167 = vunpack.c.l.b16 %v638
    %v3168 = vunpack.c.h.b16 %v638
    %v3169 = vunpack.c.l.b16 %v639
    %v3170 = vunpack.c.h.b16 %v639
    %v3171 = vunpack.c.l.b16 %v640
    %v3172 = vunpack.c.h.b16 %v640
    %v3173 = vunpack.c.l.b16 %v641
    %v3174 = vunpack.c.h.b16 %v641
    %v3175 = vunpack.c.l.b16 %v642
    %v3176 = vunpack.c.h.b16 %v642
    %v3177 = vunpack.c.l.b16 %v643
    %v3178 = vunpack.c.h.b16 %v643
    %v3179 = vunpack.c.l.b16 %v644
    %v3180 = vunpack.c.h.b16 %v644
    %v3181 = vunpack.c.l.b16 %v645
    %v3182 = vunpack.c.h.b16 %v645
    %v3183 = vunpack.c.l.b16 %v646
    %v3184 = vunpack.c.h.b16 %v646
    %v3185 = vunpack.c.l.b16 %v647
    %v3186 = vunpack.c.h.b16 %v647
    %v3187 = vunpack.c.l.b16 %v648
    %v3188 = vunpack.c.h.b16 %v648
    %v3189 = vunpack.c.l.b16 %v649
    %v3190 = vunpack.c.h.b16 %v649
    %v3191 = vunpack.c.l.b16 %v650
    %v3192 = vunpack.c.h.b16 %v650
    %v3193 = vunpack.c.l.b16 %v651
    %v3194 = vunpack.c.h.b16 %v651
    %v3195 = vunpack.c.l.b16 %v652
    %v3196 = vunpack.c.h.b16 %v652
    %v3197 = vunpack.c.l.b16 %v653
    %v3198 = vunpack.c.h.b16 %v653
    %v3199 = vunpack.c.l.b16 %v654
    %v3200 = vunpack.c.h.b16 %v654
    %v3201 = vunpack.c.l.b16 %v655
    %v3202 = vunpack.c.h.b16 %v655
    %v3203 = vunpack.c.l.b16 %v656
    %v3204 = vunpack.c.h.b16 %v656
    %v3205 = vunpack.c.l.b16 %v657
    %v3206 = vunpack.c.h.b16 %v657
    %v3207 = vunpack.c.l.b16 %v658
    %v3208 = vunpack.c.h.b16 %v658
    %v3209 = vunpack.c.l.b16 %v659
    %v3210 = vunpack.c.h.b16 %v659
    %v3211 = vunpack.c.l.b16 %v660
    %v3212 = vunpack.c.h.b16 %v660
    %v3213 = vunpack.c.l.b16 %v661
    %v3214 = vunpack.c.h.b16 %v661
    %v3215 = vunpack.c.l.b16 %v662
    %v3216 = vunpack.c.h.b16 %v662
    %v3217 = vunpack.c.l.b16 %v663
    %v3218 = vunpack.c.h.b16 %v663
    %v3219 = vunpack.c.l.b16 %v664
    %v3220 = vunpack.c.h.b16 %v664
    %v3221 = vunpack.c.l.b16 %v665
    %v3222 = vunpack.c.h.b16 %v665
    %v3223 = vunpack.c.l.b16 %v666
    %v3224 = vunpack.c.h.b16 %v666
    %v3225 = vunpack.c.l.b16 %v667
    %v3226 = vunpack.c.h.b16 %v667
    %v3227 = vunpack.c.l.b16 %v668
    %v3228 = vunpack.c.h.b16 %v668
    %v3229 = vunpack.c.l.b16 %v669
    %v3230 = vunpack.c.h.b16 %v669
    %v3231 = vunpack.c.l.b16 %v670
    %v3232 = vunpack.c.h.b16 %v670
    %v3233 = vunpack.c.l.b16 %v671
    %v3234 = vunpack.c.h.b16 %v671
    %v3235 = vunpack.c.l.b16 %v672
    %v3236 = vunpack.c.h.b16 %v672
    %v3237 = vunpack.c.l.b16 %v673
    %v3238 = vunpack.c.h.b16 %v673
    %v3239 = vunpack.c.l.b16 %v674
    %v3240 = vunpack.c.h.b16 %v674
    %v3241 = vunpack.c.l.b16 %v675
    %v3242 = vunpack.c.h.b16 %v675
    %v3243 = vunpack.c.l.b16 %v676
    %v3244 = vunpack.c.h.b16 %v676
    %v3245 = vunpack.c.l.b16 %v677
    %v3246 = vunpack.c.h.b16 %v677
    %v3247 = vunpack.c.l.b16 %v678
    %v3248 = vunpack.c.h.b16 %v678
    %v3249 = vunpack.c.l.b16 %v679
    %v3250 = vunpack.c.h.b16 %v679
    %v3251 = vunpack.c.l.b16 %v680
    %v3252 = vunpack.c.h.b16 %v680
    %v3253 = vunpack.c.l.b16 %v681
    %v3254 = vunpack.c.h.b16 %v681
    %v3255 = vunpack.c.l.b16 %v682
    %v3256 = vunpack.c.h.b16 %v682
    %v3257 = vunpack.c.l.b16 %v683
    %v3258 = vunpack.c.h.b16 %v683
    %v3259 = vunpack.c.l.b16 %v684
    %v3260 = vunpack.c.h.b16 %v684
    %v3261 = vunpack.c.l.b16 %v685
    %v3262 = vunpack.c.h.b16 %v685
    %v3263 = vunpack.c.l.b16 %v686
    %v3264 = vunpack.c.h.b16 %v686
    %v3265 = vunpack.c.l.b16 %v687
    %v3266 = vunpack.c.h.b16 %v687
    %v3267 = vunpack.c.l.b16 %v688
    %v3268 = vunpack.c.h.b16 %v688
    %v3269 = vunpack.c.l.b16 %v689
    %v3270 = vunpack.c.h.b16 %v689
    %v3271 = vunpack.c.l.b16 %v690
    %v3272 = vunpack.c.h.b16 %v690
    %v3273 = vunpack.c.l.b16 %v691
    %v3274 = vunpack.c.h.b16 %v691
    %v3275 = vunpack.c.l.b16 %v692
    %v3276 = vunpack.c.h.b16 %v692
    %v3277 = vunpack.c.l.b16 %v693
    %v3278 = vunpack.c.h.b16 %v693
    %v3279 = vunpack.c.l.b16 %v694
    %v3280 = vunpack.c.h.b16 %v694
    %v3281 = vunpack.c.l.b16 %v695
    %v3282 = vunpack.c.h.b16 %v695
    %v3283 = vunpack.c.l.b16 %v696
    %v3284 = vunpack.c.h.b16 %v696
    %v3285 = vunpack.c.l.b16 %v697
    %v3286 = vunpack.c.h.b16 %v697
    %v3287 = vunpack.c.l.b16 %v698
    %v3288 = vunpack.c.h.b16 %v698
    %v3289 = vunpack.c.l.b16 %v699
    %v3290 = vunpack.c.h.b16 %v699
    %v3291 = vunpack.c.l.b16 %v700
    %v3292 = vunpack.c.h.b16 %v700
    %v3293 = vunpack.c.l.b16 %v701
    %v3294 = vunpack.c.h.b16 %v701
    %v3295 = vunpack.c.l.b16 %v702
    %v3296 = vunpack.c.h.b16 %v702
    %v3297 = vunpack.c.l.b16 %v703
    %v3298 = vunpack.c.h.b16 %v703
    %v3299 = vunpack.c.l.b16 %v704
    %v3300 = vunpack.c.h.b16 %v704
    %v3301 = vunpack.c.l.b16 %v705
    %v3302 = vunpack.c.h.b16 %v705
    %v3303 = vunpack.c.l.b16 %v706
    %v3304 = vunpack.c.h.b16 %v706
    %v3305 = vunpack.c.l.b16 %v707
    %v3306 = vunpack.c.h.b16 %v707
    %v3307 = vunpack.c.l.b16 %v708
    %v3308 = vunpack.c.h.b16 %v708
    %v3309 = vunpack.c.l.b16 %v709
    %v3310 = vunpack.c.h.b16 %v709
    %v3311 = vunpack.c.l.b16 %v710
    %v3312 = vunpack.c.h.b16 %v710
    %v3313 = vunpack.c.l.b16 %v711
    %v3314 = vunpack.c.h.b16 %v711
    %v3315 = vunpack.c.l.b16 %v712
    %v3316 = vunpack.c.h.b16 %v712
    %v3317 = vunpack.c.l.b16 %v713
    %v3318 = vunpack.c.h.b16 %v713
    %v3319 = vunpack.c.l.b16 %v714
    %v3320 = vunpack.c.h.b16 %v714
    %v3321 = vunpack.c.l.b16 %v715
    %v3322 = vunpack.c.h.b16 %v715
    %v3323 = vunpack.c.l.b16 %v716
    %v3324 = vunpack.c.h.b16 %v716
    %v3325 = vunpack.c.l.b16 %v717
    %v3326 = vunpack.c.h.b16 %v717
    %v3327 = vunpack.c.l.b16 %v718
    %v3328 = vunpack.c.h.b16 %v718
    %v3329 = vunpack.c.l.b16 %v719
    %v3330 = vunpack.c.h.b16 %v719
    %v3331 = vunpack.c.l.b16 %v720
    %v3332 = vunpack.c.h.b16 %v720
    %v3333 = vunpack.c.l.b16 %v721
    %v3334 = vunpack.c.h.b16 %v721
    %v3335 = vunpack.c.l.b16 %v722
    %v3336 = vunpack.c.h.b16 %v722
    %v3337 = vunpack.c.l.b16 %v723
    %v3338 = vunpack.c.h.b16 %v723
    %v3339 = vunpack.c.l.b16 %v724
    %v3340 = vunpack.c.h.b16 %v724
    %v3341 = vunpack.c.l.b16 %v725
    %v3342 = vunpack.c.h.b16 %v725
    %v3343 = vunpack.c.l.b16 %v726
    %v3344 = vunpack.c.h.b16 %v726
    %v3345 = vunpack.c.l.b16 %v727
    %v3346 = vunpack.c.h.b16 %v727
    %v3347 = vunpack.c.l.b16 %v728
    %v3348 = vunpack.c.h.b16 %v728
    %v3349 = vunpack.c.l.b16 %v729
    %v3350 = vunpack.c.h.b16 %v729
    %v3351 = vunpack.c.l.b16 %v730
    %v3352 = vunpack.c.h.b16 %v730
    %v3353 = vunpack.c.l.b16 %v731
    %v3354 = vunpack.c.h.b16 %v731
    %v3355 = vunpack.c.l.b16 %v732
    %v3356 = vunpack.c.h.b16 %v732
    %v3357 = vunpack.c.l.b16 %v733
    %v3358 = vunpack.c.h.b16 %v733
    %v3359 = vunpack.c.l.b16 %v734
    %v3360 = vunpack.c.h.b16 %v734
    %v3361 = vunpack.c.l.b16 %v735
    %v3362 = vunpack.c.h.b16 %v735
    %v3363 = vunpack.c.l.b16 %v736
    %v3364 = vunpack.c.h.b16 %v736
    %v3365 = vunpack.c.l.b16 %v737
    %v3366 = vunpack.c.h.b16 %v737
    %v3367 = vunpack.c.l.b16 %v738
    %v3368 = vunpack.c.h.b16 %v738
    %v3369 = vunpack.c.l.b16 %v739
    %v3370 = vunpack.c.h.b16 %v739
    %v3371 = vunpack.c.l.b16 %v740
    %v3372 = vunpack.c.h.b16 %v740
    %v3373 = vunpack.c.l.b16 %v741
    %v3374 = vunpack.c.h.b16 %v741
    %v3375 = vunpack.c.l.b16 %v742
    %v3376 = vunpack.c.h.b16 %v742
    %v3377 = vunpack.c.l.b16 %v743
    %v3378 = vunpack.c.h.b16 %v743
    %v3379 = vunpack.c.l.b16 %v744
    %v3380 = vunpack.c.h.b16 %v744
    %v3381 = vunpack.c.l.b16 %v745
    %v3382 = vunpack.c.h.b16 %v745
    %v3383 = vunpack.c.l.b16 %v746
    %v3384 = vunpack.c.h.b16 %v746
    %v3385 = vunpack.c.l.b16 %v747
    %v3386 = vunpack.c.h.b16 %v747
    %v3387 = vunpack.c.l.b16 %v748
    %v3388 = vunpack.c.h.b16 %v748
    %v3389 = vunpack.c.l.b16 %v749
    %v3390 = vunpack.c.h.b16 %v749
    %v3391 = vunpack.c.l.b16 %v750
    %v3392 = vunpack.c.h.b16 %v750
    %v3393 = vunpack.c.l.b16 %v751
    %v3394 = vunpack.c.h.b16 %v751
    %v3395 = vunpack.c.l.b16 %v752
    %v3396 = vunpack.c.h.b16 %v752
    %v3397 = vunpack.c.l.b16 %v753
    %v3398 = vunpack.c.h.b16 %v753
    %v3399 = vunpack.c.l.b16 %v754
    %v3400 = vunpack.c.h.b16 %v754
    %v3401 = vunpack.c.l.b16 %v755
    %v3402 = vunpack.c.h.b16 %v755
    %v3403 = vunpack.c.l.b16 %v756
    %v3404 = vunpack.c.h.b16 %v756
    %v3405 = vunpack.c.l.b16 %v757
    %v3406 = vunpack.c.h.b16 %v757
    %v3407 = vunpack.c.l.b16 %v758
    %v3408 = vunpack.c.h.b16 %v758
    %v3409 = vunpack.c.l.b16 %v759
    %v3410 = vunpack.c.h.b16 %v759
    %v3411 = vunpack.c.l.b16 %v760
    %v3412 = vunpack.c.h.b16 %v760
    %v3413 = vunpack.c.l.b16 %v761
    %v3414 = vunpack.c.h.b16 %v761
    %v3415 = vunpack.c.l.b16 %v762
    %v3416 = vunpack.c.h.b16 %v762
    %v3417 = vunpack.c.l.b16 %v763
    %v3418 = vunpack.c.h.b16 %v763
    %v3419 = vunpack.c.l.b16 %v764
    %v3420 = vunpack.c.h.b16 %v764
    %v3421 = vunpack.c.l.b16 %v765
    %v3422 = vunpack.c.h.b16 %v765
    %v3423 = vunpack.c.l.b16 %v766
    %v3424 = vunpack.c.h.b16 %v766
    %v3425 = vunpack.c.l.b16 %v767
    %v3426 = vunpack.c.h.b16 %v767
    %v3427 = vunpack.c.l.b16 %v768
    %v3428 = vunpack.c.h.b16 %v768
    %v3429 = vunpack.c.l.b16 %v769
    %v3430 = vunpack.c.h.b16 %v769
    %v3431 = vunpack.c.l.b16 %v770
    %v3432 = vunpack.c.h.b16 %v770
    %v3433 = vunpack.c.l.b16 %v771
    %v3434 = vunpack.c.h.b16 %v771
    %v3435 = vunpack.c.l.b16 %v772
    %v3436 = vunpack.c.h.b16 %v772
    %v3437 = vunpack.c.l.b16 %v773
    %v3438 = vunpack.c.h.b16 %v773
    %v3439 = vunpack.c.l.b16 %v774
    %v3440 = vunpack.c.h.b16 %v774
    %v3441 = vunpack.c.l.b16 %v775
    %v3442 = vunpack.c.h.b16 %v775
    %v3443 = vunpack.c.l.b16 %v776
    %v3444 = vunpack.c.h.b16 %v776
    %v3445 = vunpack.c.l.b16 %v777
    %v3446 = vunpack.c.h.b16 %v777
    %v3447 = vunpack.c.l.b16 %v778
    %v3448 = vunpack.c.h.b16 %v778
    %v3449 = vunpack.c.l.b16 %v779
    %v3450 = vunpack.c.h.b16 %v779
    %v3451 = vunpack.c.l.b16 %v780
    %v3452 = vunpack.c.h.b16 %v780
    %v3453 = vunpack.c.l.b16 %v781
    %v3454 = vunpack.c.h.b16 %v781
    %v3455 = vunpack.c.l.b16 %v782
    %v3456 = vunpack.c.h.b16 %v782
    %v3457 = vunpack.c.l.b16 %v783
    %v3458 = vunpack.c.h.b16 %v783
    %v3459 = vunpack.c.l.b16 %v784
    %v3460 = vunpack.c.h.b16 %v784
    %v3461 = vunpack.c.l.b16 %v785
    %v3462 = vunpack.c.h.b16 %v785
    %v3463 = vunpack.c.l.b16 %v786
    %v3464 = vunpack.c.h.b16 %v786
    %v3465 = vunpack.c.l.b16 %v787
    %v3466 = vunpack.c.h.b16 %v787
    %v3467 = vunpack.c.l.b16 %v788
    %v3468 = vunpack.c.h.b16 %v788
    %v3469 = vunpack.c.l.b16 %v789
    %v3470 = vunpack.c.h.b16 %v789
    %v3471 = vunpack.c.l.b16 %v790
    %v3472 = vunpack.c.h.b16 %v790
    %v3473 = vunpack.c.l.b16 %v791
    %v3474 = vunpack.c.h.b16 %v791
    %v3475 = vunpack.c.l.b16 %v792
    %v3476 = vunpack.c.h.b16 %v792
    %v3477 = vunpack.c.l.b16 %v793
    %v3478 = vunpack.c.h.b16 %v793
    %v3479 = vunpack.c.l.b16 %v794
    %v3480 = vunpack.c.h.b16 %v794
    %v3481 = vunpack.c.l.b16 %v795
    %v3482 = vunpack.c.h.b16 %v795
    %v3483 = vunpack.c.l.b16 %v796
    %v3484 = vunpack.c.h.b16 %v796
    %v3485 = vunpack.c.l.b16 %v797
    %v3486 = vunpack.c.h.b16 %v797
    %v3487 = vunpack.c.l.b16 %v798
    %v3488 = vunpack.c.h.b16 %v798
    %v3489 = vunpack.c.l.b16 %v799
    %v3490 = vunpack.c.h.b16 %v799
    %v3491 = vunpack.c.l.b16 %v800
    %v3492 = vunpack.c.h.b16 %v800
    %v3493 = vunpack.c.l.b16 %v801
    %v3494 = vunpack.c.h.b16 %v801
    %v3495 = vunpack.c.l.b16 %v802
    %v3496 = vunpack.c.h.b16 %v802
    %v3497 = vunpack.c.l.b16 %v803
    %v3498 = vunpack.c.h.b16 %v803
    %v3499 = vunpack.c.l.b16 %v804
    %v3500 = vunpack.c.h.b16 %v804
    %v3501 = vunpack.c.l.b16 %v805
    %v3502 = vunpack.c.h.b16 %v805
    %v3503 = vunpack.c.l.b16 %v806
    %v3504 = vunpack.c.h.b16 %v806
    %v3505 = vunpack.c.l.b16 %v807
    %v3506 = vunpack.c.h.b16 %v807
    %v3507 = vunpack.c.l.b16 %v808
    %v3508 = vunpack.c.h.b16 %v808
    %v3509 = vunpack.c.l.b16 %v809
    %v3510 = vunpack.c.h.b16 %v809
    %v3511 = vunpack.c.l.b16 %v810
    %v3512 = vunpack.c.h.b16 %v810
    %v3513 = vunpack.c.l.b16 %v811
    %v3514 = vunpack.c.h.b16 %v811
    %v3515 = vunpack.c.l.b16 %v812
    %v3516 = vunpack.c.h.b16 %v812
    %v3517 = vunpack.c.l.b16 %v813
    %v3518 = vunpack.c.h.b16 %v813
    %v3519 = vunpack.c.l.b16 %v814
    %v3520 = vunpack.c.h.b16 %v814
    %v3521 = vunpack.c.l.b16 %v815
    %v3522 = vunpack.c.h.b16 %v815
    %v3523 = vunpack.c.l.b16 %v816
    %v3524 = vunpack.c.h.b16 %v816
    %v3525 = vunpack.c.l.b16 %v817
    %v3526 = vunpack.c.h.b16 %v817
    %v3527 = vunpack.c.l.b16 %v818
    %v3528 = vunpack.c.h.b16 %v818
    %v3529 = vunpack.c.l.b16 %v819
    %v3530 = vunpack.c.h.b16 %v819
    %v3531 = vunpack.c.l.b16 %v820
    %v3532 = vunpack.c.h.b16 %v820
    %v3533 = vunpack.c.l.b16 %v821
    %v3534 = vunpack.c.h.b16 %v821
    %v3535 = vunpack.c.l.b16 %v822
    %v3536 = vunpack.c.h.b16 %v822
    %v3537 = vunpack.c.l.b16 %v823
    %v3538 = vunpack.c.h.b16 %v823
    %v3539 = vunpack.c.l.b16 %v824
    %v3540 = vunpack.c.h.b16 %v824
    %v3541 = vunpack.c.l.b16 %v825
    %v3542 = vunpack.c.h.b16 %v825
    %v3543 = vunpack.c.l.b16 %v826
    %v3544 = vunpack.c.h.b16 %v826
    %v3545 = vunpack.c.l.b16 %v827
    %v3546 = vunpack.c.h.b16 %v827
    %v3547 = vunpack.c.l.b16 %v828
    %v3548 = vunpack.c.h.b16 %v828
    %v3549 = vunpack.c.l.b16 %v829
    %v3550 = vunpack.c.h.b16 %v829
    %v3551 = vunpack.c.l.b16 %v830
    %v3552 = vunpack.c.h.b16 %v830
    %v3553 = vunpack.c.l.b16 %v831
    %v3554 = vunpack.c.h.b16 %v831
    %v3555 = vunpack.c.l.b16 %v832
    %v3556 = vunpack.c.h.b16 %v832
    %v3557 = vunpack.c.l.b16 %v833
    %v3558 = vunpack.c.h.b16 %v833
    %v3559 = vunpack.c.l.b16 %v834
    %v3560 = vunpack.c.h.b16 %v834
    %v3561 = vunpack.c.l.b16 %v835
    %v3562 = vunpack.c.h.b16 %v835
    %v3563 = vunpack.c.l.b16 %v836
    %v3564 = vunpack.c.h.b16 %v836
    %v3565 = vunpack.c.l.b16 %v837
    %v3566 = vunpack.c.h.b16 %v837
    %v3567 = vunpack.c.l.b16 %v838
    %v3568 = vunpack.c.h.b16 %v838
    %v3569 = vunpack.c.l.b16 %v839
    %v3570 = vunpack.c.h.b16 %v839
    %v3571 = vunpack.c.l.b16 %v840
    %v3572 = vunpack.c.h.b16 %v840
    %v3573 = vunpack.c.l.b16 %v841
    %v3574 = vunpack.c.h.b16 %v841
    %v3575 = vunpack.c.l.b16 %v842
    %v3576 = vunpack.c.h.b16 %v842
    %v3577 = vunpack.c.l.b16 %v843
    %v3578 = vunpack.c.h.b16 %v843
    %v3579 = vunpack.c.l.b16 %v844
    %v3580 = vunpack.c.h.b16 %v844
    %v3581 = vunpack.c.l.b16 %v845
    %v3582 = vunpack.c.h.b16 %v845
    %v3583 = vunpack.c.l.b16 %v846
    %v3584 = vunpack.c.h.b16 %v846
    %v3585 = vunpack.c.l.b16 %v847
    %v3586 = vunpack.c.h.b16 %v847
    %v3587 = vunpack.c.l.b16 %v848
    %v3588 = vunpack.c.h.b16 %v848
    %v3589 = vunpack.c.l.b16 %v849
    %v3590 = vunpack.c.h.b16 %v849
    %v3591 = vunpack.c.l.b16 %v850
    %v3592 = vunpack.c.h.b16 %v850
    %v3593 = vunpack.c.l.b16 %v851
    %v3594 = vunpack.c.h.b16 %v851
    %v3595 = vunpack.c.l.b16 %v852
    %v3596 = vunpack.c.h.b16 %v852
    %v3597 = vunpack.c.l.b16 %v853
    %v3598 = vunpack.c.h.b16 %v853
    %v3599 = vunpack.c.l.b16 %v854
    %v3600 = vunpack.c.h.b16 %v854
    %v3601 = vunpack.c.l.b16 %v855
    %v3602 = vunpack.c.h.b16 %v855
    %v3603 = vunpack.c.l.b16 %v856
    %v3604 = vunpack.c.h.b16 %v856
    %v3605 = vunpack.c.l.b16 %v857
    %v3606 = vunpack.c.h.b16 %v857
    %v3607 = vunpack.c.l.b16 %v858
    %v3608 = vunpack.c.h.b16 %v858
    %v3609 = vunpack.c.l.b16 %v859
    %v3610 = vunpack.c.h.b16 %v859
    %v3611 = vunpack.c.l.b16 %v860
    %v3612 = vunpack.c.h.b16 %v860
    %v3613 = vunpack.c.l.b16 %v861
    %v3614 = vunpack.c.h.b16 %v861
    %v3615 = vunpack.c.l.b16 %v862
    %v3616 = vunpack.c.h.b16 %v862
    %v3617 = vunpack.c.l.b16 %v863
    %v3618 = vunpack.c.h.b16 %v863
    %v3619 = vunpack.c.l.b16 %v864
    %v3620 = vunpack.c.h.b16 %v864
    %v3621 = vunpack.c.l.b16 %v865
    %v3622 = vunpack.c.h.b16 %v865
    %v3623 = vunpack.c.l.b16 %v866
    %v3624 = vunpack.c.h.b16 %v866
    %v3625 = vunpack.c.l.b16 %v867
    %v3626 = vunpack.c.h.b16 %v867
    %v3627 = vunpack.c.l.b16 %v868
    %v3628 = vunpack.c.h.b16 %v868
    %v3629 = vunpack.c.l.b16 %v869
    %v3630 = vunpack.c.h.b16 %v869
    %v3631 = vunpack.c.l.b16 %v870
    %v3632 = vunpack.c.h.b16 %v870
    %v3633 = vunpack.c.l.b16 %v871
    %v3634 = vunpack.c.h.b16 %v871
    %v3635 = vunpack.c.l.b16 %v872
    %v3636 = vunpack.c.h.b16 %v872
    %v3637 = vunpack.c.l.b16 %v873
    %v3638 = vunpack.c.h.b16 %v873
    %v3639 = vunpack.c.l.b16 %v874
    %v3640 = vunpack.c.h.b16 %v874
    %v3641 = vunpack.c.l.b16 %v875
    %v3642 = vunpack.c.h.b16 %v875
    %v3643 = vunpack.c.l.b16 %v876
    %v3644 = vunpack.c.h.b16 %v876
    %v3645 = vunpack.c.l.b16 %v877
    %v3646 = vunpack.c.h.b16 %v877
    %v3647 = vunpack.c.l.b16 %v878
    %v3648 = vunpack.c.h.b16 %v878
    %v3649 = vunpack.c.l.b16 %v879
    %v3650 = vunpack.c.h.b16 %v879
    %v3651 = vunpack.c.l.b16 %v880
    %v3652 = vunpack.c.h.b16 %v880
    %v3653 = vunpack.c.l.b16 %v881
    %v3654 = vunpack.c.h.b16 %v881
    %v3655 = vunpack.c.l.b16 %v882
    %v3656 = vunpack.c.h.b16 %v882
    %v3657 = vunpack.c.l.b16 %v883
    %v3658 = vunpack.c.h.b16 %v883
    %v3659 = vunpack.c.l.b16 %v884
    %v3660 = vunpack.c.h.b16 %v884
    %v3661 = vunpack.c.l.b16 %v885
    %v3662 = vunpack.c.h.b16 %v885
    %v3663 = vunpack.c.l.b16 %v886
    %v3664 = vunpack.c.h.b16 %v886
    %v3665 = vunpack.c.l.b16 %v887
    %v3666 = vunpack.c.h.b16 %v887
    %v3667 = vunpack.c.l.b16 %v888
    %v3668 = vunpack.c.h.b16 %v888
    %v3669 = vunpack.c.l.b16 %v889
    %v3670 = vunpack.c.h.b16 %v889
    %v3671 = vunpack.c.l.b16 %v890
    %v3672 = vunpack.c.h.b16 %v890
    %v3673 = vunpack.c.l.b16 %v891
    %v3674 = vunpack.c.h.b16 %v891
    %v3675 = vunpack.c.l.b16 %v892
    %v3676 = vunpack.c.h.b16 %v892
    %v3677 = vunpack.c.l.b16 %v893
    %v3678 = vunpack.c.h.b16 %v893
    %v3679 = vunpack.c.l.b16 %v894
    %v3680 = vunpack.c.h.b16 %v894
    %v3681 = vunpack.c.l.b16 %v895
    %v3682 = vunpack.c.h.b16 %v895
    %v3683 = vunpack.c.l.b16 %v896
    %v3684 = vunpack.c.h.b16 %v896
    %v3685 = vunpack.c.l.b16 %v897
    %v3686 = vunpack.c.h.b16 %v897
    %v3687 = vunpack.c.l.b16 %v898
    %v3688 = vunpack.c.h.b16 %v898
    %v3689 = vunpack.c.l.b16 %v899
    %v3690 = vunpack.c.h.b16 %v899
    %v3691 = vunpack.c.l.b16 %v900
    %v3692 = vunpack.c.h.b16 %v900
    %v3693 = vunpack.c.l.b16 %v901
    %v3694 = vunpack.c.h.b16 %v901
    %v3695 = vunpack.c.l.b16 %v902
    %v3696 = vunpack.c.h.b16 %v902
    %v3697 = vunpack.c.l.b16 %v903
    %v3698 = vunpack.c.h.b16 %v903
    %v3699 = vunpack.c.l.b16 %v904
    %v3700 = vunpack.c.h.b16 %v904
    %v3701 = vunpack.c.l.b16 %v905
    %v3702 = vunpack.c.h.b16 %v905
    %v3703 = vunpack.c.l.b16 %v906
    %v3704 = vunpack.c.h.b16 %v906
    %v3705 = vunpack.c.l.b16 %v907
    %v3706 = vunpack.c.h.b16 %v907
    %v3707 = vunpack.c.l.b16 %v908
    %v3708 = vunpack.c.h.b16 %v908
    %v3709 = vunpack.c.l.b16 %v909
    %v3710 = vunpack.c.h.b16 %v909
    %v3711 = vunpack.c.l.b16 %v910
    %v3712 = vunpack.c.h.b16 %v910
    %v3713 = vunpack.c.l.b16 %v911
    %v3714 = vunpack.c.h.b16 %v911
    %v3715 = vunpack.c.l.b16 %v912
    %v3716 = vunpack.c.h.b16 %v912
    %v3717 = vunpack.c.l.b16 %v913
    %v3718 = vunpack.c.h.b16 %v913
    %v3719 = vunpack.c.l.b16 %v914
    %v3720 = vunpack.c.h.b16 %v914
    %v3721 = vunpack.c.l.b16 %v915
    %v3722 = vunpack.c.h.b16 %v915
    %v3723 = vunpack.c.l.b16 %v916
    %v3724 = vunpack.c.h.b16 %v916
    %v3725 = vunpack.c.l.b16 %v917
    %v3726 = vunpack.c.h.b16 %v917
    %v3727 = vunpack.c.l.b16 %v918
    %v3728 = vunpack.c.h.b16 %v918
    %v3729 = vunpack.c.l.b16 %v919
    %v3730 = vunpack.c.h.b16 %v919
    %v3731 = vunpack.c.l.b16 %v920
    %v3732 = vunpack.c.h.b16 %v920
    %v3733 = vunpack.c.l.b16 %v921
    %v3734 = vunpack.c.h.b16 %v921
    %v3735 = vunpack.c.l.b16 %v922
    %v3736 = vunpack.c.h.b16 %v922
    %v3737 = vunpack.c.l.b16 %v923
    %v3738 = vunpack.c.h.b16 %v923
    %v3739 = vunpack.c.l.b16 %v924
    %v3740 = vunpack.c.h.b16 %v924
    %v3741 = vunpack.c.l.b16 %v925
    %v3742 = vunpack.c.h.b16 %v925
    %v3743 = vunpack.c.l.b16 %v926
    %v3744 = vunpack.c.h.b16 %v926
    %v3745 = vunpack.c.l.b16 %v927
    %v3746 = vunpack.c.h.b16 %v927
    %v3747 = vunpack.c.l.b16 %v928
    %v3748 = vunpack.c.h.b16 %v928
    %v3749 = vunpack.c.l.b16 %v929
    %v3750 = vunpack.c.h.b16 %v929
    %v3751 = vunpack.c.l.b16 %v930
    %v3752 = vunpack.c.h.b16 %v930
    %v3753 = vunpack.c.l.b16 %v931
    %v3754 = vunpack.c.h.b16 %v931
    %v3755 = vunpack.c.l.b16 %v932
    %v3756 = vunpack.c.h.b16 %v932
    %v3757 = vunpack.c.l.b16 %v933
    %v3758 = vunpack.c.h.b16 %v933
    %v3759 = vunpack.c.l.b16 %v934
    %v3760 = vunpack.c.h.b16 %v934
    %v3761 = vunpack.c.l.b16 %v935
    %v3762 = vunpack.c.h.b16 %v935
    %v3763 = vunpack.c.l.b16 %v936
    %v3764 = vunpack.c.h.b16 %v936
    %v3765 = vunpack.c.l.b16 %v937
    %v3766 = vunpack.c.h.b16 %v937
    %v3767 = vunpack.c.l.b16 %v938
    %v3768 = vunpack.c.h.b16 %v938
    %v3769 = vunpack.c.l.b16 %v939
    %v3770 = vunpack.c.h.b16 %v939
    %v3771 = vunpack.c.l.b16 %v940
    %v3772 = vunpack.c.h.b16 %v940
    %v3773 = vunpack.c.l.b16 %v941
    %v3774 = vunpack.c.h.b16 %v941
    %v3775 = vunpack.c.l.b16 %v942
    %v3776 = vunpack.c.h.b16 %v942
    %v3777 = vunpack.c.l.b16 %v943
    %v3778 = vunpack.c.h.b16 %v943
    %v3779 = vunpack.c.l.b16 %v944
    %v3780 = vunpack.c.h.b16 %v944
    %v3781 = vunpack.c.l.b16 %v945
    %v3782 = vunpack.c.h.b16 %v945
    %v3783 = vunpack.c.l.b16 %v946
    %v3784 = vunpack.c.h.b16 %v946
    %v3785 = vunpack.c.l.b16 %v947
    %v3786 = vunpack.c.h.b16 %v947
    %v3787 = vunpack.c.l.b16 %v948
    %v3788 = vunpack.c.h.b16 %v948
    %v3789 = vunpack.c.l.b16 %v949
    %v3790 = vunpack.c.h.b16 %v949
    %v3791 = vunpack.c.l.b16 %v950
    %v3792 = vunpack.c.h.b16 %v950
    %v3793 = vunpack.c.l.b16 %v951
    %v3794 = vunpack.c.h.b16 %v951
    %v3795 = vunpack.c.l.b16 %v952
    %v3796 = vunpack.c.h.b16 %v952
    %v3797 = vunpack.c.l.b16 %v953
    %v3798 = vunpack.c.h.b16 %v953
    %v3799 = vunpack.c.l.b16 %v954
    %v3800 = vunpack.c.h.b16 %v954
    %v3801 = vunpack.c.l.b16 %v955
    %v3802 = vunpack.c.h.b16 %v955
    %v3803 = vunpack.c.l.b16 %v956
    %v3804 = vunpack.c.h.b16 %v956
    %v3805 = vunpack.c.l.b16 %v957
    %v3806 = vunpack.c.h.b16 %v957
    %v3807 = vunpack.c.l.b16 %v958
    %v3808 = vunpack.c.h.b16 %v958
    %v3809 = vunpack.c.l.b16 %v959
    %v3810 = vunpack.c.h.b16 %v959
    %v3811 = vunpack.c.l.b16 %v960
    %v3812 = vunpack.c.h.b16 %v960
    %v3813 = vunpack.c.l.b16 %v961
    %v3814 = vunpack.c.h.b16 %v961
    %v3815 = vunpack.c.l.b16 %v962
    %v3816 = vunpack.c.h.b16 %v962
    %v3817 = vunpack.c.l.b16 %v963
    %v3818 = vunpack.c.h.b16 %v963
    %v3819 = vunpack.c.l.b16 %v964
    %v3820 = vunpack.c.h.b16 %v964
    %v3821 = vunpack.c.l.b16 %v965
    %v3822 = vunpack.c.h.b16 %v965
    %v3823 = vunpack.c.l.b16 %v966
    %v3824 = vunpack.c.h.b16 %v966
    %v3825 = vunpack.c.l.b16 %v967
    %v3826 = vunpack.c.h.b16 %v967
    %v3827 = vunpack.c.l.b16 %v968
    %v3828 = vunpack.c.h.b16 %v968
    %v3829 = vunpack.c.l.b16 %v969
    %v3830 = vunpack.c.h.b16 %v969
    %v3831 = vunpack.c.l.b16 %v970
    %v3832 = vunpack.c.h.b16 %v970
    %v3833 = vunpack.c.l.b16 %v971
    %v3834 = vunpack.c.h.b16 %v971
    %v3835 = vunpack.c.l.b16 %v972
    %v3836 = vunpack.c.h.b16 %v972
    %v3837 = vunpack.c.l.b16 %v973
    %v3838 = vunpack.c.h.b16 %v973
    %v3839 = vunpack.c.l.b16 %v974
    %v3840 = vunpack.c.h.b16 %v974
    %v3841 = vunpack.c.l.b16 %v975
    %v3842 = vunpack.c.h.b16 %v975
    %v3843 = vunpack.c.l.b16 %v976
    %v3844 = vunpack.c.h.b16 %v976
    %v3845 = vunpack.c.l.b16 %v977
    %v3846 = vunpack.c.h.b16 %v977
    %v3847 = vunpack.c.l.b16 %v978
    %v3848 = vunpack.c.h.b16 %v978
    %v3849 = vunpack.c.l.b16 %v979
    %v3850 = vunpack.c.h.b16 %v979
    %v3851 = vunpack.c.l.b16 %v980
    %v3852 = vunpack.c.h.b16 %v980
    %v3853 = vunpack.c.l.b16 %v981
    %v3854 = vunpack.c.h.b16 %v981
    %v3855 = vunpack.c.l.b16 %v982
    %v3856 = vunpack.c.h.b16 %v982
    %v3857 = vunpack.c.l.b16 %v983
    %v3858 = vunpack.c.h.b16 %v983
    %v3859 = vunpack.c.l.b16 %v984
    %v3860 = vunpack.c.h.b16 %v984
    %v3861 = vunpack.c.l.b16 %v985
    %v3862 = vunpack.c.h.b16 %v985
    %v3863 = vunpack.c.l.b16 %v986
    %v3864 = vunpack.c.h.b16 %v986
    %v3865 = vunpack.c.l.b16 %v987
    %v3866 = vunpack.c.h.b16 %v987
    %v3867 = vunpack.c.l.b16 %v988
    %v3868 = vunpack.c.h.b16 %v988
    %v3869 = vunpack.c.l.b16 %v989
    %v3870 = vunpack.c.h.b16 %v989
    %v3871 = vunpack.c.l.b16 %v990
    %v3872 = vunpack.c.h.b16 %v990
    %v3873 = vunpack.c.l.b16 %v991
    %v3874 = vunpack.c.h.b16 %v991
    %v3875 = vunpack.c.l.b16 %v992
    %v3876 = vunpack.c.h.b16 %v992
    %v3877 = vunpack.c.l.b16 %v993
    %v3878 = vunpack.c.h.b16 %v993
    %v3879 = vunpack.c.l.b16 %v994
    %v3880 = vunpack.c.h.b16 %v994
    %v3881 = vunpack.c.l.b16 %v995
    %v3882 = vunpack.c.h.b16 %v995
    %v3883 = vunpack.c.l.b16 %v996
    %v3884 = vunpack.c.h.b16 %v996
    %v3885 = vunpack.c.l.b16 %v997
    %v3886 = vunpack.c.h.b16 %v997
    %v3887 = vunpack.c.l.b16 %v998
    %v3888 = vunpack.c.h.b16 %v998
    %v3889 = vunpack.c.l.b16 %v999
    %v3890 = vunpack.c.h.b16 %v999
    %v3891 = vunpack.c.l.b16 %v1000
    %v3892 = vunpack.c.h.b16 %v1000
    %v3893 = vunpack.c.l.b16 %v1001
    %v3894 = vunpack.c.h.b16 %v1001
    %v3895 = vunpack.c.l.b16 %v1002
    %v3896 = vunpack.c.h.b16 %v1002
    %v3897 = vunpack.c.l.b16 %v1003
    %v3898 = vunpack.c.h.b16 %v1003
    %v3899 = vunpack.c.l.b16 %v1004
    %v3900 = vunpack.c.h.b16 %v1004
    %v3901 = vunpack.c.l.b16 %v1005
    %v3902 = vunpack.c.h.b16 %v1005
    %v3903 = vunpack.c.l.b16 %v1006
    %v3904 = vunpack.c.h.b16 %v1006
    %v3905 = vunpack.c.l.b16 %v1007
    %v3906 = vunpack.c.h.b16 %v1007
    %v3907 = vunpack.c.l.b16 %v1008
    %v3908 = vunpack.c.h.b16 %v1008
    %v3909 = vunpack.c.l.b16 %v1009
    %v3910 = vunpack.c.h.b16 %v1009
    %v3911 = vunpack.c.l.b16 %v1010
    %v3912 = vunpack.c.h.b16 %v1010
    %v3913 = vunpack.c.l.b16 %v1011
    %v3914 = vunpack.c.h.b16 %v1011
    %v3915 = vunpack.c.l.b16 %v1012
    %v3916 = vunpack.c.h.b16 %v1012
    %v3917 = vunpack.c.l.b16 %v1013
    %v3918 = vunpack.c.h.b16 %v1013
    %v3919 = vunpack.c.l.b16 %v1014
    %v3920 = vunpack.c.h.b16 %v1014
    %v3921 = vunpack.c.l.b16 %v1015
    %v3922 = vunpack.c.h.b16 %v1015
    %v3923 = vunpack.c.l.b16 %v1016
    %v3924 = vunpack.c.h.b16 %v1016
    %v3925 = vunpack.c.l.b16 %v1017
    %v3926 = vunpack.c.h.b16 %v1017
    %v3927 = vunpack.c.l.b16 %v1018
    %v3928 = vunpack.c.h.b16 %v1018
    %v3929 = vunpack.c.l.b16 %v1019
    %v3930 = vunpack.c.h.b16 %v1019
    %v3931 = vunpack.c.l.b16 %v1020
    %v3932 = vunpack.c.h.b16 %v1020
    %v3933 = vunpack.c.l.b16 %v1021
    %v3934 = vunpack.c.h.b16 %v1021
    %v3935 = vunpack.c.l.b16 %v1022
    %v3936 = vunpack.c.h.b16 %v1022
    %v3937 = vunpack.c.l.b16 %v1023
    %v3938 = vunpack.c.h.b16 %v1023
    %v3939 = vunpack.c.l.b16 %v1024
    %v3940 = vunpack.c.h.b16 %v1024
    %v3941 = vunpack.c.l.b16 %v1025
    %v3942 = vunpack.c.h.b16 %v1025
    %v3943 = vunpack.c.l.b16 %v1026
    %v3944 = vunpack.c.h.b16 %v1026
    %v3945 = vunpack.c.l.b16 %v1027
    %v3946 = vunpack.c.h.b16 %v1027
    %v3947 = vunpack.c.l.b16 %v1028
    %v3948 = vunpack.c.h.b16 %v1028
    %v3949 = vunpack.c.l.b16 %v1029
    %v3950 = vunpack.c.h.b16 %v1029
    %v3951 = vunpack.c.l.b16 %v1030
    %v3952 = vunpack.c.h.b16 %v1030
    %v3953 = vunpack.c.l.b16 %v1031
    %v3954 = vunpack.c.h.b16 %v1031
    %v3955 = vunpack.c.l.b16 %v1032
    %v3956 = vunpack.c.h.b16 %v1032
    %v3957 = vunpack.c.l.b16 %v1033
    %v3958 = vunpack.c.h.b16 %v1033
    %v3959 = vunpack.c.l.b16 %v1034
    %v3960 = vunpack.c.h.b16 %v1034
    %v3961 = vunpack.c.l.b16 %v1035
    %v3962 = vunpack.c.h.b16 %v1035
    %v3963 = vunpack.c.l.b16 %v1036
    %v3964 = vunpack.c.h.b16 %v1036
    %v3965 = vunpack.c.l.b16 %v1037
    %v3966 = vunpack.c.h.b16 %v1037
    %v3967 = vunpack.c.l.b16 %v1038
    %v3968 = vunpack.c.h.b16 %v1038
    %v3969 = vunpack.c.l.b16 %v1039
    %v3970 = vunpack.c.h.b16 %v1039
    %v3971 = vunpack.c.l.b16 %v1040
    %v3972 = vunpack.c.h.b16 %v1040
    %v3973 = vunpack.c.l.b16 %v1041
    %v3974 = vunpack.c.h.b16 %v1041
    %v3975 = vunpack.c.l.b16 %v1042
    %v3976 = vunpack.c.h.b16 %v1042
    %v3977 = vunpack.c.l.b16 %v1043
    %v3978 = vunpack.c.h.b16 %v1043
    %v3979 = vunpack.c.l.b16 %v1044
    %v3980 = vunpack.c.h.b16 %v1044
    %v3981 = vunpack.c.l.b16 %v1045
    %v3982 = vunpack.c.h.b16 %v1045
    %v3983 = vunpack.c.l.b16 %v1046
    %v3984 = vunpack.c.h.b16 %v1046
    %v3985 = vunpack.c.l.b16 %v1047
    %v3986 = vunpack.c.h.b16 %v1047
    %v3987 = vunpack.c.l.b16 %v1048
    %v3988 = vunpack.c.h.b16 %v1048
    %v3989 = vunpack.c.l.b16 %v1049
    %v3990 = vunpack.c.h.b16 %v1049
    %v3991 = vunpack.c.l.b16 %v1050
    %v3992 = vunpack.c.h.b16 %v1050
    %v3993 = vunpack.c.l.b16 %v1051
    %v3994 = vunpack.c.h.b16 %v1051
    %v3995 = vunpack.c.l.b16 %v1052
    %v3996 = vunpack.c.h.b16 %v1052
    %v3997 = vunpack.c.l.b16 %v1053
    %v3998 = vunpack.c.h.b16 %v1053
    %v3999 = vunpack.c.l.b16 %v1054
    %v4000 = vunpack.c.h.b16 %v1054
    %v4001 = vunpack.c.l.b16 %v1055
    %v4002 = vunpack.c.h.b16 %v1055
    %v4003 = vunpack.c.l.b16 %v1056
    %v4004 = vunpack.c.h.b16 %v1056
    %v4005 = vunpack.c.l.b16 %v1057
    %v4006 = vunpack.c.h.b16 %v1057
    %v4007 = vunpack.c.l.b16 %v1058
    %v4008 = vunpack.c.h.b16 %v1058
    %v4009 = vunpack.c.l.b16 %v1059
    %v4010 = vunpack.c.h.b16 %v1059
    %v4011 = vunpack.c.l.b16 %v1060
    %v4012 = vunpack.c.h.b16 %v1060
    %v4013 = vunpack.c.l.b16 %v1061
    %v4014 = vunpack.c.h.b16 %v1061
    %v4015 = vunpack.c.l.b16 %v1062
    %v4016 = vunpack.c.h.b16 %v1062
    %v4017 = vunpack.c.l.b16 %v1063
    %v4018 = vunpack.c.h.b16 %v1063
    %v4019 = vunpack.c.l.b16 %v1064
    %v4020 = vunpack.c.h.b16 %v1064
    %v4021 = vunpack.c.l.b16 %v1065
    %v4022 = vunpack.c.h.b16 %v1065
    %v4023 = vunpack.c.l.b16 %v1066
    %v4024 = vunpack.c.h.b16 %v1066
    %v4025 = vunpack.c.l.b16 %v1067
    %v4026 = vunpack.c.h.b16 %v1067
    %v4027 = vunpack.c.l.b16 %v1068
    %v4028 = vunpack.c.h.b16 %v1068
    %v4029 = vunpack.c.l.b16 %v1069
    %v4030 = vunpack.c.h.b16 %v1069
    %v4031 = vunpack.c.l.b16 %v1070
    %v4032 = vunpack.c.h.b16 %v1070
    %v4033 = vunpack.c.l.b16 %v1071
    %v4034 = vunpack.c.h.b16 %v1071
    %v4035 = vunpack.c.l.b16 %v1072
    %v4036 = vunpack.c.h.b16 %v1072
    %v4037 = vunpack.c.l.b16 %v1073
    %v4038 = vunpack.c.h.b16 %v1073
    %v4039 = vunpack.c.l.b16 %v1074
    %v4040 = vunpack.c.h.b16 %v1074
    %v4041 = vunpack.c.l.b16 %v1075
    %v4042 = vunpack.c.h.b16 %v1075
    %v4043 = vunpack.c.l.b16 %v1076
    %v4044 = vunpack.c.h.b16 %v1076
    %v4045 = vunpack.c.l.b16 %v1077
    %v4046 = vunpack.c.h.b16 %v1077
    %v4047 = vunpack.c.l.b16 %v1078
    %v4048 = vunpack.c.h.b16 %v1078
    %v4049 = vunpack.c.l.b16 %v1079
    %v4050 = vunpack.c.h.b16 %v1079
    %v4051 = vunpack.c.l.b16 %v1080
    %v4052 = vunpack.c.h.b16 %v1080
    %v4053 = vunpack.c.l.b16 %v1081
    %v4054 = vunpack.c.h.b16 %v1081
    %v4055 = vunpack.c.l.b16 %v1082
    %v4056 = vunpack.c.h.b16 %v1082
    %v4057 = vunpack.c.l.b16 %v1083
    %v4058 = vunpack.c.h.b16 %v1083
    %v4059 = vunpack.c.l.b16 %v1084
    %v4060 = vunpack.c.h.b16 %v1084
    %v4061 = vunpack.c.l.b16 %v1085
    %v4062 = vunpack.c.h.b16 %v1085
    %v4063 = vunpack.c.l.b16 %v1086
    %v4064 = vunpack.c.h.b16 %v1086
    %v4065 = vunpack.c.l.b16 %v1087
    %v4066 = vunpack.c.h.b16 %v1087
    %v4067 = vunpack.c.l.b16 %v1088
    %v4068 = vunpack.c.h.b16 %v1088
    %v4069 = vunpack.c.l.b16 %v1089
    %v4070 = vunpack.c.h.b16 %v1089
    %v4071 = vunpack.c.l.b16 %v1090
    %v4072 = vunpack.c.h.b16 %v1090
    %v4073 = vunpack.c.l.b16 %v1091
    %v4074 = vunpack.c.h.b16 %v1091
    %v4075 = vunpack.c.l.b16 %v1092
    %v4076 = vunpack.c.h.b16 %v1092
    %v4077 = vunpack.c.l.b16 %v1093
    %v4078 = vunpack.c.h.b16 %v1093
    %v4079 = vunpack.c.l.b16 %v1094
    %v4080 = vunpack.c.h.b16 %v1094
    %v4081 = vunpack.c.l.b16 %v1095
    %v4082 = vunpack.c.h.b16 %v1095
    %v4083 = vunpack.c.l.b16 %v1096
    %v4084 = vunpack.c.h.b16 %v1096
    %v4085 = vunpack.c.l.b16 %v1097
    %v4086 = vunpack.c.h.b16 %v1097
    %v4087 = vunpack.c.l.b16 %v1098
    %v4088 = vunpack.c.h.b16 %v1098
    %v4089 = vunpack.c.l.b16 %v1099
    %v4090 = vunpack.c.h.b16 %v1099
    %v4091 = vunpack.c.l.b16 %v1100
    %v4092 = vunpack.c.h.b16 %v1100
    %v4093 = vunpack.c.l.b16 %v1101
    %v4094 = vunpack.c.h.b16 %v1101
    %v4095 = vunpack.c.l.b16 %v1102
    %v4096 = vunpack.c.h.b16 %v1102
    %v4097 = vunpack.c.l.b16 %v1103
    %v4098 = vunpack.c.h.b16 %v1103
    %v4099 = vunpack.c.l.b16 %v1104
    %v4100 = vunpack.c.h.b16 %v1104
    %v4101 = vunpack.c.l.b16 %v1105
    %v4102 = vunpack.c.h.b16 %v1105
    %v4103 = vunpack.c.l.b16 %v1106
    %v4104 = vunpack.c.h.b16 %v1106
    %v4105 = vunpack.c.l.b16 %v1107
    %v4106 = vunpack.c.h.b16 %v1107
    %v4107 = vunpack.c.l.b16 %v1108
    %v4108 = vunpack.c.h.b16 %v1108
    %v4109 = vunpack.c.l.b16 %v1109
    %v4110 = vunpack.c.h.b16 %v1109
    %v4111 = vunpack.c.l.b16 %v1110
    %v4112 = vunpack.c.h.b16 %v1110
    %v4113 = vunpack.c.l.b16 %v1111
    %v4114 = vunpack.c.h.b16 %v1111
    %v4115 = vunpack.c.l.b16 %v1112
    %v4116 = vunpack.c.h.b16 %v1112
    %v4117 = vunpack.c.l.b16 %v1113
    %v4118 = vunpack.c.h.b16 %v1113
    %v4119 = vunpack.c.l.b16 %v1114
    %v4120 = vunpack.c.h.b16 %v1114
    %v4121 = vunpack.c.l.b16 %v1115
    %v4122 = vunpack.c.h.b16 %v1115
    %v4123 = vunpack.c.l.b16 %v1116
    %v4124 = vunpack.c.h.b16 %v1116
    %v4125 = vunpack.c.l.b16 %v1117
    %v4126 = vunpack.c.h.b16 %v1117
    %v4127 = vunpack.c.l.b16 %v1118
    %v4128 = vunpack.c.h.b16 %v1118
    %v4129 = vunpack.c.l.b16 %v1119
    %v4130 = vunpack.c.h.b16 %v1119
    %v4131 = vunpack.c.l.b16 %v1120
    %v4132 = vunpack.c.h.b16 %v1120
    %v4133 = vunpack.c.l.b16 %v1121
    %v4134 = vunpack.c.h.b16 %v1121
    %v4135 = vunpack.c.l.b16 %v1122
    %v4136 = vunpack.c.h.b16 %v1122
    %v4137 = vunpack.c.l.b16 %v1123
    %v4138 = vunpack.c.h.b16 %v1123
    %v4139 = vunpack.c.l.b16 %v1124
    %v4140 = vunpack.c.h.b16 %v1124
    %v4141 = vunpack.c.l.b16 %v1125
    %v4142 = vunpack.c.h.b16 %v1125
    %v4143 = vunpack.c.l.b16 %v1126
    %v4144 = vunpack.c.h.b16 %v1126
    %v4145 = vunpack.c.l.b16 %v1127
    %v4146 = vunpack.c.h.b16 %v1127
    %v4147 = vunpack.c.l.b16 %v1128
    %v4148 = vunpack.c.h.b16 %v1128
    %v4149 = vunpack.c.l.b16 %v1129
    %v4150 = vunpack.c.h.b16 %v1129
    %v4151 = vunpack.c.l.b16 %v1130
    %v4152 = vunpack.c.h.b16 %v1130
    %v4153 = vunpack.c.l.b16 %v1131
    %v4154 = vunpack.c.h.b16 %v1131
    %v4155 = vunpack.c.l.b16 %v1132
    %v4156 = vunpack.c.h.b16 %v1132
    %v4157 = vunpack.c.l.b16 %v1133
    %v4158 = vunpack.c.h.b16 %v1133
    %v4159 = vunpack.c.l.b16 %v1134
    %v4160 = vunpack.c.h.b16 %v1134
    %v4161 = vunpack.c.l.b16 %v1135
    %v4162 = vunpack.c.h.b16 %v1135
    %v4163 = vunpack.c.l.b16 %v1136
    %v4164 = vunpack.c.h.b16 %v1136
    %v4165 = vunpack.c.l.b16 %v1137
    %v4166 = vunpack.c.h.b16 %v1137
    %v4167 = vunpack.c.l.b16 %v1138
    %v4168 = vunpack.c.h.b16 %v1138
    %v4169 = vunpack.c.l.b16 %v1139
    %v4170 = vunpack.c.h.b16 %v1139
    %v4171 = vunpack.c.l.b16 %v1140
    %v4172 = vunpack.c.h.b16 %v1140
    %v4173 = vunpack.c.l.b16 %v1141
    %v4174 = vunpack.c.h.b16 %v1141
    %v4175 = vunpack.c.l.b16 %v1142
    %v4176 = vunpack.c.h.b16 %v1142
    %v4177 = vunpack.c.l.b16 %v1143
    %v4178 = vunpack.c.h.b16 %v1143
    %v4179 = vunpack.c.l.b16 %v1144
    %v4180 = vunpack.c.h.b16 %v1144
    %v4181 = vunpack.c.l.b16 %v1145
    %v4182 = vunpack.c.h.b16 %v1145
    %v4183 = vunpack.c.l.b16 %v1146
    %v4184 = vunpack.c.h.b16 %v1146
    %v4185 = vunpack.c.l.b16 %v1147
    %v4186 = vunpack.c.h.b16 %v1147
    %v4187 = vunpack.c.l.b16 %v1148
    %v4188 = vunpack.c.h.b16 %v1148
    %v4189 = vunpack.c.l.b16 %v1149
    %v4190 = vunpack.c.h.b16 %v1149
    %v4191 = vunpack.c.l.b16 %v1150
    %v4192 = vunpack.c.h.b16 %v1150
    %v4193 = vunpack.c.l.b16 %v1151
    %v4194 = vunpack.c.h.b16 %v1151
    %v4195 = vunpack.c.l.b16 %v1152
    %v4196 = vunpack.c.h.b16 %v1152
    %v4197 = vunpack.c.l.b16 %v1153
    %v4198 = vunpack.c.h.b16 %v1153
    %v4199 = vunpack.c.l.b16 %v1154
    %v4200 = vunpack.c.h.b16 %v1154
    %v4201 = vunpack.c.l.b16 %v1155
    %v4202 = vunpack.c.h.b16 %v1155
    %v4203 = vunpack.c.l.b16 %v1156
    %v4204 = vunpack.c.h.b16 %v1156
    %v4205 = vunpack.c.l.b16 %v1157
    %v4206 = vunpack.c.h.b16 %v1157
    %v4207 = vunpack.c.l.b16 %v1158
    %v4208 = vunpack.c.h.b16 %v1158
    %v4209 = vunpack.c.l.b16 %v1159
    %v4210 = vunpack.c.h.b16 %v1159
    %v4211 = vunpack.c.l.b16 %v1160
    %v4212 = vunpack.c.h.b16 %v1160
    %v4213 = vunpack.c.l.b16 %v1161
    %v4214 = vunpack.c.h.b16 %v1161
    %v4215 = vunpack.c.l.b16 %v1162
    %v4216 = vunpack.c.h.b16 %v1162
    %v4217 = vunpack.c.l.b16 %v1163
    %v4218 = vunpack.c.h.b16 %v1163
    %v4219 = vunpack.c.l.b16 %v1164
    %v4220 = vunpack.c.h.b16 %v1164
    %v4221 = vunpack.c.l.b16 %v1165
    %v4222 = vunpack.c.h.b16 %v1165
    %v4223 = vunpack.c.l.b16 %v1166
    %v4224 = vunpack.c.h.b16 %v1166
    %v4225 = vunpack.c.l.b16 %v1167
    %v4226 = vunpack.c.h.b16 %v1167
    %v4227 = vunpack.c.l.b16 %v1168
    %v4228 = vunpack.c.h.b16 %v1168
    %v4229 = vunpack.c.l.b16 %v1169
    %v4230 = vunpack.c.h.b16 %v1169
    %v4231 = vunpack.c.l.b16 %v1170
    %v4232 = vunpack.c.h.b16 %v1170
    %v4233 = vunpack.c.l.b16 %v1171
    %v4234 = vunpack.c.h.b16 %v1171
    %v4235 = vunpack.c.l.b16 %v1172
    %v4236 = vunpack.c.h.b16 %v1172
    %v4237 = vunpack.c.l.b16 %v1173
    %v4238 = vunpack.c.h.b16 %v1173
    %v4239 = vunpack.c.l.b16 %v1174
    %v4240 = vunpack.c.h.b16 %v1174
    %v4241 = vunpack.c.l.b16 %v1175
    %v4242 = vunpack.c.h.b16 %v1175
    %v4243 = vunpack.c.l.b16 %v1176
    %v4244 = vunpack.c.h.b16 %v1176
    %v4245 = vunpack.c.l.b16 %v1177
    %v4246 = vunpack.c.h.b16 %v1177
    %v4247 = vunpack.c.l.b16 %v1178
    %v4248 = vunpack.c.h.b16 %v1178
    %v4249 = vunpack.c.l.b16 %v1179
    %v4250 = vunpack.c.h.b16 %v1179
    %v4251 = vunpack.c.l.b16 %v1180
    %v4252 = vunpack.c.h.b16 %v1180
    %v4253 = vunpack.c.l.b16 %v1181
    %v4254 = vunpack.c.h.b16 %v1181
    %v4255 = vunpack.c.l.b16 %v1182
    %v4256 = vunpack.c.h.b16 %v1182
    %v4257 = vunpack.c.l.b16 %v1183
    %v4258 = vunpack.c.h.b16 %v1183
    %v4259 = vunpack.c.l.b16 %v1184
    %v4260 = vunpack.c.h.b16 %v1184
    %v4261 = vunpack.c.l.b16 %v1185
    %v4262 = vunpack.c.h.b16 %v1185
    %v4263 = vunpack.c.l.b16 %v1186
    %v4264 = vunpack.c.h.b16 %v1186
    %v4265 = vunpack.c.l.b16 %v1187
    %v4266 = vunpack.c.h.b16 %v1187
    %v4267 = vunpack.c.l.b16 %v1188
    %v4268 = vunpack.c.h.b16 %v1188
    %v4269 = vunpack.c.l.b16 %v1189
    %v4270 = vunpack.c.h.b16 %v1189
    %v4271 = vunpack.c.l.b16 %v1190
    %v4272 = vunpack.c.h.b16 %v1190
    %v4273 = vunpack.c.l.b16 %v1191
    %v4274 = vunpack.c.h.b16 %v1191
    %v4275 = vunpack.c.l.b16 %v1192
    %v4276 = vunpack.c.h.b16 %v1192
    %v4277 = vunpack.c.l.b16 %v1193
    %v4278 = vunpack.c.h.b16 %v1193
    %v4279 = vunpack.c.l.b16 %v1194
    %v4280 = vunpack.c.h.b16 %v1194
    %v4281 = vunpack.c.l.b16 %v1195
    %v4282 = vunpack.c.h.b16 %v1195
    %v4283 = vunpack.c.l.b16 %v1196
    %v4284 = vunpack.c.h.b16 %v1196
    %v4285 = vunpack.c.l.b16 %v1197
    %v4286 = vunpack.c.h.b16 %v1197
    %v4287 = vunpack.c.l.b16 %v1198
    %v4288 = vunpack.c.h.b16 %v1198
    %v4289 = vunpack.c.l.b16 %v1199
    %v4290 = vunpack.c.h.b16 %v1199
    %v4291 = vunpack.c.l.b16 %v1200
    %v4292 = vunpack.c.h.b16 %v1200
    %v4293 = vunpack.c.l.b16 %v1201
    %v4294 = vunpack.c.h.b16 %v1201
    %v4295 = vunpack.c.l.b16 %v1202
    %v4296 = vunpack.c.h.b16 %v1202
    %v4297 = vpack.c.b16 %v2253, %v2249
    %v4298 = vpack.c.b16 %v2254, %v2250
    %v4299 = vpack.c.b16 %v2255, %v2251
    %v4300 = vpack.c.b16 %v2256, %v2252
    %v4301 = vpack.c.b16 %v2261, %v2257
    %v4302 = vpack.c.b16 %v2262, %v2258
    %v4303 = vpack.c.b16 %v2263, %v2259
    %v4304 = vpack.c.b16 %v2264, %v2260
    %v4305 = vpack.c.b16 %v2269, %v2265
    %v4306 = vpack.c.b16 %v2270, %v2266
    %v4307 = vpack.c.b16 %v2271, %v2267
    %v4308 = vpack.c.b16 %v2272, %v2268
    %v4309 = vpack.c.b16 %v2277, %v2273
    %v4310 = vpack.c.b16 %v2278, %v2274
    %v4311 = vpack.c.b16 %v2279, %v2275
    %v4312 = vpack.c.b16 %v2280, %v2276
    %v4313 = vpack.c.b16 %v2285, %v2281
    %v4314 = vpack.c.b16 %v2286, %v2282
    %v4315 = vpack.c.b16 %v2287, %v2283
    %v4316 = vpack.c.b16 %v2288, %v2284
    %v4317 = vpack.c.b16 %v2293, %v2289
    %v4318 = vpack.c.b16 %v2294, %v2290
    %v4319 = vpack.c.b16 %v2295, %v2291
    %v4320 = vpack.c.b16 %v2296, %v2292
    %v4321 = vpack.c.b16 %v2301, %v2297
    %v4322 = vpack.c.b16 %v2302, %v2298
    %v4323 = vpack.c.b16 %v2303, %v2299
    %v4324 = vpack.c.b16 %v2304, %v2300
    %v4325 = vpack.c.b16 %v2309, %v2305
    %v4326 = vpack.c.b16 %v2310, %v2306
    %v4327 = vpack.c.b16 %v2311, %v2307
    %v4328 = vpack.c.b16 %v2312, %v2308
    %v4329 = vpack.c.b16 %v2317, %v2313
    %v4330 = vpack.c.b16 %v2318, %v2314
    %v4331 = vpack.c.b16 %v2319, %v2315
    %v4332 = vpack.c.b16 %v2320, %v2316
    %v4333 = vpack.c.b16 %v2325, %v2321
    %v4334 = vpack.c.b16 %v2326, %v2322
    %v4335 = vpack.c.b16 %v2327, %v2323
    %v4336 = vpack.c.b16 %v2328, %v2324
    %v4337 = vpack.c.b16 %v2333, %v2329
    %v4338 = vpack.c.b16 %v2334, %v2330
    %v4339 = vpack.c.b16 %v2335, %v2331
    %v4340 = vpack.c.b16 %v2336, %v2332
    %v4341 = vpack.c.b16 %v2341, %v2337
    %v4342 = vpack.c.b16 %v2342, %v2338
    %v4343 = vpack.c.b16 %v2343, %v2339
    %v4344 = vpack.c.b16 %v2344, %v2340
    %v4345 = vpack.c.b16 %v2349, %v2345
    %v4346 = vpack.c.b16 %v2350, %v2346
    %v4347 = vpack.c.b16 %v2351, %v2347
    %v4348 = vpack.c.b16 %v2352, %v2348
    %v4349 = vpack.c.b16 %v2357, %v2353
    %v4350 = vpack.c.b16 %v2358, %v2354
    %v4351 = vpack.c.b16 %v2359, %v2355
    %v4352 = vpack.c.b16 %v2360, %v2356
    %v4353 = vpack.c.b16 %v2365, %v2361
    %v4354 = vpack.c.b16 %v2366, %v2362
    %v4355 = vpack.c.b16 %v2367, %v2363
    %v4356 = vpack.c.b16 %v2368, %v2364
    %v4357 = vpack.c.b16 %v2373, %v2369
    %v4358 = vpack.c.b16 %v2374, %v2370
    %v4359 = vpack.c.b16 %v2375, %v2371
    %v4360 = vpack.c.b16 %v2376, %v2372
    %v4361 = vpack.c.b16 %v2381, %v2377
    %v4362 = vpack.c.b16 %v2382, %v2378
    %v4363 = vpack.c.b16 %v2383, %v2379
    %v4364 = vpack.c.b16 %v2384, %v2380
    %v4365 = vpack.c.b16 %v2389, %v2385
    %v4366 = vpack.c.b16 %v2390, %v2386
    %v4367 = vpack.c.b16 %v2391, %v2387
    %v4368 = vpack.c.b16 %v2392, %v2388
    %v4369 = vpack.c.b16 %v2397, %v2393
    %v4370 = vpack.c.b16 %v2398, %v2394
    %v4371 = vpack.c.b16 %v2399, %v2395
    %v4372 = vpack.c.b16 %v2400, %v2396
    %v4373 = vpack.c.b16 %v2405, %v2401
    %v4374 = vpack.c.b16 %v2406, %v2402
    %v4375 = vpack.c.b16 %v2407, %v2403
    %v4376 = vpack.c.b16 %v2408, %v2404
    %v4377 = vpack.c.b16 %v2413, %v2409
    %v4378 = vpack.c.b16 %v2414, %v2410
    %v4379 = vpack.c.b16 %v2415, %v2411
    %v4380 = vpack.c.b16 %v2416, %v2412
    %v4381 = vpack.c.b16 %v2421, %v2417
    %v4382 = vpack.c.b16 %v2422, %v2418
    %v4383 = vpack.c.b16 %v2423, %v2419
    %v4384 = vpack.c.b16 %v2424, %v2420
    %v4385 = vpack.c.b16 %v2429, %v2425
    %v4386 = vpack.c.b16 %v2430, %v2426
    %v4387 = vpack.c.b16 %v2431, %v2427
    %v4388 = vpack.c.b16 %v2432, %v2428
    %v4389 = vpack.c.b16 %v2437, %v2433
    %v4390 = vpack.c.b16 %v2438, %v2434
    %v4391 = vpack.c.b16 %v2439, %v2435
    %v4392 = vpack.c.b16 %v2440, %v2436
    %v4393 = vpack.c.b16 %v2445, %v2441
    %v4394 = vpack.c.b16 %v2446, %v2442
    %v4395 = vpack.c.b16 %v2447, %v2443
    %v4396 = vpack.c.b16 %v2448, %v2444
    %v4397 = vpack.c.b16 %v2453, %v2449
    %v4398 = vpack.c.b16 %v2454, %v2450
    %v4399 = vpack.c.b16 %v2455, %v2451
    %v4400 = vpack.c.b16 %v2456, %v2452
    %v4401 = vpack.c.b16 %v2461, %v2457
    %v4402 = vpack.c.b16 %v2462, %v2458
    %v4403 = vpack.c.b16 %v2463, %v2459
    %v4404 = vpack.c.b16 %v2464, %v2460
    %v4405 = vpack.c.b16 %v2469, %v2465
    %v4406 = vpack.c.b16 %v2470, %v2466
    %v4407 = vpack.c.b16 %v2471, %v2467
    %v4408 = vpack.c.b16 %v2472, %v2468
    %v4409 = vpack.c.b16 %v2477, %v2473
    %v4410 = vpack.c.b16 %v2478, %v2474
    %v4411 = vpack.c.b16 %v2479, %v2475
    %v4412 = vpack.c.b16 %v2480, %v2476
    %v4413 = vpack.c.b16 %v2485, %v2481
    %v4414 = vpack.c.b16 %v2486, %v2482
    %v4415 = vpack.c.b16 %v2487, %v2483
    %v4416 = vpack.c.b16 %v2488, %v2484
    %v4417 = vpack.c.b16 %v2493, %v2489
    %v4418 = vpack.c.b16 %v2494, %v2490
    %v4419 = vpack.c.b16 %v2495, %v2491
    %v4420 = vpack.c.b16 %v2496, %v2492
    %v4421 = vpack.c.b16 %v2501, %v2497
    %v4422 = vpack.c.b16 %v2502, %v2498
    %v4423 = vpack.c.b16 %v2503, %v2499
    %v4424 = vpack.c.b16 %v2504, %v2500
    %v4425 = vpack.c.b16 %v2509, %v2505
    %v4426 = vpack.c.b16 %v2510, %v2506
    %v4427 = vpack.c.b16 %v2511, %v2507
    %v4428 = vpack.c.b16 %v2512, %v2508
    %v4429 = vpack.c.b16 %v2517, %v2513
    %v4430 = vpack.c.b16 %v2518, %v2514
    %v4431 = vpack.c.b16 %v2519, %v2515
    %v4432 = vpack.c.b16 %v2520, %v2516
    %v4433 = vpack.c.b16 %v2525, %v2521
    %v4434 = vpack.c.b16 %v2526, %v2522
    %v4435 = vpack.c.b16 %v2527, %v2523
    %v4436 = vpack.c.b16 %v2528, %v2524
    %v4437 = vpack.c.b16 %v2533, %v2529
    %v4438 = vpack.c.b16 %v2534, %v2530
    %v4439 = vpack.c.b16 %v2535, %v2531
    %v4440 = vpack.c.b16 %v2536, %v2532
    %v4441 = vpack.c.b16 %v2541, %v2537
    %v4442 = vpack.c.b16 %v2542, %v2538
    %v4443 = vpack.c.b16 %v2543, %v2539
    %v4444 = vpack.c.b16 %v2544, %v2540
    %v4445 = vpack.c.b16 %v2549, %v2545
    %v4446 = vpack.c.b16 %v2550, %v2546
    %v4447 = vpack.c.b16 %v2551, %v2547
    %v4448 = vpack.c.b16 %v2552, %v2548
    %v4449 = vpack.c.b16 %v2557, %v2553
    %v4450 = vpack.c.b16 %v2558, %v2554
    %v4451 = vpack.c.b16 %v2559, %v2555
    %v4452 = vpack.c.b16 %v2560, %v2556
    %v4453 = vpack.c.b16 %v2565, %v2561
    %v4454 = vpack.c.b16 %v2566, %v2562
    %v4455 = vpack.c.b16 %v2567, %v2563
    %v4456 = vpack.c.b16 %v2568, %v2564
    %v4457 = vpack.c.b16 %v2573, %v2569
    %v4458 = vpack.c.b16 %v2574, %v2570
    %v4459 = vpack.c.b16 %v2575, %v2571
    %v4460 = vpack.c.b16 %v2576, %v2572
    %v4461 = vpack.c.b16 %v2581, %v2577
    %v4462 = vpack.c.b16 %v2582, %v2578
    %v4463 = vpack.c.b16 %v2583, %v2579
    %v4464 = vpack.c.b16 %v2584, %v2580
    %v4465 = vpack.c.b16 %v2589, %v2585
    %v4466 = vpack.c.b16 %v2590, %v2586
    %v4467 = vpack.c.b16 %v2591, %v2587
    %v4468 = vpack.c.b16 %v2592, %v2588
    %v4469 = vpack.c.b16 %v2597, %v2593
    %v4470 = vpack.c.b16 %v2598, %v2594
    %v4471 = vpack.c.b16 %v2599, %v2595
    %v4472 = vpack.c.b16 %v2600, %v2596
    %v4473 = vpack.c.b16 %v2605, %v2601
    %v4474 = vpack.c.b16 %v2606, %v2602
    %v4475 = vpack.c.b16 %v2607, %v2603
    %v4476 = vpack.c.b16 %v2608, %v2604
    %v4477 = vpack.c.b16 %v2613, %v2609
    %v4478 = vpack.c.b16 %v2614, %v2610
    %v4479 = vpack.c.b16 %v2615, %v2611
    %v4480 = vpack.c.b16 %v2616, %v2612
    %v4481 = vpack.c.b16 %v2621, %v2617
    %v4482 = vpack.c.b16 %v2622, %v2618
    %v4483 = vpack.c.b16 %v2623, %v2619
    %v4484 = vpack.c.b16 %v2624, %v2620
    %v4485 = vpack.c.b16 %v2629, %v2625
    %v4486 = vpack.c.b16 %v2630, %v2626
    %v4487 = vpack.c.b16 %v2631, %v2627
    %v4488 = vpack.c.b16 %v2632, %v2628
    %v4489 = vpack.c.b16 %v2637, %v2633
    %v4490 = vpack.c.b16 %v2638, %v2634
    %v4491 = vpack.c.b16 %v2639, %v2635
    %v4492 = vpack.c.b16 %v2640, %v2636
    %v4493 = vpack.c.b16 %v2645, %v2641
    %v4494 = vpack.c.b16 %v2646, %v2642
    %v4495 = vpack.c.b16 %v2647, %v2643
    %v4496 = vpack.c.b16 %v2648, %v2644
    %v4497 = vpack.c.b16 %v2653, %v2649
    %v4498 = vpack.c.b16 %v2654, %v2650
    %v4499 = vpack.c.b16 %v2655, %v2651
    %v4500 = vpack.c.b16 %v2656, %v2652
    %v4501 = vpack.c.b16 %v2661, %v2657
    %v4502 = vpack.c.b16 %v2662, %v2658
    %v4503 = vpack.c.b16 %v2663, %v2659
    %v4504 = vpack.c.b16 %v2664, %v2660
    %v4505 = vpack.c.b16 %v2669, %v2665
    %v4506 = vpack.c.b16 %v2670, %v2666
    %v4507 = vpack.c.b16 %v2671, %v2667
    %v4508 = vpack.c.b16 %v2672, %v2668
    %v4509 = vpack.c.b16 %v2677, %v2673
    %v4510 = vpack.c.b16 %v2678, %v2674
    %v4511 = vpack.c.b16 %v2679, %v2675
    %v4512 = vpack.c.b16 %v2680, %v2676
    %v4513 = vpack.c.b16 %v2685, %v2681
    %v4514 = vpack.c.b16 %v2686, %v2682
    %v4515 = vpack.c.b16 %v2687, %v2683
    %v4516 = vpack.c.b16 %v2688, %v2684
    %v4517 = vpack.c.b16 %v2693, %v2689
    %v4518 = vpack.c.b16 %v2694, %v2690
    %v4519 = vpack.c.b16 %v2695, %v2691
    %v4520 = vpack.c.b16 %v2696, %v2692
    %v4521 = vpack.c.b16 %v2701, %v2697
    %v4522 = vpack.c.b16 %v2702, %v2698
    %v4523 = vpack.c.b16 %v2703, %v2699
    %v4524 = vpack.c.b16 %v2704, %v2700
    %v4525 = vpack.c.b16 %v2709, %v2705
    %v4526 = vpack.c.b16 %v2710, %v2706
    %v4527 = vpack.c.b16 %v2711, %v2707
    %v4528 = vpack.c.b16 %v2712, %v2708
    %v4529 = vpack.c.b16 %v2717, %v2713
    %v4530 = vpack.c.b16 %v2718, %v2714
    %v4531 = vpack.c.b16 %v2719, %v2715
    %v4532 = vpack.c.b16 %v2720, %v2716
    %v4533 = vpack.c.b16 %v2725, %v2721
    %v4534 = vpack.c.b16 %v2726, %v2722
    %v4535 = vpack.c.b16 %v2727, %v2723
    %v4536 = vpack.c.b16 %v2728, %v2724
    %v4537 = vpack.c.b16 %v2733, %v2729
    %v4538 = vpack.c.b16 %v2734, %v2730
    %v4539 = vpack.c.b16 %v2735, %v2731
    %v4540 = vpack.c.b16 %v2736, %v2732
    %v4541 = vpack.c.b16 %v2741, %v2737
    %v4542 = vpack.c.b16 %v2742, %v2738
    %v4543 = vpack.c.b16 %v2743, %v2739
    %v4544 = vpack.c.b16 %v2744, %v2740
    %v4545 = vpack.c.b16 %v2749, %v2745
    %v4546 = vpack.c.b16 %v2750, %v2746
    %v4547 = vpack.c.b16 %v2751, %v2747
    %v4548 = vpack.c.b16 %v2752, %v2748
    %v4549 = vpack.c.b16 %v2757, %v2753
    %v4550 = vpack.c.b16 %v2758, %v2754
    %v4551 = vpack.c.b16 %v2759, %v2755
    %v4552 = vpack.c.b16 %v2760, %v2756
    %v4553 = vpack.c.b16 %v2765, %v2761
    %v4554 = vpack.c.b16 %v2766, %v2762
    %v4555 = vpack.c.b16 %v2767, %v2763
    %v4556 = vpack.c.b16 %v2768, %v2764
    %v4557 = vpack.c.b16 %v2773, %v2769
    %v4558 = vpack.c.b16 %v2774, %v2770
    %v4559 = vpack.c.b16 %v2775, %v2771
    %v4560 = vpack.c.b16 %v2776, %v2772
    %v4561 = vpack.c.b16 %v2781, %v2777
    %v4562 = vpack.c.b16 %v2782, %v2778
    %v4563 = vpack.c.b16 %v2783, %v2779
    %v4564 = vpack.c.b16 %v2784, %v2780
    %v4565 = vpack.c.b16 %v2789, %v2785
    %v4566 = vpack.c.b16 %v2790, %v2786
    %v4567 = vpack.c.b16 %v2791, %v2787
    %v4568 = vpack.c.b16 %v2792, %v2788
    %v4569 = vpack.c.b16 %v2797, %v2793
    %v4570 = vpack.c.b16 %v2798, %v2794
    %v4571 = vpack.c.b16 %v2799, %v2795
    %v4572 = vpack.c.b16 %v2800, %v2796
    %v4573 = vpack.c.b16 %v2805, %v2801
    %v4574 = vpack.c.b16 %v2806, %v2802
    %v4575 = vpack.c.b16 %v2807, %v2803
    %v4576 = vpack.c.b16 %v2808, %v2804
    %v4577 = vpack.c.b16 %v2813, %v2809
    %v4578 = vpack.c.b16 %v2814, %v2810
    %v4579 = vpack.c.b16 %v2815, %v2811
    %v4580 = vpack.c.b16 %v2816, %v2812
    %v4581 = vpack.c.b16 %v2821, %v2817
    %v4582 = vpack.c.b16 %v2822, %v2818
    %v4583 = vpack.c.b16 %v2823, %v2819
    %v4584 = vpack.c.b16 %v2824, %v2820
    %v4585 = vpack.c.b16 %v2829, %v2825
    %v4586 = vpack.c.b16 %v2830, %v2826
    %v4587 = vpack.c.b16 %v2831, %v2827
    %v4588 = vpack.c.b16 %v2832, %v2828
    %v4589 = vpack.c.b16 %v2837, %v2833
    %v4590 = vpack.c.b16 %v2838, %v2834
    %v4591 = vpack.c.b16 %v2839, %v2835
    %v4592 = vpack.c.b16 %v2840, %v2836
    %v4593 = vpack.c.b16 %v2845, %v2841
    %v4594 = vpack.c.b16 %v2846, %v2842
    %v4595 = vpack.c.b16 %v2847, %v2843
    %v4596 = vpack.c.b16 %v2848, %v2844
    %v4597 = vpack.c.b16 %v2853, %v2849
    %v4598 = vpack.c.b16 %v2854, %v2850
    %v4599 = vpack.c.b16 %v2855, %v2851
    %v4600 = vpack.c.b16 %v2856, %v2852
    %v4601 = vpack.c.b16 %v2861, %v2857
    %v4602 = vpack.c.b16 %v2862, %v2858
    %v4603 = vpack.c.b16 %v2863, %v2859
    %v4604 = vpack.c.b16 %v2864, %v2860
    %v4605 = vpack.c.b16 %v2869, %v2865
    %v4606 = vpack.c.b16 %v2870, %v2866
    %v4607 = vpack.c.b16 %v2871, %v2867
    %v4608 = vpack.c.b16 %v2872, %v2868
    %v4609 = vpack.c.b16 %v2877, %v2873
    %v4610 = vpack.c.b16 %v2878, %v2874
    %v4611 = vpack.c.b16 %v2879, %v2875
    %v4612 = vpack.c.b16 %v2880, %v2876
    %v4613 = vpack.c.b16 %v2885, %v2881
    %v4614 = vpack.c.b16 %v2886, %v2882
    %v4615 = vpack.c.b16 %v2887, %v2883
    %v4616 = vpack.c.b16 %v2888, %v2884
    %v4617 = vpack.c.b16 %v2893, %v2889
    %v4618 = vpack.c.b16 %v2894, %v2890
    %v4619 = vpack.c.b16 %v2895, %v2891
    %v4620 = vpack.c.b16 %v2896, %v2892
    %v4621 = vpack.c.b16 %v2901, %v2897
    %v4622 = vpack.c.b16 %v2902, %v2898
    %v4623 = vpack.c.b16 %v2903, %v2899
    %v4624 = vpack.c.b16 %v2904, %v2900
    %v4625 = vpack.c.b16 %v2909, %v2905
    %v4626 = vpack.c.b16 %v2910, %v2906
    %v4627 = vpack.c.b16 %v2911, %v2907
    %v4628 = vpack.c.b16 %v2912, %v2908
    %v4629 = vpack.c.b16 %v2917, %v2913
    %v4630 = vpack.c.b16 %v2918, %v2914
    %v4631 = vpack.c.b16 %v2919, %v2915
    %v4632 = vpack.c.b16 %v2920, %v2916
    %v4633 = vpack.c.b16 %v2925, %v2921
    %v4634 = vpack.c.b16 %v2926, %v2922
    %v4635 = vpack.c.b16 %v2927, %v2923
    %v4636 = vpack.c.b16 %v2928, %v2924
    %v4637 = vpack.c.b16 %v2933, %v2929
    %v4638 = vpack.c.b16 %v2934, %v2930
    %v4639 = vpack.c.b16 %v2935, %v2931
    %v4640 = vpack.c.b16 %v2936, %v2932
    %v4641 = vpack.c.b16 %v2941, %v2937
    %v4642 = vpack.c.b16 %v2942, %v2938
    %v4643 = vpack.c.b16 %v2943, %v2939
    %v4644 = vpack.c.b16 %v2944, %v2940
    %v4645 = vpack.c.b16 %v2949, %v2945
    %v4646 = vpack.c.b16 %v2950, %v2946
    %v4647 = vpack.c.b16 %v2951, %v2947
    %v4648 = vpack.c.b16 %v2952, %v2948
    %v4649 = vpack.c.b16 %v2957, %v2953
    %v4650 = vpack.c.b16 %v2958, %v2954
    %v4651 = vpack.c.b16 %v2959, %v2955
    %v4652 = vpack.c.b16 %v2960, %v2956
    %v4653 = vpack.c.b16 %v2965, %v2961
    %v4654 = vpack.c.b16 %v2966, %v2962
    %v4655 = vpack.c.b16 %v2967, %v2963
    %v4656 = vpack.c.b16 %v2968, %v2964
    %v4657 = vpack.c.b16 %v2973, %v2969
    %v4658 = vpack.c.b16 %v2974, %v2970
    %v4659 = vpack.c.b16 %v2975, %v2971
    %v4660 = vpack.c.b16 %v2976, %v2972
    %v4661 = vpack.c.b16 %v2981, %v2977
    %v4662 = vpack.c.b16 %v2982, %v2978
    %v4663 = vpack.c.b16 %v2983, %v2979
    %v4664 = vpack.c.b16 %v2984, %v2980
    %v4665 = vpack.c.b16 %v2989, %v2985
    %v4666 = vpack.c.b16 %v2990, %v2986
    %v4667 = vpack.c.b16 %v2991, %v2987
    %v4668 = vpack.c.b16 %v2992, %v2988
    %v4669 = vpack.c.b16 %v2997, %v2993
    %v4670 = vpack.c.b16 %v2998, %v2994
    %v4671 = vpack.c.b16 %v2999, %v2995
    %v4672 = vpack.c.b16 %v3000, %v2996
    %v4673 = vpack.c.b16 %v3005, %v3001
    %v4674 = vpack.c.b16 %v3006, %v3002
    %v4675 = vpack.c.b16 %v3007, %v3003
    %v4676 = vpack.c.b16 %v3008, %v3004
    %v4677 = vpack.c.b16 %v3013, %v3009
    %v4678 = vpack.c.b16 %v3014, %v3010
    %v4679 = vpack.c.b16 %v3015, %v3011
    %v4680 = vpack.c.b16 %v3016, %v3012
    %v4681 = vpack.c.b16 %v3021, %v3017
    %v4682 = vpack.c.b16 %v3022, %v3018
    %v4683 = vpack.c.b16 %v3023, %v3019
    %v4684 = vpack.c.b16 %v3024, %v3020
    %v4685 = vpack.c.b16 %v3029, %v3025
    %v4686 = vpack.c.b16 %v3030, %v3026
    %v4687 = vpack.c.b16 %v3031, %v3027
    %v4688 = vpack.c.b16 %v3032, %v3028
    %v4689 = vpack.c.b16 %v3037, %v3033
    %v4690 = vpack.c.b16 %v3038, %v3034
    %v4691 = vpack.c.b16 %v3039, %v3035
    %v4692 = vpack.c.b16 %v3040, %v3036
    %v4693 = vpack.c.b16 %v3045, %v3041
    %v4694 = vpack.c.b16 %v3046, %v3042
    %v4695 = vpack.c.b16 %v3047, %v3043
    %v4696 = vpack.c.b16 %v3048, %v3044
    %v4697 = vpack.c.b16 %v3053, %v3049
    %v4698 = vpack.c.b16 %v3054, %v3050
    %v4699 = vpack.c.b16 %v3055, %v3051
    %v4700 = vpack.c.b16 %v3056, %v3052
    %v4701 = vpack.c.b16 %v3061, %v3057
    %v4702 = vpack.c.b16 %v3062, %v3058
    %v4703 = vpack.c.b16 %v3063, %v3059
    %v4704 = vpack.c.b16 %v3064, %v3060
    %v4705 = vpack.c.b16 %v3069, %v3065
    %v4706 = vpack.c.b16 %v3070, %v3066
    %v4707 = vpack.c.b16 %v3071, %v3067
    %v4708 = vpack.c.b16 %v3072, %v3068
    %v4709 = vpack.c.b16 %v3077, %v3073
    %v4710 = vpack.c.b16 %v3078, %v3074
    %v4711 = vpack.c.b16 %v3079, %v3075
    %v4712 = vpack.c.b16 %v3080, %v3076
    %v4713 = vpack.c.b16 %v3085, %v3081
    %v4714 = vpack.c.b16 %v3086, %v3082
    %v4715 = vpack.c.b16 %v3087, %v3083
    %v4716 = vpack.c.b16 %v3088, %v3084
    %v4717 = vpack.c.b16 %v3093, %v3089
    %v4718 = vpack.c.b16 %v3094, %v3090
    %v4719 = vpack.c.b16 %v3095, %v3091
    %v4720 = vpack.c.b16 %v3096, %v3092
    %v4721 = vpack.c.b16 %v3101, %v3097
    %v4722 = vpack.c.b16 %v3102, %v3098
    %v4723 = vpack.c.b16 %v3103, %v3099
    %v4724 = vpack.c.b16 %v3104, %v3100
    %v4725 = vpack.c.b16 %v3109, %v3105
    %v4726 = vpack.c.b16 %v3110, %v3106
    %v4727 = vpack.c.b16 %v3111, %v3107
    %v4728 = vpack.c.b16 %v3112, %v3108
    %v4729 = vpack.c.b16 %v3117, %v3113
    %v4730 = vpack.c.b16 %v3118, %v3114
    %v4731 = vpack.c.b16 %v3119, %v3115
    %v4732 = vpack.c.b16 %v3120, %v3116
    %v4733 = vpack.c.b16 %v3125, %v3121
    %v4734 = vpack.c.b16 %v3126, %v3122
    %v4735 = vpack.c.b16 %v3127, %v3123
    %v4736 = vpack.c.b16 %v3128, %v3124
    %v4737 = vpack.c.b16 %v3133, %v3129
    %v4738 = vpack.c.b16 %v3134, %v3130
    %v4739 = vpack.c.b16 %v3135, %v3131
    %v4740 = vpack.c.b16 %v3136, %v3132
    %v4741 = vpack.c.b16 %v3141, %v3137
    %v4742 = vpack.c.b16 %v3142, %v3138
    %v4743 = vpack.c.b16 %v3143, %v3139
    %v4744 = vpack.c.b16 %v3144, %v3140
    %v4745 = vpack.c.b16 %v3149, %v3145
    %v4746 = vpack.c.b16 %v3150, %v3146
    %v4747 = vpack.c.b16 %v3151, %v3147
    %v4748 = vpack.c.b16 %v3152, %v3148
    %v4749 = vpack.c.b16 %v3157, %v3153
    %v4750 = vpack.c.b16 %v3158, %v3154
    %v4751 = vpack.c.b16 %v3159, %v3155
    %v4752 = vpack.c.b16 %v3160, %v3156
    %v4753 = vpack.c.b16 %v3165, %v3161
    %v4754 = vpack.c.b16 %v3166, %v3162
    %v4755 = vpack.c.b16 %v3167, %v3163
    %v4756 = vpack.c.b16 %v3168, %v3164
    %v4757 = vpack.c.b16 %v3173, %v3169
    %v4758 = vpack.c.b16 %v3174, %v3170
    %v4759 = vpack.c.b16 %v3175, %v3171
    %v4760 = vpack.c.b16 %v3176, %v3172
    %v4761 = vpack.c.b16 %v3181, %v3177
    %v4762 = vpack.c.b16 %v3182, %v3178
    %v4763 = vpack.c.b16 %v3183, %v3179
    %v4764 = vpack.c.b16 %v3184, %v3180
    %v4765 = vpack.c.b16 %v3189, %v3185
    %v4766 = vpack.c.b16 %v3190, %v3186
    %v4767 = vpack.c.b16 %v3191, %v3187
    %v4768 = vpack.c.b16 %v3192, %v3188
    %v4769 = vpack.c.b16 %v3197, %v3193
    %v4770 = vpack.c.b16 %v3198, %v3194
    %v4771 = vpack.c.b16 %v3199, %v3195
    %v4772 = vpack.c.b16 %v3200, %v3196
    %v4773 = vpack.c.b16 %v3205, %v3201
    %v4774 = vpack.c.b16 %v3206, %v3202
    %v4775 = vpack.c.b16 %v3207, %v3203
    %v4776 = vpack.c.b16 %v3208, %v3204
    %v4777 = vpack.c.b16 %v3213, %v3209
    %v4778 = vpack.c.b16 %v3214, %v3210
    %v4779 = vpack.c.b16 %v3215, %v3211
    %v4780 = vpack.c.b16 %v3216, %v3212
    %v4781 = vpack.c.b16 %v3221, %v3217
    %v4782 = vpack.c.b16 %v3222, %v3218
    %v4783 = vpack.c.b16 %v3223, %v3219
    %v4784 = vpack.c.b16 %v3224, %v3220
    %v4785 = vpack.c.b16 %v3229, %v3225
    %v4786 = vpack.c.b16 %v3230, %v3226
    %v4787 = vpack.c.b16 %v3231, %v3227
    %v4788 = vpack.c.b16 %v3232, %v3228
    %v4789 = vpack.c.b16 %v3237, %v3233
    %v4790 = vpack.c.b16 %v3238, %v3234
    %v4791 = vpack.c.b16 %v3239, %v3235
    %v4792 = vpack.c.b16 %v3240, %v3236
    %v4793 = vpack.c.b16 %v3245, %v3241
    %v4794 = vpack.c.b16 %v3246, %v3242
    %v4795 = vpack.c.b16 %v3247, %v3243
    %v4796 = vpack.c.b16 %v3248, %v3244
    %v4797 = vpack.c.b16 %v3253, %v3249
    %v4798 = vpack.c.b16 %v3254, %v3250
    %v4799 = vpack.c.b16 %v3255, %v3251
    %v4800 = vpack.c.b16 %v3256, %v3252
    %v4801 = vpack.c.b16 %v3261, %v3257
    %v4802 = vpack.c.b16 %v3262, %v3258
    %v4803 = vpack.c.b16 %v3263, %v3259
    %v4804 = vpack.c.b16 %v3264, %v3260
    %v4805 = vpack.c.b16 %v3269, %v3265
    %v4806 = vpack.c.b16 %v3270, %v3266
    %v4807 = vpack.c.b16 %v3271, %v3267
    %v4808 = vpack.c.b16 %v3272, %v3268
    %v4809 = vpack.c.b16 %v3277, %v3273
    %v4810 = vpack.c.b16 %v3278, %v3274
    %v4811 = vpack.c.b16 %v3279, %v3275
    %v4812 = vpack.c.b16 %v3280, %v3276
    %v4813 = vpack.c.b16 %v3285, %v3281
    %v4814 = vpack.c.b16 %v3286, %v3282
    %v4815 = vpack.c.b16 %v3287, %v3283
    %v4816 = vpack.c.b16 %v3288, %v3284
    %v4817 = vpack.c.b16 %v3293, %v3289
    %v4818 = vpack.c.b16 %v3294, %v3290
    %v4819 = vpack.c.b16 %v3295, %v3291
    %v4820 = vpack.c.b16 %v3296, %v3292
    %v4821 = vpack.c.b16 %v3301, %v3297
    %v4822 = vpack.c.b16 %v3302, %v3298
    %v4823 = vpack.c.b16 %v3303, %v3299
    %v4824 = vpack.c.b16 %v3304, %v3300
    %v4825 = vpack.c.b16 %v3309, %v3305
    %v4826 = vpack.c.b16 %v3310, %v3306
    %v4827 = vpack.c.b16 %v3311, %v3307
    %v4828 = vpack.c.b16 %v3312, %v3308
    %v4829 = vpack.c.b16 %v3317, %v3313
    %v4830 = vpack.c.b16 %v3318, %v3314
    %v4831 = vpack.c.b16 %v3319, %v3315
    %v4832 = vpack.c.b16 %v3320, %v3316
    %v4833 = vpack.c.b16 %v3325, %v3321
    %v4834 = vpack.c.b16 %v3326, %v3322
    %v4835 = vpack.c.b16 %v3327, %v3323
    %v4836 = vpack.c.b16 %v3328, %v3324
    %v4837 = vpack.c.b16 %v3333, %v3329
    %v4838 = vpack.c.b16 %v3334, %v3330
    %v4839 = vpack.c.b16 %v3335, %v3331
    %v4840 = vpack.c.b16 %v3336, %v3332
    %v4841 = vpack.c.b16 %v3341, %v3337
    %v4842 = vpack.c.b16 %v3342, %v3338
    %v4843 = vpack.c.b16 %v3343, %v3339
    %v4844 = vpack.c.b16 %v3344, %v3340
    %v4845 = vpack.c.b16 %v3349, %v3345
    %v4846 = vpack.c.b16 %v3350, %v3346
    %v4847 = vpack.c.b16 %v3351, %v3347
    %v4848 = vpack.c.b16 %v3352, %v3348
    %v4849 = vpack.c.b16 %v3357, %v3353
    %v4850 = vpack.c.b16 %v3358, %v3354
    %v4851 = vpack.c.b16 %v3359, %v3355
    %v4852 = vpack.c.b16 %v3360, %v3356
    %v4853 = vpack.c.b16 %v3365, %v3361
    %v4854 = vpack.c.b16 %v3366, %v3362
    %v4855 = vpack.c.b16 %v3367, %v3363
    %v4856 = vpack.c.b16 %v3368, %v3364
    %v4857 = vpack.c.b16 %v3373, %v3369
    %v4858 = vpack.c.b16 %v3374, %v3370
    %v4859 = vpack.c.b16 %v3375, %v3371
    %v4860 = vpack.c.b16 %v3376, %v3372
    %v4861 = vpack.c.b16 %v3381, %v3377
    %v4862 = vpack.c.b16 %v3382, %v3378
    %v4863 = vpack.c.b16 %v3383, %v3379
    %v4864 = vpack.c.b16 %v3384, %v3380
    %v4865 = vpack.c.b16 %v3389, %v3385
    %v4866 = vpack.c.b16 %v3390, %v3386
    %v4867 = vpack.c.b16 %v3391, %v3387
    %v4868 = vpack.c.b16 %v3392, %v3388
    %v4869 = vpack.c.b16 %v3397, %v3393
    %v4870 = vpack.c.b16 %v3398, %v3394
    %v4871 = vpack.c.b16 %v3399, %v3395
    %v4872 = vpack.c.b16 %v3400, %v3396
    %v4873 = vpack.c.b16 %v3405, %v3401
    %v4874 = vpack.c.b16 %v3406, %v3402
    %v4875 = vpack.c.b16 %v3407, %v3403
    %v4876 = vpack.c.b16 %v3408, %v3404
    %v4877 = vpack.c.b16 %v3413, %v3409
    %v4878 = vpack.c.b16 %v3414, %v3410
    %v4879 = vpack.c.b16 %v3415, %v3411
    %v4880 = vpack.c.b16 %v3416, %v3412
    %v4881 = vpack.c.b16 %v3421, %v3417
    %v4882 = vpack.c.b16 %v3422, %v3418
    %v4883 = vpack.c.b16 %v3423, %v3419
    %v4884 = vpack.c.b16 %v3424, %v3420
    %v4885 = vpack.c.b16 %v3429, %v3425
    %v4886 = vpack.c.b16 %v3430, %v3426
    %v4887 = vpack.c.b16 %v3431, %v3427
    %v4888 = vpack.c.b16 %v3432, %v3428
    %v4889 = vpack.c.b16 %v3437, %v3433
    %v4890 = vpack.c.b16 %v3438, %v3434
    %v4891 = vpack.c.b16 %v3439, %v3435
    %v4892 = vpack.c.b16 %v3440, %v3436
    %v4893 = vpack.c.b16 %v3445, %v3441
    %v4894 = vpack.c.b16 %v3446, %v3442
    %v4895 = vpack.c.b16 %v3447, %v3443
    %v4896 = vpack.c.b16 %v3448, %v3444
    %v4897 = vpack.c.b16 %v3453, %v3449
    %v4898 = vpack.c.b16 %v3454, %v3450
    %v4899 = vpack.c.b16 %v3455, %v3451
    %v4900 = vpack.c.b16 %v3456, %v3452
    %v4901 = vpack.c.b16 %v3461, %v3457
    %v4902 = vpack.c.b16 %v3462, %v3458
    %v4903 = vpack.c.b16 %v3463, %v3459
    %v4904 = vpack.c.b16 %v3464, %v3460
    %v4905 = vpack.c.b16 %v3469, %v3465
    %v4906 = vpack.c.b16 %v3470, %v3466
    %v4907 = vpack.c.b16 %v3471, %v3467
    %v4908 = vpack.c.b16 %v3472, %v3468
    %v4909 = vpack.c.b16 %v3477, %v3473
    %v4910 = vpack.c.b16 %v3478, %v3474
    %v4911 = vpack.c.b16 %v3479, %v3475
    %v4912 = vpack.c.b16 %v3480, %v3476
    %v4913 = vpack.c.b16 %v3485, %v3481
    %v4914 = vpack.c.b16 %v3486, %v3482
    %v4915 = vpack.c.b16 %v3487, %v3483
    %v4916 = vpack.c.b16 %v3488, %v3484
    %v4917 = vpack.c.b16 %v3493, %v3489
    %v4918 = vpack.c.b16 %v3494, %v3490
    %v4919 = vpack.c.b16 %v3495, %v3491
    %v4920 = vpack.c.b16 %v3496, %v3492
    %v4921 = vpack.c.b16 %v3501, %v3497
    %v4922 = vpack.c.b16 %v3502, %v3498
    %v4923 = vpack.c.b16 %v3503, %v3499
    %v4924 = vpack.c.b16 %v3504, %v3500
    %v4925 = vpack.c.b16 %v3509, %v3505
    %v4926 = vpack.c.b16 %v3510, %v3506
    %v4927 = vpack.c.b16 %v3511, %v3507
    %v4928 = vpack.c.b16 %v3512, %v3508
    %v4929 = vpack.c.b16 %v3517, %v3513
    %v4930 = vpack.c.b16 %v3518, %v3514
    %v4931 = vpack.c.b16 %v3519, %v3515
    %v4932 = vpack.c.b16 %v3520, %v3516
    %v4933 = vpack.c.b16 %v3525, %v3521
    %v4934 = vpack.c.b16 %v3526, %v3522
    %v4935 = vpack.c.b16 %v3527, %v3523
    %v4936 = vpack.c.b16 %v3528, %v3524
    %v4937 = vpack.c.b16 %v3533, %v3529
    %v4938 = vpack.c.b16 %v3534, %v3530
    %v4939 = vpack.c.b16 %v3535, %v3531
    %v4940 = vpack.c.b16 %v3536, %v3532
    %v4941 = vpack.c.b16 %v3541, %v3537
    %v4942 = vpack.c.b16 %v3542, %v3538
    %v4943 = vpack.c.b16 %v3543, %v3539
    %v4944 = vpack.c.b16 %v3544, %v3540
    %v4945 = vpack.c.b16 %v3549, %v3545
    %v4946 = vpack.c.b16 %v3550, %v3546
    %v4947 = vpack.c.b16 %v3551, %v3547
    %v4948 = vpack.c.b16 %v3552, %v3548
    %v4949 = vpack.c.b16 %v3557, %v3553
    %v4950 = vpack.c.b16 %v3558, %v3554
    %v4951 = vpack.c.b16 %v3559, %v3555
    %v4952 = vpack.c.b16 %v3560, %v3556
    %v4953 = vpack.c.b16 %v3565, %v3561
    %v4954 = vpack.c.b16 %v3566, %v3562
    %v4955 = vpack.c.b16 %v3567, %v3563
    %v4956 = vpack.c.b16 %v3568, %v3564
    %v4957 = vpack.c.b16 %v3573, %v3569
    %v4958 = vpack.c.b16 %v3574, %v3570
    %v4959 = vpack.c.b16 %v3575, %v3571
    %v4960 = vpack.c.b16 %v3576, %v3572
    %v4961 = vpack.c.b16 %v3581, %v3577
    %v4962 = vpack.c.b16 %v3582, %v3578
    %v4963 = vpack.c.b16 %v3583, %v3579
    %v4964 = vpack.c.b16 %v3584, %v3580
    %v4965 = vpack.c.b16 %v3589, %v3585
    %v4966 = vpack.c.b16 %v3590, %v3586
    %v4967 = vpack.c.b16 %v3591, %v3587
    %v4968 = vpack.c.b16 %v3592, %v3588
    %v4969 = vpack.c.b16 %v3597, %v3593
    %v4970 = vpack.c.b16 %v3598, %v3594
    %v4971 = vpack.c.b16 %v3599, %v3595
    %v4972 = vpack.c.b16 %v3600, %v3596
    %v4973 = vpack.c.b16 %v3605, %v3601
    %v4974 = vpack.c.b16 %v3606, %v3602
    %v4975 = vpack.c.b16 %v3607, %v3603
    %v4976 = vpack.c.b16 %v3608, %v3604
    %v4977 = vpack.c.b16 %v3613, %v3609
    %v4978 = vpack.c.b16 %v3614, %v3610
    %v4979 = vpack.c.b16 %v3615, %v3611
    %v4980 = vpack.c.b16 %v3616, %v3612
    %v4981 = vpack.c.b16 %v3621, %v3617
    %v4982 = vpack.c.b16 %v3622, %v3618
    %v4983 = vpack.c.b16 %v3623, %v3619
    %v4984 = vpack.c.b16 %v3624, %v3620
    %v4985 = vpack.c.b16 %v3629, %v3625
    %v4986 = vpack.c.b16 %v3630, %v3626
    %v4987 = vpack.c.b16 %v3631, %v3627
    %v4988 = vpack.c.b16 %v3632, %v3628
    %v4989 = vpack.c.b16 %v3637, %v3633
    %v4990 = vpack.c.b16 %v3638, %v3634
    %v4991 = vpack.c.b16 %v3639, %v3635
    %v4992 = vpack.c.b16 %v3640, %v3636
    %v4993 = vpack.c.b16 %v3645, %v3641
    %v4994 = vpack.c.b16 %v3646, %v3642
    %v4995 = vpack.c.b16 %v3647, %v3643
    %v4996 = vpack.c.b16 %v3648, %v3644
    %v4997 = vpack.c.b16 %v3653, %v3649
    %v4998 = vpack.c.b16 %v3654, %v3650
    %v4999 = vpack.c.b16 %v3655, %v3651
    %v5000 = vpack.c.b16 %v3656, %v3652
    %v5001 = vpack.c.b16 %v3661, %v3657
    %v5002 = vpack.c.b16 %v3662, %v3658
    %v5003 = vpack.c.b16 %v3663, %v3659
    %v5004 = vpack.c.b16 %v3664, %v3660
    %v5005 = vpack.c.b16 %v3669, %v3665
    %v5006 = vpack.c.b16 %v3670, %v3666
    %v5007 = vpack.c.b16 %v3671, %v3667
    %v5008 = vpack.c.b16 %v3672, %v3668
    %v5009 = vpack.c.b16 %v3677, %v3673
    %v5010 = vpack.c.b16 %v3678, %v3674
    %v5011 = vpack.c.b16 %v3679, %v3675
    %v5012 = vpack.c.b16 %v3680, %v3676
    %v5013 = vpack.c.b16 %v3685, %v3681
    %v5014 = vpack.c.b16 %v3686, %v3682
    %v5015 = vpack.c.b16 %v3687, %v3683
    %v5016 = vpack.c.b16 %v3688, %v3684
    %v5017 = vpack.c.b16 %v3693, %v3689
    %v5018 = vpack.c.b16 %v3694, %v3690
    %v5019 = vpack.c.b16 %v3695, %v3691
    %v5020 = vpack.c.b16 %v3696, %v3692
    %v5021 = vpack.c.b16 %v3701, %v3697
    %v5022 = vpack.c.b16 %v3702, %v3698
    %v5023 = vpack.c.b16 %v3703, %v3699
    %v5024 = vpack.c.b16 %v3704, %v3700
    %v5025 = vpack.c.b16 %v3709, %v3705
    %v5026 = vpack.c.b16 %v3710, %v3706
    %v5027 = vpack.c.b16 %v3711, %v3707
    %v5028 = vpack.c.b16 %v3712, %v3708
    %v5029 = vpack.c.b16 %v3717, %v3713
    %v5030 = vpack.c.b16 %v3718, %v3714
    %v5031 = vpack.c.b16 %v3719, %v3715
    %v5032 = vpack.c.b16 %v3720, %v3716
    %v5033 = vpack.c.b16 %v3725, %v3721
    %v5034 = vpack.c.b16 %v3726, %v3722
    %v5035 = vpack.c.b16 %v3727, %v3723
    %v5036 = vpack.c.b16 %v3728, %v3724
    %v5037 = vpack.c.b16 %v3733, %v3729
    %v5038 = vpack.c.b16 %v3734, %v3730
    %v5039 = vpack.c.b16 %v3735, %v3731
    %v5040 = vpack.c.b16 %v3736, %v3732
    %v5041 = vpack.c.b16 %v3741, %v3737
    %v5042 = vpack.c.b16 %v3742, %v3738
    %v5043 = vpack.c.b16 %v3743, %v3739
    %v5044 = vpack.c.b16 %v3744, %v3740
    %v5045 = vpack.c.b16 %v3749, %v3745
    %v5046 = vpack.c.b16 %v3750, %v3746
    %v5047 = vpack.c.b16 %v3751, %v3747
    %v5048 = vpack.c.b16 %v3752, %v3748
    %v5049 = vpack.c.b16 %v3757, %v3753
    %v5050 = vpack.c.b16 %v3758, %v3754
    %v5051 = vpack.c.b16 %v3759, %v3755
    %v5052 = vpack.c.b16 %v3760, %v3756
    %v5053 = vpack.c.b16 %v3765, %v3761
    %v5054 = vpack.c.b16 %v3766, %v3762
    %v5055 = vpack.c.b16 %v3767, %v3763
    %v5056 = vpack.c.b16 %v3768, %v3764
    %v5057 = vpack.c.b16 %v3773, %v3769
    %v5058 = vpack.c.b16 %v3774, %v3770
    %v5059 = vpack.c.b16 %v3775, %v3771
    %v5060 = vpack.c.b16 %v3776, %v3772
    %v5061 = vpack.c.b16 %v3781, %v3777
    %v5062 = vpack.c.b16 %v3782, %v3778
    %v5063 = vpack.c.b16 %v3783, %v3779
    %v5064 = vpack.c.b16 %v3784, %v3780
    %v5065 = vpack.c.b16 %v3789, %v3785
    %v5066 = vpack.c.b16 %v3790, %v3786
    %v5067 = vpack.c.b16 %v3791, %v3787
    %v5068 = vpack.c.b16 %v3792, %v3788
    %v5069 = vpack.c.b16 %v3797, %v3793
    %v5070 = vpack.c.b16 %v3798, %v3794
    %v5071 = vpack.c.b16 %v3799, %v3795
    %v5072 = vpack.c.b16 %v3800, %v3796
    %v5073 = vpack.c.b16 %v3805, %v3801
    %v5074 = vpack.c.b16 %v3806, %v3802
    %v5075 = vpack.c.b16 %v3807, %v3803
    %v5076 = vpack.c.b16 %v3808, %v3804
    %v5077 = vpack.c.b16 %v3813, %v3809
    %v5078 = vpack.c.b16 %v3814, %v3810
    %v5079 = vpack.c.b16 %v3815, %v3811
    %v5080 = vpack.c.b16 %v3816, %v3812
    %v5081 = vpack.c.b16 %v3821, %v3817
    %v5082 = vpack.c.b16 %v3822, %v3818
    %v5083 = vpack.c.b16 %v3823, %v3819
    %v5084 = vpack.c.b16 %v3824, %v3820
    %v5085 = vpack.c.b16 %v3829, %v3825
    %v5086 = vpack.c.b16 %v3830, %v3826
    %v5087 = vpack.c.b16 %v3831, %v3827
    %v5088 = vpack.c.b16 %v3832, %v3828
    %v5089 = vpack.c.b16 %v3837, %v3833
    %v5090 = vpack.c.b16 %v3838, %v3834
    %v5091 = vpack.c.b16 %v3839, %v3835
    %v5092 = vpack.c.b16 %v3840, %v3836
    %v5093 = vpack.c.b16 %v3845, %v3841
    %v5094 = vpack.c.b16 %v3846, %v3842
    %v5095 = vpack.c.b16 %v3847, %v3843
    %v5096 = vpack.c.b16 %v3848, %v3844
    %v5097 = vpack.c.b16 %v3853, %v3849
    %v5098 = vpack.c.b16 %v3854, %v3850
    %v5099 = vpack.c.b16 %v3855, %v3851
    %v5100 = vpack.c.b16 %v3856, %v3852
    %v5101 = vpack.c.b16 %v3861, %v3857
    %v5102 = vpack.c.b16 %v3862, %v3858
    %v5103 = vpack.c.b16 %v3863, %v3859
    %v5104 = vpack.c.b16 %v3864, %v3860
    %v5105 = vpack.c.b16 %v3869, %v3865
    %v5106 = vpack.c.b16 %v3870, %v3866
    %v5107 = vpack.c.b16 %v3871, %v3867
    %v5108 = vpack.c.b16 %v3872, %v3868
    %v5109 = vpack.c.b16 %v3877, %v3873
    %v5110 = vpack.c.b16 %v3878, %v3874
    %v5111 = vpack.c.b16 %v3879, %v3875
    %v5112 = vpack.c.b16 %v3880, %v3876
    %v5113 = vpack.c.b16 %v3885, %v3881
    %v5114 = vpack.c.b16 %v3886, %v3882
    %v5115 = vpack.c.b16 %v3887, %v3883
    %v5116 = vpack.c.b16 %v3888, %v3884
    %v5117 = vpack.c.b16 %v3893, %v3889
    %v5118 = vpack.c.b16 %v3894, %v3890
    %v5119 = vpack.c.b16 %v3895, %v3891
    %v5120 = vpack.c.b16 %v3896, %v3892
    %v5121 = vpack.c.b16 %v3901, %v3897
    %v5122 = vpack.c.b16 %v3902, %v3898
    %v5123 = vpack.c.b16 %v3903, %v3899
    %v5124 = vpack.c.b16 %v3904, %v3900
    %v5125 = vpack.c.b16 %v3909, %v3905
    %v5126 = vpack.c.b16 %v3910, %v3906
    %v5127 = vpack.c.b16 %v3911, %v3907
    %v5128 = vpack.c.b16 %v3912, %v3908
    %v5129 = vpack.c.b16 %v3917, %v3913
    %v5130 = vpack.c.b16 %v3918, %v3914
    %v5131 = vpack.c.b16 %v3919, %v3915
    %v5132 = vpack.c.b16 %v3920, %v3916
    %v5133 = vpack.c.b16 %v3925, %v3921
    %v5134 = vpack.c.b16 %v3926, %v3922
    %v5135 = vpack.c.b16 %v3927, %v3923
    %v5136 = vpack.c.b16 %v3928, %v3924
    %v5137 = vpack.c.b16 %v3933, %v3929
    %v5138 = vpack.c.b16 %v3934, %v3930
    %v5139 = vpack.c.b16 %v3935, %v3931
    %v5140 = vpack.c.b16 %v3936, %v3932
    %v5141 = vpack.c.b16 %v3941, %v3937
    %v5142 = vpack.c.b16 %v3942, %v3938
    %v5143 = vpack.c.b16 %v3943, %v3939
    %v5144 = vpack.c.b16 %v3944, %v3940
    %v5145 = vpack.c.b16 %v3949, %v3945
    %v5146 = vpack.c.b16 %v3950, %v3946
    %v5147 = vpack.c.b16 %v3951, %v3947
    %v5148 = vpack.c.b16 %v3952, %v3948
    %v5149 = vpack.c.b16 %v3957, %v3953
    %v5150 = vpack.c.b16 %v3958, %v3954
    %v5151 = vpack.c.b16 %v3959, %v3955
    %v5152 = vpack.c.b16 %v3960, %v3956
    %v5153 = vpack.c.b16 %v3965, %v3961
    %v5154 = vpack.c.b16 %v3966, %v3962
    %v5155 = vpack.c.b16 %v3967, %v3963
    %v5156 = vpack.c.b16 %v3968, %v3964
    %v5157 = vpack.c.b16 %v3973, %v3969
    %v5158 = vpack.c.b16 %v3974, %v3970
    %v5159 = vpack.c.b16 %v3975, %v3971
    %v5160 = vpack.c.b16 %v3976, %v3972
    %v5161 = vpack.c.b16 %v3981, %v3977
    %v5162 = vpack.c.b16 %v3982, %v3978
    %v5163 = vpack.c.b16 %v3983, %v3979
    %v5164 = vpack.c.b16 %v3984, %v3980
    %v5165 = vpack.c.b16 %v3989, %v3985
    %v5166 = vpack.c.b16 %v3990, %v3986
    %v5167 = vpack.c.b16 %v3991, %v3987
    %v5168 = vpack.c.b16 %v3992, %v3988
    %v5169 = vpack.c.b16 %v3997, %v3993
    %v5170 = vpack.c.b16 %v3998, %v3994
    %v5171 = vpack.c.b16 %v3999, %v3995
    %v5172 = vpack.c.b16 %v4000, %v3996
    %v5173 = vpack.c.b16 %v4005, %v4001
    %v5174 = vpack.c.b16 %v4006, %v4002
    %v5175 = vpack.c.b16 %v4007, %v4003
    %v5176 = vpack.c.b16 %v4008, %v4004
    %v5177 = vpack.c.b16 %v4013, %v4009
    %v5178 = vpack.c.b16 %v4014, %v4010
    %v5179 = vpack.c.b16 %v4015, %v4011
    %v5180 = vpack.c.b16 %v4016, %v4012
    %v5181 = vpack.c.b16 %v4021, %v4017
    %v5182 = vpack.c.b16 %v4022, %v4018
    %v5183 = vpack.c.b16 %v4023, %v4019
    %v5184 = vpack.c.b16 %v4024, %v4020
    %v5185 = vpack.c.b16 %v4029, %v4025
    %v5186 = vpack.c.b16 %v4030, %v4026
    %v5187 = vpack.c.b16 %v4031, %v4027
    %v5188 = vpack.c.b16 %v4032, %v4028
    %v5189 = vpack.c.b16 %v4037, %v4033
    %v5190 = vpack.c.b16 %v4038, %v4034
    %v5191 = vpack.c.b16 %v4039, %v4035
    %v5192 = vpack.c.b16 %v4040, %v4036
    %v5193 = vpack.c.b16 %v4045, %v4041
    %v5194 = vpack.c.b16 %v4046, %v4042
    %v5195 = vpack.c.b16 %v4047, %v4043
    %v5196 = vpack.c.b16 %v4048, %v4044
    %v5197 = vpack.c.b16 %v4053, %v4049
    %v5198 = vpack.c.b16 %v4054, %v4050
    %v5199 = vpack.c.b16 %v4055, %v4051
    %v5200 = vpack.c.b16 %v4056, %v4052
    %v5201 = vpack.c.b16 %v4061, %v4057
    %v5202 = vpack.c.b16 %v4062, %v4058
    %v5203 = vpack.c.b16 %v4063, %v4059
    %v5204 = vpack.c.b16 %v4064, %v4060
    %v5205 = vpack.c.b16 %v4069, %v4065
    %v5206 = vpack.c.b16 %v4070, %v4066
    %v5207 = vpack.c.b16 %v4071, %v4067
    %v5208 = vpack.c.b16 %v4072, %v4068
    %v5209 = vpack.c.b16 %v4077, %v4073
    %v5210 = vpack.c.b16 %v4078, %v4074
    %v5211 = vpack.c.b16 %v4079, %v4075
    %v5212 = vpack.c.b16 %v4080, %v4076
    %v5213 = vpack.c.b16 %v4085, %v4081
    %v5214 = vpack.c.b16 %v4086, %v4082
    %v5215 = vpack.c.b16 %v4087, %v4083
    %v5216 = vpack.c.b16 %v4088, %v4084
    %v5217 = vpack.c.b16 %v4093, %v4089
    %v5218 = vpack.c.b16 %v4094, %v4090
    %v5219 = vpack.c.b16 %v4095, %v4091
    %v5220 = vpack.c.b16 %v4096, %v4092
    %v5221 = vpack.c.b16 %v4101, %v4097
    %v5222 = vpack.c.b16 %v4102, %v4098
    %v5223 = vpack.c.b16 %v4103, %v4099
    %v5224 = vpack.c.b16 %v4104, %v4100
    %v5225 = vpack.c.b16 %v4109, %v4105
    %v5226 = vpack.c.b16 %v4110, %v4106
    %v5227 = vpack.c.b16 %v4111, %v4107
    %v5228 = vpack.c.b16 %v4112, %v4108
    %v5229 = vpack.c.b16 %v4117, %v4113
    %v5230 = vpack.c.b16 %v4118, %v4114
    %v5231 = vpack.c.b16 %v4119, %v4115
    %v5232 = vpack.c.b16 %v4120, %v4116
    %v5233 = vpack.c.b16 %v4125, %v4121
    %v5234 = vpack.c.b16 %v4126, %v4122
    %v5235 = vpack.c.b16 %v4127, %v4123
    %v5236 = vpack.c.b16 %v4128, %v4124
    %v5237 = vpack.c.b16 %v4133, %v4129
    %v5238 = vpack.c.b16 %v4134, %v4130
    %v5239 = vpack.c.b16 %v4135, %v4131
    %v5240 = vpack.c.b16 %v4136, %v4132
    %v5241 = vpack.c.b16 %v4141, %v4137
    %v5242 = vpack.c.b16 %v4142, %v4138
    %v5243 = vpack.c.b16 %v4143, %v4139
    %v5244 = vpack.c.b16 %v4144, %v4140
    %v5245 = vpack.c.b16 %v4149, %v4145
    %v5246 = vpack.c.b16 %v4150, %v4146
    %v5247 = vpack.c.b16 %v4151, %v4147
    %v5248 = vpack.c.b16 %v4152, %v4148
    %v5249 = vpack.c.b16 %v4157, %v4153
    %v5250 = vpack.c.b16 %v4158, %v4154
    %v5251 = vpack.c.b16 %v4159, %v4155
    %v5252 = vpack.c.b16 %v4160, %v4156
    %v5253 = vpack.c.b16 %v4165, %v4161
    %v5254 = vpack.c.b16 %v4166, %v4162
    %v5255 = vpack.c.b16 %v4167, %v4163
    %v5256 = vpack.c.b16 %v4168, %v4164
    %v5257 = vpack.c.b16 %v4173, %v4169
    %v5258 = vpack.c.b16 %v4174, %v4170
    %v5259 = vpack.c.b16 %v4175, %v4171
    %v5260 = vpack.c.b16 %v4176, %v4172
    %v5261 = vpack.c.b16 %v4181, %v4177
    %v5262 = vpack.c.b16 %v4182, %v4178
    %v5263 = vpack.c.b16 %v4183, %v4179
    %v5264 = vpack.c.b16 %v4184, %v4180
    %v5265 = vpack.c.b16 %v4189, %v4185
    %v5266 = vpack.c.b16 %v4190, %v4186
    %v5267 = vpack.c.b16 %v4191, %v4187
    %v5268 = vpack.c.b16 %v4192, %v4188
    %v5269 = vpack.c.b16 %v4197, %v4193
    %v5270 = vpack.c.b16 %v4198, %v4194
    %v5271 = vpack.c.b16 %v4199, %v4195
    %v5272 = vpack.c.b16 %v4200, %v4196
    %v5273 = vpack.c.b16 %v4205, %v4201
    %v5274 = vpack.c.b16 %v4206, %v4202
    %v5275 = vpack.c.b16 %v4207, %v4203
    %v5276 = vpack.c.b16 %v4208, %v4204
    %v5277 = vpack.c.b16 %v4213, %v4209
    %v5278 = vpack.c.b16 %v4214, %v4210
    %v5279 = vpack.c.b16 %v4215, %v4211
    %v5280 = vpack.c.b16 %v4216, %v4212
    %v5281 = vpack.c.b16 %v4221, %v4217
    %v5282 = vpack.c.b16 %v4222, %v4218
    %v5283 = vpack.c.b16 %v4223, %v4219
    %v5284 = vpack.c.b16 %v4224, %v4220
    %v5285 = vpack.c.b16 %v4229, %v4225
    %v5286 = vpack.c.b16 %v4230, %v4226
    %v5287 = vpack.c.b16 %v4231, %v4227
    %v5288 = vpack.c.b16 %v4232, %v4228
    %v5289 = vpack.c.b16 %v4237, %v4233
    %v5290 = vpack.c.b16 %v4238, %v4234
    %v5291 = vpack.c.b16 %v4239, %v4235
    %v5292 = vpack.c.b16 %v4240, %v4236
    %v5293 = vpack.c.b16 %v4245, %v4241
    %v5294 = vpack.c.b16 %v4246, %v4242
    %v5295 = vpack.c.b16 %v4247, %v4243
    %v5296 = vpack.c.b16 %v4248, %v4244
    %v5297 = vpack.c.b16 %v4253, %v4249
    %v5298 = vpack.c.b16 %v4254, %v4250
    %v5299 = vpack.c.b16 %v4255, %v4251
    %v5300 = vpack.c.b16 %v4256, %v4252
    %v5301 = vpack.c.b16 %v4261, %v4257
    %v5302 = vpack.c.b16 %v4262, %v4258
    %v5303 = vpack.c.b16 %v4263, %v4259
    %v5304 = vpack.c.b16 %v4264, %v4260
    %v5305 = vpack.c.b16 %v4269, %v4265
    %v5306 = vpack.c.b16 %v4270, %v4266
    %v5307 = vpack.c.b16 %v4271, %v4267
    %v5308 = vpack.c.b16 %v4272, %v4268
    %v5309 = vpack.c.b16 %v4277, %v4273
    %v5310 = vpack.c.b16 %v4278, %v4274
    %v5311 = vpack.c.b16 %v4279, %v4275
    %v5312 = vpack.c.b16 %v4280, %v4276
    %v5313 = vpack.c.b16 %v4285, %v4281
    %v5314 = vpack.c.b16 %v4286, %v4282
    %v5315 = vpack.c.b16 %v4287, %v4283
    %v5316 = vpack.c.b16 %v4288, %v4284
    %v5317 = vpack.c.b16 %v4293, %v4289
    %v5318 = vpack.c.b16 %v4294, %v4290
    %v5319 = vpack.c.b16 %v4295, %v4291
    %v5320 = vpack.c.b16 %v4296, %v4292
    %6345 = vmatprep.subr.bf16.mxu0 %v4298
    %6346 = vmatpush1.bf16.msra.mxu0 %v4297
    %6347 = vmatprep.subr.bf16.mxu0 %v4302
    %6348 = vmatpush1.bf16.msra.mxu0 %v4301
    %6349 = vmatprep.subr.bf16.mxu0 %v4306
    %6350 = vmatpush1.bf16.msra.mxu0 %v4305
    %6351 = vmatprep.subr.bf16.mxu0 %v4310
    %6352 = vmatpush1.bf16.msra.mxu0 %v4309
    %6353 = vmatprep.subr.bf16.mxu0 %v4314
    %6354 = vmatpush1.bf16.msra.mxu0 %v4313
    %6355 = vmatprep.subr.bf16.mxu0 %v4318
    %6356 = vmatpush1.bf16.msra.mxu0 %v4317
    %6357 = vmatprep.subr.bf16.mxu0 %v4322
    %6358 = vmatpush1.bf16.msra.mxu0 %v4321
    %6359 = vmatprep.subr.bf16.mxu0 %v4326
    %6360 = vmatpush1.bf16.msra.mxu0 %v4325
    %6361 = vmatprep.subr.bf16.mxu0 %v4330
    %6362 = vmatpush1.bf16.msra.mxu0 %v4329
    %6363 = vmatprep.subr.bf16.mxu0 %v4334
    %6364 = vmatpush1.bf16.msra.mxu0 %v4333
    %6365 = vmatprep.subr.bf16.mxu0 %v4338
    %6366 = vmatpush1.bf16.msra.mxu0 %v4337
    %6367 = vmatprep.subr.bf16.mxu0 %v4342
    %6368 = vmatpush1.bf16.msra.mxu0 %v4341
    %6369 = vmatprep.subr.bf16.mxu0 %v4346
    %6370 = vmatpush1.bf16.msra.mxu0 %v4345
    %6371 = vmatprep.subr.bf16.mxu0 %v4350
    %6372 = vmatpush1.bf16.msra.mxu0 %v4349
    %6373 = vmatprep.subr.bf16.mxu0 %v4354
    %6374 = vmatpush1.bf16.msra.mxu0 %v4353
    %6375 = vmatprep.subr.bf16.mxu0 %v4358
    %6376 = vmatpush1.bf16.msra.mxu0 %v4357
    %6377 = vmatprep.mubr.bf16.mxu0 %v148
    %6378 = vmatmul.mubr.bf16.gmra.mrb[0].mxu0 %v147
    %v6379 = vpop.f32.mrb[0].mxu0
    %v6380 = vadd.f32 %v1208, %v6379
    %v6381 = vpop.f32.mrb[0].mxu0
    %v6382 = vadd.f32 %v1212, %v6381
    %v6383 = vpop.f32.mrb[0].mxu0
    %v6384 = vpop.f32.mrb[0].mxu0
    %6385 = vdwg.mxu0
    %6386 = vmatprep.subr.bf16.mxu0 %v4362
    %6387 = vmatpush1.bf16.msra.mxu0 %v4361
    %6388 = vmatprep.subr.bf16.mxu0 %v4366
    %6389 = vmatpush1.bf16.msra.mxu0 %v4365
    %6390 = vmatprep.subr.bf16.mxu0 %v4370
    %6391 = vmatpush1.bf16.msra.mxu0 %v4369
    %6392 = vmatprep.subr.bf16.mxu0 %v4374
    %6393 = vmatpush1.bf16.msra.mxu0 %v4373
    %6394 = vmatprep.subr.bf16.mxu0 %v4378
    %6395 = vmatpush1.bf16.msra.mxu0 %v4377
    %6396 = vmatprep.subr.bf16.mxu0 %v4382
    %6397 = vmatpush1.bf16.msra.mxu0 %v4381
    %6398 = vmatprep.subr.bf16.mxu0 %v4386
    %6399 = vmatpush1.bf16.msra.mxu0 %v4385
    %6400 = vmatprep.subr.bf16.mxu0 %v4390
    %6401 = vmatpush1.bf16.msra.mxu0 %v4389
    %6402 = vmatprep.subr.bf16.mxu0 %v4394
    %6403 = vmatpush1.bf16.msra.mxu0 %v4393
    %6404 = vmatprep.subr.bf16.mxu0 %v4398
    %6405 = vmatpush1.bf16.msra.mxu0 %v4397
    %6406 = vmatprep.subr.bf16.mxu0 %v4402
    %6407 = vmatpush1.bf16.msra.mxu0 %v4401
    %6408 = vmatprep.subr.bf16.mxu0 %v4406
    %6409 = vmatpush1.bf16.msra.mxu0 %v4405
    %6410 = vmatprep.subr.bf16.mxu0 %v4410
    %6411 = vmatpush1.bf16.msra.mxu0 %v4409
    %6412 = vmatprep.subr.bf16.mxu0 %v4414
    %6413 = vmatpush1.bf16.msra.mxu0 %v4413
    %6414 = vmatprep.subr.bf16.mxu0 %v4418
    %6415 = vmatpush1.bf16.msra.mxu0 %v4417
    %6416 = vmatprep.subr.bf16.mxu0 %v4422
    %6417 = vmatpush1.bf16.msra.mxu0 %v4421
    %6418 = vmatprep.mubr.bf16.mxu0 %v150
    %6419 = vmatmul.mubr.bf16.gmra.mrb[0].mxu0 %v149
    %v6420 = vpop.f32.mrb[0].mxu0
    %v6421 = vadd.f32 %v6380, %v6420
    %v6422 = vpop.f32.mrb[0].mxu0
    %v6423 = vadd.f32 %v6382, %v6422
    %v6424 = vpop.f32.mrb[0].mxu0
    %v6425 = vpop.f32.mrb[0].mxu0
    %6426 = vdwg.mxu0
    %6427 = vmatprep.subr.bf16.mxu0 %v4426
    %6428 = vmatpush1.bf16.msra.mxu0 %v4425
    %6429 = vmatprep.subr.bf16.mxu0 %v4430
    %6430 = vmatpush1.bf16.msra.mxu0 %v4429
    %6431 = vmatprep.subr.bf16.mxu0 %v4434
    %6432 = vmatpush1.bf16.msra.mxu0 %v4433
    %6433 = vmatprep.subr.bf16.mxu0 %v4438
    %6434 = vmatpush1.bf16.msra.mxu0 %v4437
    %6435 = vmatprep.subr.bf16.mxu0 %v4442
    %6436 = vmatpush1.bf16.msra.mxu0 %v4441
    %6437 = vmatprep.subr.bf16.mxu0 %v4446
    %6438 = vmatpush1.bf16.msra.mxu0 %v4445
    %6439 = vmatprep.subr.bf16.mxu0 %v4450
    %6440 = vmatpush1.bf16.msra.mxu0 %v4449
    %6441 = vmatprep.subr.bf16.mxu0 %v4454
    %6442 = vmatpush1.bf16.msra.mxu0 %v4453
    %6443 = vmatprep.subr.bf16.mxu0 %v4458
    %6444 = vmatpush1.bf16.msra.mxu0 %v4457
    %6445 = vmatprep.subr.bf16.mxu0 %v4462
    %6446 = vmatpush1.bf16.msra.mxu0 %v4461
    %6447 = vmatprep.subr.bf16.mxu0 %v4466
    %6448 = vmatpush1.bf16.msra.mxu0 %v4465
    %6449 = vmatprep.subr.bf16.mxu0 %v4470
    %6450 = vmatpush1.bf16.msra.mxu0 %v4469
    %6451 = vmatprep.subr.bf16.mxu0 %v4474
    %6452 = vmatpush1.bf16.msra.mxu0 %v4473
    %6453 = vmatprep.subr.bf16.mxu0 %v4478
    %6454 = vmatpush1.bf16.msra.mxu0 %v4477
    %6455 = vmatprep.subr.bf16.mxu0 %v4482
    %6456 = vmatpush1.bf16.msra.mxu0 %v4481
    %6457 = vmatprep.subr.bf16.mxu0 %v4486
    %6458 = vmatpush1.bf16.msra.mxu0 %v4485
    %6459 = vmatprep.mubr.bf16.mxu0 %v152
    %6460 = vmatmul.mubr.bf16.gmra.mrb[0].mxu0 %v151
    %v6461 = vpop.f32.mrb[0].mxu0
    %v6462 = vadd.f32 %v6421, %v6461
    %v6463 = vpop.f32.mrb[0].mxu0
    %v6464 = vadd.f32 %v6423, %v6463
    %v6465 = vpop.f32.mrb[0].mxu0
    %v6466 = vpop.f32.mrb[0].mxu0
    %6467 = vdwg.mxu0
    %6468 = vmatprep.subr.bf16.mxu0 %v4490
    %6469 = vmatpush1.bf16.msra.mxu0 %v4489
    %6470 = vmatprep.subr.bf16.mxu0 %v4494
    %6471 = vmatpush1.bf16.msra.mxu0 %v4493
    %6472 = vmatprep.subr.bf16.mxu0 %v4498
    %6473 = vmatpush1.bf16.msra.mxu0 %v4497
    %6474 = vmatprep.subr.bf16.mxu0 %v4502
    %6475 = vmatpush1.bf16.msra.mxu0 %v4501
    %6476 = vmatprep.subr.bf16.mxu0 %v4506
    %6477 = vmatpush1.bf16.msra.mxu0 %v4505
    %6478 = vmatprep.subr.bf16.mxu0 %v4510
    %6479 = vmatpush1.bf16.msra.mxu0 %v4509
    %6480 = vmatprep.subr.bf16.mxu0 %v4514
    %6481 = vmatpush1.bf16.msra.mxu0 %v4513
    %6482 = vmatprep.subr.bf16.mxu0 %v4518
    %6483 = vmatpush1.bf16.msra.mxu0 %v4517
    %6484 = vmatprep.subr.bf16.mxu0 %v4522
    %6485 = vmatpush1.bf16.msra.mxu0 %v4521
    %6486 = vmatprep.subr.bf16.mxu0 %v4526
    %6487 = vmatpush1.bf16.msra.mxu0 %v4525
    %6488 = vmatprep.subr.bf16.mxu0 %v4530
    %6489 = vmatpush1.bf16.msra.mxu0 %v4529
    %6490 = vmatprep.subr.bf16.mxu0 %v4534
    %6491 = vmatpush1.bf16.msra.mxu0 %v4533
    %6492 = vmatprep.subr.bf16.mxu0 %v4538
    %6493 = vmatpush1.bf16.msra.mxu0 %v4537
    %6494 = vmatprep.subr.bf16.mxu0 %v4542
    %6495 = vmatpush1.bf16.msra.mxu0 %v4541
    %6496 = vmatprep.subr.bf16.mxu0 %v4546
    %6497 = vmatpush1.bf16.msra.mxu0 %v4545
    %6498 = vmatprep.subr.bf16.mxu0 %v4550
    %6499 = vmatpush1.bf16.msra.mxu0 %v4549
    %6500 = vmatprep.mubr.bf16.mxu0 %v154
    %6501 = vmatmul.mubr.bf16.gmra.mrb[0].mxu0 %v153
    %v6502 = vpop.f32.mrb[0].mxu0
    %v6503 = vadd.f32 %v6462, %v6502
    %v6504 = vpop.f32.mrb[0].mxu0
    %v6505 = vadd.f32 %v6464, %v6504
    %v6506 = vpop.f32.mrb[0].mxu0
    %v6507 = vpop.f32.mrb[0].mxu0
    %6508 = vdwg.mxu0
    %6509 = vmatprep.subr.bf16.mxu0 %v4554
    %6510 = vmatpush1.bf16.msra.mxu0 %v4553
    %6511 = vmatprep.subr.bf16.mxu0 %v4558
    %6512 = vmatpush1.bf16.msra.mxu0 %v4557
    %6513 = vmatprep.subr.bf16.mxu0 %v4562
    %6514 = vmatpush1.bf16.msra.mxu0 %v4561
    %6515 = vmatprep.subr.bf16.mxu0 %v4566
    %6516 = vmatpush1.bf16.msra.mxu0 %v4565
    %6517 = vmatprep.subr.bf16.mxu0 %v4570
    %6518 = vmatpush1.bf16.msra.mxu0 %v4569
    %6519 = vmatprep.subr.bf16.mxu0 %v4574
    %6520 = vmatpush1.bf16.msra.mxu0 %v4573
    %6521 = vmatprep.subr.bf16.mxu0 %v4578
    %6522 = vmatpush1.bf16.msra.mxu0 %v4577
    %6523 = vmatprep.subr.bf16.mxu0 %v4582
    %6524 = vmatpush1.bf16.msra.mxu0 %v4581
    %6525 = vmatprep.subr.bf16.mxu0 %v4586
    %6526 = vmatpush1.bf16.msra.mxu0 %v4585
    %6527 = vmatprep.subr.bf16.mxu0 %v4590
    %6528 = vmatpush1.bf16.msra.mxu0 %v4589
    %6529 = vmatprep.subr.bf16.mxu0 %v4594
    %6530 = vmatpush1.bf16.msra.mxu0 %v4593
    %6531 = vmatprep.subr.bf16.mxu0 %v4598
    %6532 = vmatpush1.bf16.msra.mxu0 %v4597
    %6533 = vmatprep.subr.bf16.mxu0 %v4602
    %6534 = vmatpush1.bf16.msra.mxu0 %v4601
    %6535 = vmatprep.subr.bf16.mxu0 %v4606
    %6536 = vmatpush1.bf16.msra.mxu0 %v4605
    %6537 = vmatprep.subr.bf16.mxu0 %v4610
    %6538 = vmatpush1.bf16.msra.mxu0 %v4609
    %6539 = vmatprep.subr.bf16.mxu0 %v4614
    %6540 = vmatpush1.bf16.msra.mxu0 %v4613
    %6541 = vmatprep.mubr.bf16.mxu0 %v156
    %6542 = vmatmul.mubr.bf16.gmra.mrb[0].mxu0 %v155
    %v6543 = vpop.f32.mrb[0].mxu0
    %v6544 = vadd.f32 %v6503, %v6543
    %v6545 = vpop.f32.mrb[0].mxu0
    %v6546 = vadd.f32 %v6505, %v6545
    %v6547 = vpop.f32.mrb[0].mxu0
    %v6548 = vpop.f32.mrb[0].mxu0
    %6549 = vdwg.mxu0
    %6550 = vmatprep.subr.bf16.mxu0 %v4618
    %6551 = vmatpush1.bf16.msra.mxu0 %v4617
    %6552 = vmatprep.subr.bf16.mxu0 %v4622
    %6553 = vmatpush1.bf16.msra.mxu0 %v4621
    %6554 = vmatprep.subr.bf16.mxu0 %v4626
    %6555 = vmatpush1.bf16.msra.mxu0 %v4625
    %6556 = vmatprep.subr.bf16.mxu0 %v4630
    %6557 = vmatpush1.bf16.msra.mxu0 %v4629
    %6558 = vmatprep.subr.bf16.mxu0 %v4634
    %6559 = vmatpush1.bf16.msra.mxu0 %v4633
    %6560 = vmatprep.subr.bf16.mxu0 %v4638
    %6561 = vmatpush1.bf16.msra.mxu0 %v4637
    %6562 = vmatprep.subr.bf16.mxu0 %v4642
    %6563 = vmatpush1.bf16.msra.mxu0 %v4641
    %6564 = vmatprep.subr.bf16.mxu0 %v4646
    %6565 = vmatpush1.bf16.msra.mxu0 %v4645
    %6566 = vmatprep.subr.bf16.mxu0 %v4650
    %6567 = vmatpush1.bf16.msra.mxu0 %v4649
    %6568 = vmatprep.subr.bf16.mxu0 %v4654
    %6569 = vmatpush1.bf16.msra.mxu0 %v4653
    %6570 = vmatprep.subr.bf16.mxu0 %v4658
    %6571 = vmatpush1.bf16.msra.mxu0 %v4657
    %6572 = vmatprep.subr.bf16.mxu0 %v4662
    %6573 = vmatpush1.bf16.msra.mxu0 %v4661
    %6574 = vmatprep.subr.bf16.mxu0 %v4666
    %6575 = vmatpush1.bf16.msra.mxu0 %v4665
    %6576 = vmatprep.subr.bf16.mxu0 %v4670
    %6577 = vmatpush1.bf16.msra.mxu0 %v4669
    %6578 = vmatprep.subr.bf16.mxu0 %v4674
    %6579 = vmatpush1.bf16.msra.mxu0 %v4673
    %6580 = vmatprep.subr.bf16.mxu0 %v4678
    %6581 = vmatpush1.bf16.msra.mxu0 %v4677
    %6582 = vmatprep.mubr.bf16.mxu0 %v158
    %6583 = vmatmul.mubr.bf16.gmra.mrb[0].mxu0 %v157
    %v6584 = vpop.f32.mrb[0].mxu0
    %v6585 = vadd.f32 %v6544, %v6584
    %v6586 = vpop.f32.mrb[0].mxu0
    %v6587 = vadd.f32 %v6546, %v6586
    %v6588 = vpop.f32.mrb[0].mxu0
    %v6589 = vpop.f32.mrb[0].mxu0
    %6590 = vdwg.mxu0
    %6591 = vmatprep.subr.bf16.mxu0 %v4682
    %6592 = vmatpush1.bf16.msra.mxu0 %v4681
    %6593 = vmatprep.subr.bf16.mxu0 %v4686
    %6594 = vmatpush1.bf16.msra.mxu0 %v4685
    %6595 = vmatprep.subr.bf16.mxu0 %v4690
    %6596 = vmatpush1.bf16.msra.mxu0 %v4689
    %6597 = vmatprep.subr.bf16.mxu0 %v4694
    %6598 = vmatpush1.bf16.msra.mxu0 %v4693
    %6599 = vmatprep.subr.bf16.mxu0 %v4698
    %6600 = vmatpush1.bf16.msra.mxu0 %v4697
    %6601 = vmatprep.subr.bf16.mxu0 %v4702
    %6602 = vmatpush1.bf16.msra.mxu0 %v4701
    %6603 = vmatprep.subr.bf16.mxu0 %v4706
    %6604 = vmatpush1.bf16.msra.mxu0 %v4705
    %6605 = vmatprep.subr.bf16.mxu0 %v4710
    %6606 = vmatpush1.bf16.msra.mxu0 %v4709
    %6607 = vmatprep.subr.bf16.mxu0 %v4714
    %6608 = vmatpush1.bf16.msra.mxu0 %v4713
    %6609 = vmatprep.subr.bf16.mxu0 %v4718
    %6610 = vmatpush1.bf16.msra.mxu0 %v4717
    %6611 = vmatprep.subr.bf16.mxu0 %v4722
    %6612 = vmatpush1.bf16.msra.mxu0 %v4721
    %6613 = vmatprep.subr.bf16.mxu0 %v4726
    %6614 = vmatpush1.bf16.msra.mxu0 %v4725
    %6615 = vmatprep.subr.bf16.mxu0 %v4730
    %6616 = vmatpush1.bf16.msra.mxu0 %v4729
    %6617 = vmatprep.subr.bf16.mxu0 %v4734
    %6618 = vmatpush1.bf16.msra.mxu0 %v4733
    %6619 = vmatprep.subr.bf16.mxu0 %v4738
    %6620 = vmatpush1.bf16.msra.mxu0 %v4737
    %6621 = vmatprep.subr.bf16.mxu0 %v4742
    %6622 = vmatpush1.bf16.msra.mxu0 %v4741
    %6623 = vmatprep.mubr.bf16.mxu0 %v160
    %6624 = vmatmul.mubr.bf16.gmra.mrb[0].mxu0 %v159
    %v6625 = vpop.f32.mrb[0].mxu0
    %v6626 = vadd.f32 %v6585, %v6625
    %v6627 = vpop.f32.mrb[0].mxu0
    %v6628 = vadd.f32 %v6587, %v6627
    %v6629 = vpop.f32.mrb[0].mxu0
    %v6630 = vpop.f32.mrb[0].mxu0
    %6631 = vdwg.mxu0
    %6632 = vmatprep.subr.bf16.mxu0 %v4746
    %6633 = vmatpush1.bf16.msra.mxu0 %v4745
    %6634 = vmatprep.subr.bf16.mxu0 %v4750
    %6635 = vmatpush1.bf16.msra.mxu0 %v4749
    %6636 = vmatprep.subr.bf16.mxu0 %v4754
    %6637 = vmatpush1.bf16.msra.mxu0 %v4753
    %6638 = vmatprep.subr.bf16.mxu0 %v4758
    %6639 = vmatpush1.bf16.msra.mxu0 %v4757
    %6640 = vmatprep.subr.bf16.mxu0 %v4762
    %6641 = vmatpush1.bf16.msra.mxu0 %v4761
    %6642 = vmatprep.subr.bf16.mxu0 %v4766
    %6643 = vmatpush1.bf16.msra.mxu0 %v4765
    %6644 = vmatprep.subr.bf16.mxu0 %v4770
    %6645 = vmatpush1.bf16.msra.mxu0 %v4769
    %6646 = vmatprep.subr.bf16.mxu0 %v4774
    %6647 = vmatpush1.bf16.msra.mxu0 %v4773
    %6648 = vmatprep.subr.bf16.mxu0 %v4778
    %6649 = vmatpush1.bf16.msra.mxu0 %v4777
    %6650 = vmatprep.subr.bf16.mxu0 %v4782
    %6651 = vmatpush1.bf16.msra.mxu0 %v4781
    %6652 = vmatprep.subr.bf16.mxu0 %v4786
    %6653 = vmatpush1.bf16.msra.mxu0 %v4785
    %6654 = vmatprep.subr.bf16.mxu0 %v4790
    %6655 = vmatpush1.bf16.msra.mxu0 %v4789
    %6656 = vmatprep.subr.bf16.mxu0 %v4794
    %6657 = vmatpush1.bf16.msra.mxu0 %v4793
    %6658 = vmatprep.subr.bf16.mxu0 %v4798
    %6659 = vmatpush1.bf16.msra.mxu0 %v4797
    %6660 = vmatprep.subr.bf16.mxu0 %v4802
    %6661 = vmatpush1.bf16.msra.mxu0 %v4801
    %6662 = vmatprep.subr.bf16.mxu0 %v4806
    %6663 = vmatpush1.bf16.msra.mxu0 %v4805
    %6664 = vmatprep.mubr.bf16.mxu0 %v162
    %6665 = vmatmul.mubr.bf16.gmra.mrb[0].mxu0 %v161
    %v6666 = vpop.f32.mrb[0].mxu0
    %v6667 = vadd.f32 %v6626, %v6666
    %v6668 = vpop.f32.mrb[0].mxu0
    %v6669 = vadd.f32 %v6628, %v6668
    %v6670 = vpop.f32.mrb[0].mxu0
    %v6671 = vpop.f32.mrb[0].mxu0
    %6672 = vdwg.mxu0
    %6673 = vmatprep.subr.bf16.mxu0 %v4810
    %6674 = vmatpush1.bf16.msra.mxu0 %v4809
    %6675 = vmatprep.subr.bf16.mxu0 %v4814
    %6676 = vmatpush1.bf16.msra.mxu0 %v4813
    %6677 = vmatprep.subr.bf16.mxu0 %v4818
    %6678 = vmatpush1.bf16.msra.mxu0 %v4817
    %6679 = vmatprep.subr.bf16.mxu0 %v4822
    %6680 = vmatpush1.bf16.msra.mxu0 %v4821
    %6681 = vmatprep.subr.bf16.mxu0 %v4826
    %6682 = vmatpush1.bf16.msra.mxu0 %v4825
    %6683 = vmatprep.subr.bf16.mxu0 %v4830
    %6684 = vmatpush1.bf16.msra.mxu0 %v4829
    %6685 = vmatprep.subr.bf16.mxu0 %v4834
    %6686 = vmatpush1.bf16.msra.mxu0 %v4833
    %6687 = vmatprep.subr.bf16.mxu0 %v4838
    %6688 = vmatpush1.bf16.msra.mxu0 %v4837
    %6689 = vmatprep.subr.bf16.mxu0 %v4842
    %6690 = vmatpush1.bf16.msra.mxu0 %v4841
    %6691 = vmatprep.subr.bf16.mxu0 %v4846
    %6692 = vmatpush1.bf16.msra.mxu0 %v4845
    %6693 = vmatprep.subr.bf16.mxu0 %v4850
    %6694 = vmatpush1.bf16.msra.mxu0 %v4849
    %6695 = vmatprep.subr.bf16.mxu0 %v4854
    %6696 = vmatpush1.bf16.msra.mxu0 %v4853
    %6697 = vmatprep.subr.bf16.mxu0 %v4858
    %6698 = vmatpush1.bf16.msra.mxu0 %v4857
    %6699 = vmatprep.subr.bf16.mxu0 %v4862
    %6700 = vmatpush1.bf16.msra.mxu0 %v4861
    %6701 = vmatprep.subr.bf16.mxu0 %v4866
    %6702 = vmatpush1.bf16.msra.mxu0 %v4865
    %6703 = vmatprep.subr.bf16.mxu0 %v4870
    %6704 = vmatpush1.bf16.msra.mxu0 %v4869
    %6705 = vmatprep.mubr.bf16.mxu0 %v164
    %6706 = vmatmul.mubr.bf16.gmra.mrb[0].mxu0 %v163
    %v6707 = vpop.f32.mrb[0].mxu0
    %v6708 = vadd.f32 %v6667, %v6707
    %v6709 = vpop.f32.mrb[0].mxu0
    %v6710 = vadd.f32 %v6669, %v6709
    %v6711 = vpop.f32.mrb[0].mxu0
    %v6712 = vpop.f32.mrb[0].mxu0
    %6713 = vdwg.mxu0
    %6714 = vmatprep.subr.bf16.mxu0 %v4874
    %6715 = vmatpush1.bf16.msra.mxu0 %v4873
    %6716 = vmatprep.subr.bf16.mxu0 %v4878
    %6717 = vmatpush1.bf16.msra.mxu0 %v4877
    %6718 = vmatprep.subr.bf16.mxu0 %v4882
    %6719 = vmatpush1.bf16.msra.mxu0 %v4881
    %6720 = vmatprep.subr.bf16.mxu0 %v4886
    %6721 = vmatpush1.bf16.msra.mxu0 %v4885
    %6722 = vmatprep.subr.bf16.mxu0 %v4890
    %6723 = vmatpush1.bf16.msra.mxu0 %v4889
    %6724 = vmatprep.subr.bf16.mxu0 %v4894
    %6725 = vmatpush1.bf16.msra.mxu0 %v4893
    %6726 = vmatprep.subr.bf16.mxu0 %v4898
    %6727 = vmatpush1.bf16.msra.mxu0 %v4897
    %6728 = vmatprep.subr.bf16.mxu0 %v4902
    %6729 = vmatpush1.bf16.msra.mxu0 %v4901
    %6730 = vmatprep.subr.bf16.mxu0 %v4906
    %6731 = vmatpush1.bf16.msra.mxu0 %v4905
    %6732 = vmatprep.subr.bf16.mxu0 %v4910
    %6733 = vmatpush1.bf16.msra.mxu0 %v4909
    %6734 = vmatprep.subr.bf16.mxu0 %v4914
    %6735 = vmatpush1.bf16.msra.mxu0 %v4913
    %6736 = vmatprep.subr.bf16.mxu0 %v4918
    %6737 = vmatpush1.bf16.msra.mxu0 %v4917
    %6738 = vmatprep.subr.bf16.mxu0 %v4922
    %6739 = vmatpush1.bf16.msra.mxu0 %v4921
    %6740 = vmatprep.subr.bf16.mxu0 %v4926
    %6741 = vmatpush1.bf16.msra.mxu0 %v4925
    %6742 = vmatprep.subr.bf16.mxu0 %v4930
    %6743 = vmatpush1.bf16.msra.mxu0 %v4929
    %6744 = vmatprep.subr.bf16.mxu0 %v4934
    %6745 = vmatpush1.bf16.msra.mxu0 %v4933
    %6746 = vmatprep.mubr.bf16.mxu0 %v166
    %6747 = vmatmul.mubr.bf16.gmra.mrb[0].mxu0 %v165
    %v6748 = vpop.f32.mrb[0].mxu0
    %v6749 = vadd.f32 %v6708, %v6748
    %v6750 = vpop.f32.mrb[0].mxu0
    %v6751 = vadd.f32 %v6710, %v6750
    %v6752 = vpop.f32.mrb[0].mxu0
    %v6753 = vpop.f32.mrb[0].mxu0
    %6754 = vdwg.mxu0
    %6755 = vmatprep.subr.bf16.mxu0 %v4938
    %6756 = vmatpush1.bf16.msra.mxu0 %v4937
    %6757 = vmatprep.subr.bf16.mxu0 %v4942
    %6758 = vmatpush1.bf16.msra.mxu0 %v4941
    %6759 = vmatprep.subr.bf16.mxu0 %v4946
    %6760 = vmatpush1.bf16.msra.mxu0 %v4945
    %6761 = vmatprep.subr.bf16.mxu0 %v4950
    %6762 = vmatpush1.bf16.msra.mxu0 %v4949
    %6763 = vmatprep.subr.bf16.mxu0 %v4954
    %6764 = vmatpush1.bf16.msra.mxu0 %v4953
    %6765 = vmatprep.subr.bf16.mxu0 %v4958
    %6766 = vmatpush1.bf16.msra.mxu0 %v4957
    %6767 = vmatprep.subr.bf16.mxu0 %v4962
    %6768 = vmatpush1.bf16.msra.mxu0 %v4961
    %6769 = vmatprep.subr.bf16.mxu0 %v4966
    %6770 = vmatpush1.bf16.msra.mxu0 %v4965
    %6771 = vmatprep.subr.bf16.mxu0 %v4970
    %6772 = vmatpush1.bf16.msra.mxu0 %v4969
    %6773 = vmatprep.subr.bf16.mxu0 %v4974
    %6774 = vmatpush1.bf16.msra.mxu0 %v4973
    %6775 = vmatprep.subr.bf16.mxu0 %v4978
    %6776 = vmatpush1.bf16.msra.mxu0 %v4977
    %6777 = vmatprep.subr.bf16.mxu0 %v4982
    %6778 = vmatpush1.bf16.msra.mxu0 %v4981
    %6779 = vmatprep.subr.bf16.mxu0 %v4986
    %6780 = vmatpush1.bf16.msra.mxu0 %v4985
    %6781 = vmatprep.subr.bf16.mxu0 %v4990
    %6782 = vmatpush1.bf16.msra.mxu0 %v4989
    %6783 = vmatprep.subr.bf16.mxu0 %v4994
    %6784 = vmatpush1.bf16.msra.mxu0 %v4993
    %6785 = vmatprep.subr.bf16.mxu0 %v4998
    %6786 = vmatpush1.bf16.msra.mxu0 %v4997
    %6787 = vmatprep.mubr.bf16.mxu0 %v168
    %6788 = vmatmul.mubr.bf16.gmra.mrb[0].mxu0 %v167
    %v6789 = vpop.f32.mrb[0].mxu0
    %v6790 = vadd.f32 %v6749, %v6789
    %v6791 = vpop.f32.mrb[0].mxu0
    %v6792 = vadd.f32 %v6751, %v6791
    %v6793 = vpop.f32.mrb[0].mxu0
    %v6794 = vpop.f32.mrb[0].mxu0
    %6795 = vdwg.mxu0
    %6796 = vmatprep.subr.bf16.mxu0 %v5002
    %6797 = vmatpush1.bf16.msra.mxu0 %v5001
    %6798 = vmatprep.subr.bf16.mxu0 %v5006
    %6799 = vmatpush1.bf16.msra.mxu0 %v5005
    %6800 = vmatprep.subr.bf16.mxu0 %v5010
    %6801 = vmatpush1.bf16.msra.mxu0 %v5009
    %6802 = vmatprep.subr.bf16.mxu0 %v5014
    %6803 = vmatpush1.bf16.msra.mxu0 %v5013
    %6804 = vmatprep.subr.bf16.mxu0 %v5018
    %6805 = vmatpush1.bf16.msra.mxu0 %v5017
    %6806 = vmatprep.subr.bf16.mxu0 %v5022
    %6807 = vmatpush1.bf16.msra.mxu0 %v5021
    %6808 = vmatprep.subr.bf16.mxu0 %v5026
    %6809 = vmatpush1.bf16.msra.mxu0 %v5025
    %6810 = vmatprep.subr.bf16.mxu0 %v5030
    %6811 = vmatpush1.bf16.msra.mxu0 %v5029
    %6812 = vmatprep.subr.bf16.mxu0 %v5034
    %6813 = vmatpush1.bf16.msra.mxu0 %v5033
    %6814 = vmatprep.subr.bf16.mxu0 %v5038
    %6815 = vmatpush1.bf16.msra.mxu0 %v5037
    %6816 = vmatprep.subr.bf16.mxu0 %v5042
    %6817 = vmatpush1.bf16.msra.mxu0 %v5041
    %6818 = vmatprep.subr.bf16.mxu0 %v5046
    %6819 = vmatpush1.bf16.msra.mxu0 %v5045
    %6820 = vmatprep.subr.bf16.mxu0 %v5050
    %6821 = vmatpush1.bf16.msra.mxu0 %v5049
    %6822 = vmatprep.subr.bf16.mxu0 %v5054
    %6823 = vmatpush1.bf16.msra.mxu0 %v5053
    %6824 = vmatprep.subr.bf16.mxu0 %v5058
    %6825 = vmatpush1.bf16.msra.mxu0 %v5057
    %6826 = vmatprep.subr.bf16.mxu0 %v5062
    %6827 = vmatpush1.bf16.msra.mxu0 %v5061
    %6828 = vmatprep.mubr.bf16.mxu0 %v170
    %6829 = vmatmul.mubr.bf16.gmra.mrb[0].mxu0 %v169
    %v6830 = vpop.f32.mrb[0].mxu0
    %v6831 = vadd.f32 %v6790, %v6830
    %v6832 = vpop.f32.mrb[0].mxu0
    %v6833 = vadd.f32 %v6792, %v6832
    %v6834 = vpop.f32.mrb[0].mxu0
    %v6835 = vpop.f32.mrb[0].mxu0
    %6836 = vdwg.mxu0
    %6837 = vmatprep.subr.bf16.mxu0 %v5066
    %6838 = vmatpush1.bf16.msra.mxu0 %v5065
    %6839 = vmatprep.subr.bf16.mxu0 %v5070
    %6840 = vmatpush1.bf16.msra.mxu0 %v5069
    %6841 = vmatprep.subr.bf16.mxu0 %v5074
    %6842 = vmatpush1.bf16.msra.mxu0 %v5073
    %6843 = vmatprep.subr.bf16.mxu0 %v5078
    %6844 = vmatpush1.bf16.msra.mxu0 %v5077
    %6845 = vmatprep.subr.bf16.mxu0 %v5082
    %6846 = vmatpush1.bf16.msra.mxu0 %v5081
    %6847 = vmatprep.subr.bf16.mxu0 %v5086
    %6848 = vmatpush1.bf16.msra.mxu0 %v5085
    %6849 = vmatprep.subr.bf16.mxu0 %v5090
    %6850 = vmatpush1.bf16.msra.mxu0 %v5089
    %6851 = vmatprep.subr.bf16.mxu0 %v5094
    %6852 = vmatpush1.bf16.msra.mxu0 %v5093
    %6853 = vmatprep.subr.bf16.mxu0 %v5098
    %6854 = vmatpush1.bf16.msra.mxu0 %v5097
    %6855 = vmatprep.subr.bf16.mxu0 %v5102
    %6856 = vmatpush1.bf16.msra.mxu0 %v5101
    %6857 = vmatprep.subr.bf16.mxu0 %v5106
    %6858 = vmatpush1.bf16.msra.mxu0 %v5105
    %6859 = vmatprep.subr.bf16.mxu0 %v5110
    %6860 = vmatpush1.bf16.msra.mxu0 %v5109
    %6861 = vmatprep.subr.bf16.mxu0 %v5114
    %6862 = vmatpush1.bf16.msra.mxu0 %v5113
    %6863 = vmatprep.subr.bf16.mxu0 %v5118
    %6864 = vmatpush1.bf16.msra.mxu0 %v5117
    %6865 = vmatprep.subr.bf16.mxu0 %v5122
    %6866 = vmatpush1.bf16.msra.mxu0 %v5121
    %6867 = vmatprep.subr.bf16.mxu0 %v5126
    %6868 = vmatpush1.bf16.msra.mxu0 %v5125
    %6869 = vmatprep.mubr.bf16.mxu0 %v172
    %6870 = vmatmul.mubr.bf16.gmra.mrb[0].mxu0 %v171
    %v6871 = vpop.f32.mrb[0].mxu0
    %v6872 = vadd.f32 %v6831, %v6871
    %v6873 = vpop.f32.mrb[0].mxu0
    %v6874 = vadd.f32 %v6833, %v6873
    %v6875 = vpop.f32.mrb[0].mxu0
    %v6876 = vpop.f32.mrb[0].mxu0
    %6877 = vdwg.mxu0
    %6878 = vmatprep.subr.bf16.mxu0 %v5130
    %6879 = vmatpush1.bf16.msra.mxu0 %v5129
    %6880 = vmatprep.subr.bf16.mxu0 %v5134
    %6881 = vmatpush1.bf16.msra.mxu0 %v5133
    %6882 = vmatprep.subr.bf16.mxu0 %v5138
    %6883 = vmatpush1.bf16.msra.mxu0 %v5137
    %6884 = vmatprep.subr.bf16.mxu0 %v5142
    %6885 = vmatpush1.bf16.msra.mxu0 %v5141
    %6886 = vmatprep.subr.bf16.mxu0 %v5146
    %6887 = vmatpush1.bf16.msra.mxu0 %v5145
    %6888 = vmatprep.subr.bf16.mxu0 %v5150
    %6889 = vmatpush1.bf16.msra.mxu0 %v5149
    %6890 = vmatprep.subr.bf16.mxu0 %v5154
    %6891 = vmatpush1.bf16.msra.mxu0 %v5153
    %6892 = vmatprep.subr.bf16.mxu0 %v5158
    %6893 = vmatpush1.bf16.msra.mxu0 %v5157
    %6894 = vmatprep.subr.bf16.mxu0 %v5162
    %6895 = vmatpush1.bf16.msra.mxu0 %v5161
    %6896 = vmatprep.subr.bf16.mxu0 %v5166
    %6897 = vmatpush1.bf16.msra.mxu0 %v5165
    %6898 = vmatprep.subr.bf16.mxu0 %v5170
    %6899 = vmatpush1.bf16.msra.mxu0 %v5169
    %6900 = vmatprep.subr.bf16.mxu0 %v5174
    %6901 = vmatpush1.bf16.msra.mxu0 %v5173
    %6902 = vmatprep.subr.bf16.mxu0 %v5178
    %6903 = vmatpush1.bf16.msra.mxu0 %v5177
    %6904 = vmatprep.subr.bf16.mxu0 %v5182
    %6905 = vmatpush1.bf16.msra.mxu0 %v5181
    %6906 = vmatprep.subr.bf16.mxu0 %v5186
    %6907 = vmatpush1.bf16.msra.mxu0 %v5185
    %6908 = vmatprep.subr.bf16.mxu0 %v5190
    %6909 = vmatpush1.bf16.msra.mxu0 %v5189
    %6910 = vmatprep.mubr.bf16.mxu0 %v174
    %6911 = vmatmul.mubr.bf16.gmra.mrb[0].mxu0 %v173
    %v6912 = vpop.f32.mrb[0].mxu0
    %v6913 = vadd.f32 %v6872, %v6912
    %v6914 = vpop.f32.mrb[0].mxu0
    %v6915 = vadd.f32 %v6874, %v6914
    %v6916 = vpop.f32.mrb[0].mxu0
    %v6917 = vpop.f32.mrb[0].mxu0
    %6918 = vdwg.mxu0
    %6919 = vmatprep.subr.bf16.mxu0 %v5194
    %6920 = vmatpush1.bf16.msra.mxu0 %v5193
    %6921 = vmatprep.subr.bf16.mxu0 %v5198
    %6922 = vmatpush1.bf16.msra.mxu0 %v5197
    %6923 = vmatprep.subr.bf16.mxu0 %v5202
    %6924 = vmatpush1.bf16.msra.mxu0 %v5201
    %6925 = vmatprep.subr.bf16.mxu0 %v5206
    %6926 = vmatpush1.bf16.msra.mxu0 %v5205
    %6927 = vmatprep.subr.bf16.mxu0 %v5210
    %6928 = vmatpush1.bf16.msra.mxu0 %v5209
    %6929 = vmatprep.subr.bf16.mxu0 %v5214
    %6930 = vmatpush1.bf16.msra.mxu0 %v5213
    %6931 = vmatprep.subr.bf16.mxu0 %v5218
    %6932 = vmatpush1.bf16.msra.mxu0 %v5217
    %6933 = vmatprep.subr.bf16.mxu0 %v5222
    %6934 = vmatpush1.bf16.msra.mxu0 %v5221
    %6935 = vmatprep.subr.bf16.mxu0 %v5226
    %6936 = vmatpush1.bf16.msra.mxu0 %v5225
    %6937 = vmatprep.subr.bf16.mxu0 %v5230
    %6938 = vmatpush1.bf16.msra.mxu0 %v5229
    %6939 = vmatprep.subr.bf16.mxu0 %v5234
    %6940 = vmatpush1.bf16.msra.mxu0 %v5233
    %6941 = vmatprep.subr.bf16.mxu0 %v5238
    %6942 = vmatpush1.bf16.msra.mxu0 %v5237
    %6943 = vmatprep.subr.bf16.mxu0 %v5242
    %6944 = vmatpush1.bf16.msra.mxu0 %v5241
    %6945 = vmatprep.subr.bf16.mxu0 %v5246
    %6946 = vmatpush1.bf16.msra.mxu0 %v5245
    %6947 = vmatprep.subr.bf16.mxu0 %v5250
    %6948 = vmatpush1.bf16.msra.mxu0 %v5249
    %6949 = vmatprep.subr.bf16.mxu0 %v5254
    %6950 = vmatpush1.bf16.msra.mxu0 %v5253
    %6951 = vmatprep.mubr.bf16.mxu0 %v176
    %6952 = vmatmul.mubr.bf16.gmra.mrb[0].mxu0 %v175
    %v6953 = vpop.f32.mrb[0].mxu0
    %v6954 = vadd.f32 %v6913, %v6953
    %v6955 = vpop.f32.mrb[0].mxu0
    %v6956 = vadd.f32 %v6915, %v6955
    %v6957 = vpop.f32.mrb[0].mxu0
    %v6958 = vpop.f32.mrb[0].mxu0
    %6959 = vdwg.mxu0
    %6960 = vmatprep.subr.bf16.mxu0 %v5258
    %6961 = vmatpush1.bf16.msra.mxu0 %v5257
    %6962 = vmatprep.subr.bf16.mxu0 %v5262
    %6963 = vmatpush1.bf16.msra.mxu0 %v5261
    %6964 = vmatprep.subr.bf16.mxu0 %v5266
    %6965 = vmatpush1.bf16.msra.mxu0 %v5265
    %6966 = vmatprep.subr.bf16.mxu0 %v5270
    %6967 = vmatpush1.bf16.msra.mxu0 %v5269
    %6968 = vmatprep.subr.bf16.mxu0 %v5274
    %6969 = vmatpush1.bf16.msra.mxu0 %v5273
    %6970 = vmatprep.subr.bf16.mxu0 %v5278
    %6971 = vmatpush1.bf16.msra.mxu0 %v5277
    %6972 = vmatprep.subr.bf16.mxu0 %v5282
    %6973 = vmatpush1.bf16.msra.mxu0 %v5281
    %6974 = vmatprep.subr.bf16.mxu0 %v5286
    %6975 = vmatpush1.bf16.msra.mxu0 %v5285
    %6976 = vmatprep.subr.bf16.mxu0 %v5290
    %6977 = vmatpush1.bf16.msra.mxu0 %v5289
    %6978 = vmatprep.subr.bf16.mxu0 %v5294
    %6979 = vmatpush1.bf16.msra.mxu0 %v5293
    %6980 = vmatprep.subr.bf16.mxu0 %v5298
    %6981 = vmatpush1.bf16.msra.mxu0 %v5297
    %6982 = vmatprep.subr.bf16.mxu0 %v5302
    %6983 = vmatpush1.bf16.msra.mxu0 %v5301
    %6984 = vmatprep.subr.bf16.mxu0 %v5306
    %6985 = vmatpush1.bf16.msra.mxu0 %v5305
    %6986 = vmatprep.subr.bf16.mxu0 %v5310
    %6987 = vmatpush1.bf16.msra.mxu0 %v5309
    %6988 = vmatprep.subr.bf16.mxu0 %v5314
    %6989 = vmatpush1.bf16.msra.mxu0 %v5313
    %6990 = vmatprep.subr.bf16.mxu0 %v5318
    %6991 = vmatpush1.bf16.msra.mxu0 %v5317
    %6992 = vmatprep.mubr.bf16.mxu0 %v178
    %6993 = vmatmul.mubr.bf16.gmra.mrb[0].mxu0 %v177
    %v6994 = vpop.f32.mrb[0].mxu0
    %v6995 = vadd.f32 %v6954, %v6994
    %v6996 = vpop.f32.mrb[0].mxu0
    %v6997 = vadd.f32 %v6956, %v6996
    %v6998 = vpop.f32.mrb[0].mxu0
    %v6999 = vpop.f32.mrb[0].mxu0
    %7000 = vdwg.mxu0
    %7001 = vmatprep.subr.bf16.mxu0 %v4300
    %7002 = vmatpush1.bf16.msra.mxu0 %v4299
    %7003 = vmatprep.subr.bf16.mxu0 %v4304
    %7004 = vmatpush1.bf16.msra.mxu0 %v4303
    %7005 = vmatprep.subr.bf16.mxu0 %v4308
    %7006 = vmatpush1.bf16.msra.mxu0 %v4307
    %7007 = vmatprep.subr.bf16.mxu0 %v4312
    %7008 = vmatpush1.bf16.msra.mxu0 %v4311
    %7009 = vmatprep.subr.bf16.mxu0 %v4316
    %7010 = vmatpush1.bf16.msra.mxu0 %v4315
    %7011 = vmatprep.subr.bf16.mxu0 %v4320
    %7012 = vmatpush1.bf16.msra.mxu0 %v4319
    %7013 = vmatprep.subr.bf16.mxu0 %v4324
    %7014 = vmatpush1.bf16.msra.mxu0 %v4323
    %7015 = vmatprep.subr.bf16.mxu0 %v4328
    %7016 = vmatpush1.bf16.msra.mxu0 %v4327
    %7017 = vmatprep.subr.bf16.mxu0 %v4332
    %7018 = vmatpush1.bf16.msra.mxu0 %v4331
    %7019 = vmatprep.subr.bf16.mxu0 %v4336
    %7020 = vmatpush1.bf16.msra.mxu0 %v4335
    %7021 = vmatprep.subr.bf16.mxu0 %v4340
    %7022 = vmatpush1.bf16.msra.mxu0 %v4339
    %7023 = vmatprep.subr.bf16.mxu0 %v4344
    %7024 = vmatpush1.bf16.msra.mxu0 %v4343
    %7025 = vmatprep.subr.bf16.mxu0 %v4348
    %7026 = vmatpush1.bf16.msra.mxu0 %v4347
    %7027 = vmatprep.subr.bf16.mxu0 %v4352
    %7028 = vmatpush1.bf16.msra.mxu0 %v4351
    %7029 = vmatprep.subr.bf16.mxu0 %v4356
    %7030 = vmatpush1.bf16.msra.mxu0 %v4355
    %7031 = vmatprep.subr.bf16.mxu0 %v4360
    %7032 = vmatpush1.bf16.msra.mxu0 %v4359
    %7033 = vmatprep.mubr.bf16.mxu0 %v148
    %7034 = vmatmul.mubr.bf16.gmra.mrb[0].mxu0 %v147
    %v7035 = vpop.f32.mrb[0].mxu0
    %v7036 = vadd.f32 %v1216, %v7035
    %v7037 = vpop.f32.mrb[0].mxu0
    %v7038 = vadd.f32 %v1220, %v7037
    %v7039 = vpop.f32.mrb[0].mxu0
    %v7040 = vpop.f32.mrb[0].mxu0
    %7041 = vdwg.mxu0
    %7042 = vmatprep.subr.bf16.mxu0 %v4364
    %7043 = vmatpush1.bf16.msra.mxu0 %v4363
    %7044 = vmatprep.subr.bf16.mxu0 %v4368
    %7045 = vmatpush1.bf16.msra.mxu0 %v4367
    %7046 = vmatprep.subr.bf16.mxu0 %v4372
    %7047 = vmatpush1.bf16.msra.mxu0 %v4371
    %7048 = vmatprep.subr.bf16.mxu0 %v4376
    %7049 = vmatpush1.bf16.msra.mxu0 %v4375
    %7050 = vmatprep.subr.bf16.mxu0 %v4380
    %7051 = vmatpush1.bf16.msra.mxu0 %v4379
    %7052 = vmatprep.subr.bf16.mxu0 %v4384
    %7053 = vmatpush1.bf16.msra.mxu0 %v4383
    %7054 = vmatprep.subr.bf16.mxu0 %v4388
    %7055 = vmatpush1.bf16.msra.mxu0 %v4387
    %7056 = vmatprep.subr.bf16.mxu0 %v4392
    %7057 = vmatpush1.bf16.msra.mxu0 %v4391
    %7058 = vmatprep.subr.bf16.mxu0 %v4396
    %7059 = vmatpush1.bf16.msra.mxu0 %v4395
    %7060 = vmatprep.subr.bf16.mxu0 %v4400
    %7061 = vmatpush1.bf16.msra.mxu0 %v4399
    %7062 = vmatprep.subr.bf16.mxu0 %v4404
    %7063 = vmatpush1.bf16.msra.mxu0 %v4403
    %7064 = vmatprep.subr.bf16.mxu0 %v4408
    %7065 = vmatpush1.bf16.msra.mxu0 %v4407
    %7066 = vmatprep.subr.bf16.mxu0 %v4412
    %7067 = vmatpush1.bf16.msra.mxu0 %v4411
    %7068 = vmatprep.subr.bf16.mxu0 %v4416
    %7069 = vmatpush1.bf16.msra.mxu0 %v4415
    %7070 = vmatprep.subr.bf16.mxu0 %v4420
    %7071 = vmatpush1.bf16.msra.mxu0 %v4419
    %7072 = vmatprep.subr.bf16.mxu0 %v4424
    %7073 = vmatpush1.bf16.msra.mxu0 %v4423
    %7074 = vmatprep.mubr.bf16.mxu0 %v150
    %7075 = vmatmul.mubr.bf16.gmra.mrb[0].mxu0 %v149
    %v7076 = vpop.f32.mrb[0].mxu0
    %v7077 = vadd.f32 %v7036, %v7076
    %v7078 = vpop.f32.mrb[0].mxu0
    %v7079 = vadd.f32 %v7038, %v7078
    %v7080 = vpop.f32.mrb[0].mxu0
    %v7081 = vpop.f32.mrb[0].mxu0
    %7082 = vdwg.mxu0
    %7083 = vmatprep.subr.bf16.mxu0 %v4428
    %7084 = vmatpush1.bf16.msra.mxu0 %v4427
    %7085 = vmatprep.subr.bf16.mxu0 %v4432
    %7086 = vmatpush1.bf16.msra.mxu0 %v4431
    %7087 = vmatprep.subr.bf16.mxu0 %v4436
    %7088 = vmatpush1.bf16.msra.mxu0 %v4435
    %7089 = vmatprep.subr.bf16.mxu0 %v4440
    %7090 = vmatpush1.bf16.msra.mxu0 %v4439
    %7091 = vmatprep.subr.bf16.mxu0 %v4444
    %7092 = vmatpush1.bf16.msra.mxu0 %v4443
    %7093 = vmatprep.subr.bf16.mxu0 %v4448
    %7094 = vmatpush1.bf16.msra.mxu0 %v4447
    %7095 = vmatprep.subr.bf16.mxu0 %v4452
    %7096 = vmatpush1.bf16.msra.mxu0 %v4451
    %7097 = vmatprep.subr.bf16.mxu0 %v4456
    %7098 = vmatpush1.bf16.msra.mxu0 %v4455
    %7099 = vmatprep.subr.bf16.mxu0 %v4460
    %7100 = vmatpush1.bf16.msra.mxu0 %v4459
    %7101 = vmatprep.subr.bf16.mxu0 %v4464
    %7102 = vmatpush1.bf16.msra.mxu0 %v4463
    %7103 = vmatprep.subr.bf16.mxu0 %v4468
    %7104 = vmatpush1.bf16.msra.mxu0 %v4467
    %7105 = vmatprep.subr.bf16.mxu0 %v4472
    %7106 = vmatpush1.bf16.msra.mxu0 %v4471
    %7107 = vmatprep.subr.bf16.mxu0 %v4476
    %7108 = vmatpush1.bf16.msra.mxu0 %v4475
    %7109 = vmatprep.subr.bf16.mxu0 %v4480
    %7110 = vmatpush1.bf16.msra.mxu0 %v4479
    %7111 = vmatprep.subr.bf16.mxu0 %v4484
    %7112 = vmatpush1.bf16.msra.mxu0 %v4483
    %7113 = vmatprep.subr.bf16.mxu0 %v4488
    %7114 = vmatpush1.bf16.msra.mxu0 %v4487
    %7115 = vmatprep.mubr.bf16.mxu0 %v152
    %7116 = vmatmul.mubr.bf16.gmra.mrb[0].mxu0 %v151
    %v7117 = vpop.f32.mrb[0].mxu0
    %v7118 = vadd.f32 %v7077, %v7117
    %v7119 = vpop.f32.mrb[0].mxu0
    %v7120 = vadd.f32 %v7079, %v7119
    %v7121 = vpop.f32.mrb[0].mxu0
    %v7122 = vpop.f32.mrb[0].mxu0
    %7123 = vdwg.mxu0
    %7124 = vmatprep.subr.bf16.mxu0 %v4492
    %7125 = vmatpush1.bf16.msra.mxu0 %v4491
    %7126 = vmatprep.subr.bf16.mxu0 %v4496
    %7127 = vmatpush1.bf16.msra.mxu0 %v4495
    %7128 = vmatprep.subr.bf16.mxu0 %v4500
    %7129 = vmatpush1.bf16.msra.mxu0 %v4499
    %7130 = vmatprep.subr.bf16.mxu0 %v4504
    %7131 = vmatpush1.bf16.msra.mxu0 %v4503
    %7132 = vmatprep.subr.bf16.mxu0 %v4508
    %7133 = vmatpush1.bf16.msra.mxu0 %v4507
    %7134 = vmatprep.subr.bf16.mxu0 %v4512
    %7135 = vmatpush1.bf16.msra.mxu0 %v4511
    %7136 = vmatprep.subr.bf16.mxu0 %v4516
    %7137 = vmatpush1.bf16.msra.mxu0 %v4515
    %7138 = vmatprep.subr.bf16.mxu0 %v4520
    %7139 = vmatpush1.bf16.msra.mxu0 %v4519
    %7140 = vmatprep.subr.bf16.mxu0 %v4524
    %7141 = vmatpush1.bf16.msra.mxu0 %v4523
    %7142 = vmatprep.subr.bf16.mxu0 %v4528
    %7143 = vmatpush1.bf16.msra.mxu0 %v4527
    %7144 = vmatprep.subr.bf16.mxu0 %v4532
    %7145 = vmatpush1.bf16.msra.mxu0 %v4531
    %7146 = vmatprep.subr.bf16.mxu0 %v4536
    %7147 = vmatpush1.bf16.msra.mxu0 %v4535
    %7148 = vmatprep.subr.bf16.mxu0 %v4540
    %7149 = vmatpush1.bf16.msra.mxu0 %v4539
    %7150 = vmatprep.subr.bf16.mxu0 %v4544
    %7151 = vmatpush1.bf16.msra.mxu0 %v4543
    %7152 = vmatprep.subr.bf16.mxu0 %v4548
    %7153 = vmatpush1.bf16.msra.mxu0 %v4547
    %7154 = vmatprep.subr.bf16.mxu0 %v4552
    %7155 = vmatpush1.bf16.msra.mxu0 %v4551
    %7156 = vmatprep.mubr.bf16.mxu0 %v154
    %7157 = vmatmul.mubr.bf16.gmra.mrb[0].mxu0 %v153
    %v7158 = vpop.f32.mrb[0].mxu0
    %v7159 = vadd.f32 %v7118, %v7158
    %v7160 = vpop.f32.mrb[0].mxu0
    %v7161 = vadd.f32 %v7120, %v7160
    %v7162 = vpop.f32.mrb[0].mxu0
    %v7163 = vpop.f32.mrb[0].mxu0
    %7164 = vdwg.mxu0
    %7165 = vmatprep.subr.bf16.mxu0 %v4556
    %7166 = vmatpush1.bf16.msra.mxu0 %v4555
    %7167 = vmatprep.subr.bf16.mxu0 %v4560
    %7168 = vmatpush1.bf16.msra.mxu0 %v4559
    %7169 = vmatprep.subr.bf16.mxu0 %v4564
    %7170 = vmatpush1.bf16.msra.mxu0 %v4563
    %7171 = vmatprep.subr.bf16.mxu0 %v4568
    %7172 = vmatpush1.bf16.msra.mxu0 %v4567
    %7173 = vmatprep.subr.bf16.mxu0 %v4572
    %7174 = vmatpush1.bf16.msra.mxu0 %v4571
    %7175 = vmatprep.subr.bf16.mxu0 %v4576
    %7176 = vmatpush1.bf16.msra.mxu0 %v4575
    %7177 = vmatprep.subr.bf16.mxu0 %v4580
    %7178 = vmatpush1.bf16.msra.mxu0 %v4579
    %7179 = vmatprep.subr.bf16.mxu0 %v4584
    %7180 = vmatpush1.bf16.msra.mxu0 %v4583
    %7181 = vmatprep.subr.bf16.mxu0 %v4588
    %7182 = vmatpush1.bf16.msra.mxu0 %v4587
    %7183 = vmatprep.subr.bf16.mxu0 %v4592
    %7184 = vmatpush1.bf16.msra.mxu0 %v4591
    %7185 = vmatprep.subr.bf16.mxu0 %v4596
    %7186 = vmatpush1.bf16.msra.mxu0 %v4595
    %7187 = vmatprep.subr.bf16.mxu0 %v4600
    %7188 = vmatpush1.bf16.msra.mxu0 %v4599
    %7189 = vmatprep.subr.bf16.mxu0 %v4604
    %7190 = vmatpush1.bf16.msra.mxu0 %v4603
    %7191 = vmatprep.subr.bf16.mxu0 %v4608
    %7192 = vmatpush1.bf16.msra.mxu0 %v4607
    %7193 = vmatprep.subr.bf16.mxu0 %v4612
    %7194 = vmatpush1.bf16.msra.mxu0 %v4611
    %7195 = vmatprep.subr.bf16.mxu0 %v4616
    %7196 = vmatpush1.bf16.msra.mxu0 %v4615
    %7197 = vmatprep.mubr.bf16.mxu0 %v156
    %7198 = vmatmul.mubr.bf16.gmra.mrb[0].mxu0 %v155
    %v7199 = vpop.f32.mrb[0].mxu0
    %v7200 = vadd.f32 %v7159, %v7199
    %v7201 = vpop.f32.mrb[0].mxu0
    %v7202 = vadd.f32 %v7161, %v7201
    %v7203 = vpop.f32.mrb[0].mxu0
    %v7204 = vpop.f32.mrb[0].mxu0
    %7205 = vdwg.mxu0
    %7206 = vmatprep.subr.bf16.mxu0 %v4620
    %7207 = vmatpush1.bf16.msra.mxu0 %v4619
    %7208 = vmatprep.subr.bf16.mxu0 %v4624
    %7209 = vmatpush1.bf16.msra.mxu0 %v4623
    %7210 = vmatprep.subr.bf16.mxu0 %v4628
    %7211 = vmatpush1.bf16.msra.mxu0 %v4627
    %7212 = vmatprep.subr.bf16.mxu0 %v4632
    %7213 = vmatpush1.bf16.msra.mxu0 %v4631
    %7214 = vmatprep.subr.bf16.mxu0 %v4636
    %7215 = vmatpush1.bf16.msra.mxu0 %v4635
    %7216 = vmatprep.subr.bf16.mxu0 %v4640
    %7217 = vmatpush1.bf16.msra.mxu0 %v4639
    %7218 = vmatprep.subr.bf16.mxu0 %v4644
    %7219 = vmatpush1.bf16.msra.mxu0 %v4643
    %7220 = vmatprep.subr.bf16.mxu0 %v4648
    %7221 = vmatpush1.bf16.msra.mxu0 %v4647
    %7222 = vmatprep.subr.bf16.mxu0 %v4652
    %7223 = vmatpush1.bf16.msra.mxu0 %v4651
    %7224 = vmatprep.subr.bf16.mxu0 %v4656
    %7225 = vmatpush1.bf16.msra.mxu0 %v4655
    %7226 = vmatprep.subr.bf16.mxu0 %v4660
    %7227 = vmatpush1.bf16.msra.mxu0 %v4659
    %7228 = vmatprep.subr.bf16.mxu0 %v4664
    %7229 = vmatpush1.bf16.msra.mxu0 %v4663
    %7230 = vmatprep.subr.bf16.mxu0 %v4668
    %7231 = vmatpush1.bf16.msra.mxu0 %v4667
    %7232 = vmatprep.subr.bf16.mxu0 %v4672
    %7233 = vmatpush1.bf16.msra.mxu0 %v4671
    %7234 = vmatprep.subr.bf16.mxu0 %v4676
    %7235 = vmatpush1.bf16.msra.mxu0 %v4675
    %7236 = vmatprep.subr.bf16.mxu0 %v4680
    %7237 = vmatpush1.bf16.msra.mxu0 %v4679
    %7238 = vmatprep.mubr.bf16.mxu0 %v158
    %7239 = vmatmul.mubr.bf16.gmra.mrb[0].mxu0 %v157
    %v7240 = vpop.f32.mrb[0].mxu0
    %v7241 = vadd.f32 %v7200, %v7240
    %v7242 = vpop.f32.mrb[0].mxu0
    %v7243 = vadd.f32 %v7202, %v7242
    %v7244 = vpop.f32.mrb[0].mxu0
    %v7245 = vpop.f32.mrb[0].mxu0
    %7246 = vdwg.mxu0
    %7247 = vmatprep.subr.bf16.mxu0 %v4684
    %7248 = vmatpush1.bf16.msra.mxu0 %v4683
    %7249 = vmatprep.subr.bf16.mxu0 %v4688
    %7250 = vmatpush1.bf16.msra.mxu0 %v4687
    %7251 = vmatprep.subr.bf16.mxu0 %v4692
    %7252 = vmatpush1.bf16.msra.mxu0 %v4691
    %7253 = vmatprep.subr.bf16.mxu0 %v4696
    %7254 = vmatpush1.bf16.msra.mxu0 %v4695
    %7255 = vmatprep.subr.bf16.mxu0 %v4700
    %7256 = vmatpush1.bf16.msra.mxu0 %v4699
    %7257 = vmatprep.subr.bf16.mxu0 %v4704
    %7258 = vmatpush1.bf16.msra.mxu0 %v4703
    %7259 = vmatprep.subr.bf16.mxu0 %v4708
    %7260 = vmatpush1.bf16.msra.mxu0 %v4707
    %7261 = vmatprep.subr.bf16.mxu0 %v4712
    %7262 = vmatpush1.bf16.msra.mxu0 %v4711
    %7263 = vmatprep.subr.bf16.mxu0 %v4716
    %7264 = vmatpush1.bf16.msra.mxu0 %v4715
    %7265 = vmatprep.subr.bf16.mxu0 %v4720
    %7266 = vmatpush1.bf16.msra.mxu0 %v4719
    %7267 = vmatprep.subr.bf16.mxu0 %v4724
    %7268 = vmatpush1.bf16.msra.mxu0 %v4723
    %7269 = vmatprep.subr.bf16.mxu0 %v4728
    %7270 = vmatpush1.bf16.msra.mxu0 %v4727
    %7271 = vmatprep.subr.bf16.mxu0 %v4732
    %7272 = vmatpush1.bf16.msra.mxu0 %v4731
    %7273 = vmatprep.subr.bf16.mxu0 %v4736
    %7274 = vmatpush1.bf16.msra.mxu0 %v4735
    %7275 = vmatprep.subr.bf16.mxu0 %v4740
    %7276 = vmatpush1.bf16.msra.mxu0 %v4739
    %7277 = vmatprep.subr.bf16.mxu0 %v4744
    %7278 = vmatpush1.bf16.msra.mxu0 %v4743
    %7279 = vmatprep.mubr.bf16.mxu0 %v160
    %7280 = vmatmul.mubr.bf16.gmra.mrb[0].mxu0 %v159
    %v7281 = vpop.f32.mrb[0].mxu0
    %v7282 = vadd.f32 %v7241, %v7281
    %v7283 = vpop.f32.mrb[0].mxu0
    %v7284 = vadd.f32 %v7243, %v7283
    %v7285 = vpop.f32.mrb[0].mxu0
    %v7286 = vpop.f32.mrb[0].mxu0
    %7287 = vdwg.mxu0
    %7288 = vmatprep.subr.bf16.mxu0 %v4748
    %7289 = vmatpush1.bf16.msra.mxu0 %v4747
    %7290 = vmatprep.subr.bf16.mxu0 %v4752
    %7291 = vmatpush1.bf16.msra.mxu0 %v4751
    %7292 = vmatprep.subr.bf16.mxu0 %v4756
    %7293 = vmatpush1.bf16.msra.mxu0 %v4755
    %7294 = vmatprep.subr.bf16.mxu0 %v4760
    %7295 = vmatpush1.bf16.msra.mxu0 %v4759
    %7296 = vmatprep.subr.bf16.mxu0 %v4764
    %7297 = vmatpush1.bf16.msra.mxu0 %v4763
    %7298 = vmatprep.subr.bf16.mxu0 %v4768
    %7299 = vmatpush1.bf16.msra.mxu0 %v4767
    %7300 = vmatprep.subr.bf16.mxu0 %v4772
    %7301 = vmatpush1.bf16.msra.mxu0 %v4771
    %7302 = vmatprep.subr.bf16.mxu0 %v4776
    %7303 = vmatpush1.bf16.msra.mxu0 %v4775
    %7304 = vmatprep.subr.bf16.mxu0 %v4780
    %7305 = vmatpush1.bf16.msra.mxu0 %v4779
    %7306 = vmatprep.subr.bf16.mxu0 %v4784
    %7307 = vmatpush1.bf16.msra.mxu0 %v4783
    %7308 = vmatprep.subr.bf16.mxu0 %v4788
    %7309 = vmatpush1.bf16.msra.mxu0 %v4787
    %7310 = vmatprep.subr.bf16.mxu0 %v4792
    %7311 = vmatpush1.bf16.msra.mxu0 %v4791
    %7312 = vmatprep.subr.bf16.mxu0 %v4796
    %7313 = vmatpush1.bf16.msra.mxu0 %v4795
    %7314 = vmatprep.subr.bf16.mxu0 %v4800
    %7315 = vmatpush1.bf16.msra.mxu0 %v4799
    %7316 = vmatprep.subr.bf16.mxu0 %v4804
    %7317 = vmatpush1.bf16.msra.mxu0 %v4803
    %7318 = vmatprep.subr.bf16.mxu0 %v4808
    %7319 = vmatpush1.bf16.msra.mxu0 %v4807
    %7320 = vmatprep.mubr.bf16.mxu0 %v162
    %7321 = vmatmul.mubr.bf16.gmra.mrb[0].mxu0 %v161
    %v7322 = vpop.f32.mrb[0].mxu0
    %v7323 = vadd.f32 %v7282, %v7322
    %v7324 = vpop.f32.mrb[0].mxu0
    %v7325 = vadd.f32 %v7284, %v7324
    %v7326 = vpop.f32.mrb[0].mxu0
    %v7327 = vpop.f32.mrb[0].mxu0
    %7328 = vdwg.mxu0
    %7329 = vmatprep.subr.bf16.mxu0 %v4812
    %7330 = vmatpush1.bf16.msra.mxu0 %v4811
    %7331 = vmatprep.subr.bf16.mxu0 %v4816
    %7332 = vmatpush1.bf16.msra.mxu0 %v4815
    %7333 = vmatprep.subr.bf16.mxu0 %v4820
    %7334 = vmatpush1.bf16.msra.mxu0 %v4819
    %7335 = vmatprep.subr.bf16.mxu0 %v4824
    %7336 = vmatpush1.bf16.msra.mxu0 %v4823
    %7337 = vmatprep.subr.bf16.mxu0 %v4828
    %7338 = vmatpush1.bf16.msra.mxu0 %v4827
    %7339 = vmatprep.subr.bf16.mxu0 %v4832
    %7340 = vmatpush1.bf16.msra.mxu0 %v4831
    %7341 = vmatprep.subr.bf16.mxu0 %v4836
    %7342 = vmatpush1.bf16.msra.mxu0 %v4835
    %7343 = vmatprep.subr.bf16.mxu0 %v4840
    %7344 = vmatpush1.bf16.msra.mxu0 %v4839
    %7345 = vmatprep.subr.bf16.mxu0 %v4844
    %7346 = vmatpush1.bf16.msra.mxu0 %v4843
    %7347 = vmatprep.subr.bf16.mxu0 %v4848
    %7348 = vmatpush1.bf16.msra.mxu0 %v4847
    %7349 = vmatprep.subr.bf16.mxu0 %v4852
    %7350 = vmatpush1.bf16.msra.mxu0 %v4851
    %7351 = vmatprep.subr.bf16.mxu0 %v4856
    %7352 = vmatpush1.bf16.msra.mxu0 %v4855
    %7353 = vmatprep.subr.bf16.mxu0 %v4860
    %7354 = vmatpush1.bf16.msra.mxu0 %v4859
    %7355 = vmatprep.subr.bf16.mxu0 %v4864
    %7356 = vmatpush1.bf16.msra.mxu0 %v4863
    %7357 = vmatprep.subr.bf16.mxu0 %v4868
    %7358 = vmatpush1.bf16.msra.mxu0 %v4867
    %7359 = vmatprep.subr.bf16.mxu0 %v4872
    %7360 = vmatpush1.bf16.msra.mxu0 %v4871
    %7361 = vmatprep.mubr.bf16.mxu0 %v164
    %7362 = vmatmul.mubr.bf16.gmra.mrb[0].mxu0 %v163
    %v7363 = vpop.f32.mrb[0].mxu0
    %v7364 = vadd.f32 %v7323, %v7363
    %v7365 = vpop.f32.mrb[0].mxu0
    %v7366 = vadd.f32 %v7325, %v7365
    %v7367 = vpop.f32.mrb[0].mxu0
    %v7368 = vpop.f32.mrb[0].mxu0
    %7369 = vdwg.mxu0
    %7370 = vmatprep.subr.bf16.mxu0 %v4876
    %7371 = vmatpush1.bf16.msra.mxu0 %v4875
    %7372 = vmatprep.subr.bf16.mxu0 %v4880
    %7373 = vmatpush1.bf16.msra.mxu0 %v4879
    %7374 = vmatprep.subr.bf16.mxu0 %v4884
    %7375 = vmatpush1.bf16.msra.mxu0 %v4883
    %7376 = vmatprep.subr.bf16.mxu0 %v4888
    %7377 = vmatpush1.bf16.msra.mxu0 %v4887
    %7378 = vmatprep.subr.bf16.mxu0 %v4892
    %7379 = vmatpush1.bf16.msra.mxu0 %v4891
    %7380 = vmatprep.subr.bf16.mxu0 %v4896
    %7381 = vmatpush1.bf16.msra.mxu0 %v4895
    %7382 = vmatprep.subr.bf16.mxu0 %v4900
    %7383 = vmatpush1.bf16.msra.mxu0 %v4899
    %7384 = vmatprep.subr.bf16.mxu0 %v4904
    %7385 = vmatpush1.bf16.msra.mxu0 %v4903
    %7386 = vmatprep.subr.bf16.mxu0 %v4908
    %7387 = vmatpush1.bf16.msra.mxu0 %v4907
    %7388 = vmatprep.subr.bf16.mxu0 %v4912
    %7389 = vmatpush1.bf16.msra.mxu0 %v4911
    %7390 = vmatprep.subr.bf16.mxu0 %v4916
    %7391 = vmatpush1.bf16.msra.mxu0 %v4915
    %7392 = vmatprep.subr.bf16.mxu0 %v4920
    %7393 = vmatpush1.bf16.msra.mxu0 %v4919
    %7394 = vmatprep.subr.bf16.mxu0 %v4924
    %7395 = vmatpush1.bf16.msra.mxu0 %v4923
    %7396 = vmatprep.subr.bf16.mxu0 %v4928
    %7397 = vmatpush1.bf16.msra.mxu0 %v4927
    %7398 = vmatprep.subr.bf16.mxu0 %v4932
    %7399 = vmatpush1.bf16.msra.mxu0 %v4931
    %7400 = vmatprep.subr.bf16.mxu0 %v4936
    %7401 = vmatpush1.bf16.msra.mxu0 %v4935
    %7402 = vmatprep.mubr.bf16.mxu0 %v166
    %7403 = vmatmul.mubr.bf16.gmra.mrb[0].mxu0 %v165
    %v7404 = vpop.f32.mrb[0].mxu0
    %v7405 = vadd.f32 %v7364, %v7404
    %v7406 = vpop.f32.mrb[0].mxu0
    %v7407 = vadd.f32 %v7366, %v7406
    %v7408 = vpop.f32.mrb[0].mxu0
    %v7409 = vpop.f32.mrb[0].mxu0
    %7410 = vdwg.mxu0
    %7411 = vmatprep.subr.bf16.mxu0 %v4940
    %7412 = vmatpush1.bf16.msra.mxu0 %v4939
    %7413 = vmatprep.subr.bf16.mxu0 %v4944
    %7414 = vmatpush1.bf16.msra.mxu0 %v4943
    %7415 = vmatprep.subr.bf16.mxu0 %v4948
    %7416 = vmatpush1.bf16.msra.mxu0 %v4947
    %7417 = vmatprep.subr.bf16.mxu0 %v4952
    %7418 = vmatpush1.bf16.msra.mxu0 %v4951
    %7419 = vmatprep.subr.bf16.mxu0 %v4956
    %7420 = vmatpush1.bf16.msra.mxu0 %v4955
    %7421 = vmatprep.subr.bf16.mxu0 %v4960
    %7422 = vmatpush1.bf16.msra.mxu0 %v4959
    %7423 = vmatprep.subr.bf16.mxu0 %v4964
    %7424 = vmatpush1.bf16.msra.mxu0 %v4963
    %7425 = vmatprep.subr.bf16.mxu0 %v4968
    %7426 = vmatpush1.bf16.msra.mxu0 %v4967
    %7427 = vmatprep.subr.bf16.mxu0 %v4972
    %7428 = vmatpush1.bf16.msra.mxu0 %v4971
    %7429 = vmatprep.subr.bf16.mxu0 %v4976
    %7430 = vmatpush1.bf16.msra.mxu0 %v4975
    %7431 = vmatprep.subr.bf16.mxu0 %v4980
    %7432 = vmatpush1.bf16.msra.mxu0 %v4979
    %7433 = vmatprep.subr.bf16.mxu0 %v4984
    %7434 = vmatpush1.bf16.msra.mxu0 %v4983
    %7435 = vmatprep.subr.bf16.mxu0 %v4988
    %7436 = vmatpush1.bf16.msra.mxu0 %v4987
    %7437 = vmatprep.subr.bf16.mxu0 %v4992
    %7438 = vmatpush1.bf16.msra.mxu0 %v4991
    %7439 = vmatprep.subr.bf16.mxu0 %v4996
    %7440 = vmatpush1.bf16.msra.mxu0 %v4995
    %7441 = vmatprep.subr.bf16.mxu0 %v5000
    %7442 = vmatpush1.bf16.msra.mxu0 %v4999
    %7443 = vmatprep.mubr.bf16.mxu0 %v168
    %7444 = vmatmul.mubr.bf16.gmra.mrb[0].mxu0 %v167
    %v7445 = vpop.f32.mrb[0].mxu0
    %v7446 = vadd.f32 %v7405, %v7445
    %v7447 = vpop.f32.mrb[0].mxu0
    %v7448 = vadd.f32 %v7407, %v7447
    %v7449 = vpop.f32.mrb[0].mxu0
    %v7450 = vpop.f32.mrb[0].mxu0
    %7451 = vdwg.mxu0
    %7452 = vmatprep.subr.bf16.mxu0 %v5004
    %7453 = vmatpush1.bf16.msra.mxu0 %v5003
    %7454 = vmatprep.subr.bf16.mxu0 %v5008
    %7455 = vmatpush1.bf16.msra.mxu0 %v5007
    %7456 = vmatprep.subr.bf16.mxu0 %v5012
    %7457 = vmatpush1.bf16.msra.mxu0 %v5011
    %7458 = vmatprep.subr.bf16.mxu0 %v5016
    %7459 = vmatpush1.bf16.msra.mxu0 %v5015
    %7460 = vmatprep.subr.bf16.mxu0 %v5020
    %7461 = vmatpush1.bf16.msra.mxu0 %v5019
    %7462 = vmatprep.subr.bf16.mxu0 %v5024
    %7463 = vmatpush1.bf16.msra.mxu0 %v5023
    %7464 = vmatprep.subr.bf16.mxu0 %v5028
    %7465 = vmatpush1.bf16.msra.mxu0 %v5027
    %7466 = vmatprep.subr.bf16.mxu0 %v5032
    %7467 = vmatpush1.bf16.msra.mxu0 %v5031
    %7468 = vmatprep.subr.bf16.mxu0 %v5036
    %7469 = vmatpush1.bf16.msra.mxu0 %v5035
    %7470 = vmatprep.subr.bf16.mxu0 %v5040
    %7471 = vmatpush1.bf16.msra.mxu0 %v5039
    %7472 = vmatprep.subr.bf16.mxu0 %v5044
    %7473 = vmatpush1.bf16.msra.mxu0 %v5043
    %7474 = vmatprep.subr.bf16.mxu0 %v5048
    %7475 = vmatpush1.bf16.msra.mxu0 %v5047
    %7476 = vmatprep.subr.bf16.mxu0 %v5052
    %7477 = vmatpush1.bf16.msra.mxu0 %v5051
    %7478 = vmatprep.subr.bf16.mxu0 %v5056
    %7479 = vmatpush1.bf16.msra.mxu0 %v5055
    %7480 = vmatprep.subr.bf16.mxu0 %v5060
    %7481 = vmatpush1.bf16.msra.mxu0 %v5059
    %7482 = vmatprep.subr.bf16.mxu0 %v5064
    %7483 = vmatpush1.bf16.msra.mxu0 %v5063
    %7484 = vmatprep.mubr.bf16.mxu0 %v170
    %7485 = vmatmul.mubr.bf16.gmra.mrb[0].mxu0 %v169
    %v7486 = vpop.f32.mrb[0].mxu0
    %v7487 = vadd.f32 %v7446, %v7486
    %v7488 = vpop.f32.mrb[0].mxu0
    %v7489 = vadd.f32 %v7448, %v7488
    %v7490 = vpop.f32.mrb[0].mxu0
    %v7491 = vpop.f32.mrb[0].mxu0
    %7492 = vdwg.mxu0
    %7493 = vmatprep.subr.bf16.mxu0 %v5068
    %7494 = vmatpush1.bf16.msra.mxu0 %v5067
    %7495 = vmatprep.subr.bf16.mxu0 %v5072
    %7496 = vmatpush1.bf16.msra.mxu0 %v5071
    %7497 = vmatprep.subr.bf16.mxu0 %v5076
    %7498 = vmatpush1.bf16.msra.mxu0 %v5075
    %7499 = vmatprep.subr.bf16.mxu0 %v5080
    %7500 = vmatpush1.bf16.msra.mxu0 %v5079
    %7501 = vmatprep.subr.bf16.mxu0 %v5084
    %7502 = vmatpush1.bf16.msra.mxu0 %v5083
    %7503 = vmatprep.subr.bf16.mxu0 %v5088
    %7504 = vmatpush1.bf16.msra.mxu0 %v5087
    %7505 = vmatprep.subr.bf16.mxu0 %v5092
    %7506 = vmatpush1.bf16.msra.mxu0 %v5091
    %7507 = vmatprep.subr.bf16.mxu0 %v5096
    %7508 = vmatpush1.bf16.msra.mxu0 %v5095
    %7509 = vmatprep.subr.bf16.mxu0 %v5100
    %7510 = vmatpush1.bf16.msra.mxu0 %v5099
    %7511 = vmatprep.subr.bf16.mxu0 %v5104
    %7512 = vmatpush1.bf16.msra.mxu0 %v5103
    %7513 = vmatprep.subr.bf16.mxu0 %v5108
    %7514 = vmatpush1.bf16.msra.mxu0 %v5107
    %7515 = vmatprep.subr.bf16.mxu0 %v5112
    %7516 = vmatpush1.bf16.msra.mxu0 %v5111
    %7517 = vmatprep.subr.bf16.mxu0 %v5116
    %7518 = vmatpush1.bf16.msra.mxu0 %v5115
    %7519 = vmatprep.subr.bf16.mxu0 %v5120
    %7520 = vmatpush1.bf16.msra.mxu0 %v5119
    %7521 = vmatprep.subr.bf16.mxu0 %v5124
    %7522 = vmatpush1.bf16.msra.mxu0 %v5123
    %7523 = vmatprep.subr.bf16.mxu0 %v5128
    %7524 = vmatpush1.bf16.msra.mxu0 %v5127
    %7525 = vmatprep.mubr.bf16.mxu0 %v172
    %7526 = vmatmul.mubr.bf16.gmra.mrb[0].mxu0 %v171
    %v7527 = vpop.f32.mrb[0].mxu0
    %v7528 = vadd.f32 %v7487, %v7527
    %v7529 = vpop.f32.mrb[0].mxu0
    %v7530 = vadd.f32 %v7489, %v7529
    %v7531 = vpop.f32.mrb[0].mxu0
    %v7532 = vpop.f32.mrb[0].mxu0
    %7533 = vdwg.mxu0
    %7534 = vmatprep.subr.bf16.mxu0 %v5132
    %7535 = vmatpush1.bf16.msra.mxu0 %v5131
    %7536 = vmatprep.subr.bf16.mxu0 %v5136
    %7537 = vmatpush1.bf16.msra.mxu0 %v5135
    %7538 = vmatprep.subr.bf16.mxu0 %v5140
    %7539 = vmatpush1.bf16.msra.mxu0 %v5139
    %7540 = vmatprep.subr.bf16.mxu0 %v5144
    %7541 = vmatpush1.bf16.msra.mxu0 %v5143
    %7542 = vmatprep.subr.bf16.mxu0 %v5148
    %7543 = vmatpush1.bf16.msra.mxu0 %v5147
    %7544 = vmatprep.subr.bf16.mxu0 %v5152
    %7545 = vmatpush1.bf16.msra.mxu0 %v5151
    %7546 = vmatprep.subr.bf16.mxu0 %v5156
    %7547 = vmatpush1.bf16.msra.mxu0 %v5155
    %7548 = vmatprep.subr.bf16.mxu0 %v5160
    %7549 = vmatpush1.bf16.msra.mxu0 %v5159
    %7550 = vmatprep.subr.bf16.mxu0 %v5164
    %7551 = vmatpush1.bf16.msra.mxu0 %v5163
    %7552 = vmatprep.subr.bf16.mxu0 %v5168
    %7553 = vmatpush1.bf16.msra.mxu0 %v5167
    %7554 = vmatprep.subr.bf16.mxu0 %v5172
    %7555 = vmatpush1.bf16.msra.mxu0 %v5171
    %7556 = vmatprep.subr.bf16.mxu0 %v5176
    %7557 = vmatpush1.bf16.msra.mxu0 %v5175
    %7558 = vmatprep.subr.bf16.mxu0 %v5180
    %7559 = vmatpush1.bf16.msra.mxu0 %v5179
    %7560 = vmatprep.subr.bf16.mxu0 %v5184
    %7561 = vmatpush1.bf16.msra.mxu0 %v5183
    %7562 = vmatprep.subr.bf16.mxu0 %v5188
    %7563 = vmatpush1.bf16.msra.mxu0 %v5187
    %7564 = vmatprep.subr.bf16.mxu0 %v5192
    %7565 = vmatpush1.bf16.msra.mxu0 %v5191
    %7566 = vmatprep.mubr.bf16.mxu0 %v174
    %7567 = vmatmul.mubr.bf16.gmra.mrb[0].mxu0 %v173
    %v7568 = vpop.f32.mrb[0].mxu0
    %v7569 = vadd.f32 %v7528, %v7568
    %v7570 = vpop.f32.mrb[0].mxu0
    %v7571 = vadd.f32 %v7530, %v7570
    %v7572 = vpop.f32.mrb[0].mxu0
    %v7573 = vpop.f32.mrb[0].mxu0
    %7574 = vdwg.mxu0
    %7575 = vmatprep.subr.bf16.mxu0 %v5196
    %7576 = vmatpush1.bf16.msra.mxu0 %v5195
    %7577 = vmatprep.subr.bf16.mxu0 %v5200
    %7578 = vmatpush1.bf16.msra.mxu0 %v5199
    %7579 = vmatprep.subr.bf16.mxu0 %v5204
    %7580 = vmatpush1.bf16.msra.mxu0 %v5203
    %7581 = vmatprep.subr.bf16.mxu0 %v5208
    %7582 = vmatpush1.bf16.msra.mxu0 %v5207
    %7583 = vmatprep.subr.bf16.mxu0 %v5212
    %7584 = vmatpush1.bf16.msra.mxu0 %v5211
    %7585 = vmatprep.subr.bf16.mxu0 %v5216
    %7586 = vmatpush1.bf16.msra.mxu0 %v5215
    %7587 = vmatprep.subr.bf16.mxu0 %v5220
    %7588 = vmatpush1.bf16.msra.mxu0 %v5219
    %7589 = vmatprep.subr.bf16.mxu0 %v5224
    %7590 = vmatpush1.bf16.msra.mxu0 %v5223
    %7591 = vmatprep.subr.bf16.mxu0 %v5228
    %7592 = vmatpush1.bf16.msra.mxu0 %v5227
    %7593 = vmatprep.subr.bf16.mxu0 %v5232
    %7594 = vmatpush1.bf16.msra.mxu0 %v5231
    %7595 = vmatprep.subr.bf16.mxu0 %v5236
    %7596 = vmatpush1.bf16.msra.mxu0 %v5235
    %7597 = vmatprep.subr.bf16.mxu0 %v5240
    %7598 = vmatpush1.bf16.msra.mxu0 %v5239
    %7599 = vmatprep.subr.bf16.mxu0 %v5244
    %7600 = vmatpush1.bf16.msra.mxu0 %v5243
    %7601 = vmatprep.subr.bf16.mxu0 %v5248
    %7602 = vmatpush1.bf16.msra.mxu0 %v5247
    %7603 = vmatprep.subr.bf16.mxu0 %v5252
    %7604 = vmatpush1.bf16.msra.mxu0 %v5251
    %7605 = vmatprep.subr.bf16.mxu0 %v5256
    %7606 = vmatpush1.bf16.msra.mxu0 %v5255
    %7607 = vmatprep.mubr.bf16.mxu0 %v176
    %7608 = vmatmul.mubr.bf16.gmra.mrb[0].mxu0 %v175
    %v7609 = vpop.f32.mrb[0].mxu0
    %v7610 = vadd.f32 %v7569, %v7609
    %v7611 = vpop.f32.mrb[0].mxu0
    %v7612 = vadd.f32 %v7571, %v7611
    %v7613 = vpop.f32.mrb[0].mxu0
    %v7614 = vpop.f32.mrb[0].mxu0
    %7615 = vdwg.mxu0
    %7616 = vmatprep.subr.bf16.mxu0 %v5260
    %7617 = vmatpush1.bf16.msra.mxu0 %v5259
    %7618 = vmatprep.subr.bf16.mxu0 %v5264
    %7619 = vmatpush1.bf16.msra.mxu0 %v5263
    %7620 = vmatprep.subr.bf16.mxu0 %v5268
    %7621 = vmatpush1.bf16.msra.mxu0 %v5267
    %7622 = vmatprep.subr.bf16.mxu0 %v5272
    %7623 = vmatpush1.bf16.msra.mxu0 %v5271
    %7624 = vmatprep.subr.bf16.mxu0 %v5276
    %7625 = vmatpush1.bf16.msra.mxu0 %v5275
    %7626 = vmatprep.subr.bf16.mxu0 %v5280
    %7627 = vmatpush1.bf16.msra.mxu0 %v5279
    %7628 = vmatprep.subr.bf16.mxu0 %v5284
    %7629 = vmatpush1.bf16.msra.mxu0 %v5283
    %7630 = vmatprep.subr.bf16.mxu0 %v5288
    %7631 = vmatpush1.bf16.msra.mxu0 %v5287
    %7632 = vmatprep.subr.bf16.mxu0 %v5292
    %7633 = vmatpush1.bf16.msra.mxu0 %v5291
    %7634 = vmatprep.subr.bf16.mxu0 %v5296
    %7635 = vmatpush1.bf16.msra.mxu0 %v5295
    %7636 = vmatprep.subr.bf16.mxu0 %v5300
    %7637 = vmatpush1.bf16.msra.mxu0 %v5299
    %7638 = vmatprep.subr.bf16.mxu0 %v5304
    %7639 = vmatpush1.bf16.msra.mxu0 %v5303
    %7640 = vmatprep.subr.bf16.mxu0 %v5308
    %7641 = vmatpush1.bf16.msra.mxu0 %v5307
    %7642 = vmatprep.subr.bf16.mxu0 %v5312
    %7643 = vmatpush1.bf16.msra.mxu0 %v5311
    %7644 = vmatprep.subr.bf16.mxu0 %v5316
    %7645 = vmatpush1.bf16.msra.mxu0 %v5315
    %7646 = vmatprep.subr.bf16.mxu0 %v5320
    %7647 = vmatpush1.bf16.msra.mxu0 %v5319
    %7648 = vmatprep.mubr.bf16.mxu0 %v178
    %7649 = vmatmul.mubr.bf16.gmra.mrb[0].mxu0 %v177
    %v7650 = vpop.f32.mrb[0].mxu0
    %v7651 = vadd.f32 %v7610, %v7650
    %v7652 = vpop.f32.mrb[0].mxu0
    %v7653 = vadd.f32 %v7612, %v7652
    %v7654 = vpop.f32.mrb[0].mxu0
    %v7655 = vpop.f32.mrb[0].mxu0
    %7656 = vdwg.mxu0
    %v7657 = vmax.f32 %v6995, 0.0
    %v7658 = vmax.f32 %v6997, 0.0
    %v7659 = vmax.f32 %v7651, 0.0
    %v7660 = vmax.f32 %v7653, 0.0
    %v7661 = vpack.c.bf16 %v7657, %v7657
    %v7662 = vpack.c.bf16 %v7658, %v7658
    %v7663 = vpack.c.bf16 %v7659, %v7659
    %v7664 = vpack.c.bf16 %v7660, %v7660
    %v7665 = vld [vmem:[#allocation8] sm:$0xff]
    %v7666 = vld [vmem:[#allocation8 + $0x8] sm:$0xff]
    %v7667 = vld [vmem:[#allocation8 + $0x10] sm:$0xff]
    %v7668 = vld [vmem:[#allocation8 + $0x18] sm:$0xff]
    %v7669 = vld [vmem:[#allocation8 + $0x20] sm:$0xff]
    %v7670 = vld [vmem:[#allocation8 + $0x28] sm:$0xff]
    %v7671 = vld [vmem:[#allocation8 + $0x30] sm:$0xff]
    %v7672 = vld [vmem:[#allocation8 + $0x38] sm:$0xff]
    %v7673 = vld [vmem:[#allocation8 + $0x40] sm:$0xff]
    %v7674 = vld [vmem:[#allocation8 + $0x48] sm:$0xff]
    %v7675 = vld [vmem:[#allocation8 + $0x50] sm:$0xff]
    %v7676 = vld [vmem:[#allocation8 + $0x58] sm:$0xff]
    %v7677 = vld [vmem:[#allocation8 + $0x60] sm:$0xff]
    %v7678 = vld [vmem:[#allocation8 + $0x68] sm:$0xff]
    %v7679 = vld [vmem:[#allocation8 + $0x70] sm:$0xff]
    %v7680 = vld [vmem:[#allocation8 + $0x78] sm:$0xff]
    %v7681 = vld [vmem:[#allocation8 + $0x80] sm:$0xff]
    %v7682 = vld [vmem:[#allocation8 + $0x88] sm:$0xff]
    %v7683 = vld [vmem:[#allocation8 + $0x90] sm:$0xff]
    %v7684 = vld [vmem:[#allocation8 + $0x98] sm:$0xff]
    %v7685 = vld [vmem:[#allocation8 + $0xa0] sm:$0xff]
    %v7686 = vld [vmem:[#allocation8 + $0xa8] sm:$0xff]
    %v7687 = vld [vmem:[#allocation8 + $0xb0] sm:$0xff]
    %v7688 = vld [vmem:[#allocation8 + $0xb8] sm:$0xff]
    %v7689 = vld [vmem:[#allocation8 + $0xc0] sm:$0xff]
    %v7690 = vld [vmem:[#allocation8 + $0xc8] sm:$0xff]
    %v7691 = vld [vmem:[#allocation8 + $0xd0] sm:$0xff]
    %v7692 = vld [vmem:[#allocation8 + $0xd8] sm:$0xff]
    %v7693 = vld [vmem:[#allocation8 + $0xe0] sm:$0xff]
    %v7694 = vld [vmem:[#allocation8 + $0xe8] sm:$0xff]
    %v7695 = vld [vmem:[#allocation8 + $0xf0] sm:$0xff]
    %v7696 = vld [vmem:[#allocation8 + $0xf8] sm:$0xff]
    %v7697 = vld [vmem:[#allocation8 + $0x100] sm:$0xff]
    %v7698 = vld [vmem:[#allocation8 + $0x108] sm:$0xff]
    %v7699 = vld [vmem:[#allocation8 + $0x110] sm:$0xff]
    %v7700 = vld [vmem:[#allocation8 + $0x118] sm:$0xff]
    %v7701 = vld [vmem:[#allocation8 + $0x120] sm:$0xff]
    %v7702 = vld [vmem:[#allocation8 + $0x128] sm:$0xff]
    %v7703 = vld [vmem:[#allocation8 + $0x130] sm:$0xff]
    %v7704 = vld [vmem:[#allocation8 + $0x138] sm:$0xff]
    %v7705 = vld [vmem:[#allocation8 + $0x140] sm:$0xff]
    %v7706 = vld [vmem:[#allocation8 + $0x148] sm:$0xff]
    %v7707 = vld [vmem:[#allocation8 + $0x150] sm:$0xff]
    %v7708 = vld [vmem:[#allocation8 + $0x158] sm:$0xff]
    %v7709 = vld [vmem:[#allocation8 + $0x160] sm:$0xff]
    %v7710 = vld [vmem:[#allocation8 + $0x168] sm:$0xff]
    %v7711 = vld [vmem:[#allocation8 + $0x170] sm:$0xff]
    %v7712 = vld [vmem:[#allocation8 + $0x178] sm:$0xff]
    %v7713 = vld [vmem:[#allocation8 + $0x180] sm:$0xff]
    %v7714 = vld [vmem:[#allocation8 + $0x188] sm:$0xff]
    %v7715 = vld [vmem:[#allocation8 + $0x190] sm:$0xff]
    %v7716 = vld [vmem:[#allocation8 + $0x198] sm:$0xff]
    %v7717 = vld [vmem:[#allocation8 + $0x1a0] sm:$0xff]
    %v7718 = vld [vmem:[#allocation8 + $0x1a8] sm:$0xff]
    %v7719 = vld [vmem:[#allocation8 + $0x1b0] sm:$0xff]
    %v7720 = vld [vmem:[#allocation8 + $0x1b8] sm:$0xff]
    %v7721 = vld [vmem:[#allocation8 + $0x1c0] sm:$0xff]
    %v7722 = vld [vmem:[#allocation8 + $0x1c8] sm:$0xff]
    %v7723 = vld [vmem:[#allocation8 + $0x1d0] sm:$0xff]
    %v7724 = vld [vmem:[#allocation8 + $0x1d8] sm:$0xff]
    %v7725 = vld [vmem:[#allocation8 + $0x1e0] sm:$0xff]
    %v7726 = vld [vmem:[#allocation8 + $0x1e8] sm:$0xff]
    %v7727 = vld [vmem:[#allocation8 + $0x1f0] sm:$0xff]
    %v7728 = vld [vmem:[#allocation8 + $0x1f8] sm:$0xff]
    %v7729 = vld [vmem:[#allocation8 + $0x200] sm:$0xff]
    %v7730 = vld [vmem:[#allocation8 + $0x208] sm:$0xff]
    %v7731 = vld [vmem:[#allocation8 + $0x210] sm:$0xff]
    %v7732 = vld [vmem:[#allocation8 + $0x218] sm:$0xff]
    %v7733 = vld [vmem:[#allocation8 + $0x220] sm:$0xff]
    %v7734 = vld [vmem:[#allocation8 + $0x228] sm:$0xff]
    %v7735 = vld [vmem:[#allocation8 + $0x230] sm:$0xff]
    %v7736 = vld [vmem:[#allocation8 + $0x238] sm:$0xff]
    %v7737 = vld [vmem:[#allocation8 + $0x240] sm:$0xff]
    %v7738 = vld [vmem:[#allocation8 + $0x248] sm:$0xff]
    %v7739 = vld [vmem:[#allocation8 + $0x250] sm:$0xff]
    %v7740 = vld [vmem:[#allocation8 + $0x258] sm:$0xff]
    %v7741 = vld [vmem:[#allocation8 + $0x260] sm:$0xff]
    %v7742 = vld [vmem:[#allocation8 + $0x268] sm:$0xff]
    %v7743 = vld [vmem:[#allocation8 + $0x270] sm:$0xff]
    %v7744 = vld [vmem:[#allocation8 + $0x278] sm:$0xff]
    %v7745 = vld [vmem:[#allocation8 + $0x280] sm:$0xff]
    %v7746 = vld [vmem:[#allocation8 + $0x288] sm:$0xff]
    %v7747 = vld [vmem:[#allocation8 + $0x290] sm:$0xff]
    %v7748 = vld [vmem:[#allocation8 + $0x298] sm:$0xff]
    %v7749 = vld [vmem:[#allocation8 + $0x2a0] sm:$0xff]
    %v7750 = vld [vmem:[#allocation8 + $0x2a8] sm:$0xff]
    %v7751 = vld [vmem:[#allocation8 + $0x2b0] sm:$0xff]
    %v7752 = vld [vmem:[#allocation8 + $0x2b8] sm:$0xff]
    %v7753 = vld [vmem:[#allocation8 + $0x2c0] sm:$0xff]
    %v7754 = vld [vmem:[#allocation8 + $0x2c8] sm:$0xff]
    %v7755 = vld [vmem:[#allocation8 + $0x2d0] sm:$0xff]
    %v7756 = vld [vmem:[#allocation8 + $0x2d8] sm:$0xff]
    %v7757 = vld [vmem:[#allocation8 + $0x2e0] sm:$0xff]
    %v7758 = vld [vmem:[#allocation8 + $0x2e8] sm:$0xff]
    %v7759 = vld [vmem:[#allocation8 + $0x2f0] sm:$0xff]
    %v7760 = vld [vmem:[#allocation8 + $0x2f8] sm:$0xff]
    %v7761 = vld [vmem:[#allocation8 + $0x300] sm:$0xff]
    %v7762 = vld [vmem:[#allocation8 + $0x308] sm:$0xff]
    %v7763 = vld [vmem:[#allocation8 + $0x310] sm:$0xff]
    %v7764 = vld [vmem:[#allocation8 + $0x318] sm:$0xff]
    %v7765 = vld [vmem:[#allocation8 + $0x320] sm:$0xff]
    %v7766 = vld [vmem:[#allocation8 + $0x328] sm:$0xff]
    %v7767 = vld [vmem:[#allocation8 + $0x330] sm:$0xff]
    %v7768 = vld [vmem:[#allocation8 + $0x338] sm:$0xff]
    %v7769 = vld [vmem:[#allocation8 + $0x340] sm:$0xff]
    %v7770 = vld [vmem:[#allocation8 + $0x348] sm:$0xff]
    %v7771 = vld [vmem:[#allocation8 + $0x350] sm:$0xff]
    %v7772 = vld [vmem:[#allocation8 + $0x358] sm:$0xff]
    %v7773 = vld [vmem:[#allocation8 + $0x360] sm:$0xff]
    %v7774 = vld [vmem:[#allocation8 + $0x368] sm:$0xff]
    %v7775 = vld [vmem:[#allocation8 + $0x370] sm:$0xff]
    %v7776 = vld [vmem:[#allocation8 + $0x378] sm:$0xff]
    %v7777 = vld [vmem:[#allocation8 + $0x380] sm:$0xff]
    %v7778 = vld [vmem:[#allocation8 + $0x388] sm:$0xff]
    %v7779 = vld [vmem:[#allocation8 + $0x390] sm:$0xff]
    %v7780 = vld [vmem:[#allocation8 + $0x398] sm:$0xff]
    %v7781 = vld [vmem:[#allocation8 + $0x3a0] sm:$0xff]
    %v7782 = vld [vmem:[#allocation8 + $0x3a8] sm:$0xff]
    %v7783 = vld [vmem:[#allocation8 + $0x3b0] sm:$0xff]
    %v7784 = vld [vmem:[#allocation8 + $0x3b8] sm:$0xff]
    %v7785 = vld [vmem:[#allocation8 + $0x3c0] sm:$0xff]
    %v7786 = vld [vmem:[#allocation8 + $0x3c8] sm:$0xff]
    %v7787 = vld [vmem:[#allocation8 + $0x3d0] sm:$0xff]
    %v7788 = vld [vmem:[#allocation8 + $0x3d8] sm:$0xff]
    %v7789 = vld [vmem:[#allocation8 + $0x3e0] sm:$0xff]
    %v7790 = vld [vmem:[#allocation8 + $0x3e8] sm:$0xff]
    %v7791 = vld [vmem:[#allocation8 + $0x3f0] sm:$0xff]
    %v7792 = vld [vmem:[#allocation8 + $0x3f8] sm:$0xff]
    %v7793 = vld [vmem:[#allocation10] sm:$0xf]
    %v7795 = vlaneseq
    %v7796 = vshrl.u32 %v7795, 7
    %v7797 = vsub.s32 0, %v7796
    %v7798 = vrot.slane %v7793, %v7797
    %v7799 = vlaneseq
    %v7800 = vshrl.u32 %v7799, 7
    %v7801 = vsub.s32 1, %v7800
    %v7802 = vrot.slane %v7793, %v7801
    %v7803 = vlaneseq
    %v7804 = vshrl.u32 %v7803, 7
    %v7805 = vsub.s32 2, %v7804
    %v7806 = vrot.slane %v7793, %v7805
    %v7807 = vlaneseq
    %v7808 = vshrl.u32 %v7807, 7
    %v7809 = vsub.s32 3, %v7808
    %v7810 = vrot.slane %v7793, %v7809
    %v7943 = vunpack.c.l.b16 %v7665
    %v7944 = vunpack.c.h.b16 %v7665
    %v7945 = vunpack.c.l.b16 %v7666
    %v7946 = vunpack.c.h.b16 %v7666
    %v7947 = vunpack.c.l.b16 %v7667
    %v7948 = vunpack.c.h.b16 %v7667
    %v7949 = vunpack.c.l.b16 %v7668
    %v7950 = vunpack.c.h.b16 %v7668
    %v7951 = vunpack.c.l.b16 %v7669
    %v7952 = vunpack.c.h.b16 %v7669
    %v7953 = vunpack.c.l.b16 %v7670
    %v7954 = vunpack.c.h.b16 %v7670
    %v7955 = vunpack.c.l.b16 %v7671
    %v7956 = vunpack.c.h.b16 %v7671
    %v7957 = vunpack.c.l.b16 %v7672
    %v7958 = vunpack.c.h.b16 %v7672
    %v7959 = vunpack.c.l.b16 %v7673
    %v7960 = vunpack.c.h.b16 %v7673
    %v7961 = vunpack.c.l.b16 %v7674
    %v7962 = vunpack.c.h.b16 %v7674
    %v7963 = vunpack.c.l.b16 %v7675
    %v7964 = vunpack.c.h.b16 %v7675
    %v7965 = vunpack.c.l.b16 %v7676
    %v7966 = vunpack.c.h.b16 %v7676
    %v7967 = vunpack.c.l.b16 %v7677
    %v7968 = vunpack.c.h.b16 %v7677
    %v7969 = vunpack.c.l.b16 %v7678
    %v7970 = vunpack.c.h.b16 %v7678
    %v7971 = vunpack.c.l.b16 %v7679
    %v7972 = vunpack.c.h.b16 %v7679
    %v7973 = vunpack.c.l.b16 %v7680
    %v7974 = vunpack.c.h.b16 %v7680
    %v7975 = vunpack.c.l.b16 %v7681
    %v7976 = vunpack.c.h.b16 %v7681
    %v7977 = vunpack.c.l.b16 %v7682
    %v7978 = vunpack.c.h.b16 %v7682
    %v7979 = vunpack.c.l.b16 %v7683
    %v7980 = vunpack.c.h.b16 %v7683
    %v7981 = vunpack.c.l.b16 %v7684
    %v7982 = vunpack.c.h.b16 %v7684
    %v7983 = vunpack.c.l.b16 %v7685
    %v7984 = vunpack.c.h.b16 %v7685
    %v7985 = vunpack.c.l.b16 %v7686
    %v7986 = vunpack.c.h.b16 %v7686
    %v7987 = vunpack.c.l.b16 %v7687
    %v7988 = vunpack.c.h.b16 %v7687
    %v7989 = vunpack.c.l.b16 %v7688
    %v7990 = vunpack.c.h.b16 %v7688
    %v7991 = vunpack.c.l.b16 %v7689
    %v7992 = vunpack.c.h.b16 %v7689
    %v7993 = vunpack.c.l.b16 %v7690
    %v7994 = vunpack.c.h.b16 %v7690
    %v7995 = vunpack.c.l.b16 %v7691
    %v7996 = vunpack.c.h.b16 %v7691
    %v7997 = vunpack.c.l.b16 %v7692
    %v7998 = vunpack.c.h.b16 %v7692
    %v7999 = vunpack.c.l.b16 %v7693
    %v8000 = vunpack.c.h.b16 %v7693
    %v8001 = vunpack.c.l.b16 %v7694
    %v8002 = vunpack.c.h.b16 %v7694
    %v8003 = vunpack.c.l.b16 %v7695
    %v8004 = vunpack.c.h.b16 %v7695
    %v8005 = vunpack.c.l.b16 %v7696
    %v8006 = vunpack.c.h.b16 %v7696
    %v8007 = vunpack.c.l.b16 %v7697
    %v8008 = vunpack.c.h.b16 %v7697
    %v8009 = vunpack.c.l.b16 %v7698
    %v8010 = vunpack.c.h.b16 %v7698
    %v8011 = vunpack.c.l.b16 %v7699
    %v8012 = vunpack.c.h.b16 %v7699
    %v8013 = vunpack.c.l.b16 %v7700
    %v8014 = vunpack.c.h.b16 %v7700
    %v8015 = vunpack.c.l.b16 %v7701
    %v8016 = vunpack.c.h.b16 %v7701
    %v8017 = vunpack.c.l.b16 %v7702
    %v8018 = vunpack.c.h.b16 %v7702
    %v8019 = vunpack.c.l.b16 %v7703
    %v8020 = vunpack.c.h.b16 %v7703
    %v8021 = vunpack.c.l.b16 %v7704
    %v8022 = vunpack.c.h.b16 %v7704
    %v8023 = vunpack.c.l.b16 %v7705
    %v8024 = vunpack.c.h.b16 %v7705
    %v8025 = vunpack.c.l.b16 %v7706
    %v8026 = vunpack.c.h.b16 %v7706
    %v8027 = vunpack.c.l.b16 %v7707
    %v8028 = vunpack.c.h.b16 %v7707
    %v8029 = vunpack.c.l.b16 %v7708
    %v8030 = vunpack.c.h.b16 %v7708
    %v8031 = vunpack.c.l.b16 %v7709
    %v8032 = vunpack.c.h.b16 %v7709
    %v8033 = vunpack.c.l.b16 %v7710
    %v8034 = vunpack.c.h.b16 %v7710
    %v8035 = vunpack.c.l.b16 %v7711
    %v8036 = vunpack.c.h.b16 %v7711
    %v8037 = vunpack.c.l.b16 %v7712
    %v8038 = vunpack.c.h.b16 %v7712
    %v8039 = vunpack.c.l.b16 %v7713
    %v8040 = vunpack.c.h.b16 %v7713
    %v8041 = vunpack.c.l.b16 %v7714
    %v8042 = vunpack.c.h.b16 %v7714
    %v8043 = vunpack.c.l.b16 %v7715
    %v8044 = vunpack.c.h.b16 %v7715
    %v8045 = vunpack.c.l.b16 %v7716
    %v8046 = vunpack.c.h.b16 %v7716
    %v8047 = vunpack.c.l.b16 %v7717
    %v8048 = vunpack.c.h.b16 %v7717
    %v8049 = vunpack.c.l.b16 %v7718
    %v8050 = vunpack.c.h.b16 %v7718
    %v8051 = vunpack.c.l.b16 %v7719
    %v8052 = vunpack.c.h.b16 %v7719
    %v8053 = vunpack.c.l.b16 %v7720
    %v8054 = vunpack.c.h.b16 %v7720
    %v8055 = vunpack.c.l.b16 %v7721
    %v8056 = vunpack.c.h.b16 %v7721
    %v8057 = vunpack.c.l.b16 %v7722
    %v8058 = vunpack.c.h.b16 %v7722
    %v8059 = vunpack.c.l.b16 %v7723
    %v8060 = vunpack.c.h.b16 %v7723
    %v8061 = vunpack.c.l.b16 %v7724
    %v8062 = vunpack.c.h.b16 %v7724
    %v8063 = vunpack.c.l.b16 %v7725
    %v8064 = vunpack.c.h.b16 %v7725
    %v8065 = vunpack.c.l.b16 %v7726
    %v8066 = vunpack.c.h.b16 %v7726
    %v8067 = vunpack.c.l.b16 %v7727
    %v8068 = vunpack.c.h.b16 %v7727
    %v8069 = vunpack.c.l.b16 %v7728
    %v8070 = vunpack.c.h.b16 %v7728
    %v8071 = vunpack.c.l.b16 %v7729
    %v8072 = vunpack.c.h.b16 %v7729
    %v8073 = vunpack.c.l.b16 %v7730
    %v8074 = vunpack.c.h.b16 %v7730
    %v8075 = vunpack.c.l.b16 %v7731
    %v8076 = vunpack.c.h.b16 %v7731
    %v8077 = vunpack.c.l.b16 %v7732
    %v8078 = vunpack.c.h.b16 %v7732
    %v8079 = vunpack.c.l.b16 %v7733
    %v8080 = vunpack.c.h.b16 %v7733
    %v8081 = vunpack.c.l.b16 %v7734
    %v8082 = vunpack.c.h.b16 %v7734
    %v8083 = vunpack.c.l.b16 %v7735
    %v8084 = vunpack.c.h.b16 %v7735
    %v8085 = vunpack.c.l.b16 %v7736
    %v8086 = vunpack.c.h.b16 %v7736
    %v8087 = vunpack.c.l.b16 %v7737
    %v8088 = vunpack.c.h.b16 %v7737
    %v8089 = vunpack.c.l.b16 %v7738
    %v8090 = vunpack.c.h.b16 %v7738
    %v8091 = vunpack.c.l.b16 %v7739
    %v8092 = vunpack.c.h.b16 %v7739
    %v8093 = vunpack.c.l.b16 %v7740
    %v8094 = vunpack.c.h.b16 %v7740
    %v8095 = vunpack.c.l.b16 %v7741
    %v8096 = vunpack.c.h.b16 %v7741
    %v8097 = vunpack.c.l.b16 %v7742
    %v8098 = vunpack.c.h.b16 %v7742
    %v8099 = vunpack.c.l.b16 %v7743
    %v8100 = vunpack.c.h.b16 %v7743
    %v8101 = vunpack.c.l.b16 %v7744
    %v8102 = vunpack.c.h.b16 %v7744
    %v8103 = vunpack.c.l.b16 %v7745
    %v8104 = vunpack.c.h.b16 %v7745
    %v8105 = vunpack.c.l.b16 %v7746
    %v8106 = vunpack.c.h.b16 %v7746
    %v8107 = vunpack.c.l.b16 %v7747
    %v8108 = vunpack.c.h.b16 %v7747
    %v8109 = vunpack.c.l.b16 %v7748
    %v8110 = vunpack.c.h.b16 %v7748
    %v8111 = vunpack.c.l.b16 %v7749
    %v8112 = vunpack.c.h.b16 %v7749
    %v8113 = vunpack.c.l.b16 %v7750
    %v8114 = vunpack.c.h.b16 %v7750
    %v8115 = vunpack.c.l.b16 %v7751
    %v8116 = vunpack.c.h.b16 %v7751
    %v8117 = vunpack.c.l.b16 %v7752
    %v8118 = vunpack.c.h.b16 %v7752
    %v8119 = vunpack.c.l.b16 %v7753
    %v8120 = vunpack.c.h.b16 %v7753
    %v8121 = vunpack.c.l.b16 %v7754
    %v8122 = vunpack.c.h.b16 %v7754
    %v8123 = vunpack.c.l.b16 %v7755
    %v8124 = vunpack.c.h.b16 %v7755
    %v8125 = vunpack.c.l.b16 %v7756
    %v8126 = vunpack.c.h.b16 %v7756
    %v8127 = vunpack.c.l.b16 %v7757
    %v8128 = vunpack.c.h.b16 %v7757
    %v8129 = vunpack.c.l.b16 %v7758
    %v8130 = vunpack.c.h.b16 %v7758
    %v8131 = vunpack.c.l.b16 %v7759
    %v8132 = vunpack.c.h.b16 %v7759
    %v8133 = vunpack.c.l.b16 %v7760
    %v8134 = vunpack.c.h.b16 %v7760
    %v8135 = vunpack.c.l.b16 %v7761
    %v8136 = vunpack.c.h.b16 %v7761
    %v8137 = vunpack.c.l.b16 %v7762
    %v8138 = vunpack.c.h.b16 %v7762
    %v8139 = vunpack.c.l.b16 %v7763
    %v8140 = vunpack.c.h.b16 %v7763
    %v8141 = vunpack.c.l.b16 %v7764
    %v8142 = vunpack.c.h.b16 %v7764
    %v8143 = vunpack.c.l.b16 %v7765
    %v8144 = vunpack.c.h.b16 %v7765
    %v8145 = vunpack.c.l.b16 %v7766
    %v8146 = vunpack.c.h.b16 %v7766
    %v8147 = vunpack.c.l.b16 %v7767
    %v8148 = vunpack.c.h.b16 %v7767
    %v8149 = vunpack.c.l.b16 %v7768
    %v8150 = vunpack.c.h.b16 %v7768
    %v8151 = vunpack.c.l.b16 %v7769
    %v8152 = vunpack.c.h.b16 %v7769
    %v8153 = vunpack.c.l.b16 %v7770
    %v8154 = vunpack.c.h.b16 %v7770
    %v8155 = vunpack.c.l.b16 %v7771
    %v8156 = vunpack.c.h.b16 %v7771
    %v8157 = vunpack.c.l.b16 %v7772
    %v8158 = vunpack.c.h.b16 %v7772
    %v8159 = vunpack.c.l.b16 %v7773
    %v8160 = vunpack.c.h.b16 %v7773
    %v8161 = vunpack.c.l.b16 %v7774
    %v8162 = vunpack.c.h.b16 %v7774
    %v8163 = vunpack.c.l.b16 %v7775
    %v8164 = vunpack.c.h.b16 %v7775
    %v8165 = vunpack.c.l.b16 %v7776
    %v8166 = vunpack.c.h.b16 %v7776
    %v8167 = vunpack.c.l.b16 %v7777
    %v8168 = vunpack.c.h.b16 %v7777
    %v8169 = vunpack.c.l.b16 %v7778
    %v8170 = vunpack.c.h.b16 %v7778
    %v8171 = vunpack.c.l.b16 %v7779
    %v8172 = vunpack.c.h.b16 %v7779
    %v8173 = vunpack.c.l.b16 %v7780
    %v8174 = vunpack.c.h.b16 %v7780
    %v8175 = vunpack.c.l.b16 %v7781
    %v8176 = vunpack.c.h.b16 %v7781
    %v8177 = vunpack.c.l.b16 %v7782
    %v8178 = vunpack.c.h.b16 %v7782
    %v8179 = vunpack.c.l.b16 %v7783
    %v8180 = vunpack.c.h.b16 %v7783
    %v8181 = vunpack.c.l.b16 %v7784
    %v8182 = vunpack.c.h.b16 %v7784
    %v8183 = vunpack.c.l.b16 %v7785
    %v8184 = vunpack.c.h.b16 %v7785
    %v8185 = vunpack.c.l.b16 %v7786
    %v8186 = vunpack.c.h.b16 %v7786
    %v8187 = vunpack.c.l.b16 %v7787
    %v8188 = vunpack.c.h.b16 %v7787
    %v8189 = vunpack.c.l.b16 %v7788
    %v8190 = vunpack.c.h.b16 %v7788
    %v8191 = vunpack.c.l.b16 %v7789
    %v8192 = vunpack.c.h.b16 %v7789
    %v8193 = vunpack.c.l.b16 %v7790
    %v8194 = vunpack.c.h.b16 %v7790
    %v8195 = vunpack.c.l.b16 %v7791
    %v8196 = vunpack.c.h.b16 %v7791
    %v8197 = vunpack.c.l.b16 %v7792
    %v8198 = vunpack.c.h.b16 %v7792
    %v8199 = vpack.c.b16 %v7947, %v7943
    %v8200 = vpack.c.b16 %v7948, %v7944
    %v8201 = vpack.c.b16 %v7949, %v7945
    %v8202 = vpack.c.b16 %v7950, %v7946
    %v8203 = vpack.c.b16 %v7955, %v7951
    %v8204 = vpack.c.b16 %v7956, %v7952
    %v8205 = vpack.c.b16 %v7957, %v7953
    %v8206 = vpack.c.b16 %v7958, %v7954
    %v8207 = vpack.c.b16 %v7963, %v7959
    %v8208 = vpack.c.b16 %v7964, %v7960
    %v8209 = vpack.c.b16 %v7965, %v7961
    %v8210 = vpack.c.b16 %v7966, %v7962
    %v8211 = vpack.c.b16 %v7971, %v7967
    %v8212 = vpack.c.b16 %v7972, %v7968
    %v8213 = vpack.c.b16 %v7973, %v7969
    %v8214 = vpack.c.b16 %v7974, %v7970
    %v8215 = vpack.c.b16 %v7979, %v7975
    %v8216 = vpack.c.b16 %v7980, %v7976
    %v8217 = vpack.c.b16 %v7981, %v7977
    %v8218 = vpack.c.b16 %v7982, %v7978
    %v8219 = vpack.c.b16 %v7987, %v7983
    %v8220 = vpack.c.b16 %v7988, %v7984
    %v8221 = vpack.c.b16 %v7989, %v7985
    %v8222 = vpack.c.b16 %v7990, %v7986
    %v8223 = vpack.c.b16 %v7995, %v7991
    %v8224 = vpack.c.b16 %v7996, %v7992
    %v8225 = vpack.c.b16 %v7997, %v7993
    %v8226 = vpack.c.b16 %v7998, %v7994
    %v8227 = vpack.c.b16 %v8003, %v7999
    %v8228 = vpack.c.b16 %v8004, %v8000
    %v8229 = vpack.c.b16 %v8005, %v8001
    %v8230 = vpack.c.b16 %v8006, %v8002
    %v8231 = vpack.c.b16 %v8011, %v8007
    %v8232 = vpack.c.b16 %v8012, %v8008
    %v8233 = vpack.c.b16 %v8013, %v8009
    %v8234 = vpack.c.b16 %v8014, %v8010
    %v8235 = vpack.c.b16 %v8019, %v8015
    %v8236 = vpack.c.b16 %v8020, %v8016
    %v8237 = vpack.c.b16 %v8021, %v8017
    %v8238 = vpack.c.b16 %v8022, %v8018
    %v8239 = vpack.c.b16 %v8027, %v8023
    %v8240 = vpack.c.b16 %v8028, %v8024
    %v8241 = vpack.c.b16 %v8029, %v8025
    %v8242 = vpack.c.b16 %v8030, %v8026
    %v8243 = vpack.c.b16 %v8035, %v8031
    %v8244 = vpack.c.b16 %v8036, %v8032
    %v8245 = vpack.c.b16 %v8037, %v8033
    %v8246 = vpack.c.b16 %v8038, %v8034
    %v8247 = vpack.c.b16 %v8043, %v8039
    %v8248 = vpack.c.b16 %v8044, %v8040
    %v8249 = vpack.c.b16 %v8045, %v8041
    %v8250 = vpack.c.b16 %v8046, %v8042
    %v8251 = vpack.c.b16 %v8051, %v8047
    %v8252 = vpack.c.b16 %v8052, %v8048
    %v8253 = vpack.c.b16 %v8053, %v8049
    %v8254 = vpack.c.b16 %v8054, %v8050
    %v8255 = vpack.c.b16 %v8059, %v8055
    %v8256 = vpack.c.b16 %v8060, %v8056
    %v8257 = vpack.c.b16 %v8061, %v8057
    %v8258 = vpack.c.b16 %v8062, %v8058
    %v8259 = vpack.c.b16 %v8067, %v8063
    %v8260 = vpack.c.b16 %v8068, %v8064
    %v8261 = vpack.c.b16 %v8069, %v8065
    %v8262 = vpack.c.b16 %v8070, %v8066
    %v8263 = vpack.c.b16 %v8075, %v8071
    %v8264 = vpack.c.b16 %v8076, %v8072
    %v8265 = vpack.c.b16 %v8077, %v8073
    %v8266 = vpack.c.b16 %v8078, %v8074
    %v8267 = vpack.c.b16 %v8083, %v8079
    %v8268 = vpack.c.b16 %v8084, %v8080
    %v8269 = vpack.c.b16 %v8085, %v8081
    %v8270 = vpack.c.b16 %v8086, %v8082
    %v8271 = vpack.c.b16 %v8091, %v8087
    %v8272 = vpack.c.b16 %v8092, %v8088
    %v8273 = vpack.c.b16 %v8093, %v8089
    %v8274 = vpack.c.b16 %v8094, %v8090
    %v8275 = vpack.c.b16 %v8099, %v8095
    %v8276 = vpack.c.b16 %v8100, %v8096
    %v8277 = vpack.c.b16 %v8101, %v8097
    %v8278 = vpack.c.b16 %v8102, %v8098
    %v8279 = vpack.c.b16 %v8107, %v8103
    %v8280 = vpack.c.b16 %v8108, %v8104
    %v8281 = vpack.c.b16 %v8109, %v8105
    %v8282 = vpack.c.b16 %v8110, %v8106
    %v8283 = vpack.c.b16 %v8115, %v8111
    %v8284 = vpack.c.b16 %v8116, %v8112
    %v8285 = vpack.c.b16 %v8117, %v8113
    %v8286 = vpack.c.b16 %v8118, %v8114
    %v8287 = vpack.c.b16 %v8123, %v8119
    %v8288 = vpack.c.b16 %v8124, %v8120
    %v8289 = vpack.c.b16 %v8125, %v8121
    %v8290 = vpack.c.b16 %v8126, %v8122
    %v8291 = vpack.c.b16 %v8131, %v8127
    %v8292 = vpack.c.b16 %v8132, %v8128
    %v8293 = vpack.c.b16 %v8133, %v8129
    %v8294 = vpack.c.b16 %v8134, %v8130
    %v8295 = vpack.c.b16 %v8139, %v8135
    %v8296 = vpack.c.b16 %v8140, %v8136
    %v8297 = vpack.c.b16 %v8141, %v8137
    %v8298 = vpack.c.b16 %v8142, %v8138
    %v8299 = vpack.c.b16 %v8147, %v8143
    %v8300 = vpack.c.b16 %v8148, %v8144
    %v8301 = vpack.c.b16 %v8149, %v8145
    %v8302 = vpack.c.b16 %v8150, %v8146
    %v8303 = vpack.c.b16 %v8155, %v8151
    %v8304 = vpack.c.b16 %v8156, %v8152
    %v8305 = vpack.c.b16 %v8157, %v8153
    %v8306 = vpack.c.b16 %v8158, %v8154
    %v8307 = vpack.c.b16 %v8163, %v8159
    %v8308 = vpack.c.b16 %v8164, %v8160
    %v8309 = vpack.c.b16 %v8165, %v8161
    %v8310 = vpack.c.b16 %v8166, %v8162
    %v8311 = vpack.c.b16 %v8171, %v8167
    %v8312 = vpack.c.b16 %v8172, %v8168
    %v8313 = vpack.c.b16 %v8173, %v8169
    %v8314 = vpack.c.b16 %v8174, %v8170
    %v8315 = vpack.c.b16 %v8179, %v8175
    %v8316 = vpack.c.b16 %v8180, %v8176
    %v8317 = vpack.c.b16 %v8181, %v8177
    %v8318 = vpack.c.b16 %v8182, %v8178
    %v8319 = vpack.c.b16 %v8187, %v8183
    %v8320 = vpack.c.b16 %v8188, %v8184
    %v8321 = vpack.c.b16 %v8189, %v8185
    %v8322 = vpack.c.b16 %v8190, %v8186
    %v8323 = vpack.c.b16 %v8195, %v8191
    %v8324 = vpack.c.b16 %v8196, %v8192
    %v8325 = vpack.c.b16 %v8197, %v8193
    %v8326 = vpack.c.b16 %v8198, %v8194
    %8455 = vmatprep.subr.bf16.mxu0 %v8200
    %8456 = vmatpush1.bf16.msra.mxu0 %v8199
    %8457 = vmatprep.subr.bf16.mxu0 %v8204
    %8458 = vmatpush1.bf16.msra.mxu0 %v8203
    %8459 = vmatprep.subr.bf16.mxu0 %v8208
    %8460 = vmatpush1.bf16.msra.mxu0 %v8207
    %8461 = vmatprep.subr.bf16.mxu0 %v8212
    %8462 = vmatpush1.bf16.msra.mxu0 %v8211
    %8463 = vmatprep.subr.bf16.mxu0 %v8216
    %8464 = vmatpush1.bf16.msra.mxu0 %v8215
    %8465 = vmatprep.subr.bf16.mxu0 %v8220
    %8466 = vmatpush1.bf16.msra.mxu0 %v8219
    %8467 = vmatprep.subr.bf16.mxu0 %v8224
    %8468 = vmatpush1.bf16.msra.mxu0 %v8223
    %8469 = vmatprep.subr.bf16.mxu0 %v8228
    %8470 = vmatpush1.bf16.msra.mxu0 %v8227
    %8471 = vmatprep.subr.bf16.mxu0 %v8232
    %8472 = vmatpush1.bf16.msra.mxu0 %v8231
    %8473 = vmatprep.subr.bf16.mxu0 %v8236
    %8474 = vmatpush1.bf16.msra.mxu0 %v8235
    %8475 = vmatprep.subr.bf16.mxu0 %v8240
    %8476 = vmatpush1.bf16.msra.mxu0 %v8239
    %8477 = vmatprep.subr.bf16.mxu0 %v8244
    %8478 = vmatpush1.bf16.msra.mxu0 %v8243
    %8479 = vmatprep.subr.bf16.mxu0 %v8248
    %8480 = vmatpush1.bf16.msra.mxu0 %v8247
    %8481 = vmatprep.subr.bf16.mxu0 %v8252
    %8482 = vmatpush1.bf16.msra.mxu0 %v8251
    %8483 = vmatprep.subr.bf16.mxu0 %v8256
    %8484 = vmatpush1.bf16.msra.mxu0 %v8255
    %8485 = vmatprep.subr.bf16.mxu0 %v8260
    %8486 = vmatpush1.bf16.msra.mxu0 %v8259
    %8487 = vmatprep.mubr.bf16.mxu0 %v7662
    %8488 = vmatmul.mubr.bf16.gmra.mrb[0].mxu0 %v7661
    %v8489 = vpop.f32.mrb[0].mxu0
    %v8490 = vadd.f32 %v7798, %v8489
    %v8491 = vpop.f32.mrb[0].mxu0
    %v8492 = vadd.f32 %v7802, %v8491
    %v8493 = vpop.f32.mrb[0].mxu0
    %v8494 = vpop.f32.mrb[0].mxu0
    %8495 = vdwg.mxu0
    %8496 = vmatprep.subr.bf16.mxu0 %v8264
    %8497 = vmatpush1.bf16.msra.mxu0 %v8263
    %8498 = vmatprep.subr.bf16.mxu0 %v8268
    %8499 = vmatpush1.bf16.msra.mxu0 %v8267
    %8500 = vmatprep.subr.bf16.mxu0 %v8272
    %8501 = vmatpush1.bf16.msra.mxu0 %v8271
    %8502 = vmatprep.subr.bf16.mxu0 %v8276
    %8503 = vmatpush1.bf16.msra.mxu0 %v8275
    %8504 = vmatprep.subr.bf16.mxu0 %v8280
    %8505 = vmatpush1.bf16.msra.mxu0 %v8279
    %8506 = vmatprep.subr.bf16.mxu0 %v8284
    %8507 = vmatpush1.bf16.msra.mxu0 %v8283
    %8508 = vmatprep.subr.bf16.mxu0 %v8288
    %8509 = vmatpush1.bf16.msra.mxu0 %v8287
    %8510 = vmatprep.subr.bf16.mxu0 %v8292
    %8511 = vmatpush1.bf16.msra.mxu0 %v8291
    %8512 = vmatprep.subr.bf16.mxu0 %v8296
    %8513 = vmatpush1.bf16.msra.mxu0 %v8295
    %8514 = vmatprep.subr.bf16.mxu0 %v8300
    %8515 = vmatpush1.bf16.msra.mxu0 %v8299
    %8516 = vmatprep.subr.bf16.mxu0 %v8304
    %8517 = vmatpush1.bf16.msra.mxu0 %v8303
    %8518 = vmatprep.subr.bf16.mxu0 %v8308
    %8519 = vmatpush1.bf16.msra.mxu0 %v8307
    %8520 = vmatprep.subr.bf16.mxu0 %v8312
    %8521 = vmatpush1.bf16.msra.mxu0 %v8311
    %8522 = vmatprep.subr.bf16.mxu0 %v8316
    %8523 = vmatpush1.bf16.msra.mxu0 %v8315
    %8524 = vmatprep.subr.bf16.mxu0 %v8320
    %8525 = vmatpush1.bf16.msra.mxu0 %v8319
    %8526 = vmatprep.subr.bf16.mxu0 %v8324
    %8527 = vmatpush1.bf16.msra.mxu0 %v8323
    %8528 = vmatprep.mubr.bf16.mxu0 %v7664
    %8529 = vmatmul.mubr.bf16.gmra.mrb[0].mxu0 %v7663
    %v8530 = vpop.f32.mrb[0].mxu0
    %v8531 = vadd.f32 %v8490, %v8530
    %v8532 = vpop.f32.mrb[0].mxu0
    %v8533 = vadd.f32 %v8492, %v8532
    %v8534 = vpop.f32.mrb[0].mxu0
    %v8535 = vpop.f32.mrb[0].mxu0
    %8536 = vdwg.mxu0
    %8537 = vmatprep.subr.bf16.mxu0 %v8202
    %8538 = vmatpush1.bf16.msra.mxu0 %v8201
    %8539 = vmatprep.subr.bf16.mxu0 %v8206
    %8540 = vmatpush1.bf16.msra.mxu0 %v8205
    %8541 = vmatprep.subr.bf16.mxu0 %v8210
    %8542 = vmatpush1.bf16.msra.mxu0 %v8209
    %8543 = vmatprep.subr.bf16.mxu0 %v8214
    %8544 = vmatpush1.bf16.msra.mxu0 %v8213
    %8545 = vmatprep.subr.bf16.mxu0 %v8218
    %8546 = vmatpush1.bf16.msra.mxu0 %v8217
    %8547 = vmatprep.subr.bf16.mxu0 %v8222
    %8548 = vmatpush1.bf16.msra.mxu0 %v8221
    %8549 = vmatprep.subr.bf16.mxu0 %v8226
    %8550 = vmatpush1.bf16.msra.mxu0 %v8225
    %8551 = vmatprep.subr.bf16.mxu0 %v8230
    %8552 = vmatpush1.bf16.msra.mxu0 %v8229
    %8553 = vmatprep.subr.bf16.mxu0 %v8234
    %8554 = vmatpush1.bf16.msra.mxu0 %v8233
    %8555 = vmatprep.subr.bf16.mxu0 %v8238
    %8556 = vmatpush1.bf16.msra.mxu0 %v8237
    %8557 = vmatprep.subr.bf16.mxu0 %v8242
    %8558 = vmatpush1.bf16.msra.mxu0 %v8241
    %8559 = vmatprep.subr.bf16.mxu0 %v8246
    %8560 = vmatpush1.bf16.msra.mxu0 %v8245
    %8561 = vmatprep.subr.bf16.mxu0 %v8250
    %8562 = vmatpush1.bf16.msra.mxu0 %v8249
    %8563 = vmatprep.subr.bf16.mxu0 %v8254
    %8564 = vmatpush1.bf16.msra.mxu0 %v8253
    %8565 = vmatprep.subr.bf16.mxu0 %v8258
    %8566 = vmatpush1.bf16.msra.mxu0 %v8257
    %8567 = vmatprep.subr.bf16.mxu0 %v8262
    %8568 = vmatpush1.bf16.msra.mxu0 %v8261
    %8569 = vmatprep.mubr.bf16.mxu0 %v7662
    %8570 = vmatmul.mubr.bf16.gmra.mrb[0].mxu0 %v7661
    %v8571 = vpop.f32.mrb[0].mxu0
    %v8572 = vadd.f32 %v7806, %v8571
    %v8573 = vpop.f32.mrb[0].mxu0
    %v8574 = vadd.f32 %v7810, %v8573
    %v8575 = vpop.f32.mrb[0].mxu0
    %v8576 = vpop.f32.mrb[0].mxu0
    %8577 = vdwg.mxu0
    %8578 = vmatprep.subr.bf16.mxu0 %v8266
    %8579 = vmatpush1.bf16.msra.mxu0 %v8265
    %8580 = vmatprep.subr.bf16.mxu0 %v8270
    %8581 = vmatpush1.bf16.msra.mxu0 %v8269
    %8582 = vmatprep.subr.bf16.mxu0 %v8274
    %8583 = vmatpush1.bf16.msra.mxu0 %v8273
    %8584 = vmatprep.subr.bf16.mxu0 %v8278
    %8585 = vmatpush1.bf16.msra.mxu0 %v8277
    %8586 = vmatprep.subr.bf16.mxu0 %v8282
    %8587 = vmatpush1.bf16.msra.mxu0 %v8281
    %8588 = vmatprep.subr.bf16.mxu0 %v8286
    %8589 = vmatpush1.bf16.msra.mxu0 %v8285
    %8590 = vmatprep.subr.bf16.mxu0 %v8290
    %8591 = vmatpush1.bf16.msra.mxu0 %v8289
    %8592 = vmatprep.subr.bf16.mxu0 %v8294
    %8593 = vmatpush1.bf16.msra.mxu0 %v8293
    %8594 = vmatprep.subr.bf16.mxu0 %v8298
    %8595 = vmatpush1.bf16.msra.mxu0 %v8297
    %8596 = vmatprep.subr.bf16.mxu0 %v8302
    %8597 = vmatpush1.bf16.msra.mxu0 %v8301
    %8598 = vmatprep.subr.bf16.mxu0 %v8306
    %8599 = vmatpush1.bf16.msra.mxu0 %v8305
    %8600 = vmatprep.subr.bf16.mxu0 %v8310
    %8601 = vmatpush1.bf16.msra.mxu0 %v8309
    %8602 = vmatprep.subr.bf16.mxu0 %v8314
    %8603 = vmatpush1.bf16.msra.mxu0 %v8313
    %8604 = vmatprep.subr.bf16.mxu0 %v8318
    %8605 = vmatpush1.bf16.msra.mxu0 %v8317
    %8606 = vmatprep.subr.bf16.mxu0 %v8322
    %8607 = vmatpush1.bf16.msra.mxu0 %v8321
    %8608 = vmatprep.subr.bf16.mxu0 %v8326
    %8609 = vmatpush1.bf16.msra.mxu0 %v8325
    %8610 = vmatprep.mubr.bf16.mxu0 %v7664
    %8611 = vmatmul.mubr.bf16.gmra.mrb[0].mxu0 %v7663
    %v8612 = vpop.f32.mrb[0].mxu0
    %v8613 = vadd.f32 %v8572, %v8612
    %v8614 = vpop.f32.mrb[0].mxu0
    %v8615 = vadd.f32 %v8574, %v8614
    %v8616 = vpop.f32.mrb[0].mxu0
    %v8617 = vpop.f32.mrb[0].mxu0
    %8618 = vdwg.mxu0
    %v8619 = vmax.f32 %v8531, 0.0
    %v8620 = vmax.f32 %v8533, 0.0
    %v8621 = vmax.f32 %v8613, 0.0
    %v8622 = vmax.f32 %v8615, 0.0
    %v8623 = vpack.c.bf16 %v8619, %v8619
    %v8624 = vpack.c.bf16 %v8620, %v8620
    %v8625 = vpack.c.bf16 %v8621, %v8621
    %v8626 = vpack.c.bf16 %v8622, %v8622
    %v8627 = vld [vmem:[#allocation11] sm:$0xf]
    %v8628 = vld [vmem:[#allocation11 + $0x4] sm:$0xf]
    %v8629 = vld [vmem:[#allocation11 + $0x8] sm:$0xf]
    %v8630 = vld [vmem:[#allocation11 + $0xc] sm:$0xf]
    %v8631 = vld [vmem:[#allocation11 + $0x10] sm:$0xf]
    %v8632 = vld [vmem:[#allocation11 + $0x14] sm:$0xf]
    %v8633 = vld [vmem:[#allocation11 + $0x18] sm:$0xf]
    %v8634 = vld [vmem:[#allocation11 + $0x1c] sm:$0xf]
    %v8635 = vld [vmem:[#allocation11 + $0x20] sm:$0xf]
    %v8636 = vld [vmem:[#allocation11 + $0x24] sm:$0xf]
    %v8637 = vld [vmem:[#allocation11 + $0x28] sm:$0xf]
    %v8638 = vld [vmem:[#allocation11 + $0x2c] sm:$0xf]
    %v8639 = vld [vmem:[#allocation11 + $0x30] sm:$0xf]
    %v8640 = vld [vmem:[#allocation11 + $0x34] sm:$0xf]
    %v8641 = vld [vmem:[#allocation11 + $0x38] sm:$0xf]
    %v8642 = vld [vmem:[#allocation11 + $0x3c] sm:$0xf]
    %v8643 = vld [vmem:[#allocation11 + $0x40] sm:$0xf]
    %v8644 = vld [vmem:[#allocation11 + $0x44] sm:$0xf]
    %v8645 = vld [vmem:[#allocation11 + $0x48] sm:$0xf]
    %v8646 = vld [vmem:[#allocation11 + $0x4c] sm:$0xf]
    %v8647 = vld [vmem:[#allocation11 + $0x50] sm:$0xf]
    %v8648 = vld [vmem:[#allocation11 + $0x54] sm:$0xf]
    %v8649 = vld [vmem:[#allocation11 + $0x58] sm:$0xf]
    %v8650 = vld [vmem:[#allocation11 + $0x5c] sm:$0xf]
    %v8651 = vld [vmem:[#allocation11 + $0x60] sm:$0xf]
    %v8652 = vld [vmem:[#allocation11 + $0x64] sm:$0xf]
    %v8653 = vld [vmem:[#allocation11 + $0x68] sm:$0xf]
    %v8654 = vld [vmem:[#allocation11 + $0x6c] sm:$0xf]
    %v8655 = vld [vmem:[#allocation11 + $0x70] sm:$0xf]
    %v8656 = vld [vmem:[#allocation11 + $0x74] sm:$0xf]
    %v8657 = vld [vmem:[#allocation11 + $0x78] sm:$0xf]
    %v8658 = vld [vmem:[#allocation11 + $0x7c] sm:$0xf]
    %v8659 = vld [vmem:[#allocation11 + $0x80] sm:$0xf]
    %v8660 = vld [vmem:[#allocation11 + $0x84] sm:$0xf]
    %v8661 = vld [vmem:[#allocation11 + $0x88] sm:$0xf]
    %v8662 = vld [vmem:[#allocation11 + $0x8c] sm:$0xf]
    %v8663 = vld [vmem:[#allocation11 + $0x90] sm:$0xf]
    %v8664 = vld [vmem:[#allocation11 + $0x94] sm:$0xf]
    %v8665 = vld [vmem:[#allocation11 + $0x98] sm:$0xf]
    %v8666 = vld [vmem:[#allocation11 + $0x9c] sm:$0xf]
    %v8667 = vld [vmem:[#allocation11 + $0xa0] sm:$0xf]
    %v8668 = vld [vmem:[#allocation11 + $0xa4] sm:$0xf]
    %v8669 = vld [vmem:[#allocation11 + $0xa8] sm:$0xf]
    %v8670 = vld [vmem:[#allocation11 + $0xac] sm:$0xf]
    %v8671 = vld [vmem:[#allocation11 + $0xb0] sm:$0xf]
    %v8672 = vld [vmem:[#allocation11 + $0xb4] sm:$0xf]
    %v8673 = vld [vmem:[#allocation11 + $0xb8] sm:$0xf]
    %v8674 = vld [vmem:[#allocation11 + $0xbc] sm:$0xf]
    %v8675 = vld [vmem:[#allocation11 + $0xc0] sm:$0xf]
    %v8676 = vld [vmem:[#allocation11 + $0xc4] sm:$0xf]
    %v8677 = vld [vmem:[#allocation11 + $0xc8] sm:$0xf]
    %v8678 = vld [vmem:[#allocation11 + $0xcc] sm:$0xf]
    %v8679 = vld [vmem:[#allocation11 + $0xd0] sm:$0xf]
    %v8680 = vld [vmem:[#allocation11 + $0xd4] sm:$0xf]
    %v8681 = vld [vmem:[#allocation11 + $0xd8] sm:$0xf]
    %v8682 = vld [vmem:[#allocation11 + $0xdc] sm:$0xf]
    %v8683 = vld [vmem:[#allocation11 + $0xe0] sm:$0xf]
    %v8684 = vld [vmem:[#allocation11 + $0xe4] sm:$0xf]
    %v8685 = vld [vmem:[#allocation11 + $0xe8] sm:$0xf]
    %v8686 = vld [vmem:[#allocation11 + $0xec] sm:$0xf]
    %v8687 = vld [vmem:[#allocation11 + $0xf0] sm:$0xf]
    %v8688 = vld [vmem:[#allocation11 + $0xf4] sm:$0xf]
    %v8689 = vld [vmem:[#allocation11 + $0xf8] sm:$0xf]
    %v8690 = vld [vmem:[#allocation11 + $0xfc] sm:$0xf]
    %v8691 = vld [vmem:[#allocation13] sm:$0x1]
    %v8693 = vlaneseq
    %v8694 = vshrl.u32 %v8693, 7
    %v8695 = vsub.s32 0, %v8694
    %v8696 = vrot.slane %v8691, %v8695
    %v8762 = vunpack.c.l.b16 %v8627
    %v8763 = vunpack.c.l.b16 %v8628
    %v8764 = vunpack.c.l.b16 %v8629
    %v8765 = vunpack.c.l.b16 %v8630
    %v8766 = vunpack.c.l.b16 %v8631
    %v8767 = vunpack.c.l.b16 %v8632
    %v8768 = vunpack.c.l.b16 %v8633
    %v8769 = vunpack.c.l.b16 %v8634
    %v8770 = vunpack.c.l.b16 %v8635
    %v8771 = vunpack.c.l.b16 %v8636
    %v8772 = vunpack.c.l.b16 %v8637
    %v8773 = vunpack.c.l.b16 %v8638
    %v8774 = vunpack.c.l.b16 %v8639
    %v8775 = vunpack.c.l.b16 %v8640
    %v8776 = vunpack.c.l.b16 %v8641
    %v8777 = vunpack.c.l.b16 %v8642
    %v8778 = vunpack.c.l.b16 %v8643
    %v8779 = vunpack.c.l.b16 %v8644
    %v8780 = vunpack.c.l.b16 %v8645
    %v8781 = vunpack.c.l.b16 %v8646
    %v8782 = vunpack.c.l.b16 %v8647
    %v8783 = vunpack.c.l.b16 %v8648
    %v8784 = vunpack.c.l.b16 %v8649
    %v8785 = vunpack.c.l.b16 %v8650
    %v8786 = vunpack.c.l.b16 %v8651
    %v8787 = vunpack.c.l.b16 %v8652
    %v8788 = vunpack.c.l.b16 %v8653
    %v8789 = vunpack.c.l.b16 %v8654
    %v8790 = vunpack.c.l.b16 %v8655
    %v8791 = vunpack.c.l.b16 %v8656
    %v8792 = vunpack.c.l.b16 %v8657
    %v8793 = vunpack.c.l.b16 %v8658
    %v8794 = vunpack.c.l.b16 %v8659
    %v8795 = vunpack.c.l.b16 %v8660
    %v8796 = vunpack.c.l.b16 %v8661
    %v8797 = vunpack.c.l.b16 %v8662
    %v8798 = vunpack.c.l.b16 %v8663
    %v8799 = vunpack.c.l.b16 %v8664
    %v8800 = vunpack.c.l.b16 %v8665
    %v8801 = vunpack.c.l.b16 %v8666
    %v8802 = vunpack.c.l.b16 %v8667
    %v8803 = vunpack.c.l.b16 %v8668
    %v8804 = vunpack.c.l.b16 %v8669
    %v8805 = vunpack.c.l.b16 %v8670
    %v8806 = vunpack.c.l.b16 %v8671
    %v8807 = vunpack.c.l.b16 %v8672
    %v8808 = vunpack.c.l.b16 %v8673
    %v8809 = vunpack.c.l.b16 %v8674
    %v8810 = vunpack.c.l.b16 %v8675
    %v8811 = vunpack.c.l.b16 %v8676
    %v8812 = vunpack.c.l.b16 %v8677
    %v8813 = vunpack.c.l.b16 %v8678
    %v8814 = vunpack.c.l.b16 %v8679
    %v8815 = vunpack.c.l.b16 %v8680
    %v8816 = vunpack.c.l.b16 %v8681
    %v8817 = vunpack.c.l.b16 %v8682
    %v8818 = vunpack.c.l.b16 %v8683
    %v8819 = vunpack.c.l.b16 %v8684
    %v8820 = vunpack.c.l.b16 %v8685
    %v8821 = vunpack.c.l.b16 %v8686
    %v8822 = vunpack.c.l.b16 %v8687
    %v8823 = vunpack.c.l.b16 %v8688
    %v8824 = vunpack.c.l.b16 %v8689
    %v8825 = vunpack.c.l.b16 %v8690
    %v8826 = vpack.c.b16 %v8763, %v8762
    %v8827 = vpack.c.b16 %v8765, %v8764
    %v8828 = vpack.c.b16 %v8767, %v8766
    %v8829 = vpack.c.b16 %v8769, %v8768
    %v8830 = vpack.c.b16 %v8771, %v8770
    %v8831 = vpack.c.b16 %v8773, %v8772
    %v8832 = vpack.c.b16 %v8775, %v8774
    %v8833 = vpack.c.b16 %v8777, %v8776
    %v8834 = vpack.c.b16 %v8779, %v8778
    %v8835 = vpack.c.b16 %v8781, %v8780
    %v8836 = vpack.c.b16 %v8783, %v8782
    %v8837 = vpack.c.b16 %v8785, %v8784
    %v8838 = vpack.c.b16 %v8787, %v8786
    %v8839 = vpack.c.b16 %v8789, %v8788
    %v8840 = vpack.c.b16 %v8791, %v8790
    %v8841 = vpack.c.b16 %v8793, %v8792
    %v8842 = vpack.c.b16 %v8795, %v8794
    %v8843 = vpack.c.b16 %v8797, %v8796
    %v8844 = vpack.c.b16 %v8799, %v8798
    %v8845 = vpack.c.b16 %v8801, %v8800
    %v8846 = vpack.c.b16 %v8803, %v8802
    %v8847 = vpack.c.b16 %v8805, %v8804
    %v8848 = vpack.c.b16 %v8807, %v8806
    %v8849 = vpack.c.b16 %v8809, %v8808
    %v8850 = vpack.c.b16 %v8811, %v8810
    %v8851 = vpack.c.b16 %v8813, %v8812
    %v8852 = vpack.c.b16 %v8815, %v8814
    %v8853 = vpack.c.b16 %v8817, %v8816
    %v8854 = vpack.c.b16 %v8819, %v8818
    %v8855 = vpack.c.b16 %v8821, %v8820
    %v8856 = vpack.c.b16 %v8823, %v8822
    %v8857 = vpack.c.b16 %v8825, %v8824
    %8890 = vmatprep.subr.bf16.mxu0 0
    %8891 = vmatpush1.bf16.msra.mxu0 %v8826
    %8892 = vmatprep.subr.bf16.mxu0 0
    %8893 = vmatpush1.bf16.msra.mxu0 %v8827
    %8894 = vmatprep.subr.bf16.mxu0 0
    %8895 = vmatpush1.bf16.msra.mxu0 %v8828
    %8896 = vmatprep.subr.bf16.mxu0 0
    %8897 = vmatpush1.bf16.msra.mxu0 %v8829
    %8898 = vmatprep.subr.bf16.mxu0 0
    %8899 = vmatpush1.bf16.msra.mxu0 %v8830
    %8900 = vmatprep.subr.bf16.mxu0 0
    %8901 = vmatpush1.bf16.msra.mxu0 %v8831
    %8902 = vmatprep.subr.bf16.mxu0 0
    %8903 = vmatpush1.bf16.msra.mxu0 %v8832
    %8904 = vmatprep.subr.bf16.mxu0 0
    %8905 = vmatpush1.bf16.msra.mxu0 %v8833
    %8906 = vmatprep.subr.bf16.mxu0 0
    %8907 = vmatpush1.bf16.msra.mxu0 %v8834
    %8908 = vmatprep.subr.bf16.mxu0 0
    %8909 = vmatpush1.bf16.msra.mxu0 %v8835
    %8910 = vmatprep.subr.bf16.mxu0 0
    %8911 = vmatpush1.bf16.msra.mxu0 %v8836
    %8912 = vmatprep.subr.bf16.mxu0 0
    %8913 = vmatpush1.bf16.msra.mxu0 %v8837
    %8914 = vmatprep.subr.bf16.mxu0 0
    %8915 = vmatpush1.bf16.msra.mxu0 %v8838
    %8916 = vmatprep.subr.bf16.mxu0 0
    %8917 = vmatpush1.bf16.msra.mxu0 %v8839
    %8918 = vmatprep.subr.bf16.mxu0 0
    %8919 = vmatpush1.bf16.msra.mxu0 %v8840
    %8920 = vmatprep.subr.bf16.mxu0 0
    %8921 = vmatpush1.bf16.msra.mxu0 %v8841
    %8922 = vmatprep.mubr.bf16.mxu0 %v8624
    %8923 = vmatmul.mubr.bf16.gmra.mrb[0].mxu0 %v8623
    %v8924 = vpop.f32.mrb[0].mxu0
    %v8925 = vadd.f32 %v8696, %v8924
    %v8926 = vpop.f32.mrb[0].mxu0
    %v8927 = vpop.f32.mrb[0].mxu0
    %v8928 = vpop.f32.mrb[0].mxu0
    %8929 = vdwg.mxu0
    %8930 = vmatprep.subr.bf16.mxu0 0
    %8931 = vmatpush1.bf16.msra.mxu0 %v8842
    %8932 = vmatprep.subr.bf16.mxu0 0
    %8933 = vmatpush1.bf16.msra.mxu0 %v8843
    %8934 = vmatprep.subr.bf16.mxu0 0
    %8935 = vmatpush1.bf16.msra.mxu0 %v8844
    %8936 = vmatprep.subr.bf16.mxu0 0
    %8937 = vmatpush1.bf16.msra.mxu0 %v8845
    %8938 = vmatprep.subr.bf16.mxu0 0
    %8939 = vmatpush1.bf16.msra.mxu0 %v8846
    %8940 = vmatprep.subr.bf16.mxu0 0
    %8941 = vmatpush1.bf16.msra.mxu0 %v8847
    %8942 = vmatprep.subr.bf16.mxu0 0
    %8943 = vmatpush1.bf16.msra.mxu0 %v8848
    %8944 = vmatprep.subr.bf16.mxu0 0
    %8945 = vmatpush1.bf16.msra.mxu0 %v8849
    %8946 = vmatprep.subr.bf16.mxu0 0
    %8947 = vmatpush1.bf16.msra.mxu0 %v8850
    %8948 = vmatprep.subr.bf16.mxu0 0
    %8949 = vmatpush1.bf16.msra.mxu0 %v8851
    %8950 = vmatprep.subr.bf16.mxu0 0
    %8951 = vmatpush1.bf16.msra.mxu0 %v8852
    %8952 = vmatprep.subr.bf16.mxu0 0
    %8953 = vmatpush1.bf16.msra.mxu0 %v8853
    %8954 = vmatprep.subr.bf16.mxu0 0
    %8955 = vmatpush1.bf16.msra.mxu0 %v8854
    %8956 = vmatprep.subr.bf16.mxu0 0
    %8957 = vmatpush1.bf16.msra.mxu0 %v8855
    %8958 = vmatprep.subr.bf16.mxu0 0
    %8959 = vmatpush1.bf16.msra.mxu0 %v8856
    %8960 = vmatprep.subr.bf16.mxu0 0
    %8961 = vmatpush1.bf16.msra.mxu0 %v8857
    %8962 = vmatprep.mubr.bf16.mxu0 %v8626
    %8963 = vmatmul.mubr.bf16.gmra.mrb[0].mxu0 %v8625
    %v8964 = vpop.f32.mrb[0].mxu0
    %v8965 = vadd.f32 %v8925, %v8964
    %v8966 = vpop.f32.mrb[0].mxu0
    %v8967 = vpop.f32.mrb[0].mxu0
    %v8968 = vpop.f32.mrb[0].mxu0
    %8969 = vdwg.mxu0
    %8970 = vst [vmem:[#allocation14] sm:$0xff] %v8965
    // Predicated region
    $region58: #{tpu_custom_call.1} parent=1 // pred_check
      _
    $region59: #{tpu_custom_call.1} parent=1 // pred_check_branch
      %8972 = sbr.rel (0) target = $region61
    $region60: #{tpu_custom_call.1} parent=1 // pred_region
      %s8974 = ssub.s32 128, 128
      %8975 = vsyncadd [#allocation4], %s8974
      %s8977 = sshll.u32 [#allocation14], 4
      %s8978 = int_to_ptr.vmem [resolvable:$true] %s8977
      %8980 = dma.vmem_to_hbm [thread:$0]  %s8978, 128, %s7, [#allocation4]
    $region61: #{tpu_custom_call.1} parent=1 // pred_fallthru
      _
    // Predicated region
    $region62: #{tpu_custom_call.1} parent=1 // pred_check
      _
    $region63: #{tpu_custom_call.1} parent=1 // pred_check_branch
      %8982 = sbr.rel (0) target = $region65
    $region64: #{tpu_custom_call.1} parent=1 // pred_region
      %8983 = dma.done [#allocation4], 128
    $region65: #{tpu_custom_call.1} parent=1 // pred_fallthru
      _
    %8984 = vsyncpa [#allocation3], 1
    %8985 = vsyncpa [#allocation6], 1
    %8986 = vsyncpa [#allocation9], 1
    %8987 = vsyncpa [#allocation12], 1
    %8988 = vsyncpa [#allocation4], 1

</llo_original>
